<compile_context>
chip_gen: v6e
topology: v6e:2x2x1
jax: 0.10.0
libtpu: 0.0.40
codegen_flags: <defaults>
</compile_context>

<pallas_src>
import functools
import math

import jax
import jax.numpy as jnp
from jax.experimental import pallas as pl
from jax.experimental.pallas import tpu as pltpu


def _rup8(n):
    return ((n + 7) // 8) * 8


# ------------------------------ fused model kernel -----------------------------
def _fused_lstm_kernel(x_ref, w_ref, out_ref, *, act_id, lay, T, N, D):
    """Whole model in one kernel: stacked LSTM (wavefront over layers) + head.

    x_ref : (T*N, D) time-major input flattened over (time, batch)
    w_ref : (rows, lanes) packed weight slab; static row offsets in `lay`
    out   : (T, 1) == (B, 1) prediction
    """
    f32 = jnp.float32
    H = lay["H"]
    HID = lay["HID"]
    n_layers = len(lay["layers"])

    def dot32(a, b):
        return jnp.dot(a, b, preferred_element_type=f32)

    # ---- hoisted weight loads: static row slices of the single slab ----------
    # Gate order is PyTorch's native [i, f, g, o]; each gate is its own H-wide,
    # lane-offset-0 block, so no lane rotates are ever needed on gate results.
    Wih, Whh, Bias = [], [], []
    for info in lay["layers"]:
        ind = info["in_dim"]
        wb, hb, bb = info["wih"], info["whh"], info["b"]
        Wih.append([w_ref[wb + g * _rup8(ind): wb + g * _rup8(ind) + ind, 0:H]
                    for g in range(4)])
        Whh.append([w_ref[hb + g * _rup8(H): hb + g * _rup8(H) + H, 0:H]
                    for g in range(4)])
        Bias.append([w_ref[bb + g: bb + g + 1, 0:H] for g in range(4)])

    # Per-layer state widths.  Only batch column N-1 feeds the head and LSTM
    # batch columns are independent, so the last layer keeps just the trailing
    # min(N, 8) columns (8-row floor = full sublane tile; 1 would also be valid).
    last_w = N if n_layers == 1 else min(N, 8)
    widths = [N] * (n_layers - 1) + [last_w]

    # Layer-0 input projection for ALL timesteps (one matmul per gate, bias
    # folded in, hoisted out of the recurrence).
    x = x_ref[...]                                                # (T*N, D)
    xg0 = [dot32(x, Wih[0][g]) + Bias[0][g] for g in range(4)]    # 4 x (T*N, H)

    # Hoisted bias broadcasts for layers whose input projection runs inside the
    # time loop (JAX does not CSE broadcast_in_dim inside unrolled loops).
    BiasW = [None] + [[jnp.broadcast_to(Bias[l][g], (widths[l], H))
                       for g in range(4)] for l in range(1, n_layers)]

    def cell(pre, c):
        i = jax.nn.sigmoid(pre[0])
        f = jax.nn.sigmoid(pre[1])
        g = jnp.tanh(pre[2])
        o = jax.nn.sigmoid(pre[3])
        c = f * c + i * g
        return o * jnp.tanh(c), c

    hs = [jnp.zeros((w, H), f32) for w in widths]
    cs = [jnp.zeros((w, H), f32) for w in widths]

    # hl[t] collects the last layer's h at column N-1 (== PyTorch out[-1,:,:])
    # for every step, assembled purely in vregs (no VMEM scratch).
    row_ids = jax.lax.broadcasted_iota(jnp.int32, (T, H), 0)      # hoisted
    hl = jnp.zeros((T, H), f32)

    # Wavefront: layer l's step t runs right after layer l-1 produces h_t, so
    # independent work of consecutive layers overlaps on the VLIW scheduler and
    # the serial dependency depth is ~T + n_layers rather than n_layers * T.
    # (T is small and static -> full unroll; use lax.fori_loop if T grows.)
    for t in range(T):
        for l in range(n_layers):
            w = widths[l]
            if l == 0:
                pre = [xg0[g][t * N + (N - w): t * N + N, :] for g in range(4)]
            else:
                xin = hs[l - 1][widths[l - 1] - w: widths[l - 1], :]
                pre = [dot32(xin, Wih[l][g]) + BiasW[l][g] for g in range(4)]
            pre = [pre[g] + dot32(hs[l], Whh[l][g]) for g in range(4)]
            hs[l], cs[l] = cell(pre, cs[l])
        h_row = hs[-1][widths[-1] - 1: widths[-1], :]             # column N-1
        hl = jnp.where(row_ids == t, jnp.broadcast_to(h_row, (T, H)), hl)

    # ------------------------------- head -------------------------------------
    # TODO(synk): nn.Dropout is identity in eval mode; training-mode dropout is
    # not modeled.
    wa = w_ref[lay["wa"]: lay["wa"] + H, 0:HID]
    ba = w_ref[lay["ba"]: lay["ba"] + 1, 0:HID]
    wp = w_ref[lay["wp"]: lay["wp"] + HID, 0:1]
    bp = w_ref[lay["bp"]: lay["bp"] + 1, 0:1]

    z = dot32(hl, wa) + ba                                        # (B, HID)
    if act_id == 1:
        z = jnp.clip(z, 0.0, 6.0)          # ReLU6
    elif act_id == 2:
        z = jnp.tanh(z)                    # Tanh
    elif act_id == 3:
        z = jax.nn.sigmoid(z)              # Sigmoid
    else:
        z = jnp.maximum(z, 0.0)            # ReLU
    out_ref[...] = (dot32(z, wp) + bp).astype(out_ref.dtype)


def lstm_model_forward(x, w_slab, *, layout, act_id):
    """x: (B, S, 5) batch-first, exactly as the PyTorch module receives it."""
    B, S, D = x.shape
    # Time-major layout (T=B, N=S, D) is numerically x itself; flatten to
    # (T*N, D) in the wrapper (free XLA reshape) so the kernel never reshapes.
    x2d = x.reshape(B * S, D)

    kernel = functools.partial(_fused_lstm_kernel, act_id=act_id, lay=layout,
                               T=B, N=S, D=D)
    return pl.pallas_call(
        kernel,
        out_shape=jax.ShapeDtypeStruct((B, 1), jnp.float32),
        in_specs=[pl.BlockSpec(memory_space=pltpu.MemorySpace.VMEM),   # x (1 DMA)
                  pl.BlockSpec(memory_space=pltpu.MemorySpace.VMEM)],  # weights (1 DMA)
        out_specs=pl.BlockSpec(memory_space=pltpu.MemorySpace.VMEM),
        # Guard the grid-less "everything resident" design; safe on v5e/v6e/v7x.
        compiler_params=pltpu.CompilerParams(vmem_limit_bytes=32 * 1024 * 1024),
    )(x2d, w_slab)


# ----------------------- deterministic init (PyTorch layout) -------------------
def init_raw_params(key, input_size, n_neurouse, n_layers, hidden_size):
    """Parameters in the exact PyTorch shapes / gate order [i, f, g, o]."""
    H = n_neurouse
    keys = jax.random.split(key, 4 * n_layers + 4)
    idx = 0
    raw = {"lstm": []}
    k = 1.0 / math.sqrt(H)
    in_dim = input_size
    for _ in range(n_layers):
        wih = jax.random.uniform(keys[idx], (4 * H, in_dim), jnp.float32, -k, k); idx += 1
        whh = jax.random.uniform(keys[idx], (4 * H, H), jnp.float32, -k, k); idx += 1
        bih = jax.random.uniform(keys[idx], (4 * H,), jnp.float32, -k, k); idx += 1
        bhh = jax.random.uniform(keys[idx], (4 * H,), jnp.float32, -k, k); idx += 1
        raw["lstm"].append((wih, whh, bih, bhh))
        in_dim = H
    k1 = 1.0 / math.sqrt(H)
    raw["w1"] = jax.random.uniform(keys[idx], (hidden_size, H), jnp.float32, -k1, k1); idx += 1
    raw["b1"] = jax.random.uniform(keys[idx], (hidden_size,), jnp.float32, -k1, k1); idx += 1
    k2 = 1.0 / math.sqrt(hidden_size)
    raw["w2"] = jax.random.uniform(keys[idx], (1, hidden_size), jnp.float32, -k2, k2); idx += 1
    raw["b2"] = jax.random.uniform(keys[idx], (1,), jnp.float32, -k2, k2); idx += 1
    return raw


def pack_params(raw, input_size):
    """Pack every weight into ONE lane-aligned f32 slab (single prologue DMA).

    Per layer, per gate (PyTorch order i, f, g, o): wih_g (in_dim, H),
    whh_g (H, H), then a bias block whose row g holds bias_ih_g + bias_hh_g.
    Head: w1.T (H, HID), b1 (1, HID), w2.T (HID, 1), b2 (1, 1).
    Every block is zero-padded to a multiple of 8 rows so all static row
    offsets stay sublane-tile aligned; gate blocks sit at lane offset 0.
    """
    H = raw["lstm"][0][1].shape[1]
    HID = raw["w1"].shape[0]
    lanes = max(H, HID)

    blocks = []
    offset = 0

    def add(arr):
        nonlocal offset
        arr = jnp.asarray(arr, jnp.float32)
        rows, cols = arr.shape
        rpad = _rup8(rows)
        blocks.append(jnp.zeros((rpad, lanes), jnp.float32).at[:rows, :cols].set(arr))
        base = offset
        offset += rpad
        return base

    layout = {"layers": [], "H": H, "HID": HID}
    in_dim = input_size
    for (wih, whh, bih, bhh) in raw["lstm"]:
        info = {"in_dim": in_dim}
        # per-gate input weights (x @ W form), contiguous gate blocks
        info["wih"] = add(wih[0:H, :].T)
        for g in range(1, 4):
            add(wih[g * H:(g + 1) * H, :].T)
        # per-gate recurrent weights
        info["whh"] = add(whh[0:H, :].T)
        for g in range(1, 4):
            add(whh[g * H:(g + 1) * H, :].T)
        # fused biases, one row per gate
        b = bih + bhh
        info["b"] = add(jnp.stack([b[g * H:(g + 1) * H] for g in range(4)], axis=0))
        layout["layers"].append(info)
        in_dim = H
    layout["wa"] = add(raw["w1"].T)
    layout["ba"] = add(raw["b1"].reshape(1, -1))
    layout["wp"] = add(raw["w2"].T)
    layout["bp"] = add(raw["b2"].reshape(1, 1))
    slab = jnp.concatenate(blocks, axis=0)
    return slab, layout


# -------------------- plain-JAX reference of the PyTorch forward ----------------
def reference_forward(x, raw, act_id):
    xp = jnp.transpose(x, (1, 0, 2))            # input_seq.permute([1,0,2]) -> (S,B,5)
    batch, T = xp.shape[0], xp.shape[1]         # batch_first=True: batch=S, time=B
    H = raw["lstm"][0][1].shape[1]
    layer_in = xp
    for (wih, whh, bih, bhh) in raw["lstm"]:
        h = jnp.zeros((batch, H)); c = jnp.zeros((batch, H))
        outs = []
        for t in range(T):
            gates = layer_in[:, t, :] @ wih.T + bih + h @ whh.T + bhh
            i = jax.nn.sigmoid(gates[:, :H])
            f = jax.nn.sigmoid(gates[:, H:2 * H])
            g = jnp.tanh(gates[:, 2 * H:3 * H])
            o = jax.nn.sigmoid(gates[:, 3 * H:])
            c = f * c + i * g
            h = o * jnp.tanh(c)
            outs.append(h)
        layer_in = jnp.stack(outs, axis=1)      # (S, B, H)
    out_last = layer_in[-1, :, :]               # out[-1, :, :] -> (B, H)
    z = out_last @ raw["w1"].T + raw["b1"]
    if act_id == 1:
        z = jnp.clip(z, 0.0, 6.0)
    elif act_id == 2:
        z = jnp.tanh(z)
    elif act_id == 3:
        z = jax.nn.sigmoid(z)
    else:
        z = jnp.maximum(z, 0.0)
    return z @ raw["w2"].T + raw["b2"]


if __name__ == "__main__":
    key = jax.random.PRNGKey(0)
    B, S = 8, 8               # batch, sequence length
    input_size = 5            # fixed by the module
    n_neurouse = 16           # LSTM hidden size
    n_layers = 2
    hidden_size = 32          # width of self.a Linear
    Active_fun = 2            # 1=ReLU6, 2=Tanh, 3=Sigmoid, else ReLU
    # drop_rate is irrelevant at inference (Dropout == identity)

    kx, kp = jax.random.split(key)
    x = jax.random.normal(kx, (B, S, input_size), jnp.float32)
    raw = init_raw_params(kp, input_size, n_neurouse, n_layers, hidden_size)
    w_slab, layout = pack_params(raw, input_size)

    fwd = jax.jit(functools.partial(lstm_model_forward, layout=layout,
                                    act_id=Active_fun))
    pred = jax.block_until_ready(fwd(x, w_slab))

    assert pred.shape == (B, 1), pred.shape
    assert bool(jnp.all(jnp.isfinite(pred)))

    # Tight, scramble-proof correctness check: compare against the highest-
    # precision reference; widen the floor by the backend's measured default-vs-
    # highest matmul rounding scale so MXU f32-pass behavior can never trip it,
    # while any gate/layout scramble (O(1e-2..1) error) still fails loudly.
    with jax.default_matmul_precision("highest"):
        ref_hi = reference_forward(x, raw, Active_fun)
    ref_lo = reference_forward(x, raw, Active_fun)
    gap = float(jnp.max(jnp.abs(ref_hi - ref_lo)))
    tol = max(1e-3, 8.0 * gap)
    err = float(jnp.max(jnp.abs(pred - ref_hi)))
    assert err < tol, (err, tol)

    print("KERNEL_OK")
</pallas_src>

<mosaic_0001>
module attributes {stable_mosaic.version = 11 : i64} {
  func.func @_fused_lstm_kernel(%arg0: memref<64x5xf32, #tpu.memory_space<vmem>>, %arg1: memref<304x32xf32, #tpu.memory_space<vmem>>, %arg2: memref<8x1xf32, #tpu.memory_space<vmem>>) attributes {dimension_semantics = [], scalar_prefetch = 0 : i64, scratch_operands = 0 : i64, tpu.core_type = #tpu.core_type<tc>} {
    %c0 = arith.constant 0 : index
    %c0_0 = arith.constant 0 : index
    %0 = vector.load %arg1[%c0, %c0_0] : memref<304x32xf32, #tpu.memory_space<vmem>>, vector<5x16xf32>
    %c8 = arith.constant 8 : index
    %c0_1 = arith.constant 0 : index
    %1 = vector.load %arg1[%c8, %c0_1] : memref<304x32xf32, #tpu.memory_space<vmem>>, vector<5x16xf32>
    %c16 = arith.constant 16 : index
    %c0_2 = arith.constant 0 : index
    %2 = vector.load %arg1[%c16, %c0_2] : memref<304x32xf32, #tpu.memory_space<vmem>>, vector<5x16xf32>
    %c24 = arith.constant 24 : index
    %c0_3 = arith.constant 0 : index
    %3 = vector.load %arg1[%c24, %c0_3] : memref<304x32xf32, #tpu.memory_space<vmem>>, vector<5x16xf32>
    %c32 = arith.constant 32 : index
    %c0_4 = arith.constant 0 : index
    %4 = vector.load %arg1[%c32, %c0_4] : memref<304x32xf32, #tpu.memory_space<vmem>>, vector<16x16xf32>
    %c48 = arith.constant 48 : index
    %c0_5 = arith.constant 0 : index
    %5 = vector.load %arg1[%c48, %c0_5] : memref<304x32xf32, #tpu.memory_space<vmem>>, vector<16x16xf32>
    %c64 = arith.constant 64 : index
    %c0_6 = arith.constant 0 : index
    %6 = vector.load %arg1[%c64, %c0_6] : memref<304x32xf32, #tpu.memory_space<vmem>>, vector<16x16xf32>
    %c80 = arith.constant 80 : index
    %c0_7 = arith.constant 0 : index
    %7 = vector.load %arg1[%c80, %c0_7] : memref<304x32xf32, #tpu.memory_space<vmem>>, vector<16x16xf32>
    %c96 = arith.constant 96 : index
    %c0_8 = arith.constant 0 : index
    %8 = vector.load %arg1[%c96, %c0_8] : memref<304x32xf32, #tpu.memory_space<vmem>>, vector<1x16xf32>
    %c97 = arith.constant 97 : index
    %c0_9 = arith.constant 0 : index
    %9 = vector.load %arg1[%c97, %c0_9] : memref<304x32xf32, #tpu.memory_space<vmem>>, vector<1x16xf32>
    %c98 = arith.constant 98 : index
    %c0_10 = arith.constant 0 : index
    %10 = vector.load %arg1[%c98, %c0_10] : memref<304x32xf32, #tpu.memory_space<vmem>>, vector<1x16xf32>
    %c99 = arith.constant 99 : index
    %c0_11 = arith.constant 0 : index
    %11 = vector.load %arg1[%c99, %c0_11] : memref<304x32xf32, #tpu.memory_space<vmem>>, vector<1x16xf32>
    %c104 = arith.constant 104 : index
    %c0_12 = arith.constant 0 : index
    %12 = vector.load %arg1[%c104, %c0_12] : memref<304x32xf32, #tpu.memory_space<vmem>>, vector<16x16xf32>
    %c120 = arith.constant 120 : index
    %c0_13 = arith.constant 0 : index
    %13 = vector.load %arg1[%c120, %c0_13] : memref<304x32xf32, #tpu.memory_space<vmem>>, vector<16x16xf32>
    %c136 = arith.constant 136 : index
    %c0_14 = arith.constant 0 : index
    %14 = vector.load %arg1[%c136, %c0_14] : memref<304x32xf32, #tpu.memory_space<vmem>>, vector<16x16xf32>
    %c152 = arith.constant 152 : index
    %c0_15 = arith.constant 0 : index
    %15 = vector.load %arg1[%c152, %c0_15] : memref<304x32xf32, #tpu.memory_space<vmem>>, vector<16x16xf32>
    %c168 = arith.constant 168 : index
    %c0_16 = arith.constant 0 : index
    %16 = vector.load %arg1[%c168, %c0_16] : memref<304x32xf32, #tpu.memory_space<vmem>>, vector<16x16xf32>
    %c184 = arith.constant 184 : index
    %c0_17 = arith.constant 0 : index
    %17 = vector.load %arg1[%c184, %c0_17] : memref<304x32xf32, #tpu.memory_space<vmem>>, vector<16x16xf32>
    %c200 = arith.constant 200 : index
    %c0_18 = arith.constant 0 : index
    %18 = vector.load %arg1[%c200, %c0_18] : memref<304x32xf32, #tpu.memory_space<vmem>>, vector<16x16xf32>
    %c216 = arith.constant 216 : index
    %c0_19 = arith.constant 0 : index
    %19 = vector.load %arg1[%c216, %c0_19] : memref<304x32xf32, #tpu.memory_space<vmem>>, vector<16x16xf32>
    %c232 = arith.constant 232 : index
    %c0_20 = arith.constant 0 : index
    %20 = vector.load %arg1[%c232, %c0_20] : memref<304x32xf32, #tpu.memory_space<vmem>>, vector<1x16xf32>
    %c233 = arith.constant 233 : index
    %c0_21 = arith.constant 0 : index
    %21 = vector.load %arg1[%c233, %c0_21] : memref<304x32xf32, #tpu.memory_space<vmem>>, vector<1x16xf32>
    %c234 = arith.constant 234 : index
    %c0_22 = arith.constant 0 : index
    %22 = vector.load %arg1[%c234, %c0_22] : memref<304x32xf32, #tpu.memory_space<vmem>>, vector<1x16xf32>
    %c235 = arith.constant 235 : index
    %c0_23 = arith.constant 0 : index
    %23 = vector.load %arg1[%c235, %c0_23] : memref<304x32xf32, #tpu.memory_space<vmem>>, vector<1x16xf32>
    %c0_24 = arith.constant 0 : index
    %c0_25 = arith.constant 0 : index
    %24 = vector.load %arg0[%c0_24, %c0_25] : memref<64x5xf32, #tpu.memory_space<vmem>>, vector<64x5xf32>
    %cst = arith.constant dense<0.000000e+00> : vector<64x16xf32>
    %25 = tpu.matmul %24, %0, %cst {dimension_numbers = #tpu.dot_dimension_numbers<[1], [0], [0], [1], [0, 0, 1, 1], [], []>} : vector<64x5xf32>, vector<5x16xf32>, vector<64x16xf32> -> vector<64x16xf32>
    %26 = vector.broadcast %8 : vector<1x16xf32> to vector<64x16xf32>
    %27 = arith.addf %25, %26 : vector<64x16xf32>
    %cst_26 = arith.constant dense<0.000000e+00> : vector<64x16xf32>
    %28 = tpu.matmul %24, %1, %cst_26 {dimension_numbers = #tpu.dot_dimension_numbers<[1], [0], [0], [1], [0, 0, 1, 1], [], []>} : vector<64x5xf32>, vector<5x16xf32>, vector<64x16xf32> -> vector<64x16xf32>
    %29 = vector.broadcast %9 : vector<1x16xf32> to vector<64x16xf32>
    %30 = arith.addf %28, %29 : vector<64x16xf32>
    %cst_27 = arith.constant dense<0.000000e+00> : vector<64x16xf32>
    %31 = tpu.matmul %24, %2, %cst_27 {dimension_numbers = #tpu.dot_dimension_numbers<[1], [0], [0], [1], [0, 0, 1, 1], [], []>} : vector<64x5xf32>, vector<5x16xf32>, vector<64x16xf32> -> vector<64x16xf32>
    %32 = vector.broadcast %10 : vector<1x16xf32> to vector<64x16xf32>
    %33 = arith.addf %31, %32 : vector<64x16xf32>
    %cst_28 = arith.constant dense<0.000000e+00> : vector<64x16xf32>
    %34 = tpu.matmul %24, %3, %cst_28 {dimension_numbers = #tpu.dot_dimension_numbers<[1], [0], [0], [1], [0, 0, 1, 1], [], []>} : vector<64x5xf32>, vector<5x16xf32>, vector<64x16xf32> -> vector<64x16xf32>
    %35 = vector.broadcast %11 : vector<1x16xf32> to vector<64x16xf32>
    %36 = arith.addf %34, %35 : vector<64x16xf32>
    %37 = vector.shape_cast %20 : vector<1x16xf32> to vector<1x16xf32>
    %38 = vector.broadcast %37 : vector<1x16xf32> to vector<8x16xf32>
    %39 = vector.shape_cast %21 : vector<1x16xf32> to vector<1x16xf32>
    %40 = vector.broadcast %39 : vector<1x16xf32> to vector<8x16xf32>
    %41 = vector.shape_cast %22 : vector<1x16xf32> to vector<1x16xf32>
    %42 = vector.broadcast %41 : vector<1x16xf32> to vector<8x16xf32>
    %43 = vector.shape_cast %23 : vector<1x16xf32> to vector<1x16xf32>
    %44 = vector.broadcast %43 : vector<1x16xf32> to vector<8x16xf32>
    %cst_29 = arith.constant 0.000000e+00 : f32
    %45 = vector.broadcast %cst_29 : f32 to vector<8x16xf32>
    %cst_30 = arith.constant 0.000000e+00 : f32
    %46 = vector.broadcast %cst_30 : f32 to vector<8x16xf32>
    %cst_31 = arith.constant 0.000000e+00 : f32
    %47 = vector.broadcast %cst_31 : f32 to vector<8x16xf32>
    %cst_32 = arith.constant 0.000000e+00 : f32
    %48 = vector.broadcast %cst_32 : f32 to vector<8x16xf32>
    %49 = tpu.iota {dimensions = array<i32: 0>} : vector<8x16xi32>
    %cst_33 = arith.constant 0.000000e+00 : f32
    %50 = vector.broadcast %cst_33 : f32 to vector<8x16xf32>
    %51 = vector.extract_strided_slice %27 {offsets = [0, 0], sizes = [8, 16], strides = [1, 1]} : vector<64x16xf32> to vector<8x16xf32>
    %52 = vector.extract_strided_slice %30 {offsets = [0, 0], sizes = [8, 16], strides = [1, 1]} : vector<64x16xf32> to vector<8x16xf32>
    %53 = vector.extract_strided_slice %33 {offsets = [0, 0], sizes = [8, 16], strides = [1, 1]} : vector<64x16xf32> to vector<8x16xf32>
    %54 = vector.extract_strided_slice %36 {offsets = [0, 0], sizes = [8, 16], strides = [1, 1]} : vector<64x16xf32> to vector<8x16xf32>
    %cst_34 = arith.constant dense<0.000000e+00> : vector<8x16xf32>
    %55 = tpu.matmul %45, %4, %cst_34 {dimension_numbers = #tpu.dot_dimension_numbers<[1], [0], [0], [1], [0, 0, 1, 1], [], []>} : vector<8x16xf32>, vector<16x16xf32>, vector<8x16xf32> -> vector<8x16xf32>
    %56 = arith.addf %51, %55 : vector<8x16xf32>
    %cst_35 = arith.constant dense<0.000000e+00> : vector<8x16xf32>
    %57 = tpu.matmul %45, %5, %cst_35 {dimension_numbers = #tpu.dot_dimension_numbers<[1], [0], [0], [1], [0, 0, 1, 1], [], []>} : vector<8x16xf32>, vector<16x16xf32>, vector<8x16xf32> -> vector<8x16xf32>
    %58 = arith.addf %52, %57 : vector<8x16xf32>
    %cst_36 = arith.constant dense<0.000000e+00> : vector<8x16xf32>
    %59 = tpu.matmul %45, %6, %cst_36 {dimension_numbers = #tpu.dot_dimension_numbers<[1], [0], [0], [1], [0, 0, 1, 1], [], []>} : vector<8x16xf32>, vector<16x16xf32>, vector<8x16xf32> -> vector<8x16xf32>
    %60 = arith.addf %53, %59 : vector<8x16xf32>
    %cst_37 = arith.constant dense<0.000000e+00> : vector<8x16xf32>
    %61 = tpu.matmul %45, %7, %cst_37 {dimension_numbers = #tpu.dot_dimension_numbers<[1], [0], [0], [1], [0, 0, 1, 1], [], []>} : vector<8x16xf32>, vector<16x16xf32>, vector<8x16xf32> -> vector<8x16xf32>
    %62 = arith.addf %54, %61 : vector<8x16xf32>
    %63 = arith.negf %56 : vector<8x16xf32>
    %64 = math.exp %63 : vector<8x16xf32>
    %cst_38 = arith.constant 1.000000e+00 : f32
    %65 = vector.broadcast %cst_38 : f32 to vector<8x16xf32>
    %66 = arith.addf %65, %64 : vector<8x16xf32>
    %67 = arith.divf %65, %66 : vector<8x16xf32>
    %68 = arith.negf %58 : vector<8x16xf32>
    %69 = math.exp %68 : vector<8x16xf32>
    %cst_39 = arith.constant 1.000000e+00 : f32
    %70 = vector.broadcast %cst_39 : f32 to vector<8x16xf32>
    %71 = arith.addf %70, %69 : vector<8x16xf32>
    %72 = arith.divf %70, %71 : vector<8x16xf32>
    %73 = math.tanh %60 : vector<8x16xf32>
    %74 = arith.negf %62 : vector<8x16xf32>
    %75 = math.exp %74 : vector<8x16xf32>
    %cst_40 = arith.constant 1.000000e+00 : f32
    %76 = vector.broadcast %cst_40 : f32 to vector<8x16xf32>
    %77 = arith.addf %76, %75 : vector<8x16xf32>
    %78 = arith.divf %76, %77 : vector<8x16xf32>
    %79 = arith.mulf %72, %47 : vector<8x16xf32>
    %80 = arith.mulf %67, %73 : vector<8x16xf32>
    %81 = arith.addf %79, %80 : vector<8x16xf32>
    %82 = math.tanh %81 : vector<8x16xf32>
    %83 = arith.mulf %78, %82 : vector<8x16xf32>
    %cst_41 = arith.constant dense<0.000000e+00> : vector<8x16xf32>
    %84 = tpu.matmul %83, %12, %cst_41 {dimension_numbers = #tpu.dot_dimension_numbers<[1], [0], [0], [1], [0, 0, 1, 1], [], []>} : vector<8x16xf32>, vector<16x16xf32>, vector<8x16xf32> -> vector<8x16xf32>
    %85 = arith.addf %84, %38 : vector<8x16xf32>
    %cst_42 = arith.constant dense<0.000000e+00> : vector<8x16xf32>
    %86 = tpu.matmul %83, %13, %cst_42 {dimension_numbers = #tpu.dot_dimension_numbers<[1], [0], [0], [1], [0, 0, 1, 1], [], []>} : vector<8x16xf32>, vector<16x16xf32>, vector<8x16xf32> -> vector<8x16xf32>
    %87 = arith.addf %86, %40 : vector<8x16xf32>
    %cst_43 = arith.constant dense<0.000000e+00> : vector<8x16xf32>
    %88 = tpu.matmul %83, %14, %cst_43 {dimension_numbers = #tpu.dot_dimension_numbers<[1], [0], [0], [1], [0, 0, 1, 1], [], []>} : vector<8x16xf32>, vector<16x16xf32>, vector<8x16xf32> -> vector<8x16xf32>
    %89 = arith.addf %88, %42 : vector<8x16xf32>
    %cst_44 = arith.constant dense<0.000000e+00> : vector<8x16xf32>
    %90 = tpu.matmul %83, %15, %cst_44 {dimension_numbers = #tpu.dot_dimension_numbers<[1], [0], [0], [1], [0, 0, 1, 1], [], []>} : vector<8x16xf32>, vector<16x16xf32>, vector<8x16xf32> -> vector<8x16xf32>
    %91 = arith.addf %90, %44 : vector<8x16xf32>
    %cst_45 = arith.constant dense<0.000000e+00> : vector<8x16xf32>
    %92 = tpu.matmul %46, %16, %cst_45 {dimension_numbers = #tpu.dot_dimension_numbers<[1], [0], [0], [1], [0, 0, 1, 1], [], []>} : vector<8x16xf32>, vector<16x16xf32>, vector<8x16xf32> -> vector<8x16xf32>
    %93 = arith.addf %85, %92 : vector<8x16xf32>
    %cst_46 = arith.constant dense<0.000000e+00> : vector<8x16xf32>
    %94 = tpu.matmul %46, %17, %cst_46 {dimension_numbers = #tpu.dot_dimension_numbers<[1], [0], [0], [1], [0, 0, 1, 1], [], []>} : vector<8x16xf32>, vector<16x16xf32>, vector<8x16xf32> -> vector<8x16xf32>
    %95 = arith.addf %87, %94 : vector<8x16xf32>
    %cst_47 = arith.constant dense<0.000000e+00> : vector<8x16xf32>
    %96 = tpu.matmul %46, %18, %cst_47 {dimension_numbers = #tpu.dot_dimension_numbers<[1], [0], [0], [1], [0, 0, 1, 1], [], []>} : vector<8x16xf32>, vector<16x16xf32>, vector<8x16xf32> -> vector<8x16xf32>
    %97 = arith.addf %89, %96 : vector<8x16xf32>
    %cst_48 = arith.constant dense<0.000000e+00> : vector<8x16xf32>
    %98 = tpu.matmul %46, %19, %cst_48 {dimension_numbers = #tpu.dot_dimension_numbers<[1], [0], [0], [1], [0, 0, 1, 1], [], []>} : vector<8x16xf32>, vector<16x16xf32>, vector<8x16xf32> -> vector<8x16xf32>
    %99 = arith.addf %91, %98 : vector<8x16xf32>
    %100 = arith.negf %93 : vector<8x16xf32>
    %101 = math.exp %100 : vector<8x16xf32>
    %cst_49 = arith.constant 1.000000e+00 : f32
    %102 = vector.broadcast %cst_49 : f32 to vector<8x16xf32>
    %103 = arith.addf %102, %101 : vector<8x16xf32>
    %104 = arith.divf %102, %103 : vector<8x16xf32>
    %105 = arith.negf %95 : vector<8x16xf32>
    %106 = math.exp %105 : vector<8x16xf32>
    %cst_50 = arith.constant 1.000000e+00 : f32
    %107 = vector.broadcast %cst_50 : f32 to vector<8x16xf32>
    %108 = arith.addf %107, %106 : vector<8x16xf32>
    %109 = arith.divf %107, %108 : vector<8x16xf32>
    %110 = math.tanh %97 : vector<8x16xf32>
    %111 = arith.negf %99 : vector<8x16xf32>
    %112 = math.exp %111 : vector<8x16xf32>
    %cst_51 = arith.constant 1.000000e+00 : f32
    %113 = vector.broadcast %cst_51 : f32 to vector<8x16xf32>
    %114 = arith.addf %113, %112 : vector<8x16xf32>
    %115 = arith.divf %113, %114 : vector<8x16xf32>
    %116 = arith.mulf %109, %48 : vector<8x16xf32>
    %117 = arith.mulf %104, %110 : vector<8x16xf32>
    %118 = arith.addf %116, %117 : vector<8x16xf32>
    %119 = math.tanh %118 : vector<8x16xf32>
    %120 = arith.mulf %115, %119 : vector<8x16xf32>
    %121 = vector.extract_strided_slice %120 {offsets = [7, 0], sizes = [1, 16], strides = [1, 1]} : vector<8x16xf32> to vector<1x16xf32>
    %c0_i32 = arith.constant 0 : i32
    %122 = vector.broadcast %c0_i32 : i32 to vector<8x16xi32>
    %123 = arith.cmpi eq, %49, %122 : vector<8x16xi32>
    %124 = vector.shape_cast %121 : vector<1x16xf32> to vector<1x16xf32>
    %125 = vector.broadcast %124 : vector<1x16xf32> to vector<8x16xf32>
    %126 = arith.select %123, %125, %50 : vector<8x16xi1>, vector<8x16xf32>
    %127 = vector.extract_strided_slice %27 {offsets = [8, 0], sizes = [8, 16], strides = [1, 1]} : vector<64x16xf32> to vector<8x16xf32>
    %128 = vector.extract_strided_slice %30 {offsets = [8, 0], sizes = [8, 16], strides = [1, 1]} : vector<64x16xf32> to vector<8x16xf32>
    %129 = vector.extract_strided_slice %33 {offsets = [8, 0], sizes = [8, 16], strides = [1, 1]} : vector<64x16xf32> to vector<8x16xf32>
    %130 = vector.extract_strided_slice %36 {offsets = [8, 0], sizes = [8, 16], strides = [1, 1]} : vector<64x16xf32> to vector<8x16xf32>
    %cst_52 = arith.constant dense<0.000000e+00> : vector<8x16xf32>
    %131 = tpu.matmul %83, %4, %cst_52 {dimension_numbers = #tpu.dot_dimension_numbers<[1], [0], [0], [1], [0, 0, 1, 1], [], []>} : vector<8x16xf32>, vector<16x16xf32>, vector<8x16xf32> -> vector<8x16xf32>
    %132 = arith.addf %127, %131 : vector<8x16xf32>
    %cst_53 = arith.constant dense<0.000000e+00> : vector<8x16xf32>
    %133 = tpu.matmul %83, %5, %cst_53 {dimension_numbers = #tpu.dot_dimension_numbers<[1], [0], [0], [1], [0, 0, 1, 1], [], []>} : vector<8x16xf32>, vector<16x16xf32>, vector<8x16xf32> -> vector<8x16xf32>
    %134 = arith.addf %128, %133 : vector<8x16xf32>
    %cst_54 = arith.constant dense<0.000000e+00> : vector<8x16xf32>
    %135 = tpu.matmul %83, %6, %cst_54 {dimension_numbers = #tpu.dot_dimension_numbers<[1], [0], [0], [1], [0, 0, 1, 1], [], []>} : vector<8x16xf32>, vector<16x16xf32>, vector<8x16xf32> -> vector<8x16xf32>
    %136 = arith.addf %129, %135 : vector<8x16xf32>
    %cst_55 = arith.constant dense<0.000000e+00> : vector<8x16xf32>
    %137 = tpu.matmul %83, %7, %cst_55 {dimension_numbers = #tpu.dot_dimension_numbers<[1], [0], [0], [1], [0, 0, 1, 1], [], []>} : vector<8x16xf32>, vector<16x16xf32>, vector<8x16xf32> -> vector<8x16xf32>
    %138 = arith.addf %130, %137 : vector<8x16xf32>
    %139 = arith.negf %132 : vector<8x16xf32>
    %140 = math.exp %139 : vector<8x16xf32>
    %cst_56 = arith.constant 1.000000e+00 : f32
    %141 = vector.broadcast %cst_56 : f32 to vector<8x16xf32>
    %142 = arith.addf %141, %140 : vector<8x16xf32>
    %143 = arith.divf %141, %142 : vector<8x16xf32>
    %144 = arith.negf %134 : vector<8x16xf32>
    %145 = math.exp %144 : vector<8x16xf32>
    %cst_57 = arith.constant 1.000000e+00 : f32
    %146 = vector.broadcast %cst_57 : f32 to vector<8x16xf32>
    %147 = arith.addf %146, %145 : vector<8x16xf32>
    %148 = arith.divf %146, %147 : vector<8x16xf32>
    %149 = math.tanh %136 : vector<8x16xf32>
    %150 = arith.negf %138 : vector<8x16xf32>
    %151 = math.exp %150 : vector<8x16xf32>
    %cst_58 = arith.constant 1.000000e+00 : f32
    %152 = vector.broadcast %cst_58 : f32 to vector<8x16xf32>
    %153 = arith.addf %152, %151 : vector<8x16xf32>
    %154 = arith.divf %152, %153 : vector<8x16xf32>
    %155 = arith.mulf %148, %81 : vector<8x16xf32>
    %156 = arith.mulf %143, %149 : vector<8x16xf32>
    %157 = arith.addf %155, %156 : vector<8x16xf32>
    %158 = math.tanh %157 : vector<8x16xf32>
    %159 = arith.mulf %154, %158 : vector<8x16xf32>
    %cst_59 = arith.constant dense<0.000000e+00> : vector<8x16xf32>
    %160 = tpu.matmul %159, %12, %cst_59 {dimension_numbers = #tpu.dot_dimension_numbers<[1], [0], [0], [1], [0, 0, 1, 1], [], []>} : vector<8x16xf32>, vector<16x16xf32>, vector<8x16xf32> -> vector<8x16xf32>
    %161 = arith.addf %160, %38 : vector<8x16xf32>
    %cst_60 = arith.constant dense<0.000000e+00> : vector<8x16xf32>
    %162 = tpu.matmul %159, %13, %cst_60 {dimension_numbers = #tpu.dot_dimension_numbers<[1], [0], [0], [1], [0, 0, 1, 1], [], []>} : vector<8x16xf32>, vector<16x16xf32>, vector<8x16xf32> -> vector<8x16xf32>
    %163 = arith.addf %162, %40 : vector<8x16xf32>
    %cst_61 = arith.constant dense<0.000000e+00> : vector<8x16xf32>
    %164 = tpu.matmul %159, %14, %cst_61 {dimension_numbers = #tpu.dot_dimension_numbers<[1], [0], [0], [1], [0, 0, 1, 1], [], []>} : vector<8x16xf32>, vector<16x16xf32>, vector<8x16xf32> -> vector<8x16xf32>
    %165 = arith.addf %164, %42 : vector<8x16xf32>
    %cst_62 = arith.constant dense<0.000000e+00> : vector<8x16xf32>
    %166 = tpu.matmul %159, %15, %cst_62 {dimension_numbers = #tpu.dot_dimension_numbers<[1], [0], [0], [1], [0, 0, 1, 1], [], []>} : vector<8x16xf32>, vector<16x16xf32>, vector<8x16xf32> -> vector<8x16xf32>
    %167 = arith.addf %166, %44 : vector<8x16xf32>
    %cst_63 = arith.constant dense<0.000000e+00> : vector<8x16xf32>
    %168 = tpu.matmul %120, %16, %cst_63 {dimension_numbers = #tpu.dot_dimension_numbers<[1], [0], [0], [1], [0, 0, 1, 1], [], []>} : vector<8x16xf32>, vector<16x16xf32>, vector<8x16xf32> -> vector<8x16xf32>
    %169 = arith.addf %161, %168 : vector<8x16xf32>
    %cst_64 = arith.constant dense<0.000000e+00> : vector<8x16xf32>
    %170 = tpu.matmul %120, %17, %cst_64 {dimension_numbers = #tpu.dot_dimension_numbers<[1], [0], [0], [1], [0, 0, 1, 1], [], []>} : vector<8x16xf32>, vector<16x16xf32>, vector<8x16xf32> -> vector<8x16xf32>
    %171 = arith.addf %163, %170 : vector<8x16xf32>
    %cst_65 = arith.constant dense<0.000000e+00> : vector<8x16xf32>
    %172 = tpu.matmul %120, %18, %cst_65 {dimension_numbers = #tpu.dot_dimension_numbers<[1], [0], [0], [1], [0, 0, 1, 1], [], []>} : vector<8x16xf32>, vector<16x16xf32>, vector<8x16xf32> -> vector<8x16xf32>
    %173 = arith.addf %165, %172 : vector<8x16xf32>
    %cst_66 = arith.constant dense<0.000000e+00> : vector<8x16xf32>
    %174 = tpu.matmul %120, %19, %cst_66 {dimension_numbers = #tpu.dot_dimension_numbers<[1], [0], [0], [1], [0, 0, 1, 1], [], []>} : vector<8x16xf32>, vector<16x16xf32>, vector<8x16xf32> -> vector<8x16xf32>
    %175 = arith.addf %167, %174 : vector<8x16xf32>
    %176 = arith.negf %169 : vector<8x16xf32>
    %177 = math.exp %176 : vector<8x16xf32>
    %cst_67 = arith.constant 1.000000e+00 : f32
    %178 = vector.broadcast %cst_67 : f32 to vector<8x16xf32>
    %179 = arith.addf %178, %177 : vector<8x16xf32>
    %180 = arith.divf %178, %179 : vector<8x16xf32>
    %181 = arith.negf %171 : vector<8x16xf32>
    %182 = math.exp %181 : vector<8x16xf32>
    %cst_68 = arith.constant 1.000000e+00 : f32
    %183 = vector.broadcast %cst_68 : f32 to vector<8x16xf32>
    %184 = arith.addf %183, %182 : vector<8x16xf32>
    %185 = arith.divf %183, %184 : vector<8x16xf32>
    %186 = math.tanh %173 : vector<8x16xf32>
    %187 = arith.negf %175 : vector<8x16xf32>
    %188 = math.exp %187 : vector<8x16xf32>
    %cst_69 = arith.constant 1.000000e+00 : f32
    %189 = vector.broadcast %cst_69 : f32 to vector<8x16xf32>
    %190 = arith.addf %189, %188 : vector<8x16xf32>
    %191 = arith.divf %189, %190 : vector<8x16xf32>
    %192 = arith.mulf %185, %118 : vector<8x16xf32>
    %193 = arith.mulf %180, %186 : vector<8x16xf32>
    %194 = arith.addf %192, %193 : vector<8x16xf32>
    %195 = math.tanh %194 : vector<8x16xf32>
    %196 = arith.mulf %191, %195 : vector<8x16xf32>
    %197 = vector.extract_strided_slice %196 {offsets = [7, 0], sizes = [1, 16], strides = [1, 1]} : vector<8x16xf32> to vector<1x16xf32>
    %c1_i32 = arith.constant 1 : i32
    %198 = vector.broadcast %c1_i32 : i32 to vector<8x16xi32>
    %199 = arith.cmpi eq, %49, %198 : vector<8x16xi32>
    %200 = vector.shape_cast %197 : vector<1x16xf32> to vector<1x16xf32>
    %201 = vector.broadcast %200 : vector<1x16xf32> to vector<8x16xf32>
    %202 = arith.select %199, %201, %126 : vector<8x16xi1>, vector<8x16xf32>
    %203 = vector.extract_strided_slice %27 {offsets = [16, 0], sizes = [8, 16], strides = [1, 1]} : vector<64x16xf32> to vector<8x16xf32>
    %204 = vector.extract_strided_slice %30 {offsets = [16, 0], sizes = [8, 16], strides = [1, 1]} : vector<64x16xf32> to vector<8x16xf32>
    %205 = vector.extract_strided_slice %33 {offsets = [16, 0], sizes = [8, 16], strides = [1, 1]} : vector<64x16xf32> to vector<8x16xf32>
    %206 = vector.extract_strided_slice %36 {offsets = [16, 0], sizes = [8, 16], strides = [1, 1]} : vector<64x16xf32> to vector<8x16xf32>
    %cst_70 = arith.constant dense<0.000000e+00> : vector<8x16xf32>
    %207 = tpu.matmul %159, %4, %cst_70 {dimension_numbers = #tpu.dot_dimension_numbers<[1], [0], [0], [1], [0, 0, 1, 1], [], []>} : vector<8x16xf32>, vector<16x16xf32>, vector<8x16xf32> -> vector<8x16xf32>
    %208 = arith.addf %203, %207 : vector<8x16xf32>
    %cst_71 = arith.constant dense<0.000000e+00> : vector<8x16xf32>
    %209 = tpu.matmul %159, %5, %cst_71 {dimension_numbers = #tpu.dot_dimension_numbers<[1], [0], [0], [1], [0, 0, 1, 1], [], []>} : vector<8x16xf32>, vector<16x16xf32>, vector<8x16xf32> -> vector<8x16xf32>
    %210 = arith.addf %204, %209 : vector<8x16xf32>
    %cst_72 = arith.constant dense<0.000000e+00> : vector<8x16xf32>
    %211 = tpu.matmul %159, %6, %cst_72 {dimension_numbers = #tpu.dot_dimension_numbers<[1], [0], [0], [1], [0, 0, 1, 1], [], []>} : vector<8x16xf32>, vector<16x16xf32>, vector<8x16xf32> -> vector<8x16xf32>
    %212 = arith.addf %205, %211 : vector<8x16xf32>
    %cst_73 = arith.constant dense<0.000000e+00> : vector<8x16xf32>
    %213 = tpu.matmul %159, %7, %cst_73 {dimension_numbers = #tpu.dot_dimension_numbers<[1], [0], [0], [1], [0, 0, 1, 1], [], []>} : vector<8x16xf32>, vector<16x16xf32>, vector<8x16xf32> -> vector<8x16xf32>
    %214 = arith.addf %206, %213 : vector<8x16xf32>
    %215 = arith.negf %208 : vector<8x16xf32>
    %216 = math.exp %215 : vector<8x16xf32>
    %cst_74 = arith.constant 1.000000e+00 : f32
    %217 = vector.broadcast %cst_74 : f32 to vector<8x16xf32>
    %218 = arith.addf %217, %216 : vector<8x16xf32>
    %219 = arith.divf %217, %218 : vector<8x16xf32>
    %220 = arith.negf %210 : vector<8x16xf32>
    %221 = math.exp %220 : vector<8x16xf32>
    %cst_75 = arith.constant 1.000000e+00 : f32
    %222 = vector.broadcast %cst_75 : f32 to vector<8x16xf32>
    %223 = arith.addf %222, %221 : vector<8x16xf32>
    %224 = arith.divf %222, %223 : vector<8x16xf32>
    %225 = math.tanh %212 : vector<8x16xf32>
    %226 = arith.negf %214 : vector<8x16xf32>
    %227 = math.exp %226 : vector<8x16xf32>
    %cst_76 = arith.constant 1.000000e+00 : f32
    %228 = vector.broadcast %cst_76 : f32 to vector<8x16xf32>
    %229 = arith.addf %228, %227 : vector<8x16xf32>
    %230 = arith.divf %228, %229 : vector<8x16xf32>
    %231 = arith.mulf %224, %157 : vector<8x16xf32>
    %232 = arith.mulf %219, %225 : vector<8x16xf32>
    %233 = arith.addf %231, %232 : vector<8x16xf32>
    %234 = math.tanh %233 : vector<8x16xf32>
    %235 = arith.mulf %230, %234 : vector<8x16xf32>
    %cst_77 = arith.constant dense<0.000000e+00> : vector<8x16xf32>
    %236 = tpu.matmul %235, %12, %cst_77 {dimension_numbers = #tpu.dot_dimension_numbers<[1], [0], [0], [1], [0, 0, 1, 1], [], []>} : vector<8x16xf32>, vector<16x16xf32>, vector<8x16xf32> -> vector<8x16xf32>
    %237 = arith.addf %236, %38 : vector<8x16xf32>
    %cst_78 = arith.constant dense<0.000000e+00> : vector<8x16xf32>
    %238 = tpu.matmul %235, %13, %cst_78 {dimension_numbers = #tpu.dot_dimension_numbers<[1], [0], [0], [1], [0, 0, 1, 1], [], []>} : vector<8x16xf32>, vector<16x16xf32>, vector<8x16xf32> -> vector<8x16xf32>
    %239 = arith.addf %238, %40 : vector<8x16xf32>
    %cst_79 = arith.constant dense<0.000000e+00> : vector<8x16xf32>
    %240 = tpu.matmul %235, %14, %cst_79 {dimension_numbers = #tpu.dot_dimension_numbers<[1], [0], [0], [1], [0, 0, 1, 1], [], []>} : vector<8x16xf32>, vector<16x16xf32>, vector<8x16xf32> -> vector<8x16xf32>
    %241 = arith.addf %240, %42 : vector<8x16xf32>
    %cst_80 = arith.constant dense<0.000000e+00> : vector<8x16xf32>
    %242 = tpu.matmul %235, %15, %cst_80 {dimension_numbers = #tpu.dot_dimension_numbers<[1], [0], [0], [1], [0, 0, 1, 1], [], []>} : vector<8x16xf32>, vector<16x16xf32>, vector<8x16xf32> -> vector<8x16xf32>
    %243 = arith.addf %242, %44 : vector<8x16xf32>
    %cst_81 = arith.constant dense<0.000000e+00> : vector<8x16xf32>
    %244 = tpu.matmul %196, %16, %cst_81 {dimension_numbers = #tpu.dot_dimension_numbers<[1], [0], [0], [1], [0, 0, 1, 1], [], []>} : vector<8x16xf32>, vector<16x16xf32>, vector<8x16xf32> -> vector<8x16xf32>
    %245 = arith.addf %237, %244 : vector<8x16xf32>
    %cst_82 = arith.constant dense<0.000000e+00> : vector<8x16xf32>
    %246 = tpu.matmul %196, %17, %cst_82 {dimension_numbers = #tpu.dot_dimension_numbers<[1], [0], [0], [1], [0, 0, 1, 1], [], []>} : vector<8x16xf32>, vector<16x16xf32>, vector<8x16xf32> -> vector<8x16xf32>
    %247 = arith.addf %239, %246 : vector<8x16xf32>
    %cst_83 = arith.constant dense<0.000000e+00> : vector<8x16xf32>
    %248 = tpu.matmul %196, %18, %cst_83 {dimension_numbers = #tpu.dot_dimension_numbers<[1], [0], [0], [1], [0, 0, 1, 1], [], []>} : vector<8x16xf32>, vector<16x16xf32>, vector<8x16xf32> -> vector<8x16xf32>
    %249 = arith.addf %241, %248 : vector<8x16xf32>
    %cst_84 = arith.constant dense<0.000000e+00> : vector<8x16xf32>
    %250 = tpu.matmul %196, %19, %cst_84 {dimension_numbers = #tpu.dot_dimension_numbers<[1], [0], [0], [1], [0, 0, 1, 1], [], []>} : vector<8x16xf32>, vector<16x16xf32>, vector<8x16xf32> -> vector<8x16xf32>
    %251 = arith.addf %243, %250 : vector<8x16xf32>
    %252 = arith.negf %245 : vector<8x16xf32>
    %253 = math.exp %252 : vector<8x16xf32>
    %cst_85 = arith.constant 1.000000e+00 : f32
    %254 = vector.broadcast %cst_85 : f32 to vector<8x16xf32>
    %255 = arith.addf %254, %253 : vector<8x16xf32>
    %256 = arith.divf %254, %255 : vector<8x16xf32>
    %257 = arith.negf %247 : vector<8x16xf32>
    %258 = math.exp %257 : vector<8x16xf32>
    %cst_86 = arith.constant 1.000000e+00 : f32
    %259 = vector.broadcast %cst_86 : f32 to vector<8x16xf32>
    %260 = arith.addf %259, %258 : vector<8x16xf32>
    %261 = arith.divf %259, %260 : vector<8x16xf32>
    %262 = math.tanh %249 : vector<8x16xf32>
    %263 = arith.negf %251 : vector<8x16xf32>
    %264 = math.exp %263 : vector<8x16xf32>
    %cst_87 = arith.constant 1.000000e+00 : f32
    %265 = vector.broadcast %cst_87 : f32 to vector<8x16xf32>
    %266 = arith.addf %265, %264 : vector<8x16xf32>
    %267 = arith.divf %265, %266 : vector<8x16xf32>
    %268 = arith.mulf %261, %194 : vector<8x16xf32>
    %269 = arith.mulf %256, %262 : vector<8x16xf32>
    %270 = arith.addf %268, %269 : vector<8x16xf32>
    %271 = math.tanh %270 : vector<8x16xf32>
    %272 = arith.mulf %267, %271 : vector<8x16xf32>
    %273 = vector.extract_strided_slice %272 {offsets = [7, 0], sizes = [1, 16], strides = [1, 1]} : vector<8x16xf32> to vector<1x16xf32>
    %c2_i32 = arith.constant 2 : i32
    %274 = vector.broadcast %c2_i32 : i32 to vector<8x16xi32>
    %275 = arith.cmpi eq, %49, %274 : vector<8x16xi32>
    %276 = vector.shape_cast %273 : vector<1x16xf32> to vector<1x16xf32>
    %277 = vector.broadcast %276 : vector<1x16xf32> to vector<8x16xf32>
    %278 = arith.select %275, %277, %202 : vector<8x16xi1>, vector<8x16xf32>
    %279 = vector.extract_strided_slice %27 {offsets = [24, 0], sizes = [8, 16], strides = [1, 1]} : vector<64x16xf32> to vector<8x16xf32>
    %280 = vector.extract_strided_slice %30 {offsets = [24, 0], sizes = [8, 16], strides = [1, 1]} : vector<64x16xf32> to vector<8x16xf32>
    %281 = vector.extract_strided_slice %33 {offsets = [24, 0], sizes = [8, 16], strides = [1, 1]} : vector<64x16xf32> to vector<8x16xf32>
    %282 = vector.extract_strided_slice %36 {offsets = [24, 0], sizes = [8, 16], strides = [1, 1]} : vector<64x16xf32> to vector<8x16xf32>
    %cst_88 = arith.constant dense<0.000000e+00> : vector<8x16xf32>
    %283 = tpu.matmul %235, %4, %cst_88 {dimension_numbers = #tpu.dot_dimension_numbers<[1], [0], [0], [1], [0, 0, 1, 1], [], []>} : vector<8x16xf32>, vector<16x16xf32>, vector<8x16xf32> -> vector<8x16xf32>
    %284 = arith.addf %279, %283 : vector<8x16xf32>
    %cst_89 = arith.constant dense<0.000000e+00> : vector<8x16xf32>
    %285 = tpu.matmul %235, %5, %cst_89 {dimension_numbers = #tpu.dot_dimension_numbers<[1], [0], [0], [1], [0, 0, 1, 1], [], []>} : vector<8x16xf32>, vector<16x16xf32>, vector<8x16xf32> -> vector<8x16xf32>
    %286 = arith.addf %280, %285 : vector<8x16xf32>
    %cst_90 = arith.constant dense<0.000000e+00> : vector<8x16xf32>
    %287 = tpu.matmul %235, %6, %cst_90 {dimension_numbers = #tpu.dot_dimension_numbers<[1], [0], [0], [1], [0, 0, 1, 1], [], []>} : vector<8x16xf32>, vector<16x16xf32>, vector<8x16xf32> -> vector<8x16xf32>
    %288 = arith.addf %281, %287 : vector<8x16xf32>
    %cst_91 = arith.constant dense<0.000000e+00> : vector<8x16xf32>
    %289 = tpu.matmul %235, %7, %cst_91 {dimension_numbers = #tpu.dot_dimension_numbers<[1], [0], [0], [1], [0, 0, 1, 1], [], []>} : vector<8x16xf32>, vector<16x16xf32>, vector<8x16xf32> -> vector<8x16xf32>
    %290 = arith.addf %282, %289 : vector<8x16xf32>
    %291 = arith.negf %284 : vector<8x16xf32>
    %292 = math.exp %291 : vector<8x16xf32>
    %cst_92 = arith.constant 1.000000e+00 : f32
    %293 = vector.broadcast %cst_92 : f32 to vector<8x16xf32>
    %294 = arith.addf %293, %292 : vector<8x16xf32>
    %295 = arith.divf %293, %294 : vector<8x16xf32>
    %296 = arith.negf %286 : vector<8x16xf32>
    %297 = math.exp %296 : vector<8x16xf32>
    %cst_93 = arith.constant 1.000000e+00 : f32
    %298 = vector.broadcast %cst_93 : f32 to vector<8x16xf32>
    %299 = arith.addf %298, %297 : vector<8x16xf32>
    %300 = arith.divf %298, %299 : vector<8x16xf32>
    %301 = math.tanh %288 : vector<8x16xf32>
    %302 = arith.negf %290 : vector<8x16xf32>
    %303 = math.exp %302 : vector<8x16xf32>
    %cst_94 = arith.constant 1.000000e+00 : f32
    %304 = vector.broadcast %cst_94 : f32 to vector<8x16xf32>
    %305 = arith.addf %304, %303 : vector<8x16xf32>
    %306 = arith.divf %304, %305 : vector<8x16xf32>
    %307 = arith.mulf %300, %233 : vector<8x16xf32>
    %308 = arith.mulf %295, %301 : vector<8x16xf32>
    %309 = arith.addf %307, %308 : vector<8x16xf32>
    %310 = math.tanh %309 : vector<8x16xf32>
    %311 = arith.mulf %306, %310 : vector<8x16xf32>
    %cst_95 = arith.constant dense<0.000000e+00> : vector<8x16xf32>
    %312 = tpu.matmul %311, %12, %cst_95 {dimension_numbers = #tpu.dot_dimension_numbers<[1], [0], [0], [1], [0, 0, 1, 1], [], []>} : vector<8x16xf32>, vector<16x16xf32>, vector<8x16xf32> -> vector<8x16xf32>
    %313 = arith.addf %312, %38 : vector<8x16xf32>
    %cst_96 = arith.constant dense<0.000000e+00> : vector<8x16xf32>
    %314 = tpu.matmul %311, %13, %cst_96 {dimension_numbers = #tpu.dot_dimension_numbers<[1], [0], [0], [1], [0, 0, 1, 1], [], []>} : vector<8x16xf32>, vector<16x16xf32>, vector<8x16xf32> -> vector<8x16xf32>
    %315 = arith.addf %314, %40 : vector<8x16xf32>
    %cst_97 = arith.constant dense<0.000000e+00> : vector<8x16xf32>
    %316 = tpu.matmul %311, %14, %cst_97 {dimension_numbers = #tpu.dot_dimension_numbers<[1], [0], [0], [1], [0, 0, 1, 1], [], []>} : vector<8x16xf32>, vector<16x16xf32>, vector<8x16xf32> -> vector<8x16xf32>
    %317 = arith.addf %316, %42 : vector<8x16xf32>
    %cst_98 = arith.constant dense<0.000000e+00> : vector<8x16xf32>
    %318 = tpu.matmul %311, %15, %cst_98 {dimension_numbers = #tpu.dot_dimension_numbers<[1], [0], [0], [1], [0, 0, 1, 1], [], []>} : vector<8x16xf32>, vector<16x16xf32>, vector<8x16xf32> -> vector<8x16xf32>
    %319 = arith.addf %318, %44 : vector<8x16xf32>
    %cst_99 = arith.constant dense<0.000000e+00> : vector<8x16xf32>
    %320 = tpu.matmul %272, %16, %cst_99 {dimension_numbers = #tpu.dot_dimension_numbers<[1], [0], [0], [1], [0, 0, 1, 1], [], []>} : vector<8x16xf32>, vector<16x16xf32>, vector<8x16xf32> -> vector<8x16xf32>
    %321 = arith.addf %313, %320 : vector<8x16xf32>
    %cst_100 = arith.constant dense<0.000000e+00> : vector<8x16xf32>
    %322 = tpu.matmul %272, %17, %cst_100 {dimension_numbers = #tpu.dot_dimension_numbers<[1], [0], [0], [1], [0, 0, 1, 1], [], []>} : vector<8x16xf32>, vector<16x16xf32>, vector<8x16xf32> -> vector<8x16xf32>
    %323 = arith.addf %315, %322 : vector<8x16xf32>
    %cst_101 = arith.constant dense<0.000000e+00> : vector<8x16xf32>
    %324 = tpu.matmul %272, %18, %cst_101 {dimension_numbers = #tpu.dot_dimension_numbers<[1], [0], [0], [1], [0, 0, 1, 1], [], []>} : vector<8x16xf32>, vector<16x16xf32>, vector<8x16xf32> -> vector<8x16xf32>
    %325 = arith.addf %317, %324 : vector<8x16xf32>
    %cst_102 = arith.constant dense<0.000000e+00> : vector<8x16xf32>
    %326 = tpu.matmul %272, %19, %cst_102 {dimension_numbers = #tpu.dot_dimension_numbers<[1], [0], [0], [1], [0, 0, 1, 1], [], []>} : vector<8x16xf32>, vector<16x16xf32>, vector<8x16xf32> -> vector<8x16xf32>
    %327 = arith.addf %319, %326 : vector<8x16xf32>
    %328 = arith.negf %321 : vector<8x16xf32>
    %329 = math.exp %328 : vector<8x16xf32>
    %cst_103 = arith.constant 1.000000e+00 : f32
    %330 = vector.broadcast %cst_103 : f32 to vector<8x16xf32>
    %331 = arith.addf %330, %329 : vector<8x16xf32>
    %332 = arith.divf %330, %331 : vector<8x16xf32>
    %333 = arith.negf %323 : vector<8x16xf32>
    %334 = math.exp %333 : vector<8x16xf32>
    %cst_104 = arith.constant 1.000000e+00 : f32
    %335 = vector.broadcast %cst_104 : f32 to vector<8x16xf32>
    %336 = arith.addf %335, %334 : vector<8x16xf32>
    %337 = arith.divf %335, %336 : vector<8x16xf32>
    %338 = math.tanh %325 : vector<8x16xf32>
    %339 = arith.negf %327 : vector<8x16xf32>
    %340 = math.exp %339 : vector<8x16xf32>
    %cst_105 = arith.constant 1.000000e+00 : f32
    %341 = vector.broadcast %cst_105 : f32 to vector<8x16xf32>
    %342 = arith.addf %341, %340 : vector<8x16xf32>
    %343 = arith.divf %341, %342 : vector<8x16xf32>
    %344 = arith.mulf %337, %270 : vector<8x16xf32>
    %345 = arith.mulf %332, %338 : vector<8x16xf32>
    %346 = arith.addf %344, %345 : vector<8x16xf32>
    %347 = math.tanh %346 : vector<8x16xf32>
    %348 = arith.mulf %343, %347 : vector<8x16xf32>
    %349 = vector.extract_strided_slice %348 {offsets = [7, 0], sizes = [1, 16], strides = [1, 1]} : vector<8x16xf32> to vector<1x16xf32>
    %c3_i32 = arith.constant 3 : i32
    %350 = vector.broadcast %c3_i32 : i32 to vector<8x16xi32>
    %351 = arith.cmpi eq, %49, %350 : vector<8x16xi32>
    %352 = vector.shape_cast %349 : vector<1x16xf32> to vector<1x16xf32>
    %353 = vector.broadcast %352 : vector<1x16xf32> to vector<8x16xf32>
    %354 = arith.select %351, %353, %278 : vector<8x16xi1>, vector<8x16xf32>
    %355 = vector.extract_strided_slice %27 {offsets = [32, 0], sizes = [8, 16], strides = [1, 1]} : vector<64x16xf32> to vector<8x16xf32>
    %356 = vector.extract_strided_slice %30 {offsets = [32, 0], sizes = [8, 16], strides = [1, 1]} : vector<64x16xf32> to vector<8x16xf32>
    %357 = vector.extract_strided_slice %33 {offsets = [32, 0], sizes = [8, 16], strides = [1, 1]} : vector<64x16xf32> to vector<8x16xf32>
    %358 = vector.extract_strided_slice %36 {offsets = [32, 0], sizes = [8, 16], strides = [1, 1]} : vector<64x16xf32> to vector<8x16xf32>
    %cst_106 = arith.constant dense<0.000000e+00> : vector<8x16xf32>
    %359 = tpu.matmul %311, %4, %cst_106 {dimension_numbers = #tpu.dot_dimension_numbers<[1], [0], [0], [1], [0, 0, 1, 1], [], []>} : vector<8x16xf32>, vector<16x16xf32>, vector<8x16xf32> -> vector<8x16xf32>
    %360 = arith.addf %355, %359 : vector<8x16xf32>
    %cst_107 = arith.constant dense<0.000000e+00> : vector<8x16xf32>
    %361 = tpu.matmul %311, %5, %cst_107 {dimension_numbers = #tpu.dot_dimension_numbers<[1], [0], [0], [1], [0, 0, 1, 1], [], []>} : vector<8x16xf32>, vector<16x16xf32>, vector<8x16xf32> -> vector<8x16xf32>
    %362 = arith.addf %356, %361 : vector<8x16xf32>
    %cst_108 = arith.constant dense<0.000000e+00> : vector<8x16xf32>
    %363 = tpu.matmul %311, %6, %cst_108 {dimension_numbers = #tpu.dot_dimension_numbers<[1], [0], [0], [1], [0, 0, 1, 1], [], []>} : vector<8x16xf32>, vector<16x16xf32>, vector<8x16xf32> -> vector<8x16xf32>
    %364 = arith.addf %357, %363 : vector<8x16xf32>
    %cst_109 = arith.constant dense<0.000000e+00> : vector<8x16xf32>
    %365 = tpu.matmul %311, %7, %cst_109 {dimension_numbers = #tpu.dot_dimension_numbers<[1], [0], [0], [1], [0, 0, 1, 1], [], []>} : vector<8x16xf32>, vector<16x16xf32>, vector<8x16xf32> -> vector<8x16xf32>
    %366 = arith.addf %358, %365 : vector<8x16xf32>
    %367 = arith.negf %360 : vector<8x16xf32>
    %368 = math.exp %367 : vector<8x16xf32>
    %cst_110 = arith.constant 1.000000e+00 : f32
    %369 = vector.broadcast %cst_110 : f32 to vector<8x16xf32>
    %370 = arith.addf %369, %368 : vector<8x16xf32>
    %371 = arith.divf %369, %370 : vector<8x16xf32>
    %372 = arith.negf %362 : vector<8x16xf32>
    %373 = math.exp %372 : vector<8x16xf32>
    %cst_111 = arith.constant 1.000000e+00 : f32
    %374 = vector.broadcast %cst_111 : f32 to vector<8x16xf32>
    %375 = arith.addf %374, %373 : vector<8x16xf32>
    %376 = arith.divf %374, %375 : vector<8x16xf32>
    %377 = math.tanh %364 : vector<8x16xf32>
    %378 = arith.negf %366 : vector<8x16xf32>
    %379 = math.exp %378 : vector<8x16xf32>
    %cst_112 = arith.constant 1.000000e+00 : f32
    %380 = vector.broadcast %cst_112 : f32 to vector<8x16xf32>
    %381 = arith.addf %380, %379 : vector<8x16xf32>
    %382 = arith.divf %380, %381 : vector<8x16xf32>
    %383 = arith.mulf %376, %309 : vector<8x16xf32>
    %384 = arith.mulf %371, %377 : vector<8x16xf32>
    %385 = arith.addf %383, %384 : vector<8x16xf32>
    %386 = math.tanh %385 : vector<8x16xf32>
    %387 = arith.mulf %382, %386 : vector<8x16xf32>
    %cst_113 = arith.constant dense<0.000000e+00> : vector<8x16xf32>
    %388 = tpu.matmul %387, %12, %cst_113 {dimension_numbers = #tpu.dot_dimension_numbers<[1], [0], [0], [1], [0, 0, 1, 1], [], []>} : vector<8x16xf32>, vector<16x16xf32>, vector<8x16xf32> -> vector<8x16xf32>
    %389 = arith.addf %388, %38 : vector<8x16xf32>
    %cst_114 = arith.constant dense<0.000000e+00> : vector<8x16xf32>
    %390 = tpu.matmul %387, %13, %cst_114 {dimension_numbers = #tpu.dot_dimension_numbers<[1], [0], [0], [1], [0, 0, 1, 1], [], []>} : vector<8x16xf32>, vector<16x16xf32>, vector<8x16xf32> -> vector<8x16xf32>
    %391 = arith.addf %390, %40 : vector<8x16xf32>
    %cst_115 = arith.constant dense<0.000000e+00> : vector<8x16xf32>
    %392 = tpu.matmul %387, %14, %cst_115 {dimension_numbers = #tpu.dot_dimension_numbers<[1], [0], [0], [1], [0, 0, 1, 1], [], []>} : vector<8x16xf32>, vector<16x16xf32>, vector<8x16xf32> -> vector<8x16xf32>
    %393 = arith.addf %392, %42 : vector<8x16xf32>
    %cst_116 = arith.constant dense<0.000000e+00> : vector<8x16xf32>
    %394 = tpu.matmul %387, %15, %cst_116 {dimension_numbers = #tpu.dot_dimension_numbers<[1], [0], [0], [1], [0, 0, 1, 1], [], []>} : vector<8x16xf32>, vector<16x16xf32>, vector<8x16xf32> -> vector<8x16xf32>
    %395 = arith.addf %394, %44 : vector<8x16xf32>
    %cst_117 = arith.constant dense<0.000000e+00> : vector<8x16xf32>
    %396 = tpu.matmul %348, %16, %cst_117 {dimension_numbers = #tpu.dot_dimension_numbers<[1], [0], [0], [1], [0, 0, 1, 1], [], []>} : vector<8x16xf32>, vector<16x16xf32>, vector<8x16xf32> -> vector<8x16xf32>
    %397 = arith.addf %389, %396 : vector<8x16xf32>
    %cst_118 = arith.constant dense<0.000000e+00> : vector<8x16xf32>
    %398 = tpu.matmul %348, %17, %cst_118 {dimension_numbers = #tpu.dot_dimension_numbers<[1], [0], [0], [1], [0, 0, 1, 1], [], []>} : vector<8x16xf32>, vector<16x16xf32>, vector<8x16xf32> -> vector<8x16xf32>
    %399 = arith.addf %391, %398 : vector<8x16xf32>
    %cst_119 = arith.constant dense<0.000000e+00> : vector<8x16xf32>
    %400 = tpu.matmul %348, %18, %cst_119 {dimension_numbers = #tpu.dot_dimension_numbers<[1], [0], [0], [1], [0, 0, 1, 1], [], []>} : vector<8x16xf32>, vector<16x16xf32>, vector<8x16xf32> -> vector<8x16xf32>
    %401 = arith.addf %393, %400 : vector<8x16xf32>
    %cst_120 = arith.constant dense<0.000000e+00> : vector<8x16xf32>
    %402 = tpu.matmul %348, %19, %cst_120 {dimension_numbers = #tpu.dot_dimension_numbers<[1], [0], [0], [1], [0, 0, 1, 1], [], []>} : vector<8x16xf32>, vector<16x16xf32>, vector<8x16xf32> -> vector<8x16xf32>
    %403 = arith.addf %395, %402 : vector<8x16xf32>
    %404 = arith.negf %397 : vector<8x16xf32>
    %405 = math.exp %404 : vector<8x16xf32>
    %cst_121 = arith.constant 1.000000e+00 : f32
    %406 = vector.broadcast %cst_121 : f32 to vector<8x16xf32>
    %407 = arith.addf %406, %405 : vector<8x16xf32>
    %408 = arith.divf %406, %407 : vector<8x16xf32>
    %409 = arith.negf %399 : vector<8x16xf32>
    %410 = math.exp %409 : vector<8x16xf32>
    %cst_122 = arith.constant 1.000000e+00 : f32
    %411 = vector.broadcast %cst_122 : f32 to vector<8x16xf32>
    %412 = arith.addf %411, %410 : vector<8x16xf32>
    %413 = arith.divf %411, %412 : vector<8x16xf32>
    %414 = math.tanh %401 : vector<8x16xf32>
    %415 = arith.negf %403 : vector<8x16xf32>
    %416 = math.exp %415 : vector<8x16xf32>
    %cst_123 = arith.constant 1.000000e+00 : f32
    %417 = vector.broadcast %cst_123 : f32 to vector<8x16xf32>
    %418 = arith.addf %417, %416 : vector<8x16xf32>
    %419 = arith.divf %417, %418 : vector<8x16xf32>
    %420 = arith.mulf %413, %346 : vector<8x16xf32>
    %421 = arith.mulf %408, %414 : vector<8x16xf32>
    %422 = arith.addf %420, %421 : vector<8x16xf32>
    %423 = math.tanh %422 : vector<8x16xf32>
    %424 = arith.mulf %419, %423 : vector<8x16xf32>
    %425 = vector.extract_strided_slice %424 {offsets = [7, 0], sizes = [1, 16], strides = [1, 1]} : vector<8x16xf32> to vector<1x16xf32>
    %c4_i32 = arith.constant 4 : i32
    %426 = vector.broadcast %c4_i32 : i32 to vector<8x16xi32>
    %427 = arith.cmpi eq, %49, %426 : vector<8x16xi32>
    %428 = vector.shape_cast %425 : vector<1x16xf32> to vector<1x16xf32>
    %429 = vector.broadcast %428 : vector<1x16xf32> to vector<8x16xf32>
    %430 = arith.select %427, %429, %354 : vector<8x16xi1>, vector<8x16xf32>
    %431 = vector.extract_strided_slice %27 {offsets = [40, 0], sizes = [8, 16], strides = [1, 1]} : vector<64x16xf32> to vector<8x16xf32>
    %432 = vector.extract_strided_slice %30 {offsets = [40, 0], sizes = [8, 16], strides = [1, 1]} : vector<64x16xf32> to vector<8x16xf32>
    %433 = vector.extract_strided_slice %33 {offsets = [40, 0], sizes = [8, 16], strides = [1, 1]} : vector<64x16xf32> to vector<8x16xf32>
    %434 = vector.extract_strided_slice %36 {offsets = [40, 0], sizes = [8, 16], strides = [1, 1]} : vector<64x16xf32> to vector<8x16xf32>
    %cst_124 = arith.constant dense<0.000000e+00> : vector<8x16xf32>
    %435 = tpu.matmul %387, %4, %cst_124 {dimension_numbers = #tpu.dot_dimension_numbers<[1], [0], [0], [1], [0, 0, 1, 1], [], []>} : vector<8x16xf32>, vector<16x16xf32>, vector<8x16xf32> -> vector<8x16xf32>
    %436 = arith.addf %431, %435 : vector<8x16xf32>
    %cst_125 = arith.constant dense<0.000000e+00> : vector<8x16xf32>
    %437 = tpu.matmul %387, %5, %cst_125 {dimension_numbers = #tpu.dot_dimension_numbers<[1], [0], [0], [1], [0, 0, 1, 1], [], []>} : vector<8x16xf32>, vector<16x16xf32>, vector<8x16xf32> -> vector<8x16xf32>
    %438 = arith.addf %432, %437 : vector<8x16xf32>
    %cst_126 = arith.constant dense<0.000000e+00> : vector<8x16xf32>
    %439 = tpu.matmul %387, %6, %cst_126 {dimension_numbers = #tpu.dot_dimension_numbers<[1], [0], [0], [1], [0, 0, 1, 1], [], []>} : vector<8x16xf32>, vector<16x16xf32>, vector<8x16xf32> -> vector<8x16xf32>
    %440 = arith.addf %433, %439 : vector<8x16xf32>
    %cst_127 = arith.constant dense<0.000000e+00> : vector<8x16xf32>
    %441 = tpu.matmul %387, %7, %cst_127 {dimension_numbers = #tpu.dot_dimension_numbers<[1], [0], [0], [1], [0, 0, 1, 1], [], []>} : vector<8x16xf32>, vector<16x16xf32>, vector<8x16xf32> -> vector<8x16xf32>
    %442 = arith.addf %434, %441 : vector<8x16xf32>
    %443 = arith.negf %436 : vector<8x16xf32>
    %444 = math.exp %443 : vector<8x16xf32>
    %cst_128 = arith.constant 1.000000e+00 : f32
    %445 = vector.broadcast %cst_128 : f32 to vector<8x16xf32>
    %446 = arith.addf %445, %444 : vector<8x16xf32>
    %447 = arith.divf %445, %446 : vector<8x16xf32>
    %448 = arith.negf %438 : vector<8x16xf32>
    %449 = math.exp %448 : vector<8x16xf32>
    %cst_129 = arith.constant 1.000000e+00 : f32
    %450 = vector.broadcast %cst_129 : f32 to vector<8x16xf32>
    %451 = arith.addf %450, %449 : vector<8x16xf32>
    %452 = arith.divf %450, %451 : vector<8x16xf32>
    %453 = math.tanh %440 : vector<8x16xf32>
    %454 = arith.negf %442 : vector<8x16xf32>
    %455 = math.exp %454 : vector<8x16xf32>
    %cst_130 = arith.constant 1.000000e+00 : f32
    %456 = vector.broadcast %cst_130 : f32 to vector<8x16xf32>
    %457 = arith.addf %456, %455 : vector<8x16xf32>
    %458 = arith.divf %456, %457 : vector<8x16xf32>
    %459 = arith.mulf %452, %385 : vector<8x16xf32>
    %460 = arith.mulf %447, %453 : vector<8x16xf32>
    %461 = arith.addf %459, %460 : vector<8x16xf32>
    %462 = math.tanh %461 : vector<8x16xf32>
    %463 = arith.mulf %458, %462 : vector<8x16xf32>
    %cst_131 = arith.constant dense<0.000000e+00> : vector<8x16xf32>
    %464 = tpu.matmul %463, %12, %cst_131 {dimension_numbers = #tpu.dot_dimension_numbers<[1], [0], [0], [1], [0, 0, 1, 1], [], []>} : vector<8x16xf32>, vector<16x16xf32>, vector<8x16xf32> -> vector<8x16xf32>
    %465 = arith.addf %464, %38 : vector<8x16xf32>
    %cst_132 = arith.constant dense<0.000000e+00> : vector<8x16xf32>
    %466 = tpu.matmul %463, %13, %cst_132 {dimension_numbers = #tpu.dot_dimension_numbers<[1], [0], [0], [1], [0, 0, 1, 1], [], []>} : vector<8x16xf32>, vector<16x16xf32>, vector<8x16xf32> -> vector<8x16xf32>
    %467 = arith.addf %466, %40 : vector<8x16xf32>
    %cst_133 = arith.constant dense<0.000000e+00> : vector<8x16xf32>
    %468 = tpu.matmul %463, %14, %cst_133 {dimension_numbers = #tpu.dot_dimension_numbers<[1], [0], [0], [1], [0, 0, 1, 1], [], []>} : vector<8x16xf32>, vector<16x16xf32>, vector<8x16xf32> -> vector<8x16xf32>
    %469 = arith.addf %468, %42 : vector<8x16xf32>
    %cst_134 = arith.constant dense<0.000000e+00> : vector<8x16xf32>
    %470 = tpu.matmul %463, %15, %cst_134 {dimension_numbers = #tpu.dot_dimension_numbers<[1], [0], [0], [1], [0, 0, 1, 1], [], []>} : vector<8x16xf32>, vector<16x16xf32>, vector<8x16xf32> -> vector<8x16xf32>
    %471 = arith.addf %470, %44 : vector<8x16xf32>
    %cst_135 = arith.constant dense<0.000000e+00> : vector<8x16xf32>
    %472 = tpu.matmul %424, %16, %cst_135 {dimension_numbers = #tpu.dot_dimension_numbers<[1], [0], [0], [1], [0, 0, 1, 1], [], []>} : vector<8x16xf32>, vector<16x16xf32>, vector<8x16xf32> -> vector<8x16xf32>
    %473 = arith.addf %465, %472 : vector<8x16xf32>
    %cst_136 = arith.constant dense<0.000000e+00> : vector<8x16xf32>
    %474 = tpu.matmul %424, %17, %cst_136 {dimension_numbers = #tpu.dot_dimension_numbers<[1], [0], [0], [1], [0, 0, 1, 1], [], []>} : vector<8x16xf32>, vector<16x16xf32>, vector<8x16xf32> -> vector<8x16xf32>
    %475 = arith.addf %467, %474 : vector<8x16xf32>
    %cst_137 = arith.constant dense<0.000000e+00> : vector<8x16xf32>
    %476 = tpu.matmul %424, %18, %cst_137 {dimension_numbers = #tpu.dot_dimension_numbers<[1], [0], [0], [1], [0, 0, 1, 1], [], []>} : vector<8x16xf32>, vector<16x16xf32>, vector<8x16xf32> -> vector<8x16xf32>
    %477 = arith.addf %469, %476 : vector<8x16xf32>
    %cst_138 = arith.constant dense<0.000000e+00> : vector<8x16xf32>
    %478 = tpu.matmul %424, %19, %cst_138 {dimension_numbers = #tpu.dot_dimension_numbers<[1], [0], [0], [1], [0, 0, 1, 1], [], []>} : vector<8x16xf32>, vector<16x16xf32>, vector<8x16xf32> -> vector<8x16xf32>
    %479 = arith.addf %471, %478 : vector<8x16xf32>
    %480 = arith.negf %473 : vector<8x16xf32>
    %481 = math.exp %480 : vector<8x16xf32>
    %cst_139 = arith.constant 1.000000e+00 : f32
    %482 = vector.broadcast %cst_139 : f32 to vector<8x16xf32>
    %483 = arith.addf %482, %481 : vector<8x16xf32>
    %484 = arith.divf %482, %483 : vector<8x16xf32>
    %485 = arith.negf %475 : vector<8x16xf32>
    %486 = math.exp %485 : vector<8x16xf32>
    %cst_140 = arith.constant 1.000000e+00 : f32
    %487 = vector.broadcast %cst_140 : f32 to vector<8x16xf32>
    %488 = arith.addf %487, %486 : vector<8x16xf32>
    %489 = arith.divf %487, %488 : vector<8x16xf32>
    %490 = math.tanh %477 : vector<8x16xf32>
    %491 = arith.negf %479 : vector<8x16xf32>
    %492 = math.exp %491 : vector<8x16xf32>
    %cst_141 = arith.constant 1.000000e+00 : f32
    %493 = vector.broadcast %cst_141 : f32 to vector<8x16xf32>
    %494 = arith.addf %493, %492 : vector<8x16xf32>
    %495 = arith.divf %493, %494 : vector<8x16xf32>
    %496 = arith.mulf %489, %422 : vector<8x16xf32>
    %497 = arith.mulf %484, %490 : vector<8x16xf32>
    %498 = arith.addf %496, %497 : vector<8x16xf32>
    %499 = math.tanh %498 : vector<8x16xf32>
    %500 = arith.mulf %495, %499 : vector<8x16xf32>
    %501 = vector.extract_strided_slice %500 {offsets = [7, 0], sizes = [1, 16], strides = [1, 1]} : vector<8x16xf32> to vector<1x16xf32>
    %c5_i32 = arith.constant 5 : i32
    %502 = vector.broadcast %c5_i32 : i32 to vector<8x16xi32>
    %503 = arith.cmpi eq, %49, %502 : vector<8x16xi32>
    %504 = vector.shape_cast %501 : vector<1x16xf32> to vector<1x16xf32>
    %505 = vector.broadcast %504 : vector<1x16xf32> to vector<8x16xf32>
    %506 = arith.select %503, %505, %430 : vector<8x16xi1>, vector<8x16xf32>
    %507 = vector.extract_strided_slice %27 {offsets = [48, 0], sizes = [8, 16], strides = [1, 1]} : vector<64x16xf32> to vector<8x16xf32>
    %508 = vector.extract_strided_slice %30 {offsets = [48, 0], sizes = [8, 16], strides = [1, 1]} : vector<64x16xf32> to vector<8x16xf32>
    %509 = vector.extract_strided_slice %33 {offsets = [48, 0], sizes = [8, 16], strides = [1, 1]} : vector<64x16xf32> to vector<8x16xf32>
    %510 = vector.extract_strided_slice %36 {offsets = [48, 0], sizes = [8, 16], strides = [1, 1]} : vector<64x16xf32> to vector<8x16xf32>
    %cst_142 = arith.constant dense<0.000000e+00> : vector<8x16xf32>
    %511 = tpu.matmul %463, %4, %cst_142 {dimension_numbers = #tpu.dot_dimension_numbers<[1], [0], [0], [1], [0, 0, 1, 1], [], []>} : vector<8x16xf32>, vector<16x16xf32>, vector<8x16xf32> -> vector<8x16xf32>
    %512 = arith.addf %507, %511 : vector<8x16xf32>
    %cst_143 = arith.constant dense<0.000000e+00> : vector<8x16xf32>
    %513 = tpu.matmul %463, %5, %cst_143 {dimension_numbers = #tpu.dot_dimension_numbers<[1], [0], [0], [1], [0, 0, 1, 1], [], []>} : vector<8x16xf32>, vector<16x16xf32>, vector<8x16xf32> -> vector<8x16xf32>
    %514 = arith.addf %508, %513 : vector<8x16xf32>
    %cst_144 = arith.constant dense<0.000000e+00> : vector<8x16xf32>
    %515 = tpu.matmul %463, %6, %cst_144 {dimension_numbers = #tpu.dot_dimension_numbers<[1], [0], [0], [1], [0, 0, 1, 1], [], []>} : vector<8x16xf32>, vector<16x16xf32>, vector<8x16xf32> -> vector<8x16xf32>
    %516 = arith.addf %509, %515 : vector<8x16xf32>
    %cst_145 = arith.constant dense<0.000000e+00> : vector<8x16xf32>
    %517 = tpu.matmul %463, %7, %cst_145 {dimension_numbers = #tpu.dot_dimension_numbers<[1], [0], [0], [1], [0, 0, 1, 1], [], []>} : vector<8x16xf32>, vector<16x16xf32>, vector<8x16xf32> -> vector<8x16xf32>
    %518 = arith.addf %510, %517 : vector<8x16xf32>
    %519 = arith.negf %512 : vector<8x16xf32>
    %520 = math.exp %519 : vector<8x16xf32>
    %cst_146 = arith.constant 1.000000e+00 : f32
    %521 = vector.broadcast %cst_146 : f32 to vector<8x16xf32>
    %522 = arith.addf %521, %520 : vector<8x16xf32>
    %523 = arith.divf %521, %522 : vector<8x16xf32>
    %524 = arith.negf %514 : vector<8x16xf32>
    %525 = math.exp %524 : vector<8x16xf32>
    %cst_147 = arith.constant 1.000000e+00 : f32
    %526 = vector.broadcast %cst_147 : f32 to vector<8x16xf32>
    %527 = arith.addf %526, %525 : vector<8x16xf32>
    %528 = arith.divf %526, %527 : vector<8x16xf32>
    %529 = math.tanh %516 : vector<8x16xf32>
    %530 = arith.negf %518 : vector<8x16xf32>
    %531 = math.exp %530 : vector<8x16xf32>
    %cst_148 = arith.constant 1.000000e+00 : f32
    %532 = vector.broadcast %cst_148 : f32 to vector<8x16xf32>
    %533 = arith.addf %532, %531 : vector<8x16xf32>
    %534 = arith.divf %532, %533 : vector<8x16xf32>
    %535 = arith.mulf %528, %461 : vector<8x16xf32>
    %536 = arith.mulf %523, %529 : vector<8x16xf32>
    %537 = arith.addf %535, %536 : vector<8x16xf32>
    %538 = math.tanh %537 : vector<8x16xf32>
    %539 = arith.mulf %534, %538 : vector<8x16xf32>
    %cst_149 = arith.constant dense<0.000000e+00> : vector<8x16xf32>
    %540 = tpu.matmul %539, %12, %cst_149 {dimension_numbers = #tpu.dot_dimension_numbers<[1], [0], [0], [1], [0, 0, 1, 1], [], []>} : vector<8x16xf32>, vector<16x16xf32>, vector<8x16xf32> -> vector<8x16xf32>
    %541 = arith.addf %540, %38 : vector<8x16xf32>
    %cst_150 = arith.constant dense<0.000000e+00> : vector<8x16xf32>
    %542 = tpu.matmul %539, %13, %cst_150 {dimension_numbers = #tpu.dot_dimension_numbers<[1], [0], [0], [1], [0, 0, 1, 1], [], []>} : vector<8x16xf32>, vector<16x16xf32>, vector<8x16xf32> -> vector<8x16xf32>
    %543 = arith.addf %542, %40 : vector<8x16xf32>
    %cst_151 = arith.constant dense<0.000000e+00> : vector<8x16xf32>
    %544 = tpu.matmul %539, %14, %cst_151 {dimension_numbers = #tpu.dot_dimension_numbers<[1], [0], [0], [1], [0, 0, 1, 1], [], []>} : vector<8x16xf32>, vector<16x16xf32>, vector<8x16xf32> -> vector<8x16xf32>
    %545 = arith.addf %544, %42 : vector<8x16xf32>
    %cst_152 = arith.constant dense<0.000000e+00> : vector<8x16xf32>
    %546 = tpu.matmul %539, %15, %cst_152 {dimension_numbers = #tpu.dot_dimension_numbers<[1], [0], [0], [1], [0, 0, 1, 1], [], []>} : vector<8x16xf32>, vector<16x16xf32>, vector<8x16xf32> -> vector<8x16xf32>
    %547 = arith.addf %546, %44 : vector<8x16xf32>
    %cst_153 = arith.constant dense<0.000000e+00> : vector<8x16xf32>
    %548 = tpu.matmul %500, %16, %cst_153 {dimension_numbers = #tpu.dot_dimension_numbers<[1], [0], [0], [1], [0, 0, 1, 1], [], []>} : vector<8x16xf32>, vector<16x16xf32>, vector<8x16xf32> -> vector<8x16xf32>
    %549 = arith.addf %541, %548 : vector<8x16xf32>
    %cst_154 = arith.constant dense<0.000000e+00> : vector<8x16xf32>
    %550 = tpu.matmul %500, %17, %cst_154 {dimension_numbers = #tpu.dot_dimension_numbers<[1], [0], [0], [1], [0, 0, 1, 1], [], []>} : vector<8x16xf32>, vector<16x16xf32>, vector<8x16xf32> -> vector<8x16xf32>
    %551 = arith.addf %543, %550 : vector<8x16xf32>
    %cst_155 = arith.constant dense<0.000000e+00> : vector<8x16xf32>
    %552 = tpu.matmul %500, %18, %cst_155 {dimension_numbers = #tpu.dot_dimension_numbers<[1], [0], [0], [1], [0, 0, 1, 1], [], []>} : vector<8x16xf32>, vector<16x16xf32>, vector<8x16xf32> -> vector<8x16xf32>
    %553 = arith.addf %545, %552 : vector<8x16xf32>
    %cst_156 = arith.constant dense<0.000000e+00> : vector<8x16xf32>
    %554 = tpu.matmul %500, %19, %cst_156 {dimension_numbers = #tpu.dot_dimension_numbers<[1], [0], [0], [1], [0, 0, 1, 1], [], []>} : vector<8x16xf32>, vector<16x16xf32>, vector<8x16xf32> -> vector<8x16xf32>
    %555 = arith.addf %547, %554 : vector<8x16xf32>
    %556 = arith.negf %549 : vector<8x16xf32>
    %557 = math.exp %556 : vector<8x16xf32>
    %cst_157 = arith.constant 1.000000e+00 : f32
    %558 = vector.broadcast %cst_157 : f32 to vector<8x16xf32>
    %559 = arith.addf %558, %557 : vector<8x16xf32>
    %560 = arith.divf %558, %559 : vector<8x16xf32>
    %561 = arith.negf %551 : vector<8x16xf32>
    %562 = math.exp %561 : vector<8x16xf32>
    %cst_158 = arith.constant 1.000000e+00 : f32
    %563 = vector.broadcast %cst_158 : f32 to vector<8x16xf32>
    %564 = arith.addf %563, %562 : vector<8x16xf32>
    %565 = arith.divf %563, %564 : vector<8x16xf32>
    %566 = math.tanh %553 : vector<8x16xf32>
    %567 = arith.negf %555 : vector<8x16xf32>
    %568 = math.exp %567 : vector<8x16xf32>
    %cst_159 = arith.constant 1.000000e+00 : f32
    %569 = vector.broadcast %cst_159 : f32 to vector<8x16xf32>
    %570 = arith.addf %569, %568 : vector<8x16xf32>
    %571 = arith.divf %569, %570 : vector<8x16xf32>
    %572 = arith.mulf %565, %498 : vector<8x16xf32>
    %573 = arith.mulf %560, %566 : vector<8x16xf32>
    %574 = arith.addf %572, %573 : vector<8x16xf32>
    %575 = math.tanh %574 : vector<8x16xf32>
    %576 = arith.mulf %571, %575 : vector<8x16xf32>
    %577 = vector.extract_strided_slice %576 {offsets = [7, 0], sizes = [1, 16], strides = [1, 1]} : vector<8x16xf32> to vector<1x16xf32>
    %c6_i32 = arith.constant 6 : i32
    %578 = vector.broadcast %c6_i32 : i32 to vector<8x16xi32>
    %579 = arith.cmpi eq, %49, %578 : vector<8x16xi32>
    %580 = vector.shape_cast %577 : vector<1x16xf32> to vector<1x16xf32>
    %581 = vector.broadcast %580 : vector<1x16xf32> to vector<8x16xf32>
    %582 = arith.select %579, %581, %506 : vector<8x16xi1>, vector<8x16xf32>
    %583 = vector.extract_strided_slice %27 {offsets = [56, 0], sizes = [8, 16], strides = [1, 1]} : vector<64x16xf32> to vector<8x16xf32>
    %584 = vector.extract_strided_slice %30 {offsets = [56, 0], sizes = [8, 16], strides = [1, 1]} : vector<64x16xf32> to vector<8x16xf32>
    %585 = vector.extract_strided_slice %33 {offsets = [56, 0], sizes = [8, 16], strides = [1, 1]} : vector<64x16xf32> to vector<8x16xf32>
    %586 = vector.extract_strided_slice %36 {offsets = [56, 0], sizes = [8, 16], strides = [1, 1]} : vector<64x16xf32> to vector<8x16xf32>
    %cst_160 = arith.constant dense<0.000000e+00> : vector<8x16xf32>
    %587 = tpu.matmul %539, %4, %cst_160 {dimension_numbers = #tpu.dot_dimension_numbers<[1], [0], [0], [1], [0, 0, 1, 1], [], []>} : vector<8x16xf32>, vector<16x16xf32>, vector<8x16xf32> -> vector<8x16xf32>
    %588 = arith.addf %583, %587 : vector<8x16xf32>
    %cst_161 = arith.constant dense<0.000000e+00> : vector<8x16xf32>
    %589 = tpu.matmul %539, %5, %cst_161 {dimension_numbers = #tpu.dot_dimension_numbers<[1], [0], [0], [1], [0, 0, 1, 1], [], []>} : vector<8x16xf32>, vector<16x16xf32>, vector<8x16xf32> -> vector<8x16xf32>
    %590 = arith.addf %584, %589 : vector<8x16xf32>
    %cst_162 = arith.constant dense<0.000000e+00> : vector<8x16xf32>
    %591 = tpu.matmul %539, %6, %cst_162 {dimension_numbers = #tpu.dot_dimension_numbers<[1], [0], [0], [1], [0, 0, 1, 1], [], []>} : vector<8x16xf32>, vector<16x16xf32>, vector<8x16xf32> -> vector<8x16xf32>
    %592 = arith.addf %585, %591 : vector<8x16xf32>
    %cst_163 = arith.constant dense<0.000000e+00> : vector<8x16xf32>
    %593 = tpu.matmul %539, %7, %cst_163 {dimension_numbers = #tpu.dot_dimension_numbers<[1], [0], [0], [1], [0, 0, 1, 1], [], []>} : vector<8x16xf32>, vector<16x16xf32>, vector<8x16xf32> -> vector<8x16xf32>
    %594 = arith.addf %586, %593 : vector<8x16xf32>
    %595 = arith.negf %588 : vector<8x16xf32>
    %596 = math.exp %595 : vector<8x16xf32>
    %cst_164 = arith.constant 1.000000e+00 : f32
    %597 = vector.broadcast %cst_164 : f32 to vector<8x16xf32>
    %598 = arith.addf %597, %596 : vector<8x16xf32>
    %599 = arith.divf %597, %598 : vector<8x16xf32>
    %600 = arith.negf %590 : vector<8x16xf32>
    %601 = math.exp %600 : vector<8x16xf32>
    %cst_165 = arith.constant 1.000000e+00 : f32
    %602 = vector.broadcast %cst_165 : f32 to vector<8x16xf32>
    %603 = arith.addf %602, %601 : vector<8x16xf32>
    %604 = arith.divf %602, %603 : vector<8x16xf32>
    %605 = math.tanh %592 : vector<8x16xf32>
    %606 = arith.negf %594 : vector<8x16xf32>
    %607 = math.exp %606 : vector<8x16xf32>
    %cst_166 = arith.constant 1.000000e+00 : f32
    %608 = vector.broadcast %cst_166 : f32 to vector<8x16xf32>
    %609 = arith.addf %608, %607 : vector<8x16xf32>
    %610 = arith.divf %608, %609 : vector<8x16xf32>
    %611 = arith.mulf %604, %537 : vector<8x16xf32>
    %612 = arith.mulf %599, %605 : vector<8x16xf32>
    %613 = arith.addf %611, %612 : vector<8x16xf32>
    %614 = math.tanh %613 : vector<8x16xf32>
    %615 = arith.mulf %610, %614 : vector<8x16xf32>
    %cst_167 = arith.constant dense<0.000000e+00> : vector<8x16xf32>
    %616 = tpu.matmul %615, %12, %cst_167 {dimension_numbers = #tpu.dot_dimension_numbers<[1], [0], [0], [1], [0, 0, 1, 1], [], []>} : vector<8x16xf32>, vector<16x16xf32>, vector<8x16xf32> -> vector<8x16xf32>
    %617 = arith.addf %616, %38 : vector<8x16xf32>
    %cst_168 = arith.constant dense<0.000000e+00> : vector<8x16xf32>
    %618 = tpu.matmul %615, %13, %cst_168 {dimension_numbers = #tpu.dot_dimension_numbers<[1], [0], [0], [1], [0, 0, 1, 1], [], []>} : vector<8x16xf32>, vector<16x16xf32>, vector<8x16xf32> -> vector<8x16xf32>
    %619 = arith.addf %618, %40 : vector<8x16xf32>
    %cst_169 = arith.constant dense<0.000000e+00> : vector<8x16xf32>
    %620 = tpu.matmul %615, %14, %cst_169 {dimension_numbers = #tpu.dot_dimension_numbers<[1], [0], [0], [1], [0, 0, 1, 1], [], []>} : vector<8x16xf32>, vector<16x16xf32>, vector<8x16xf32> -> vector<8x16xf32>
    %621 = arith.addf %620, %42 : vector<8x16xf32>
    %cst_170 = arith.constant dense<0.000000e+00> : vector<8x16xf32>
    %622 = tpu.matmul %615, %15, %cst_170 {dimension_numbers = #tpu.dot_dimension_numbers<[1], [0], [0], [1], [0, 0, 1, 1], [], []>} : vector<8x16xf32>, vector<16x16xf32>, vector<8x16xf32> -> vector<8x16xf32>
    %623 = arith.addf %622, %44 : vector<8x16xf32>
    %cst_171 = arith.constant dense<0.000000e+00> : vector<8x16xf32>
    %624 = tpu.matmul %576, %16, %cst_171 {dimension_numbers = #tpu.dot_dimension_numbers<[1], [0], [0], [1], [0, 0, 1, 1], [], []>} : vector<8x16xf32>, vector<16x16xf32>, vector<8x16xf32> -> vector<8x16xf32>
    %625 = arith.addf %617, %624 : vector<8x16xf32>
    %cst_172 = arith.constant dense<0.000000e+00> : vector<8x16xf32>
    %626 = tpu.matmul %576, %17, %cst_172 {dimension_numbers = #tpu.dot_dimension_numbers<[1], [0], [0], [1], [0, 0, 1, 1], [], []>} : vector<8x16xf32>, vector<16x16xf32>, vector<8x16xf32> -> vector<8x16xf32>
    %627 = arith.addf %619, %626 : vector<8x16xf32>
    %cst_173 = arith.constant dense<0.000000e+00> : vector<8x16xf32>
    %628 = tpu.matmul %576, %18, %cst_173 {dimension_numbers = #tpu.dot_dimension_numbers<[1], [0], [0], [1], [0, 0, 1, 1], [], []>} : vector<8x16xf32>, vector<16x16xf32>, vector<8x16xf32> -> vector<8x16xf32>
    %629 = arith.addf %621, %628 : vector<8x16xf32>
    %cst_174 = arith.constant dense<0.000000e+00> : vector<8x16xf32>
    %630 = tpu.matmul %576, %19, %cst_174 {dimension_numbers = #tpu.dot_dimension_numbers<[1], [0], [0], [1], [0, 0, 1, 1], [], []>} : vector<8x16xf32>, vector<16x16xf32>, vector<8x16xf32> -> vector<8x16xf32>
    %631 = arith.addf %623, %630 : vector<8x16xf32>
    %632 = arith.negf %625 : vector<8x16xf32>
    %633 = math.exp %632 : vector<8x16xf32>
    %cst_175 = arith.constant 1.000000e+00 : f32
    %634 = vector.broadcast %cst_175 : f32 to vector<8x16xf32>
    %635 = arith.addf %634, %633 : vector<8x16xf32>
    %636 = arith.divf %634, %635 : vector<8x16xf32>
    %637 = arith.negf %627 : vector<8x16xf32>
    %638 = math.exp %637 : vector<8x16xf32>
    %cst_176 = arith.constant 1.000000e+00 : f32
    %639 = vector.broadcast %cst_176 : f32 to vector<8x16xf32>
    %640 = arith.addf %639, %638 : vector<8x16xf32>
    %641 = arith.divf %639, %640 : vector<8x16xf32>
    %642 = math.tanh %629 : vector<8x16xf32>
    %643 = arith.negf %631 : vector<8x16xf32>
    %644 = math.exp %643 : vector<8x16xf32>
    %cst_177 = arith.constant 1.000000e+00 : f32
    %645 = vector.broadcast %cst_177 : f32 to vector<8x16xf32>
    %646 = arith.addf %645, %644 : vector<8x16xf32>
    %647 = arith.divf %645, %646 : vector<8x16xf32>
    %648 = arith.mulf %641, %574 : vector<8x16xf32>
    %649 = arith.mulf %636, %642 : vector<8x16xf32>
    %650 = arith.addf %648, %649 : vector<8x16xf32>
    %651 = math.tanh %650 : vector<8x16xf32>
    %652 = arith.mulf %647, %651 : vector<8x16xf32>
    %653 = vector.extract_strided_slice %652 {offsets = [7, 0], sizes = [1, 16], strides = [1, 1]} : vector<8x16xf32> to vector<1x16xf32>
    %c7_i32 = arith.constant 7 : i32
    %654 = vector.broadcast %c7_i32 : i32 to vector<8x16xi32>
    %655 = arith.cmpi eq, %49, %654 : vector<8x16xi32>
    %656 = vector.shape_cast %653 : vector<1x16xf32> to vector<1x16xf32>
    %657 = vector.broadcast %656 : vector<1x16xf32> to vector<8x16xf32>
    %658 = arith.select %655, %657, %582 : vector<8x16xi1>, vector<8x16xf32>
    %c240 = arith.constant 240 : index
    %c0_178 = arith.constant 0 : index
    %659 = vector.load %arg1[%c240, %c0_178] : memref<304x32xf32, #tpu.memory_space<vmem>>, vector<16x32xf32>
    %c256 = arith.constant 256 : index
    %c0_179 = arith.constant 0 : index
    %660 = vector.load %arg1[%c256, %c0_179] : memref<304x32xf32, #tpu.memory_space<vmem>>, vector<1x32xf32>
    %c264 = arith.constant 264 : index
    %c0_180 = arith.constant 0 : index
    %661 = vector.load %arg1[%c264, %c0_180] : memref<304x32xf32, #tpu.memory_space<vmem>>, vector<32x1xf32>
    %c296 = arith.constant 296 : index
    %c0_181 = arith.constant 0 : index
    %662 = vector.load %arg1[%c296, %c0_181] : memref<304x32xf32, #tpu.memory_space<vmem>>, vector<1x1xf32>
    %cst_182 = arith.constant dense<0.000000e+00> : vector<8x32xf32>
    %663 = tpu.matmul %658, %659, %cst_182 {dimension_numbers = #tpu.dot_dimension_numbers<[1], [0], [0], [1], [0, 0, 1, 1], [], []>} : vector<8x16xf32>, vector<16x32xf32>, vector<8x32xf32> -> vector<8x32xf32>
    %664 = vector.broadcast %660 : vector<1x32xf32> to vector<8x32xf32>
    %665 = arith.addf %663, %664 : vector<8x32xf32>
    %666 = math.tanh %665 : vector<8x32xf32>
    %cst_183 = arith.constant dense<0.000000e+00> : vector<8x1xf32>
    %667 = tpu.matmul %666, %661, %cst_183 {dimension_numbers = #tpu.dot_dimension_numbers<[1], [0], [0], [1], [0, 0, 1, 1], [], []>} : vector<8x32xf32>, vector<32x1xf32>, vector<8x1xf32> -> vector<8x1xf32>
    %668 = vector.broadcast %662 : vector<1x1xf32> to vector<8x1xf32>
    %669 = arith.addf %667, %668 : vector<8x1xf32>
    %c0_184 = arith.constant 0 : index
    %c0_185 = arith.constant 0 : index
    %670 = vector.load %arg2[%c0_184, %c0_185] : memref<8x1xf32, #tpu.memory_space<vmem>>, vector<8x1xf32>
    tpu.vector_store %arg2[%c0_184, %c0_185], %669 {strides = array<i32>} : memref<8x1xf32, #tpu.memory_space<vmem>>, vector<8x1xf32>,
    return
  }
}

</mosaic_0001>

<llo_original>
// kernel: lstm_model_forward.1
$region0: #{lstm_model_forward.1}
  #allocation0 [shape = 'u32[]', space=smem, size = 0x4, offset = 0x4, fixed_abs, tag = 'smem constant byte address 0x4 - core index']
  #allocation1 [shape = 'u32[144,128]{1,0:T(1,128)}', space=vmem, size = 0x12000, scoped, tag = 'internal scratch']
  %s0 = inlined_call_operand.vmem [shape: f32[64,5], index: 0, kind: input, shape index: {}]
  %s1 = inlined_call_operand.vmem [shape: f32[304,32], index: 1, kind: input, shape index: {}]
  %s2 = inlined_call_operand.vmem [shape: f32[8,1], index: 2, kind: output, shape index: {}]
  %s3 = sld [smem:[#allocation0]]
  $region18: #{lstm_model_forward.1} parent=0
    _
  %s5 = ssub.s32 1, %s3
  %s6 = scalar_select 0, %s5, %s3
  // Predicated region
  $region2: #{lstm_model_forward.1} parent=0 // pred_check
    _
  $region3: #{lstm_model_forward.1} parent=0 // pred_check_branch
    %8 = sbr.rel (0) target = $region5
  $region4: #{lstm_model_forward.1} parent=0 // pred_region
    _
  $region5: #{lstm_model_forward.1} parent=0 // pred_fallthru
    _
  // Predicated region
  $region6: #{lstm_model_forward.1} parent=0 // pred_check
    _
  $region7: #{lstm_model_forward.1} parent=0 // pred_check_branch
    %10 = sbr.rel (0) target = $region9
  $region8: #{lstm_model_forward.1} parent=0 // pred_region
    _
  $region9: #{lstm_model_forward.1} parent=0 // pred_fallthru
    _
  %v11 = vld [vmem:[%s1] sm:$0x1f]
  %v12 = vld [vmem:[%s1 + $0x8] sm:$0x1f]
  %v13 = vld [vmem:[%s1 + $0x10] sm:$0x1f]
  %v14 = vld [vmem:[%s1 + $0x18] sm:$0x1f]
  %v15 = vld [vmem:[%s1 + $0x20] sm:$0xff]
  %v16 = vld [vmem:[%s1 + $0x28] sm:$0xff]
  %v17 = vld [vmem:[%s1 + $0x30] sm:$0xff]
  %v18 = vld [vmem:[%s1 + $0x38] sm:$0xff]
  %v19 = vld [vmem:[%s1 + $0x40] sm:$0xff]
  %v20 = vld [vmem:[%s1 + $0x48] sm:$0xff]
  %v21 = vld [vmem:[%s1 + $0x50] sm:$0xff]
  %v22 = vld [vmem:[%s1 + $0x58] sm:$0xff]
  %v23 = vld [vmem:[%s1 + $0x60] sm:$0x1]
  %v24 = vld [vmem:[%s1 + $0x61] sm:$0x1]
  %v25 = vld [vmem:[%s1 + $0x62] sm:$0x1]
  %v26 = vld [vmem:[%s1 + $0x63] sm:$0x1]
  %v27 = vld [vmem:[%s1 + $0x68] sm:$0xff]
  %v28 = vld [vmem:[%s1 + $0x70] sm:$0xff]
  %v29 = vld [vmem:[%s1 + $0x78] sm:$0xff]
  %v30 = vld [vmem:[%s1 + $0x80] sm:$0xff]
  %v31 = vld [vmem:[%s1 + $0x88] sm:$0xff]
  %v32 = vld [vmem:[%s1 + $0x90] sm:$0xff]
  %v33 = vld [vmem:[%s1 + $0x98] sm:$0xff]
  %v34 = vld [vmem:[%s1 + $0xa0] sm:$0xff]
  %v35 = vld [vmem:[%s1 + $0xa8] sm:$0xff]
  %v36 = vld [vmem:[%s1 + $0xb0] sm:$0xff]
  %v37 = vld [vmem:[%s1 + $0xb8] sm:$0xff]
  %v38 = vld [vmem:[%s1 + $0xc0] sm:$0xff]
  %v39 = vld [vmem:[%s1 + $0xc8] sm:$0xff]
  %v40 = vld [vmem:[%s1 + $0xd0] sm:$0xff]
  %v41 = vld [vmem:[%s1 + $0xd8] sm:$0xff]
  %v42 = vld [vmem:[%s1 + $0xe0] sm:$0xff]
  %v43 = vld [vmem:[%s1 + $0xe8] sm:$0x1]
  %v44 = vld [vmem:[%s1 + $0xe9] sm:$0x1]
  %v45 = vld [vmem:[%s1 + $0xea] sm:$0x1]
  %v46 = vld [vmem:[%s1 + $0xeb] sm:$0x1]
  %v47 = vld [vmem:[%s0] sm:$0xff]
  %v48 = vld [vmem:[%s0 + $0x8] sm:$0xff]
  %v49 = vld [vmem:[%s0 + $0x10] sm:$0xff]
  %v50 = vld [vmem:[%s0 + $0x18] sm:$0xff]
  %v51 = vld [vmem:[%s0 + $0x20] sm:$0xff]
  %v52 = vld [vmem:[%s0 + $0x28] sm:$0xff]
  %v53 = vld [vmem:[%s0 + $0x30] sm:$0xff]
  %v54 = vld [vmem:[%s0 + $0x38] sm:$0xff]
  %v55 = vlaneseq
  %v56 = vshrl.u32 %v55, 7
  %v57 = vsub.s32 0, %v56
  %v58 = vrot.slane %v23, %v57
  %vm59 = vcmask 39936
  %v61 = vsel %vm59, %v47, 0
  %v64 = vsel %vm59, %v48, 0
  %v67 = vsel %vm59, %v49, 0
  %v70 = vsel %vm59, %v50, 0
  %v73 = vsel %vm59, %v51, 0
  %v76 = vsel %vm59, %v52, 0
  %v79 = vsel %vm59, %v53, 0
  %v82 = vsel %vm59, %v54, 0
  %vm84 = vcmask 1044480
  %v86 = vsel %vm84, %v11, 0
  %88 = vmatprep.subr.mxu0 0.0
  %89 = vmatpush1.msra.mxu0 0.0
  %90 = vmatprep.subr.mxu0 0.0
  %91 = vmatpush1.msra.mxu0 0.0
  %92 = vmatprep.subr.mxu0 0.0
  %93 = vmatpush1.msra.mxu0 0.0
  %94 = vmatprep.subr.mxu0 0.0
  %95 = vmatpush1.msra.mxu0 0.0
  %96 = vmatprep.subr.mxu0 0.0
  %97 = vmatpush1.msra.mxu0 0.0
  %98 = vmatprep.subr.mxu0 0.0
  %99 = vmatpush1.msra.mxu0 0.0
  %100 = vmatprep.subr.mxu0 0.0
  %101 = vmatpush1.msra.mxu0 0.0
  %102 = vmatprep.subr.mxu0 0.0
  %103 = vmatpush1.msra.mxu0 0.0
  %104 = vmatprep.subr.mxu0 0.0
  %105 = vmatpush1.msra.mxu0 0.0
  %106 = vmatprep.subr.mxu0 0.0
  %107 = vmatpush1.msra.mxu0 0.0
  %108 = vmatprep.subr.mxu0 0.0
  %109 = vmatpush1.msra.mxu0 0.0
  %110 = vmatprep.subr.mxu0 0.0
  %111 = vmatpush1.msra.mxu0 0.0
  %112 = vmatprep.subr.mxu0 0.0
  %113 = vmatpush1.msra.mxu0 0.0
  %114 = vmatprep.subr.mxu0 0.0
  %115 = vmatpush1.msra.mxu0 0.0
  %116 = vmatprep.subr.mxu0 0.0
  %117 = vmatpush1.msra.mxu0 0.0
  %118 = vmatprep.subr.mxu0 0.0
  %119 = vmatpush1.msra.mxu0 %v86
  %120 = vmatprep.subr.mxu0 0.0
  %121 = vmatpush2.msra.mxu0 0.0
  %122 = vmatprep.subr.mxu0 0.0
  %123 = vmatpush2.msra.mxu0 0.0
  %124 = vmatprep.subr.mxu0 0.0
  %125 = vmatpush2.msra.mxu0 0.0
  %126 = vmatprep.subr.mxu0 0.0
  %127 = vmatpush2.msra.mxu0 0.0
  %128 = vmatprep.subr.mxu0 0.0
  %129 = vmatpush2.msra.mxu0 0.0
  %130 = vmatprep.subr.mxu0 0.0
  %131 = vmatpush2.msra.mxu0 0.0
  %132 = vmatprep.subr.mxu0 0.0
  %133 = vmatpush2.msra.mxu0 0.0
  %134 = vmatprep.subr.mxu0 0.0
  %135 = vmatpush2.msra.mxu0 0.0
  %136 = vmatprep.subr.mxu0 0.0
  %137 = vmatpush2.msra.mxu0 0.0
  %138 = vmatprep.subr.mxu0 0.0
  %139 = vmatpush2.msra.mxu0 0.0
  %140 = vmatprep.subr.mxu0 0.0
  %141 = vmatpush2.msra.mxu0 0.0
  %142 = vmatprep.subr.mxu0 0.0
  %143 = vmatpush2.msra.mxu0 0.0
  %144 = vmatprep.subr.mxu0 0.0
  %145 = vmatpush2.msra.mxu0 0.0
  %146 = vmatprep.subr.mxu0 0.0
  %147 = vmatpush2.msra.mxu0 0.0
  %148 = vmatprep.subr.mxu0 0.0
  %149 = vmatpush2.msra.mxu0 0.0
  %150 = vmatprep.subr.mxu0 0.0
  %151 = vmatpush2.msra.mxu0 0.0
  %152 = vmatprep.mubr.f32.mxu0 0.0
  %153 = vmatmul.mubr.f32.gmra.mxu0 %v61
  %v154 = vpop.f32.mrf.mxu0
  %v155 = vadd.f32 %v58, %v154
  %v156 = vpop.f32.mrf.mxu0
  %157 = vmatprep.mubr.f32.mxu0 0.0
  %158 = vmatmul.mubr.f32.gmra.mxu0 %v64
  %v159 = vpop.f32.mrf.mxu0
  %v160 = vadd.f32 %v58, %v159
  %v161 = vpop.f32.mrf.mxu0
  %162 = vmatprep.mubr.f32.mxu0 0.0
  %163 = vmatmul.mubr.f32.gmra.mxu0 %v67
  %v164 = vpop.f32.mrf.mxu0
  %v165 = vadd.f32 %v58, %v164
  %v166 = vpop.f32.mrf.mxu0
  %167 = vmatprep.mubr.f32.mxu0 0.0
  %168 = vmatmul.mubr.f32.gmra.mxu0 %v70
  %v169 = vpop.f32.mrf.mxu0
  %v170 = vadd.f32 %v58, %v169
  %v171 = vpop.f32.mrf.mxu0
  %172 = vmatprep.mubr.f32.mxu0 0.0
  %173 = vmatmul.mubr.f32.gmra.mxu0 %v73
  %v174 = vpop.f32.mrf.mxu0
  %v175 = vadd.f32 %v58, %v174
  %v176 = vpop.f32.mrf.mxu0
  %177 = vmatprep.mubr.f32.mxu0 0.0
  %178 = vmatmul.mubr.f32.gmra.mxu0 %v76
  %v179 = vpop.f32.mrf.mxu0
  %v180 = vadd.f32 %v58, %v179
  %v181 = vpop.f32.mrf.mxu0
  %182 = vmatprep.mubr.f32.mxu0 0.0
  %183 = vmatmul.mubr.f32.gmra.mxu0 %v79
  %v184 = vpop.f32.mrf.mxu0
  %v185 = vadd.f32 %v58, %v184
  %v186 = vpop.f32.mrf.mxu0
  %187 = vmatprep.mubr.f32.mxu0 0.0
  %188 = vmatmul.mubr.f32.gmra.mxu0 %v82
  %v189 = vpop.f32.mrf.mxu0
  %v190 = vadd.f32 %v58, %v189
  %v191 = vpop.f32.mrf.mxu0
  %192 = vdwg.mxu0
  %v193 = vlaneseq
  %v194 = vshrl.u32 %v193, 7
  %v195 = vsub.s32 0, %v194
  %v196 = vrot.slane %v24, %v195
  %v198 = vsel %vm84, %v12, 0
  %200 = vmatprep.subr.mxu0 0.0
  %201 = vmatpush1.msra.mxu0 0.0
  %202 = vmatprep.subr.mxu0 0.0
  %203 = vmatpush1.msra.mxu0 0.0
  %204 = vmatprep.subr.mxu0 0.0
  %205 = vmatpush1.msra.mxu0 0.0
  %206 = vmatprep.subr.mxu0 0.0
  %207 = vmatpush1.msra.mxu0 0.0
  %208 = vmatprep.subr.mxu0 0.0
  %209 = vmatpush1.msra.mxu0 0.0
  %210 = vmatprep.subr.mxu0 0.0
  %211 = vmatpush1.msra.mxu0 0.0
  %212 = vmatprep.subr.mxu0 0.0
  %213 = vmatpush1.msra.mxu0 0.0
  %214 = vmatprep.subr.mxu0 0.0
  %215 = vmatpush1.msra.mxu0 0.0
  %216 = vmatprep.subr.mxu0 0.0
  %217 = vmatpush1.msra.mxu0 0.0
  %218 = vmatprep.subr.mxu0 0.0
  %219 = vmatpush1.msra.mxu0 0.0
  %220 = vmatprep.subr.mxu0 0.0
  %221 = vmatpush1.msra.mxu0 0.0
  %222 = vmatprep.subr.mxu0 0.0
  %223 = vmatpush1.msra.mxu0 0.0
  %224 = vmatprep.subr.mxu0 0.0
  %225 = vmatpush1.msra.mxu0 0.0
  %226 = vmatprep.subr.mxu0 0.0
  %227 = vmatpush1.msra.mxu0 0.0
  %228 = vmatprep.subr.mxu0 0.0
  %229 = vmatpush1.msra.mxu0 0.0
  %230 = vmatprep.subr.mxu0 0.0
  %231 = vmatpush1.msra.mxu0 %v198
  %232 = vmatprep.subr.mxu0 0.0
  %233 = vmatpush2.msra.mxu0 0.0
  %234 = vmatprep.subr.mxu0 0.0
  %235 = vmatpush2.msra.mxu0 0.0
  %236 = vmatprep.subr.mxu0 0.0
  %237 = vmatpush2.msra.mxu0 0.0
  %238 = vmatprep.subr.mxu0 0.0
  %239 = vmatpush2.msra.mxu0 0.0
  %240 = vmatprep.subr.mxu0 0.0
  %241 = vmatpush2.msra.mxu0 0.0
  %242 = vmatprep.subr.mxu0 0.0
  %243 = vmatpush2.msra.mxu0 0.0
  %244 = vmatprep.subr.mxu0 0.0
  %245 = vmatpush2.msra.mxu0 0.0
  %246 = vmatprep.subr.mxu0 0.0
  %247 = vmatpush2.msra.mxu0 0.0
  %248 = vmatprep.subr.mxu0 0.0
  %249 = vmatpush2.msra.mxu0 0.0
  %250 = vmatprep.subr.mxu0 0.0
  %251 = vmatpush2.msra.mxu0 0.0
  %252 = vmatprep.subr.mxu0 0.0
  %253 = vmatpush2.msra.mxu0 0.0
  %254 = vmatprep.subr.mxu0 0.0
  %255 = vmatpush2.msra.mxu0 0.0
  %256 = vmatprep.subr.mxu0 0.0
  %257 = vmatpush2.msra.mxu0 0.0
  %258 = vmatprep.subr.mxu0 0.0
  %259 = vmatpush2.msra.mxu0 0.0
  %260 = vmatprep.subr.mxu0 0.0
  %261 = vmatpush2.msra.mxu0 0.0
  %262 = vmatprep.subr.mxu0 0.0
  %263 = vmatpush2.msra.mxu0 0.0
  %264 = vmatprep.mubr.f32.mxu0 0.0
  %265 = vmatmul.mubr.f32.gmra.mxu0 %v61
  %v266 = vpop.f32.mrf.mxu0
  %v267 = vadd.f32 %v196, %v266
  %v268 = vpop.f32.mrf.mxu0
  %269 = vmatprep.mubr.f32.mxu0 0.0
  %270 = vmatmul.mubr.f32.gmra.mxu0 %v64
  %v271 = vpop.f32.mrf.mxu0
  %v272 = vadd.f32 %v196, %v271
  %v273 = vpop.f32.mrf.mxu0
  %274 = vmatprep.mubr.f32.mxu0 0.0
  %275 = vmatmul.mubr.f32.gmra.mxu0 %v67
  %v276 = vpop.f32.mrf.mxu0
  %v277 = vadd.f32 %v196, %v276
  %v278 = vpop.f32.mrf.mxu0
  %279 = vmatprep.mubr.f32.mxu0 0.0
  %280 = vmatmul.mubr.f32.gmra.mxu0 %v70
  %v281 = vpop.f32.mrf.mxu0
  %v282 = vadd.f32 %v196, %v281
  %v283 = vpop.f32.mrf.mxu0
  %284 = vmatprep.mubr.f32.mxu0 0.0
  %285 = vmatmul.mubr.f32.gmra.mxu0 %v73
  %v286 = vpop.f32.mrf.mxu0
  %v287 = vadd.f32 %v196, %v286
  %v288 = vpop.f32.mrf.mxu0
  %289 = vmatprep.mubr.f32.mxu0 0.0
  %290 = vmatmul.mubr.f32.gmra.mxu0 %v76
  %v291 = vpop.f32.mrf.mxu0
  %v292 = vadd.f32 %v196, %v291
  %v293 = vpop.f32.mrf.mxu0
  %294 = vmatprep.mubr.f32.mxu0 0.0
  %295 = vmatmul.mubr.f32.gmra.mxu0 %v79
  %v296 = vpop.f32.mrf.mxu0
  %v297 = vadd.f32 %v196, %v296
  %v298 = vpop.f32.mrf.mxu0
  %299 = vmatprep.mubr.f32.mxu0 0.0
  %300 = vmatmul.mubr.f32.gmra.mxu0 %v82
  %v301 = vpop.f32.mrf.mxu0
  %v302 = vadd.f32 %v196, %v301
  %v303 = vpop.f32.mrf.mxu0
  %304 = vdwg.mxu0
  %v305 = vlaneseq
  %v306 = vshrl.u32 %v305, 7
  %v307 = vsub.s32 0, %v306
  %v308 = vrot.slane %v25, %v307
  %v310 = vsel %vm84, %v13, 0
  %312 = vmatprep.subr.mxu0 0.0
  %313 = vmatpush1.msra.mxu0 0.0
  %314 = vmatprep.subr.mxu0 0.0
  %315 = vmatpush1.msra.mxu0 0.0
  %316 = vmatprep.subr.mxu0 0.0
  %317 = vmatpush1.msra.mxu0 0.0
  %318 = vmatprep.subr.mxu0 0.0
  %319 = vmatpush1.msra.mxu0 0.0
  %320 = vmatprep.subr.mxu0 0.0
  %321 = vmatpush1.msra.mxu0 0.0
  %322 = vmatprep.subr.mxu0 0.0
  %323 = vmatpush1.msra.mxu0 0.0
  %324 = vmatprep.subr.mxu0 0.0
  %325 = vmatpush1.msra.mxu0 0.0
  %326 = vmatprep.subr.mxu0 0.0
  %327 = vmatpush1.msra.mxu0 0.0
  %328 = vmatprep.subr.mxu0 0.0
  %329 = vmatpush1.msra.mxu0 0.0
  %330 = vmatprep.subr.mxu0 0.0
  %331 = vmatpush1.msra.mxu0 0.0
  %332 = vmatprep.subr.mxu0 0.0
  %333 = vmatpush1.msra.mxu0 0.0
  %334 = vmatprep.subr.mxu0 0.0
  %335 = vmatpush1.msra.mxu0 0.0
  %336 = vmatprep.subr.mxu0 0.0
  %337 = vmatpush1.msra.mxu0 0.0
  %338 = vmatprep.subr.mxu0 0.0
  %339 = vmatpush1.msra.mxu0 0.0
  %340 = vmatprep.subr.mxu0 0.0
  %341 = vmatpush1.msra.mxu0 0.0
  %342 = vmatprep.subr.mxu0 0.0
  %343 = vmatpush1.msra.mxu0 %v310
  %344 = vmatprep.subr.mxu0 0.0
  %345 = vmatpush2.msra.mxu0 0.0
  %346 = vmatprep.subr.mxu0 0.0
  %347 = vmatpush2.msra.mxu0 0.0
  %348 = vmatprep.subr.mxu0 0.0
  %349 = vmatpush2.msra.mxu0 0.0
  %350 = vmatprep.subr.mxu0 0.0
  %351 = vmatpush2.msra.mxu0 0.0
  %352 = vmatprep.subr.mxu0 0.0
  %353 = vmatpush2.msra.mxu0 0.0
  %354 = vmatprep.subr.mxu0 0.0
  %355 = vmatpush2.msra.mxu0 0.0
  %356 = vmatprep.subr.mxu0 0.0
  %357 = vmatpush2.msra.mxu0 0.0
  %358 = vmatprep.subr.mxu0 0.0
  %359 = vmatpush2.msra.mxu0 0.0
  %360 = vmatprep.subr.mxu0 0.0
  %361 = vmatpush2.msra.mxu0 0.0
  %362 = vmatprep.subr.mxu0 0.0
  %363 = vmatpush2.msra.mxu0 0.0
  %364 = vmatprep.subr.mxu0 0.0
  %365 = vmatpush2.msra.mxu0 0.0
  %366 = vmatprep.subr.mxu0 0.0
  %367 = vmatpush2.msra.mxu0 0.0
  %368 = vmatprep.subr.mxu0 0.0
  %369 = vmatpush2.msra.mxu0 0.0
  %370 = vmatprep.subr.mxu0 0.0
  %371 = vmatpush2.msra.mxu0 0.0
  %372 = vmatprep.subr.mxu0 0.0
  %373 = vmatpush2.msra.mxu0 0.0
  %374 = vmatprep.subr.mxu0 0.0
  %375 = vmatpush2.msra.mxu0 0.0
  %376 = vmatprep.mubr.f32.mxu0 0.0
  %377 = vmatmul.mubr.f32.gmra.mxu0 %v61
  %v378 = vpop.f32.mrf.mxu0
  %v379 = vadd.f32 %v308, %v378
  %v380 = vpop.f32.mrf.mxu0
  %381 = vmatprep.mubr.f32.mxu0 0.0
  %382 = vmatmul.mubr.f32.gmra.mxu0 %v64
  %v383 = vpop.f32.mrf.mxu0
  %v384 = vadd.f32 %v308, %v383
  %v385 = vpop.f32.mrf.mxu0
  %386 = vmatprep.mubr.f32.mxu0 0.0
  %387 = vmatmul.mubr.f32.gmra.mxu0 %v67
  %v388 = vpop.f32.mrf.mxu0
  %v389 = vadd.f32 %v308, %v388
  %v390 = vpop.f32.mrf.mxu0
  %391 = vmatprep.mubr.f32.mxu0 0.0
  %392 = vmatmul.mubr.f32.gmra.mxu0 %v70
  %v393 = vpop.f32.mrf.mxu0
  %v394 = vadd.f32 %v308, %v393
  %v395 = vpop.f32.mrf.mxu0
  %396 = vmatprep.mubr.f32.mxu0 0.0
  %397 = vmatmul.mubr.f32.gmra.mxu0 %v73
  %v398 = vpop.f32.mrf.mxu0
  %v399 = vadd.f32 %v308, %v398
  %v400 = vpop.f32.mrf.mxu0
  %401 = vmatprep.mubr.f32.mxu0 0.0
  %402 = vmatmul.mubr.f32.gmra.mxu0 %v76
  %v403 = vpop.f32.mrf.mxu0
  %v404 = vadd.f32 %v308, %v403
  %v405 = vpop.f32.mrf.mxu0
  %406 = vmatprep.mubr.f32.mxu0 0.0
  %407 = vmatmul.mubr.f32.gmra.mxu0 %v79
  %v408 = vpop.f32.mrf.mxu0
  %v409 = vadd.f32 %v308, %v408
  %v410 = vpop.f32.mrf.mxu0
  %411 = vmatprep.mubr.f32.mxu0 0.0
  %412 = vmatmul.mubr.f32.gmra.mxu0 %v82
  %v413 = vpop.f32.mrf.mxu0
  %v414 = vadd.f32 %v308, %v413
  %v415 = vpop.f32.mrf.mxu0
  %416 = vdwg.mxu0
  %v417 = vlaneseq
  %v418 = vshrl.u32 %v417, 7
  %v419 = vsub.s32 0, %v418
  %v420 = vrot.slane %v26, %v419
  %v422 = vsel %vm84, %v14, 0
  %424 = vmatprep.subr.mxu0 0.0
  %425 = vmatpush1.msra.mxu0 0.0
  %426 = vmatprep.subr.mxu0 0.0
  %427 = vmatpush1.msra.mxu0 0.0
  %428 = vmatprep.subr.mxu0 0.0
  %429 = vmatpush1.msra.mxu0 0.0
  %430 = vmatprep.subr.mxu0 0.0
  %431 = vmatpush1.msra.mxu0 0.0
  %432 = vmatprep.subr.mxu0 0.0
  %433 = vmatpush1.msra.mxu0 0.0
  %434 = vmatprep.subr.mxu0 0.0
  %435 = vmatpush1.msra.mxu0 0.0
  %436 = vmatprep.subr.mxu0 0.0
  %437 = vmatpush1.msra.mxu0 0.0
  %438 = vmatprep.subr.mxu0 0.0
  %439 = vmatpush1.msra.mxu0 0.0
  %440 = vmatprep.subr.mxu0 0.0
  %441 = vmatpush1.msra.mxu0 0.0
  %442 = vmatprep.subr.mxu0 0.0
  %443 = vmatpush1.msra.mxu0 0.0
  %444 = vmatprep.subr.mxu0 0.0
  %445 = vmatpush1.msra.mxu0 0.0
  %446 = vmatprep.subr.mxu0 0.0
  %447 = vmatpush1.msra.mxu0 0.0
  %448 = vmatprep.subr.mxu0 0.0
  %449 = vmatpush1.msra.mxu0 0.0
  %450 = vmatprep.subr.mxu0 0.0
  %451 = vmatpush1.msra.mxu0 0.0
  %452 = vmatprep.subr.mxu0 0.0
  %453 = vmatpush1.msra.mxu0 0.0
  %454 = vmatprep.subr.mxu0 0.0
  %455 = vmatpush1.msra.mxu0 %v422
  %456 = vmatprep.subr.mxu0 0.0
  %457 = vmatpush2.msra.mxu0 0.0
  %458 = vmatprep.subr.mxu0 0.0
  %459 = vmatpush2.msra.mxu0 0.0
  %460 = vmatprep.subr.mxu0 0.0
  %461 = vmatpush2.msra.mxu0 0.0
  %462 = vmatprep.subr.mxu0 0.0
  %463 = vmatpush2.msra.mxu0 0.0
  %464 = vmatprep.subr.mxu0 0.0
  %465 = vmatpush2.msra.mxu0 0.0
  %466 = vmatprep.subr.mxu0 0.0
  %467 = vmatpush2.msra.mxu0 0.0
  %468 = vmatprep.subr.mxu0 0.0
  %469 = vmatpush2.msra.mxu0 0.0
  %470 = vmatprep.subr.mxu0 0.0
  %471 = vmatpush2.msra.mxu0 0.0
  %472 = vmatprep.subr.mxu0 0.0
  %473 = vmatpush2.msra.mxu0 0.0
  %474 = vmatprep.subr.mxu0 0.0
  %475 = vmatpush2.msra.mxu0 0.0
  %476 = vmatprep.subr.mxu0 0.0
  %477 = vmatpush2.msra.mxu0 0.0
  %478 = vmatprep.subr.mxu0 0.0
  %479 = vmatpush2.msra.mxu0 0.0
  %480 = vmatprep.subr.mxu0 0.0
  %481 = vmatpush2.msra.mxu0 0.0
  %482 = vmatprep.subr.mxu0 0.0
  %483 = vmatpush2.msra.mxu0 0.0
  %484 = vmatprep.subr.mxu0 0.0
  %485 = vmatpush2.msra.mxu0 0.0
  %486 = vmatprep.subr.mxu0 0.0
  %487 = vmatpush2.msra.mxu0 0.0
  %488 = vmatprep.mubr.f32.mxu0 0.0
  %489 = vmatmul.mubr.f32.gmra.mxu0 %v61
  %v490 = vpop.f32.mrf.mxu0
  %v491 = vadd.f32 %v420, %v490
  %v492 = vpop.f32.mrf.mxu0
  %493 = vmatprep.mubr.f32.mxu0 0.0
  %494 = vmatmul.mubr.f32.gmra.mxu0 %v64
  %v495 = vpop.f32.mrf.mxu0
  %v496 = vadd.f32 %v420, %v495
  %v497 = vpop.f32.mrf.mxu0
  %498 = vmatprep.mubr.f32.mxu0 0.0
  %499 = vmatmul.mubr.f32.gmra.mxu0 %v67
  %v500 = vpop.f32.mrf.mxu0
  %v501 = vadd.f32 %v420, %v500
  %v502 = vpop.f32.mrf.mxu0
  %503 = vmatprep.mubr.f32.mxu0 0.0
  %504 = vmatmul.mubr.f32.gmra.mxu0 %v70
  %v505 = vpop.f32.mrf.mxu0
  %v506 = vadd.f32 %v420, %v505
  %v507 = vpop.f32.mrf.mxu0
  %508 = vmatprep.mubr.f32.mxu0 0.0
  %509 = vmatmul.mubr.f32.gmra.mxu0 %v73
  %v510 = vpop.f32.mrf.mxu0
  %v511 = vadd.f32 %v420, %v510
  %v512 = vpop.f32.mrf.mxu0
  %513 = vmatprep.mubr.f32.mxu0 0.0
  %514 = vmatmul.mubr.f32.gmra.mxu0 %v76
  %v515 = vpop.f32.mrf.mxu0
  %v516 = vadd.f32 %v420, %v515
  %v517 = vpop.f32.mrf.mxu0
  %518 = vmatprep.mubr.f32.mxu0 0.0
  %519 = vmatmul.mubr.f32.gmra.mxu0 %v79
  %v520 = vpop.f32.mrf.mxu0
  %v521 = vadd.f32 %v420, %v520
  %v522 = vpop.f32.mrf.mxu0
  %523 = vmatprep.mubr.f32.mxu0 0.0
  %524 = vmatmul.mubr.f32.gmra.mxu0 %v82
  %v525 = vpop.f32.mrf.mxu0
  %v526 = vadd.f32 %v420, %v525
  %v527 = vpop.f32.mrf.mxu0
  %528 = vdwg.mxu0
  %v529 = vlaneseq
  %v530 = vshrl.u32 %v529, 7
  %v531 = vsub.s32 0, %v530
  %v532 = vrot.slane %v43, %v531
  %v533 = vlaneseq
  %v534 = vshrl.u32 %v533, 7
  %v535 = vsub.s32 0, %v534
  %v536 = vrot.slane %v44, %v535
  %v537 = vlaneseq
  %v538 = vshrl.u32 %v537, 7
  %v539 = vsub.s32 0, %v538
  %v540 = vrot.slane %v45, %v539
  %v541 = vlaneseq
  %v542 = vshrl.u32 %v541, 7
  %v543 = vsub.s32 0, %v542
  %v544 = vrot.slane %v46, %v543
  %v545 = vlaneseq
  %v546 = vshrl.u32 %v545, 7
  %vm547 = vcmask 130048
  %v549 = vsel %vm547, 0.0, 0
  %551 = vmatprep.subr.mxu0 0.0
  %552 = vmatpush1.msra.mxu0 0.0
  %553 = vmatprep.subr.mxu0 0.0
  %554 = vmatpush1.msra.mxu0 0.0
  %555 = vmatprep.subr.mxu0 0.0
  %556 = vmatpush1.msra.mxu0 0.0
  %557 = vmatprep.subr.mxu0 0.0
  %558 = vmatpush1.msra.mxu0 0.0
  %559 = vmatprep.subr.mxu0 0.0
  %560 = vmatpush1.msra.mxu0 0.0
  %561 = vmatprep.subr.mxu0 0.0
  %562 = vmatpush1.msra.mxu0 0.0
  %563 = vmatprep.subr.mxu0 0.0
  %564 = vmatpush1.msra.mxu0 0.0
  %565 = vmatprep.subr.mxu0 0.0
  %566 = vmatpush1.msra.mxu0 0.0
  %567 = vmatprep.subr.mxu0 0.0
  %568 = vmatpush1.msra.mxu0 0.0
  %569 = vmatprep.subr.mxu0 0.0
  %570 = vmatpush1.msra.mxu0 0.0
  %571 = vmatprep.subr.mxu0 0.0
  %572 = vmatpush1.msra.mxu0 0.0
  %573 = vmatprep.subr.mxu0 0.0
  %574 = vmatpush1.msra.mxu0 0.0
  %575 = vmatprep.subr.mxu0 0.0
  %576 = vmatpush1.msra.mxu0 0.0
  %577 = vmatprep.subr.mxu0 0.0
  %578 = vmatpush1.msra.mxu0 0.0
  %579 = vmatprep.subr.mxu0 0.0
  %580 = vmatpush1.msra.mxu0 %v16
  %581 = vmatprep.subr.mxu0 0.0
  %582 = vmatpush1.msra.mxu0 %v15
  %583 = vmatprep.subr.mxu0 0.0
  %584 = vmatpush2.msra.mxu0 0.0
  %585 = vmatprep.subr.mxu0 0.0
  %586 = vmatpush2.msra.mxu0 0.0
  %587 = vmatprep.subr.mxu0 0.0
  %588 = vmatpush2.msra.mxu0 0.0
  %589 = vmatprep.subr.mxu0 0.0
  %590 = vmatpush2.msra.mxu0 0.0
  %591 = vmatprep.subr.mxu0 0.0
  %592 = vmatpush2.msra.mxu0 0.0
  %593 = vmatprep.subr.mxu0 0.0
  %594 = vmatpush2.msra.mxu0 0.0
  %595 = vmatprep.subr.mxu0 0.0
  %596 = vmatpush2.msra.mxu0 0.0
  %597 = vmatprep.subr.mxu0 0.0
  %598 = vmatpush2.msra.mxu0 0.0
  %599 = vmatprep.subr.mxu0 0.0
  %600 = vmatpush2.msra.mxu0 0.0
  %601 = vmatprep.subr.mxu0 0.0
  %602 = vmatpush2.msra.mxu0 0.0
  %603 = vmatprep.subr.mxu0 0.0
  %604 = vmatpush2.msra.mxu0 0.0
  %605 = vmatprep.subr.mxu0 0.0
  %606 = vmatpush2.msra.mxu0 0.0
  %607 = vmatprep.subr.mxu0 0.0
  %608 = vmatpush2.msra.mxu0 0.0
  %609 = vmatprep.subr.mxu0 0.0
  %610 = vmatpush2.msra.mxu0 0.0
  %611 = vmatprep.subr.mxu0 0.0
  %612 = vmatpush2.msra.mxu0 0.0
  %613 = vmatprep.subr.mxu0 0.0
  %614 = vmatpush2.msra.mxu0 0.0
  %615 = vmatprep.mubr.f32.mxu0 0.0
  %616 = vmatmul.mubr.f32.gmra.mxu0 %v549
  %v617 = vpop.f32.mrf.mxu0
  %v618 = vadd.f32 0.0, %v617
  %v619 = vpop.f32.mrf.mxu0
  %620 = vdwg.mxu0
  %v621 = vadd.f32 %v155, %v618
  %622 = vmatprep.subr.mxu0 0.0
  %623 = vmatpush1.msra.mxu0 0.0
  %624 = vmatprep.subr.mxu0 0.0
  %625 = vmatpush1.msra.mxu0 0.0
  %626 = vmatprep.subr.mxu0 0.0
  %627 = vmatpush1.msra.mxu0 0.0
  %628 = vmatprep.subr.mxu0 0.0
  %629 = vmatpush1.msra.mxu0 0.0
  %630 = vmatprep.subr.mxu0 0.0
  %631 = vmatpush1.msra.mxu0 0.0
  %632 = vmatprep.subr.mxu0 0.0
  %633 = vmatpush1.msra.mxu0 0.0
  %634 = vmatprep.subr.mxu0 0.0
  %635 = vmatpush1.msra.mxu0 0.0
  %636 = vmatprep.subr.mxu0 0.0
  %637 = vmatpush1.msra.mxu0 0.0
  %638 = vmatprep.subr.mxu0 0.0
  %639 = vmatpush1.msra.mxu0 0.0
  %640 = vmatprep.subr.mxu0 0.0
  %641 = vmatpush1.msra.mxu0 0.0
  %642 = vmatprep.subr.mxu0 0.0
  %643 = vmatpush1.msra.mxu0 0.0
  %644 = vmatprep.subr.mxu0 0.0
  %645 = vmatpush1.msra.mxu0 0.0
  %646 = vmatprep.subr.mxu0 0.0
  %647 = vmatpush1.msra.mxu0 0.0
  %648 = vmatprep.subr.mxu0 0.0
  %649 = vmatpush1.msra.mxu0 0.0
  %650 = vmatprep.subr.mxu0 0.0
  %651 = vmatpush1.msra.mxu0 %v18
  %652 = vmatprep.subr.mxu0 0.0
  %653 = vmatpush1.msra.mxu0 %v17
  %654 = vmatprep.subr.mxu0 0.0
  %655 = vmatpush2.msra.mxu0 0.0
  %656 = vmatprep.subr.mxu0 0.0
  %657 = vmatpush2.msra.mxu0 0.0
  %658 = vmatprep.subr.mxu0 0.0
  %659 = vmatpush2.msra.mxu0 0.0
  %660 = vmatprep.subr.mxu0 0.0
  %661 = vmatpush2.msra.mxu0 0.0
  %662 = vmatprep.subr.mxu0 0.0
  %663 = vmatpush2.msra.mxu0 0.0
  %664 = vmatprep.subr.mxu0 0.0
  %665 = vmatpush2.msra.mxu0 0.0
  %666 = vmatprep.subr.mxu0 0.0
  %667 = vmatpush2.msra.mxu0 0.0
  %668 = vmatprep.subr.mxu0 0.0
  %669 = vmatpush2.msra.mxu0 0.0
  %670 = vmatprep.subr.mxu0 0.0
  %671 = vmatpush2.msra.mxu0 0.0
  %672 = vmatprep.subr.mxu0 0.0
  %673 = vmatpush2.msra.mxu0 0.0
  %674 = vmatprep.subr.mxu0 0.0
  %675 = vmatpush2.msra.mxu0 0.0
  %676 = vmatprep.subr.mxu0 0.0
  %677 = vmatpush2.msra.mxu0 0.0
  %678 = vmatprep.subr.mxu0 0.0
  %679 = vmatpush2.msra.mxu0 0.0
  %680 = vmatprep.subr.mxu0 0.0
  %681 = vmatpush2.msra.mxu0 0.0
  %682 = vmatprep.subr.mxu0 0.0
  %683 = vmatpush2.msra.mxu0 0.0
  %684 = vmatprep.subr.mxu0 0.0
  %685 = vmatpush2.msra.mxu0 0.0
  %686 = vmatprep.mubr.f32.mxu0 0.0
  %687 = vmatmul.mubr.f32.gmra.mxu0 %v549
  %v688 = vpop.f32.mrf.mxu0
  %v689 = vadd.f32 0.0, %v688
  %v690 = vpop.f32.mrf.mxu0
  %691 = vdwg.mxu0
  %v692 = vadd.f32 %v267, %v689
  %693 = vmatprep.subr.mxu0 0.0
  %694 = vmatpush1.msra.mxu0 0.0
  %695 = vmatprep.subr.mxu0 0.0
  %696 = vmatpush1.msra.mxu0 0.0
  %697 = vmatprep.subr.mxu0 0.0
  %698 = vmatpush1.msra.mxu0 0.0
  %699 = vmatprep.subr.mxu0 0.0
  %700 = vmatpush1.msra.mxu0 0.0
  %701 = vmatprep.subr.mxu0 0.0
  %702 = vmatpush1.msra.mxu0 0.0
  %703 = vmatprep.subr.mxu0 0.0
  %704 = vmatpush1.msra.mxu0 0.0
  %705 = vmatprep.subr.mxu0 0.0
  %706 = vmatpush1.msra.mxu0 0.0
  %707 = vmatprep.subr.mxu0 0.0
  %708 = vmatpush1.msra.mxu0 0.0
  %709 = vmatprep.subr.mxu0 0.0
  %710 = vmatpush1.msra.mxu0 0.0
  %711 = vmatprep.subr.mxu0 0.0
  %712 = vmatpush1.msra.mxu0 0.0
  %713 = vmatprep.subr.mxu0 0.0
  %714 = vmatpush1.msra.mxu0 0.0
  %715 = vmatprep.subr.mxu0 0.0
  %716 = vmatpush1.msra.mxu0 0.0
  %717 = vmatprep.subr.mxu0 0.0
  %718 = vmatpush1.msra.mxu0 0.0
  %719 = vmatprep.subr.mxu0 0.0
  %720 = vmatpush1.msra.mxu0 0.0
  %721 = vmatprep.subr.mxu0 0.0
  %722 = vmatpush1.msra.mxu0 %v20
  %723 = vmatprep.subr.mxu0 0.0
  %724 = vmatpush1.msra.mxu0 %v19
  %725 = vmatprep.subr.mxu0 0.0
  %726 = vmatpush2.msra.mxu0 0.0
  %727 = vmatprep.subr.mxu0 0.0
  %728 = vmatpush2.msra.mxu0 0.0
  %729 = vmatprep.subr.mxu0 0.0
  %730 = vmatpush2.msra.mxu0 0.0
  %731 = vmatprep.subr.mxu0 0.0
  %732 = vmatpush2.msra.mxu0 0.0
  %733 = vmatprep.subr.mxu0 0.0
  %734 = vmatpush2.msra.mxu0 0.0
  %735 = vmatprep.subr.mxu0 0.0
  %736 = vmatpush2.msra.mxu0 0.0
  %737 = vmatprep.subr.mxu0 0.0
  %738 = vmatpush2.msra.mxu0 0.0
  %739 = vmatprep.subr.mxu0 0.0
  %740 = vmatpush2.msra.mxu0 0.0
  %741 = vmatprep.subr.mxu0 0.0
  %742 = vmatpush2.msra.mxu0 0.0
  %743 = vmatprep.subr.mxu0 0.0
  %744 = vmatpush2.msra.mxu0 0.0
  %745 = vmatprep.subr.mxu0 0.0
  %746 = vmatpush2.msra.mxu0 0.0
  %747 = vmatprep.subr.mxu0 0.0
  %748 = vmatpush2.msra.mxu0 0.0
  %749 = vmatprep.subr.mxu0 0.0
  %750 = vmatpush2.msra.mxu0 0.0
  %751 = vmatprep.subr.mxu0 0.0
  %752 = vmatpush2.msra.mxu0 0.0
  %753 = vmatprep.subr.mxu0 0.0
  %754 = vmatpush2.msra.mxu0 0.0
  %755 = vmatprep.subr.mxu0 0.0
  %756 = vmatpush2.msra.mxu0 0.0
  %757 = vmatprep.mubr.f32.mxu0 0.0
  %758 = vmatmul.mubr.f32.gmra.mxu0 %v549
  %v759 = vpop.f32.mrf.mxu0
  %v760 = vadd.f32 0.0, %v759
  %v761 = vpop.f32.mrf.mxu0
  %762 = vdwg.mxu0
  %v763 = vadd.f32 %v379, %v760
  %764 = vmatprep.subr.mxu0 0.0
  %765 = vmatpush1.msra.mxu0 0.0
  %766 = vmatprep.subr.mxu0 0.0
  %767 = vmatpush1.msra.mxu0 0.0
  %768 = vmatprep.subr.mxu0 0.0
  %769 = vmatpush1.msra.mxu0 0.0
  %770 = vmatprep.subr.mxu0 0.0
  %771 = vmatpush1.msra.mxu0 0.0
  %772 = vmatprep.subr.mxu0 0.0
  %773 = vmatpush1.msra.mxu0 0.0
  %774 = vmatprep.subr.mxu0 0.0
  %775 = vmatpush1.msra.mxu0 0.0
  %776 = vmatprep.subr.mxu0 0.0
  %777 = vmatpush1.msra.mxu0 0.0
  %778 = vmatprep.subr.mxu0 0.0
  %779 = vmatpush1.msra.mxu0 0.0
  %780 = vmatprep.subr.mxu0 0.0
  %781 = vmatpush1.msra.mxu0 0.0
  %782 = vmatprep.subr.mxu0 0.0
  %783 = vmatpush1.msra.mxu0 0.0
  %784 = vmatprep.subr.mxu0 0.0
  %785 = vmatpush1.msra.mxu0 0.0
  %786 = vmatprep.subr.mxu0 0.0
  %787 = vmatpush1.msra.mxu0 0.0
  %788 = vmatprep.subr.mxu0 0.0
  %789 = vmatpush1.msra.mxu0 0.0
  %790 = vmatprep.subr.mxu0 0.0
  %791 = vmatpush1.msra.mxu0 0.0
  %792 = vmatprep.subr.mxu0 0.0
  %793 = vmatpush1.msra.mxu0 %v22
  %794 = vmatprep.subr.mxu0 0.0
  %795 = vmatpush1.msra.mxu0 %v21
  %796 = vmatprep.subr.mxu0 0.0
  %797 = vmatpush2.msra.mxu0 0.0
  %798 = vmatprep.subr.mxu0 0.0
  %799 = vmatpush2.msra.mxu0 0.0
  %800 = vmatprep.subr.mxu0 0.0
  %801 = vmatpush2.msra.mxu0 0.0
  %802 = vmatprep.subr.mxu0 0.0
  %803 = vmatpush2.msra.mxu0 0.0
  %804 = vmatprep.subr.mxu0 0.0
  %805 = vmatpush2.msra.mxu0 0.0
  %806 = vmatprep.subr.mxu0 0.0
  %807 = vmatpush2.msra.mxu0 0.0
  %808 = vmatprep.subr.mxu0 0.0
  %809 = vmatpush2.msra.mxu0 0.0
  %810 = vmatprep.subr.mxu0 0.0
  %811 = vmatpush2.msra.mxu0 0.0
  %812 = vmatprep.subr.mxu0 0.0
  %813 = vmatpush2.msra.mxu0 0.0
  %814 = vmatprep.subr.mxu0 0.0
  %815 = vmatpush2.msra.mxu0 0.0
  %816 = vmatprep.subr.mxu0 0.0
  %817 = vmatpush2.msra.mxu0 0.0
  %818 = vmatprep.subr.mxu0 0.0
  %819 = vmatpush2.msra.mxu0 0.0
  %820 = vmatprep.subr.mxu0 0.0
  %821 = vmatpush2.msra.mxu0 0.0
  %822 = vmatprep.subr.mxu0 0.0
  %823 = vmatpush2.msra.mxu0 0.0
  %824 = vmatprep.subr.mxu0 0.0
  %825 = vmatpush2.msra.mxu0 0.0
  %826 = vmatprep.subr.mxu0 0.0
  %827 = vmatpush2.msra.mxu0 0.0
  %828 = vmatprep.mubr.f32.mxu0 0.0
  %829 = vmatmul.mubr.f32.gmra.mxu0 %v549
  %v830 = vpop.f32.mrf.mxu0
  %v831 = vadd.f32 0.0, %v830
  %v832 = vpop.f32.mrf.mxu0
  %833 = vdwg.mxu0
  %v834 = vadd.f32 %v491, %v831
  %v835 = vxor.u32 %v621, 2147483648
  %v836 = vmul.f32 %v835, 1.442695
  %v837 = vpow.pop %v836
  %v838 = vadd.f32 %v837, 1.0
  %v839 = vrcp.pop %v838
  %v840 = vmul.f32 1.0, %v839
  %v841 = vxor.u32 %v692, 2147483648
  %v842 = vmul.f32 %v841, 1.442695
  %v843 = vpow.pop %v842
  %v844 = vadd.f32 %v843, 1.0
  %v845 = vrcp.pop %v844
  %v846 = vmul.f32 1.0, %v845
  %v847 = vtanh.pop %v763
  %v848 = vxor.u32 %v834, 2147483648
  %v849 = vmul.f32 %v848, 1.442695
  %v850 = vpow.pop %v849
  %v851 = vadd.f32 %v850, 1.0
  %v852 = vrcp.pop %v851
  %v853 = vmul.f32 1.0, %v852
  %v854 = vmul.f32 %v846, 0.0
  %v855 = vmul.f32 %v840, %v847
  %v856 = vadd.f32 %v854, %v855
  %v857 = vtanh.pop %v856
  %v858 = vmul.f32 %v853, %v857
  %v860 = vsel %vm547, %v858, 0
  %862 = vmatprep.subr.mxu0 0.0
  %863 = vmatpush1.msra.mxu0 0.0
  %864 = vmatprep.subr.mxu0 0.0
  %865 = vmatpush1.msra.mxu0 0.0
  %866 = vmatprep.subr.mxu0 0.0
  %867 = vmatpush1.msra.mxu0 0.0
  %868 = vmatprep.subr.mxu0 0.0
  %869 = vmatpush1.msra.mxu0 0.0
  %870 = vmatprep.subr.mxu0 0.0
  %871 = vmatpush1.msra.mxu0 0.0
  %872 = vmatprep.subr.mxu0 0.0
  %873 = vmatpush1.msra.mxu0 0.0
  %874 = vmatprep.subr.mxu0 0.0
  %875 = vmatpush1.msra.mxu0 0.0
  %876 = vmatprep.subr.mxu0 0.0
  %877 = vmatpush1.msra.mxu0 0.0
  %878 = vmatprep.subr.mxu0 0.0
  %879 = vmatpush1.msra.mxu0 0.0
  %880 = vmatprep.subr.mxu0 0.0
  %881 = vmatpush1.msra.mxu0 0.0
  %882 = vmatprep.subr.mxu0 0.0
  %883 = vmatpush1.msra.mxu0 0.0
  %884 = vmatprep.subr.mxu0 0.0
  %885 = vmatpush1.msra.mxu0 0.0
  %886 = vmatprep.subr.mxu0 0.0
  %887 = vmatpush1.msra.mxu0 0.0
  %888 = vmatprep.subr.mxu0 0.0
  %889 = vmatpush1.msra.mxu0 0.0
  %890 = vmatprep.subr.mxu0 0.0
  %891 = vmatpush1.msra.mxu0 %v28
  %892 = vmatprep.subr.mxu0 0.0
  %893 = vmatpush1.msra.mxu0 %v27
  %894 = vmatprep.subr.mxu0 0.0
  %895 = vmatpush2.msra.mxu0 0.0
  %896 = vmatprep.subr.mxu0 0.0
  %897 = vmatpush2.msra.mxu0 0.0
  %898 = vmatprep.subr.mxu0 0.0
  %899 = vmatpush2.msra.mxu0 0.0
  %900 = vmatprep.subr.mxu0 0.0
  %901 = vmatpush2.msra.mxu0 0.0
  %902 = vmatprep.subr.mxu0 0.0
  %903 = vmatpush2.msra.mxu0 0.0
  %904 = vmatprep.subr.mxu0 0.0
  %905 = vmatpush2.msra.mxu0 0.0
  %906 = vmatprep.subr.mxu0 0.0
  %907 = vmatpush2.msra.mxu0 0.0
  %908 = vmatprep.subr.mxu0 0.0
  %909 = vmatpush2.msra.mxu0 0.0
  %910 = vmatprep.subr.mxu0 0.0
  %911 = vmatpush2.msra.mxu0 0.0
  %912 = vmatprep.subr.mxu0 0.0
  %913 = vmatpush2.msra.mxu0 0.0
  %914 = vmatprep.subr.mxu0 0.0
  %915 = vmatpush2.msra.mxu0 0.0
  %916 = vmatprep.subr.mxu0 0.0
  %917 = vmatpush2.msra.mxu0 0.0
  %918 = vmatprep.subr.mxu0 0.0
  %919 = vmatpush2.msra.mxu0 0.0
  %920 = vmatprep.subr.mxu0 0.0
  %921 = vmatpush2.msra.mxu0 0.0
  %922 = vmatprep.subr.mxu0 0.0
  %923 = vmatpush2.msra.mxu0 0.0
  %924 = vmatprep.subr.mxu0 0.0
  %925 = vmatpush2.msra.mxu0 0.0
  %926 = vmatprep.mubr.f32.mxu0 0.0
  %927 = vmatmul.mubr.f32.gmra.mxu0 %v860
  %v928 = vpop.f32.mrf.mxu0
  %v929 = vadd.f32 %v532, %v928
  %v930 = vpop.f32.mrf.mxu0
  %931 = vdwg.mxu0
  %932 = vmatprep.subr.mxu0 0.0
  %933 = vmatpush1.msra.mxu0 0.0
  %934 = vmatprep.subr.mxu0 0.0
  %935 = vmatpush1.msra.mxu0 0.0
  %936 = vmatprep.subr.mxu0 0.0
  %937 = vmatpush1.msra.mxu0 0.0
  %938 = vmatprep.subr.mxu0 0.0
  %939 = vmatpush1.msra.mxu0 0.0
  %940 = vmatprep.subr.mxu0 0.0
  %941 = vmatpush1.msra.mxu0 0.0
  %942 = vmatprep.subr.mxu0 0.0
  %943 = vmatpush1.msra.mxu0 0.0
  %944 = vmatprep.subr.mxu0 0.0
  %945 = vmatpush1.msra.mxu0 0.0
  %946 = vmatprep.subr.mxu0 0.0
  %947 = vmatpush1.msra.mxu0 0.0
  %948 = vmatprep.subr.mxu0 0.0
  %949 = vmatpush1.msra.mxu0 0.0
  %950 = vmatprep.subr.mxu0 0.0
  %951 = vmatpush1.msra.mxu0 0.0
  %952 = vmatprep.subr.mxu0 0.0
  %953 = vmatpush1.msra.mxu0 0.0
  %954 = vmatprep.subr.mxu0 0.0
  %955 = vmatpush1.msra.mxu0 0.0
  %956 = vmatprep.subr.mxu0 0.0
  %957 = vmatpush1.msra.mxu0 0.0
  %958 = vmatprep.subr.mxu0 0.0
  %959 = vmatpush1.msra.mxu0 0.0
  %960 = vmatprep.subr.mxu0 0.0
  %961 = vmatpush1.msra.mxu0 %v30
  %962 = vmatprep.subr.mxu0 0.0
  %963 = vmatpush1.msra.mxu0 %v29
  %964 = vmatprep.subr.mxu0 0.0
  %965 = vmatpush2.msra.mxu0 0.0
  %966 = vmatprep.subr.mxu0 0.0
  %967 = vmatpush2.msra.mxu0 0.0
  %968 = vmatprep.subr.mxu0 0.0
  %969 = vmatpush2.msra.mxu0 0.0
  %970 = vmatprep.subr.mxu0 0.0
  %971 = vmatpush2.msra.mxu0 0.0
  %972 = vmatprep.subr.mxu0 0.0
  %973 = vmatpush2.msra.mxu0 0.0
  %974 = vmatprep.subr.mxu0 0.0
  %975 = vmatpush2.msra.mxu0 0.0
  %976 = vmatprep.subr.mxu0 0.0
  %977 = vmatpush2.msra.mxu0 0.0
  %978 = vmatprep.subr.mxu0 0.0
  %979 = vmatpush2.msra.mxu0 0.0
  %980 = vmatprep.subr.mxu0 0.0
  %981 = vmatpush2.msra.mxu0 0.0
  %982 = vmatprep.subr.mxu0 0.0
  %983 = vmatpush2.msra.mxu0 0.0
  %984 = vmatprep.subr.mxu0 0.0
  %985 = vmatpush2.msra.mxu0 0.0
  %986 = vmatprep.subr.mxu0 0.0
  %987 = vmatpush2.msra.mxu0 0.0
  %988 = vmatprep.subr.mxu0 0.0
  %989 = vmatpush2.msra.mxu0 0.0
  %990 = vmatprep.subr.mxu0 0.0
  %991 = vmatpush2.msra.mxu0 0.0
  %992 = vmatprep.subr.mxu0 0.0
  %993 = vmatpush2.msra.mxu0 0.0
  %994 = vmatprep.subr.mxu0 0.0
  %995 = vmatpush2.msra.mxu0 0.0
  %996 = vmatprep.mubr.f32.mxu0 0.0
  %997 = vmatmul.mubr.f32.gmra.mxu0 %v860
  %v998 = vpop.f32.mrf.mxu0
  %v999 = vadd.f32 %v536, %v998
  %v1000 = vpop.f32.mrf.mxu0
  %1001 = vdwg.mxu0
  %1002 = vmatprep.subr.mxu0 0.0
  %1003 = vmatpush1.msra.mxu0 0.0
  %1004 = vmatprep.subr.mxu0 0.0
  %1005 = vmatpush1.msra.mxu0 0.0
  %1006 = vmatprep.subr.mxu0 0.0
  %1007 = vmatpush1.msra.mxu0 0.0
  %1008 = vmatprep.subr.mxu0 0.0
  %1009 = vmatpush1.msra.mxu0 0.0
  %1010 = vmatprep.subr.mxu0 0.0
  %1011 = vmatpush1.msra.mxu0 0.0
  %1012 = vmatprep.subr.mxu0 0.0
  %1013 = vmatpush1.msra.mxu0 0.0
  %1014 = vmatprep.subr.mxu0 0.0
  %1015 = vmatpush1.msra.mxu0 0.0
  %1016 = vmatprep.subr.mxu0 0.0
  %1017 = vmatpush1.msra.mxu0 0.0
  %1018 = vmatprep.subr.mxu0 0.0
  %1019 = vmatpush1.msra.mxu0 0.0
  %1020 = vmatprep.subr.mxu0 0.0
  %1021 = vmatpush1.msra.mxu0 0.0
  %1022 = vmatprep.subr.mxu0 0.0
  %1023 = vmatpush1.msra.mxu0 0.0
  %1024 = vmatprep.subr.mxu0 0.0
  %1025 = vmatpush1.msra.mxu0 0.0
  %1026 = vmatprep.subr.mxu0 0.0
  %1027 = vmatpush1.msra.mxu0 0.0
  %1028 = vmatprep.subr.mxu0 0.0
  %1029 = vmatpush1.msra.mxu0 0.0
  %1030 = vmatprep.subr.mxu0 0.0
  %1031 = vmatpush1.msra.mxu0 %v32
  %1032 = vmatprep.subr.mxu0 0.0
  %1033 = vmatpush1.msra.mxu0 %v31
  %1034 = vmatprep.subr.mxu0 0.0
  %1035 = vmatpush2.msra.mxu0 0.0
  %1036 = vmatprep.subr.mxu0 0.0
  %1037 = vmatpush2.msra.mxu0 0.0
  %1038 = vmatprep.subr.mxu0 0.0
  %1039 = vmatpush2.msra.mxu0 0.0
  %1040 = vmatprep.subr.mxu0 0.0
  %1041 = vmatpush2.msra.mxu0 0.0
  %1042 = vmatprep.subr.mxu0 0.0
  %1043 = vmatpush2.msra.mxu0 0.0
  %1044 = vmatprep.subr.mxu0 0.0
  %1045 = vmatpush2.msra.mxu0 0.0
  %1046 = vmatprep.subr.mxu0 0.0
  %1047 = vmatpush2.msra.mxu0 0.0
  %1048 = vmatprep.subr.mxu0 0.0
  %1049 = vmatpush2.msra.mxu0 0.0
  %1050 = vmatprep.subr.mxu0 0.0
  %1051 = vmatpush2.msra.mxu0 0.0
  %1052 = vmatprep.subr.mxu0 0.0
  %1053 = vmatpush2.msra.mxu0 0.0
  %1054 = vmatprep.subr.mxu0 0.0
  %1055 = vmatpush2.msra.mxu0 0.0
  %1056 = vmatprep.subr.mxu0 0.0
  %1057 = vmatpush2.msra.mxu0 0.0
  %1058 = vmatprep.subr.mxu0 0.0
  %1059 = vmatpush2.msra.mxu0 0.0
  %1060 = vmatprep.subr.mxu0 0.0
  %1061 = vmatpush2.msra.mxu0 0.0
  %1062 = vmatprep.subr.mxu0 0.0
  %1063 = vmatpush2.msra.mxu0 0.0
  %1064 = vmatprep.subr.mxu0 0.0
  %1065 = vmatpush2.msra.mxu0 0.0
  %1066 = vmatprep.mubr.f32.mxu0 0.0
  %1067 = vmatmul.mubr.f32.gmra.mxu0 %v860
  %v1068 = vpop.f32.mrf.mxu0
  %v1069 = vadd.f32 %v540, %v1068
  %v1070 = vpop.f32.mrf.mxu0
  %1071 = vdwg.mxu0
  %1072 = vmatprep.subr.mxu0 0.0
  %1073 = vmatpush1.msra.mxu0 0.0
  %1074 = vmatprep.subr.mxu0 0.0
  %1075 = vmatpush1.msra.mxu0 0.0
  %1076 = vmatprep.subr.mxu0 0.0
  %1077 = vmatpush1.msra.mxu0 0.0
  %1078 = vmatprep.subr.mxu0 0.0
  %1079 = vmatpush1.msra.mxu0 0.0
  %1080 = vmatprep.subr.mxu0 0.0
  %1081 = vmatpush1.msra.mxu0 0.0
  %1082 = vmatprep.subr.mxu0 0.0
  %1083 = vmatpush1.msra.mxu0 0.0
  %1084 = vmatprep.subr.mxu0 0.0
  %1085 = vmatpush1.msra.mxu0 0.0
  %1086 = vmatprep.subr.mxu0 0.0
  %1087 = vmatpush1.msra.mxu0 0.0
  %1088 = vmatprep.subr.mxu0 0.0
  %1089 = vmatpush1.msra.mxu0 0.0
  %1090 = vmatprep.subr.mxu0 0.0
  %1091 = vmatpush1.msra.mxu0 0.0
  %1092 = vmatprep.subr.mxu0 0.0
  %1093 = vmatpush1.msra.mxu0 0.0
  %1094 = vmatprep.subr.mxu0 0.0
  %1095 = vmatpush1.msra.mxu0 0.0
  %1096 = vmatprep.subr.mxu0 0.0
  %1097 = vmatpush1.msra.mxu0 0.0
  %1098 = vmatprep.subr.mxu0 0.0
  %1099 = vmatpush1.msra.mxu0 0.0
  %1100 = vmatprep.subr.mxu0 0.0
  %1101 = vmatpush1.msra.mxu0 %v34
  %1102 = vmatprep.subr.mxu0 0.0
  %1103 = vmatpush1.msra.mxu0 %v33
  %1104 = vmatprep.subr.mxu0 0.0
  %1105 = vmatpush2.msra.mxu0 0.0
  %1106 = vmatprep.subr.mxu0 0.0
  %1107 = vmatpush2.msra.mxu0 0.0
  %1108 = vmatprep.subr.mxu0 0.0
  %1109 = vmatpush2.msra.mxu0 0.0
  %1110 = vmatprep.subr.mxu0 0.0
  %1111 = vmatpush2.msra.mxu0 0.0
  %1112 = vmatprep.subr.mxu0 0.0
  %1113 = vmatpush2.msra.mxu0 0.0
  %1114 = vmatprep.subr.mxu0 0.0
  %1115 = vmatpush2.msra.mxu0 0.0
  %1116 = vmatprep.subr.mxu0 0.0
  %1117 = vmatpush2.msra.mxu0 0.0
  %1118 = vmatprep.subr.mxu0 0.0
  %1119 = vmatpush2.msra.mxu0 0.0
  %1120 = vmatprep.subr.mxu0 0.0
  %1121 = vmatpush2.msra.mxu0 0.0
  %1122 = vmatprep.subr.mxu0 0.0
  %1123 = vmatpush2.msra.mxu0 0.0
  %1124 = vmatprep.subr.mxu0 0.0
  %1125 = vmatpush2.msra.mxu0 0.0
  %1126 = vmatprep.subr.mxu0 0.0
  %1127 = vmatpush2.msra.mxu0 0.0
  %1128 = vmatprep.subr.mxu0 0.0
  %1129 = vmatpush2.msra.mxu0 0.0
  %1130 = vmatprep.subr.mxu0 0.0
  %1131 = vmatpush2.msra.mxu0 0.0
  %1132 = vmatprep.subr.mxu0 0.0
  %1133 = vmatpush2.msra.mxu0 0.0
  %1134 = vmatprep.subr.mxu0 0.0
  %1135 = vmatpush2.msra.mxu0 0.0
  %1136 = vmatprep.mubr.f32.mxu0 0.0
  %1137 = vmatmul.mubr.f32.gmra.mxu0 %v860
  %v1138 = vpop.f32.mrf.mxu0
  %v1139 = vadd.f32 %v544, %v1138
  %v1140 = vpop.f32.mrf.mxu0
  %1141 = vdwg.mxu0
  %1142 = vmatprep.subr.mxu0 0.0
  %1143 = vmatpush1.msra.mxu0 0.0
  %1144 = vmatprep.subr.mxu0 0.0
  %1145 = vmatpush1.msra.mxu0 0.0
  %1146 = vmatprep.subr.mxu0 0.0
  %1147 = vmatpush1.msra.mxu0 0.0
  %1148 = vmatprep.subr.mxu0 0.0
  %1149 = vmatpush1.msra.mxu0 0.0
  %1150 = vmatprep.subr.mxu0 0.0
  %1151 = vmatpush1.msra.mxu0 0.0
  %1152 = vmatprep.subr.mxu0 0.0
  %1153 = vmatpush1.msra.mxu0 0.0
  %1154 = vmatprep.subr.mxu0 0.0
  %1155 = vmatpush1.msra.mxu0 0.0
  %1156 = vmatprep.subr.mxu0 0.0
  %1157 = vmatpush1.msra.mxu0 0.0
  %1158 = vmatprep.subr.mxu0 0.0
  %1159 = vmatpush1.msra.mxu0 0.0
  %1160 = vmatprep.subr.mxu0 0.0
  %1161 = vmatpush1.msra.mxu0 0.0
  %1162 = vmatprep.subr.mxu0 0.0
  %1163 = vmatpush1.msra.mxu0 0.0
  %1164 = vmatprep.subr.mxu0 0.0
  %1165 = vmatpush1.msra.mxu0 0.0
  %1166 = vmatprep.subr.mxu0 0.0
  %1167 = vmatpush1.msra.mxu0 0.0
  %1168 = vmatprep.subr.mxu0 0.0
  %1169 = vmatpush1.msra.mxu0 0.0
  %1170 = vmatprep.subr.mxu0 0.0
  %1171 = vmatpush1.msra.mxu0 %v36
  %1172 = vmatprep.subr.mxu0 0.0
  %1173 = vmatpush1.msra.mxu0 %v35
  %1174 = vmatprep.subr.mxu0 0.0
  %1175 = vmatpush2.msra.mxu0 0.0
  %1176 = vmatprep.subr.mxu0 0.0
  %1177 = vmatpush2.msra.mxu0 0.0
  %1178 = vmatprep.subr.mxu0 0.0
  %1179 = vmatpush2.msra.mxu0 0.0
  %1180 = vmatprep.subr.mxu0 0.0
  %1181 = vmatpush2.msra.mxu0 0.0
  %1182 = vmatprep.subr.mxu0 0.0
  %1183 = vmatpush2.msra.mxu0 0.0
  %1184 = vmatprep.subr.mxu0 0.0
  %1185 = vmatpush2.msra.mxu0 0.0
  %1186 = vmatprep.subr.mxu0 0.0
  %1187 = vmatpush2.msra.mxu0 0.0
  %1188 = vmatprep.subr.mxu0 0.0
  %1189 = vmatpush2.msra.mxu0 0.0
  %1190 = vmatprep.subr.mxu0 0.0
  %1191 = vmatpush2.msra.mxu0 0.0
  %1192 = vmatprep.subr.mxu0 0.0
  %1193 = vmatpush2.msra.mxu0 0.0
  %1194 = vmatprep.subr.mxu0 0.0
  %1195 = vmatpush2.msra.mxu0 0.0
  %1196 = vmatprep.subr.mxu0 0.0
  %1197 = vmatpush2.msra.mxu0 0.0
  %1198 = vmatprep.subr.mxu0 0.0
  %1199 = vmatpush2.msra.mxu0 0.0
  %1200 = vmatprep.subr.mxu0 0.0
  %1201 = vmatpush2.msra.mxu0 0.0
  %1202 = vmatprep.subr.mxu0 0.0
  %1203 = vmatpush2.msra.mxu0 0.0
  %1204 = vmatprep.subr.mxu0 0.0
  %1205 = vmatpush2.msra.mxu0 0.0
  %1206 = vmatprep.mubr.f32.mxu0 0.0
  %1207 = vmatmul.mubr.f32.gmra.mxu0 %v549
  %v1208 = vpop.f32.mrf.mxu0
  %v1209 = vadd.f32 0.0, %v1208
  %v1210 = vpop.f32.mrf.mxu0
  %1211 = vdwg.mxu0
  %v1212 = vadd.f32 %v929, %v1209
  %1213 = vmatprep.subr.mxu0 0.0
  %1214 = vmatpush1.msra.mxu0 0.0
  %1215 = vmatprep.subr.mxu0 0.0
  %1216 = vmatpush1.msra.mxu0 0.0
  %1217 = vmatprep.subr.mxu0 0.0
  %1218 = vmatpush1.msra.mxu0 0.0
  %1219 = vmatprep.subr.mxu0 0.0
  %1220 = vmatpush1.msra.mxu0 0.0
  %1221 = vmatprep.subr.mxu0 0.0
  %1222 = vmatpush1.msra.mxu0 0.0
  %1223 = vmatprep.subr.mxu0 0.0
  %1224 = vmatpush1.msra.mxu0 0.0
  %1225 = vmatprep.subr.mxu0 0.0
  %1226 = vmatpush1.msra.mxu0 0.0
  %1227 = vmatprep.subr.mxu0 0.0
  %1228 = vmatpush1.msra.mxu0 0.0
  %1229 = vmatprep.subr.mxu0 0.0
  %1230 = vmatpush1.msra.mxu0 0.0
  %1231 = vmatprep.subr.mxu0 0.0
  %1232 = vmatpush1.msra.mxu0 0.0
  %1233 = vmatprep.subr.mxu0 0.0
  %1234 = vmatpush1.msra.mxu0 0.0
  %1235 = vmatprep.subr.mxu0 0.0
  %1236 = vmatpush1.msra.mxu0 0.0
  %1237 = vmatprep.subr.mxu0 0.0
  %1238 = vmatpush1.msra.mxu0 0.0
  %1239 = vmatprep.subr.mxu0 0.0
  %1240 = vmatpush1.msra.mxu0 0.0
  %1241 = vmatprep.subr.mxu0 0.0
  %1242 = vmatpush1.msra.mxu0 %v38
  %1243 = vmatprep.subr.mxu0 0.0
  %1244 = vmatpush1.msra.mxu0 %v37
  %1245 = vmatprep.subr.mxu0 0.0
  %1246 = vmatpush2.msra.mxu0 0.0
  %1247 = vmatprep.subr.mxu0 0.0
  %1248 = vmatpush2.msra.mxu0 0.0
  %1249 = vmatprep.subr.mxu0 0.0
  %1250 = vmatpush2.msra.mxu0 0.0
  %1251 = vmatprep.subr.mxu0 0.0
  %1252 = vmatpush2.msra.mxu0 0.0
  %1253 = vmatprep.subr.mxu0 0.0
  %1254 = vmatpush2.msra.mxu0 0.0
  %1255 = vmatprep.subr.mxu0 0.0
  %1256 = vmatpush2.msra.mxu0 0.0
  %1257 = vmatprep.subr.mxu0 0.0
  %1258 = vmatpush2.msra.mxu0 0.0
  %1259 = vmatprep.subr.mxu0 0.0
  %1260 = vmatpush2.msra.mxu0 0.0
  %1261 = vmatprep.subr.mxu0 0.0
  %1262 = vmatpush2.msra.mxu0 0.0
  %1263 = vmatprep.subr.mxu0 0.0
  %1264 = vmatpush2.msra.mxu0 0.0
  %1265 = vmatprep.subr.mxu0 0.0
  %1266 = vmatpush2.msra.mxu0 0.0
  %1267 = vmatprep.subr.mxu0 0.0
  %1268 = vmatpush2.msra.mxu0 0.0
  %1269 = vmatprep.subr.mxu0 0.0
  %1270 = vmatpush2.msra.mxu0 0.0
  %1271 = vmatprep.subr.mxu0 0.0
  %1272 = vmatpush2.msra.mxu0 0.0
  %1273 = vmatprep.subr.mxu0 0.0
  %1274 = vmatpush2.msra.mxu0 0.0
  %1275 = vmatprep.subr.mxu0 0.0
  %1276 = vmatpush2.msra.mxu0 0.0
  %1277 = vmatprep.mubr.f32.mxu0 0.0
  %1278 = vmatmul.mubr.f32.gmra.mxu0 %v549
  %v1279 = vpop.f32.mrf.mxu0
  %v1280 = vadd.f32 0.0, %v1279
  %v1281 = vpop.f32.mrf.mxu0
  %1282 = vdwg.mxu0
  %v1283 = vadd.f32 %v999, %v1280
  %1284 = vmatprep.subr.mxu0 0.0
  %1285 = vmatpush1.msra.mxu0 0.0
  %1286 = vmatprep.subr.mxu0 0.0
  %1287 = vmatpush1.msra.mxu0 0.0
  %1288 = vmatprep.subr.mxu0 0.0
  %1289 = vmatpush1.msra.mxu0 0.0
  %1290 = vmatprep.subr.mxu0 0.0
  %1291 = vmatpush1.msra.mxu0 0.0
  %1292 = vmatprep.subr.mxu0 0.0
  %1293 = vmatpush1.msra.mxu0 0.0
  %1294 = vmatprep.subr.mxu0 0.0
  %1295 = vmatpush1.msra.mxu0 0.0
  %1296 = vmatprep.subr.mxu0 0.0
  %1297 = vmatpush1.msra.mxu0 0.0
  %1298 = vmatprep.subr.mxu0 0.0
  %1299 = vmatpush1.msra.mxu0 0.0
  %1300 = vmatprep.subr.mxu0 0.0
  %1301 = vmatpush1.msra.mxu0 0.0
  %1302 = vmatprep.subr.mxu0 0.0
  %1303 = vmatpush1.msra.mxu0 0.0
  %1304 = vmatprep.subr.mxu0 0.0
  %1305 = vmatpush1.msra.mxu0 0.0
  %1306 = vmatprep.subr.mxu0 0.0
  %1307 = vmatpush1.msra.mxu0 0.0
  %1308 = vmatprep.subr.mxu0 0.0
  %1309 = vmatpush1.msra.mxu0 0.0
  %1310 = vmatprep.subr.mxu0 0.0
  %1311 = vmatpush1.msra.mxu0 0.0
  %1312 = vmatprep.subr.mxu0 0.0
  %1313 = vmatpush1.msra.mxu0 %v40
  %1314 = vmatprep.subr.mxu0 0.0
  %1315 = vmatpush1.msra.mxu0 %v39
  %1316 = vmatprep.subr.mxu0 0.0
  %1317 = vmatpush2.msra.mxu0 0.0
  %1318 = vmatprep.subr.mxu0 0.0
  %1319 = vmatpush2.msra.mxu0 0.0
  %1320 = vmatprep.subr.mxu0 0.0
  %1321 = vmatpush2.msra.mxu0 0.0
  %1322 = vmatprep.subr.mxu0 0.0
  %1323 = vmatpush2.msra.mxu0 0.0
  %1324 = vmatprep.subr.mxu0 0.0
  %1325 = vmatpush2.msra.mxu0 0.0
  %1326 = vmatprep.subr.mxu0 0.0
  %1327 = vmatpush2.msra.mxu0 0.0
  %1328 = vmatprep.subr.mxu0 0.0
  %1329 = vmatpush2.msra.mxu0 0.0
  %1330 = vmatprep.subr.mxu0 0.0
  %1331 = vmatpush2.msra.mxu0 0.0
  %1332 = vmatprep.subr.mxu0 0.0
  %1333 = vmatpush2.msra.mxu0 0.0
  %1334 = vmatprep.subr.mxu0 0.0
  %1335 = vmatpush2.msra.mxu0 0.0
  %1336 = vmatprep.subr.mxu0 0.0
  %1337 = vmatpush2.msra.mxu0 0.0
  %1338 = vmatprep.subr.mxu0 0.0
  %1339 = vmatpush2.msra.mxu0 0.0
  %1340 = vmatprep.subr.mxu0 0.0
  %1341 = vmatpush2.msra.mxu0 0.0
  %1342 = vmatprep.subr.mxu0 0.0
  %1343 = vmatpush2.msra.mxu0 0.0
  %1344 = vmatprep.subr.mxu0 0.0
  %1345 = vmatpush2.msra.mxu0 0.0
  %1346 = vmatprep.subr.mxu0 0.0
  %1347 = vmatpush2.msra.mxu0 0.0
  %1348 = vmatprep.mubr.f32.mxu0 0.0
  %1349 = vmatmul.mubr.f32.gmra.mxu0 %v549
  %v1350 = vpop.f32.mrf.mxu0
  %v1351 = vadd.f32 0.0, %v1350
  %v1352 = vpop.f32.mrf.mxu0
  %1353 = vdwg.mxu0
  %v1354 = vadd.f32 %v1069, %v1351
  %1355 = vmatprep.subr.mxu0 0.0
  %1356 = vmatpush1.msra.mxu0 0.0
  %1357 = vmatprep.subr.mxu0 0.0
  %1358 = vmatpush1.msra.mxu0 0.0
  %1359 = vmatprep.subr.mxu0 0.0
  %1360 = vmatpush1.msra.mxu0 0.0
  %1361 = vmatprep.subr.mxu0 0.0
  %1362 = vmatpush1.msra.mxu0 0.0
  %1363 = vmatprep.subr.mxu0 0.0
  %1364 = vmatpush1.msra.mxu0 0.0
  %1365 = vmatprep.subr.mxu0 0.0
  %1366 = vmatpush1.msra.mxu0 0.0
  %1367 = vmatprep.subr.mxu0 0.0
  %1368 = vmatpush1.msra.mxu0 0.0
  %1369 = vmatprep.subr.mxu0 0.0
  %1370 = vmatpush1.msra.mxu0 0.0
  %1371 = vmatprep.subr.mxu0 0.0
  %1372 = vmatpush1.msra.mxu0 0.0
  %1373 = vmatprep.subr.mxu0 0.0
  %1374 = vmatpush1.msra.mxu0 0.0
  %1375 = vmatprep.subr.mxu0 0.0
  %1376 = vmatpush1.msra.mxu0 0.0
  %1377 = vmatprep.subr.mxu0 0.0
  %1378 = vmatpush1.msra.mxu0 0.0
  %1379 = vmatprep.subr.mxu0 0.0
  %1380 = vmatpush1.msra.mxu0 0.0
  %1381 = vmatprep.subr.mxu0 0.0
  %1382 = vmatpush1.msra.mxu0 0.0
  %1383 = vmatprep.subr.mxu0 0.0
  %1384 = vmatpush1.msra.mxu0 %v42
  %1385 = vmatprep.subr.mxu0 0.0
  %1386 = vmatpush1.msra.mxu0 %v41
  %1387 = vmatprep.subr.mxu0 0.0
  %1388 = vmatpush2.msra.mxu0 0.0
  %1389 = vmatprep.subr.mxu0 0.0
  %1390 = vmatpush2.msra.mxu0 0.0
  %1391 = vmatprep.subr.mxu0 0.0
  %1392 = vmatpush2.msra.mxu0 0.0
  %1393 = vmatprep.subr.mxu0 0.0
  %1394 = vmatpush2.msra.mxu0 0.0
  %1395 = vmatprep.subr.mxu0 0.0
  %1396 = vmatpush2.msra.mxu0 0.0
  %1397 = vmatprep.subr.mxu0 0.0
  %1398 = vmatpush2.msra.mxu0 0.0
  %1399 = vmatprep.subr.mxu0 0.0
  %1400 = vmatpush2.msra.mxu0 0.0
  %1401 = vmatprep.subr.mxu0 0.0
  %1402 = vmatpush2.msra.mxu0 0.0
  %1403 = vmatprep.subr.mxu0 0.0
  %1404 = vmatpush2.msra.mxu0 0.0
  %1405 = vmatprep.subr.mxu0 0.0
  %1406 = vmatpush2.msra.mxu0 0.0
  %1407 = vmatprep.subr.mxu0 0.0
  %1408 = vmatpush2.msra.mxu0 0.0
  %1409 = vmatprep.subr.mxu0 0.0
  %1410 = vmatpush2.msra.mxu0 0.0
  %1411 = vmatprep.subr.mxu0 0.0
  %1412 = vmatpush2.msra.mxu0 0.0
  %1413 = vmatprep.subr.mxu0 0.0
  %1414 = vmatpush2.msra.mxu0 0.0
  %1415 = vmatprep.subr.mxu0 0.0
  %1416 = vmatpush2.msra.mxu0 0.0
  %1417 = vmatprep.subr.mxu0 0.0
  %1418 = vmatpush2.msra.mxu0 0.0
  %1419 = vmatprep.mubr.f32.mxu0 0.0
  %1420 = vmatmul.mubr.f32.gmra.mxu0 %v549
  %v1421 = vpop.f32.mrf.mxu0
  %v1422 = vadd.f32 0.0, %v1421
  %v1423 = vpop.f32.mrf.mxu0
  %1424 = vdwg.mxu0
  %v1425 = vadd.f32 %v1139, %v1422
  %v1426 = vxor.u32 %v1212, 2147483648
  %v1427 = vmul.f32 %v1426, 1.442695
  %v1428 = vpow.pop %v1427
  %v1429 = vadd.f32 %v1428, 1.0
  %v1430 = vrcp.pop %v1429
  %v1431 = vmul.f32 1.0, %v1430
  %v1432 = vxor.u32 %v1283, 2147483648
  %v1433 = vmul.f32 %v1432, 1.442695
  %v1434 = vpow.pop %v1433
  %v1435 = vadd.f32 %v1434, 1.0
  %v1436 = vrcp.pop %v1435
  %v1437 = vmul.f32 1.0, %v1436
  %v1438 = vtanh.pop %v1354
  %v1439 = vxor.u32 %v1425, 2147483648
  %v1440 = vmul.f32 %v1439, 1.442695
  %v1441 = vpow.pop %v1440
  %v1442 = vadd.f32 %v1441, 1.0
  %v1443 = vrcp.pop %v1442
  %v1444 = vmul.f32 1.0, %v1443
  %v1445 = vmul.f32 %v1437, 0.0
  %v1446 = vmul.f32 %v1431, %v1438
  %v1447 = vadd.f32 %v1445, %v1446
  %v1448 = vtanh.pop %v1447
  %v1449 = vmul.f32 %v1444, %v1448
  %vm1450 = vcmp.eq.s32.totalorder %v546, 0
  %v1451 = vlaneseq
  %v1452 = vshrl.u32 %v1451, 7
  %v1453 = vsub.s32 7, %v1452
  %v1454 = vrot.slane %v1449, %v1453
  %v1455 = vsel %vm1450, %v1454, 0.0
  %1456 = vmatprep.subr.mxu0 0.0
  %1457 = vmatpush1.msra.mxu0 0.0
  %1458 = vmatprep.subr.mxu0 0.0
  %1459 = vmatpush1.msra.mxu0 0.0
  %1460 = vmatprep.subr.mxu0 0.0
  %1461 = vmatpush1.msra.mxu0 0.0
  %1462 = vmatprep.subr.mxu0 0.0
  %1463 = vmatpush1.msra.mxu0 0.0
  %1464 = vmatprep.subr.mxu0 0.0
  %1465 = vmatpush1.msra.mxu0 0.0
  %1466 = vmatprep.subr.mxu0 0.0
  %1467 = vmatpush1.msra.mxu0 0.0
  %1468 = vmatprep.subr.mxu0 0.0
  %1469 = vmatpush1.msra.mxu0 0.0
  %1470 = vmatprep.subr.mxu0 0.0
  %1471 = vmatpush1.msra.mxu0 0.0
  %1472 = vmatprep.subr.mxu0 0.0
  %1473 = vmatpush1.msra.mxu0 0.0
  %1474 = vmatprep.subr.mxu0 0.0
  %1475 = vmatpush1.msra.mxu0 0.0
  %1476 = vmatprep.subr.mxu0 0.0
  %1477 = vmatpush1.msra.mxu0 0.0
  %1478 = vmatprep.subr.mxu0 0.0
  %1479 = vmatpush1.msra.mxu0 0.0
  %1480 = vmatprep.subr.mxu0 0.0
  %1481 = vmatpush1.msra.mxu0 0.0
  %1482 = vmatprep.subr.mxu0 0.0
  %1483 = vmatpush1.msra.mxu0 0.0
  %1484 = vmatprep.subr.mxu0 0.0
  %1485 = vmatpush1.msra.mxu0 %v16
  %1486 = vmatprep.subr.mxu0 0.0
  %1487 = vmatpush1.msra.mxu0 %v15
  %1488 = vmatprep.subr.mxu0 0.0
  %1489 = vmatpush2.msra.mxu0 0.0
  %1490 = vmatprep.subr.mxu0 0.0
  %1491 = vmatpush2.msra.mxu0 0.0
  %1492 = vmatprep.subr.mxu0 0.0
  %1493 = vmatpush2.msra.mxu0 0.0
  %1494 = vmatprep.subr.mxu0 0.0
  %1495 = vmatpush2.msra.mxu0 0.0
  %1496 = vmatprep.subr.mxu0 0.0
  %1497 = vmatpush2.msra.mxu0 0.0
  %1498 = vmatprep.subr.mxu0 0.0
  %1499 = vmatpush2.msra.mxu0 0.0
  %1500 = vmatprep.subr.mxu0 0.0
  %1501 = vmatpush2.msra.mxu0 0.0
  %1502 = vmatprep.subr.mxu0 0.0
  %1503 = vmatpush2.msra.mxu0 0.0
  %1504 = vmatprep.subr.mxu0 0.0
  %1505 = vmatpush2.msra.mxu0 0.0
  %1506 = vmatprep.subr.mxu0 0.0
  %1507 = vmatpush2.msra.mxu0 0.0
  %1508 = vmatprep.subr.mxu0 0.0
  %1509 = vmatpush2.msra.mxu0 0.0
  %1510 = vmatprep.subr.mxu0 0.0
  %1511 = vmatpush2.msra.mxu0 0.0
  %1512 = vmatprep.subr.mxu0 0.0
  %1513 = vmatpush2.msra.mxu0 0.0
  %1514 = vmatprep.subr.mxu0 0.0
  %1515 = vmatpush2.msra.mxu0 0.0
  %1516 = vmatprep.subr.mxu0 0.0
  %1517 = vmatpush2.msra.mxu0 0.0
  %1518 = vmatprep.subr.mxu0 0.0
  %1519 = vmatpush2.msra.mxu0 0.0
  %1520 = vmatprep.mubr.f32.mxu0 0.0
  %1521 = vmatmul.mubr.f32.gmra.mxu0 %v860
  %v1522 = vpop.f32.mrf.mxu0
  %v1523 = vadd.f32 0.0, %v1522
  %v1524 = vpop.f32.mrf.mxu0
  %1525 = vdwg.mxu0
  %v1526 = vadd.f32 %v160, %v1523
  %1527 = vmatprep.subr.mxu0 0.0
  %1528 = vmatpush1.msra.mxu0 0.0
  %1529 = vmatprep.subr.mxu0 0.0
  %1530 = vmatpush1.msra.mxu0 0.0
  %1531 = vmatprep.subr.mxu0 0.0
  %1532 = vmatpush1.msra.mxu0 0.0
  %1533 = vmatprep.subr.mxu0 0.0
  %1534 = vmatpush1.msra.mxu0 0.0
  %1535 = vmatprep.subr.mxu0 0.0
  %1536 = vmatpush1.msra.mxu0 0.0
  %1537 = vmatprep.subr.mxu0 0.0
  %1538 = vmatpush1.msra.mxu0 0.0
  %1539 = vmatprep.subr.mxu0 0.0
  %1540 = vmatpush1.msra.mxu0 0.0
  %1541 = vmatprep.subr.mxu0 0.0
  %1542 = vmatpush1.msra.mxu0 0.0
  %1543 = vmatprep.subr.mxu0 0.0
  %1544 = vmatpush1.msra.mxu0 0.0
  %1545 = vmatprep.subr.mxu0 0.0
  %1546 = vmatpush1.msra.mxu0 0.0
  %1547 = vmatprep.subr.mxu0 0.0
  %1548 = vmatpush1.msra.mxu0 0.0
  %1549 = vmatprep.subr.mxu0 0.0
  %1550 = vmatpush1.msra.mxu0 0.0
  %1551 = vmatprep.subr.mxu0 0.0
  %1552 = vmatpush1.msra.mxu0 0.0
  %1553 = vmatprep.subr.mxu0 0.0
  %1554 = vmatpush1.msra.mxu0 0.0
  %1555 = vmatprep.subr.mxu0 0.0
  %1556 = vmatpush1.msra.mxu0 %v18
  %1557 = vmatprep.subr.mxu0 0.0
  %1558 = vmatpush1.msra.mxu0 %v17
  %1559 = vmatprep.subr.mxu0 0.0
  %1560 = vmatpush2.msra.mxu0 0.0
  %1561 = vmatprep.subr.mxu0 0.0
  %1562 = vmatpush2.msra.mxu0 0.0
  %1563 = vmatprep.subr.mxu0 0.0
  %1564 = vmatpush2.msra.mxu0 0.0
  %1565 = vmatprep.subr.mxu0 0.0
  %1566 = vmatpush2.msra.mxu0 0.0
  %1567 = vmatprep.subr.mxu0 0.0
  %1568 = vmatpush2.msra.mxu0 0.0
  %1569 = vmatprep.subr.mxu0 0.0
  %1570 = vmatpush2.msra.mxu0 0.0
  %1571 = vmatprep.subr.mxu0 0.0
  %1572 = vmatpush2.msra.mxu0 0.0
  %1573 = vmatprep.subr.mxu0 0.0
  %1574 = vmatpush2.msra.mxu0 0.0
  %1575 = vmatprep.subr.mxu0 0.0
  %1576 = vmatpush2.msra.mxu0 0.0
  %1577 = vmatprep.subr.mxu0 0.0
  %1578 = vmatpush2.msra.mxu0 0.0
  %1579 = vmatprep.subr.mxu0 0.0
  %1580 = vmatpush2.msra.mxu0 0.0
  %1581 = vmatprep.subr.mxu0 0.0
  %1582 = vmatpush2.msra.mxu0 0.0
  %1583 = vmatprep.subr.mxu0 0.0
  %1584 = vmatpush2.msra.mxu0 0.0
  %1585 = vmatprep.subr.mxu0 0.0
  %1586 = vmatpush2.msra.mxu0 0.0
  %1587 = vmatprep.subr.mxu0 0.0
  %1588 = vmatpush2.msra.mxu0 0.0
  %1589 = vmatprep.subr.mxu0 0.0
  %1590 = vmatpush2.msra.mxu0 0.0
  %1591 = vmatprep.mubr.f32.mxu0 0.0
  %1592 = vmatmul.mubr.f32.gmra.mxu0 %v860
  %v1593 = vpop.f32.mrf.mxu0
  %v1594 = vadd.f32 0.0, %v1593
  %v1595 = vpop.f32.mrf.mxu0
  %1596 = vdwg.mxu0
  %v1597 = vadd.f32 %v272, %v1594
  %1598 = vmatprep.subr.mxu0 0.0
  %1599 = vmatpush1.msra.mxu0 0.0
  %1600 = vmatprep.subr.mxu0 0.0
  %1601 = vmatpush1.msra.mxu0 0.0
  %1602 = vmatprep.subr.mxu0 0.0
  %1603 = vmatpush1.msra.mxu0 0.0
  %1604 = vmatprep.subr.mxu0 0.0
  %1605 = vmatpush1.msra.mxu0 0.0
  %1606 = vmatprep.subr.mxu0 0.0
  %1607 = vmatpush1.msra.mxu0 0.0
  %1608 = vmatprep.subr.mxu0 0.0
  %1609 = vmatpush1.msra.mxu0 0.0
  %1610 = vmatprep.subr.mxu0 0.0
  %1611 = vmatpush1.msra.mxu0 0.0
  %1612 = vmatprep.subr.mxu0 0.0
  %1613 = vmatpush1.msra.mxu0 0.0
  %1614 = vmatprep.subr.mxu0 0.0
  %1615 = vmatpush1.msra.mxu0 0.0
  %1616 = vmatprep.subr.mxu0 0.0
  %1617 = vmatpush1.msra.mxu0 0.0
  %1618 = vmatprep.subr.mxu0 0.0
  %1619 = vmatpush1.msra.mxu0 0.0
  %1620 = vmatprep.subr.mxu0 0.0
  %1621 = vmatpush1.msra.mxu0 0.0
  %1622 = vmatprep.subr.mxu0 0.0
  %1623 = vmatpush1.msra.mxu0 0.0
  %1624 = vmatprep.subr.mxu0 0.0
  %1625 = vmatpush1.msra.mxu0 0.0
  %1626 = vmatprep.subr.mxu0 0.0
  %1627 = vmatpush1.msra.mxu0 %v20
  %1628 = vmatprep.subr.mxu0 0.0
  %1629 = vmatpush1.msra.mxu0 %v19
  %1630 = vmatprep.subr.mxu0 0.0
  %1631 = vmatpush2.msra.mxu0 0.0
  %1632 = vmatprep.subr.mxu0 0.0
  %1633 = vmatpush2.msra.mxu0 0.0
  %1634 = vmatprep.subr.mxu0 0.0
  %1635 = vmatpush2.msra.mxu0 0.0
  %1636 = vmatprep.subr.mxu0 0.0
  %1637 = vmatpush2.msra.mxu0 0.0
  %1638 = vmatprep.subr.mxu0 0.0
  %1639 = vmatpush2.msra.mxu0 0.0
  %1640 = vmatprep.subr.mxu0 0.0
  %1641 = vmatpush2.msra.mxu0 0.0
  %1642 = vmatprep.subr.mxu0 0.0
  %1643 = vmatpush2.msra.mxu0 0.0
  %1644 = vmatprep.subr.mxu0 0.0
  %1645 = vmatpush2.msra.mxu0 0.0
  %1646 = vmatprep.subr.mxu0 0.0
  %1647 = vmatpush2.msra.mxu0 0.0
  %1648 = vmatprep.subr.mxu0 0.0
  %1649 = vmatpush2.msra.mxu0 0.0
  %1650 = vmatprep.subr.mxu0 0.0
  %1651 = vmatpush2.msra.mxu0 0.0
  %1652 = vmatprep.subr.mxu0 0.0
  %1653 = vmatpush2.msra.mxu0 0.0
  %1654 = vmatprep.subr.mxu0 0.0
  %1655 = vmatpush2.msra.mxu0 0.0
  %1656 = vmatprep.subr.mxu0 0.0
  %1657 = vmatpush2.msra.mxu0 0.0
  %1658 = vmatprep.subr.mxu0 0.0
  %1659 = vmatpush2.msra.mxu0 0.0
  %1660 = vmatprep.subr.mxu0 0.0
  %1661 = vmatpush2.msra.mxu0 0.0
  %1662 = vmatprep.mubr.f32.mxu0 0.0
  %1663 = vmatmul.mubr.f32.gmra.mxu0 %v860
  %v1664 = vpop.f32.mrf.mxu0
  %v1665 = vadd.f32 0.0, %v1664
  %v1666 = vpop.f32.mrf.mxu0
  %1667 = vdwg.mxu0
  %v1668 = vadd.f32 %v384, %v1665
  %1669 = vmatprep.subr.mxu0 0.0
  %1670 = vmatpush1.msra.mxu0 0.0
  %1671 = vmatprep.subr.mxu0 0.0
  %1672 = vmatpush1.msra.mxu0 0.0
  %1673 = vmatprep.subr.mxu0 0.0
  %1674 = vmatpush1.msra.mxu0 0.0
  %1675 = vmatprep.subr.mxu0 0.0
  %1676 = vmatpush1.msra.mxu0 0.0
  %1677 = vmatprep.subr.mxu0 0.0
  %1678 = vmatpush1.msra.mxu0 0.0
  %1679 = vmatprep.subr.mxu0 0.0
  %1680 = vmatpush1.msra.mxu0 0.0
  %1681 = vmatprep.subr.mxu0 0.0
  %1682 = vmatpush1.msra.mxu0 0.0
  %1683 = vmatprep.subr.mxu0 0.0
  %1684 = vmatpush1.msra.mxu0 0.0
  %1685 = vmatprep.subr.mxu0 0.0
  %1686 = vmatpush1.msra.mxu0 0.0
  %1687 = vmatprep.subr.mxu0 0.0
  %1688 = vmatpush1.msra.mxu0 0.0
  %1689 = vmatprep.subr.mxu0 0.0
  %1690 = vmatpush1.msra.mxu0 0.0
  %1691 = vmatprep.subr.mxu0 0.0
  %1692 = vmatpush1.msra.mxu0 0.0
  %1693 = vmatprep.subr.mxu0 0.0
  %1694 = vmatpush1.msra.mxu0 0.0
  %1695 = vmatprep.subr.mxu0 0.0
  %1696 = vmatpush1.msra.mxu0 0.0
  %1697 = vmatprep.subr.mxu0 0.0
  %1698 = vmatpush1.msra.mxu0 %v22
  %1699 = vmatprep.subr.mxu0 0.0
  %1700 = vmatpush1.msra.mxu0 %v21
  %1701 = vmatprep.subr.mxu0 0.0
  %1702 = vmatpush2.msra.mxu0 0.0
  %1703 = vmatprep.subr.mxu0 0.0
  %1704 = vmatpush2.msra.mxu0 0.0
  %1705 = vmatprep.subr.mxu0 0.0
  %1706 = vmatpush2.msra.mxu0 0.0
  %1707 = vmatprep.subr.mxu0 0.0
  %1708 = vmatpush2.msra.mxu0 0.0
  %1709 = vmatprep.subr.mxu0 0.0
  %1710 = vmatpush2.msra.mxu0 0.0
  %1711 = vmatprep.subr.mxu0 0.0
  %1712 = vmatpush2.msra.mxu0 0.0
  %1713 = vmatprep.subr.mxu0 0.0
  %1714 = vmatpush2.msra.mxu0 0.0
  %1715 = vmatprep.subr.mxu0 0.0
  %1716 = vmatpush2.msra.mxu0 0.0
  %1717 = vmatprep.subr.mxu0 0.0
  %1718 = vmatpush2.msra.mxu0 0.0
  %1719 = vmatprep.subr.mxu0 0.0
  %1720 = vmatpush2.msra.mxu0 0.0
  %1721 = vmatprep.subr.mxu0 0.0
  %1722 = vmatpush2.msra.mxu0 0.0
  %1723 = vmatprep.subr.mxu0 0.0
  %1724 = vmatpush2.msra.mxu0 0.0
  %1725 = vmatprep.subr.mxu0 0.0
  %1726 = vmatpush2.msra.mxu0 0.0
  %1727 = vmatprep.subr.mxu0 0.0
  %1728 = vmatpush2.msra.mxu0 0.0
  %1729 = vmatprep.subr.mxu0 0.0
  %1730 = vmatpush2.msra.mxu0 0.0
  %1731 = vmatprep.subr.mxu0 0.0
  %1732 = vmatpush2.msra.mxu0 0.0
  %1733 = vmatprep.mubr.f32.mxu0 0.0
  %1734 = vmatmul.mubr.f32.gmra.mxu0 %v860
  %v1735 = vpop.f32.mrf.mxu0
  %v1736 = vadd.f32 0.0, %v1735
  %v1737 = vpop.f32.mrf.mxu0
  %1738 = vdwg.mxu0
  %v1739 = vadd.f32 %v496, %v1736
  %v1740 = vxor.u32 %v1526, 2147483648
  %v1741 = vmul.f32 %v1740, 1.442695
  %v1742 = vpow.pop %v1741
  %v1743 = vadd.f32 %v1742, 1.0
  %v1744 = vrcp.pop %v1743
  %v1745 = vmul.f32 1.0, %v1744
  %v1746 = vxor.u32 %v1597, 2147483648
  %v1747 = vmul.f32 %v1746, 1.442695
  %v1748 = vpow.pop %v1747
  %v1749 = vadd.f32 %v1748, 1.0
  %v1750 = vrcp.pop %v1749
  %v1751 = vmul.f32 1.0, %v1750
  %v1752 = vtanh.pop %v1668
  %v1753 = vxor.u32 %v1739, 2147483648
  %v1754 = vmul.f32 %v1753, 1.442695
  %v1755 = vpow.pop %v1754
  %v1756 = vadd.f32 %v1755, 1.0
  %v1757 = vrcp.pop %v1756
  %v1758 = vmul.f32 1.0, %v1757
  %v1759 = vmul.f32 %v1751, %v856
  %v1760 = vmul.f32 %v1745, %v1752
  %v1761 = vadd.f32 %v1759, %v1760
  %v1762 = vtanh.pop %v1761
  %v1763 = vmul.f32 %v1758, %v1762
  %v1765 = vsel %vm547, %v1763, 0
  %1767 = vmatprep.subr.mxu0 0.0
  %1768 = vmatpush1.msra.mxu0 0.0
  %1769 = vmatprep.subr.mxu0 0.0
  %1770 = vmatpush1.msra.mxu0 0.0
  %1771 = vmatprep.subr.mxu0 0.0
  %1772 = vmatpush1.msra.mxu0 0.0
  %1773 = vmatprep.subr.mxu0 0.0
  %1774 = vmatpush1.msra.mxu0 0.0
  %1775 = vmatprep.subr.mxu0 0.0
  %1776 = vmatpush1.msra.mxu0 0.0
  %1777 = vmatprep.subr.mxu0 0.0
  %1778 = vmatpush1.msra.mxu0 0.0
  %1779 = vmatprep.subr.mxu0 0.0
  %1780 = vmatpush1.msra.mxu0 0.0
  %1781 = vmatprep.subr.mxu0 0.0
  %1782 = vmatpush1.msra.mxu0 0.0
  %1783 = vmatprep.subr.mxu0 0.0
  %1784 = vmatpush1.msra.mxu0 0.0
  %1785 = vmatprep.subr.mxu0 0.0
  %1786 = vmatpush1.msra.mxu0 0.0
  %1787 = vmatprep.subr.mxu0 0.0
  %1788 = vmatpush1.msra.mxu0 0.0
  %1789 = vmatprep.subr.mxu0 0.0
  %1790 = vmatpush1.msra.mxu0 0.0
  %1791 = vmatprep.subr.mxu0 0.0
  %1792 = vmatpush1.msra.mxu0 0.0
  %1793 = vmatprep.subr.mxu0 0.0
  %1794 = vmatpush1.msra.mxu0 0.0
  %1795 = vmatprep.subr.mxu0 0.0
  %1796 = vmatpush1.msra.mxu0 %v28
  %1797 = vmatprep.subr.mxu0 0.0
  %1798 = vmatpush1.msra.mxu0 %v27
  %1799 = vmatprep.subr.mxu0 0.0
  %1800 = vmatpush2.msra.mxu0 0.0
  %1801 = vmatprep.subr.mxu0 0.0
  %1802 = vmatpush2.msra.mxu0 0.0
  %1803 = vmatprep.subr.mxu0 0.0
  %1804 = vmatpush2.msra.mxu0 0.0
  %1805 = vmatprep.subr.mxu0 0.0
  %1806 = vmatpush2.msra.mxu0 0.0
  %1807 = vmatprep.subr.mxu0 0.0
  %1808 = vmatpush2.msra.mxu0 0.0
  %1809 = vmatprep.subr.mxu0 0.0
  %1810 = vmatpush2.msra.mxu0 0.0
  %1811 = vmatprep.subr.mxu0 0.0
  %1812 = vmatpush2.msra.mxu0 0.0
  %1813 = vmatprep.subr.mxu0 0.0
  %1814 = vmatpush2.msra.mxu0 0.0
  %1815 = vmatprep.subr.mxu0 0.0
  %1816 = vmatpush2.msra.mxu0 0.0
  %1817 = vmatprep.subr.mxu0 0.0
  %1818 = vmatpush2.msra.mxu0 0.0
  %1819 = vmatprep.subr.mxu0 0.0
  %1820 = vmatpush2.msra.mxu0 0.0
  %1821 = vmatprep.subr.mxu0 0.0
  %1822 = vmatpush2.msra.mxu0 0.0
  %1823 = vmatprep.subr.mxu0 0.0
  %1824 = vmatpush2.msra.mxu0 0.0
  %1825 = vmatprep.subr.mxu0 0.0
  %1826 = vmatpush2.msra.mxu0 0.0
  %1827 = vmatprep.subr.mxu0 0.0
  %1828 = vmatpush2.msra.mxu0 0.0
  %1829 = vmatprep.subr.mxu0 0.0
  %1830 = vmatpush2.msra.mxu0 0.0
  %1831 = vmatprep.mubr.f32.mxu0 0.0
  %1832 = vmatmul.mubr.f32.gmra.mxu0 %v1765
  %v1833 = vpop.f32.mrf.mxu0
  %v1834 = vadd.f32 %v532, %v1833
  %v1835 = vpop.f32.mrf.mxu0
  %1836 = vdwg.mxu0
  %1837 = vmatprep.subr.mxu0 0.0
  %1838 = vmatpush1.msra.mxu0 0.0
  %1839 = vmatprep.subr.mxu0 0.0
  %1840 = vmatpush1.msra.mxu0 0.0
  %1841 = vmatprep.subr.mxu0 0.0
  %1842 = vmatpush1.msra.mxu0 0.0
  %1843 = vmatprep.subr.mxu0 0.0
  %1844 = vmatpush1.msra.mxu0 0.0
  %1845 = vmatprep.subr.mxu0 0.0
  %1846 = vmatpush1.msra.mxu0 0.0
  %1847 = vmatprep.subr.mxu0 0.0
  %1848 = vmatpush1.msra.mxu0 0.0
  %1849 = vmatprep.subr.mxu0 0.0
  %1850 = vmatpush1.msra.mxu0 0.0
  %1851 = vmatprep.subr.mxu0 0.0
  %1852 = vmatpush1.msra.mxu0 0.0
  %1853 = vmatprep.subr.mxu0 0.0
  %1854 = vmatpush1.msra.mxu0 0.0
  %1855 = vmatprep.subr.mxu0 0.0
  %1856 = vmatpush1.msra.mxu0 0.0
  %1857 = vmatprep.subr.mxu0 0.0
  %1858 = vmatpush1.msra.mxu0 0.0
  %1859 = vmatprep.subr.mxu0 0.0
  %1860 = vmatpush1.msra.mxu0 0.0
  %1861 = vmatprep.subr.mxu0 0.0
  %1862 = vmatpush1.msra.mxu0 0.0
  %1863 = vmatprep.subr.mxu0 0.0
  %1864 = vmatpush1.msra.mxu0 0.0
  %1865 = vmatprep.subr.mxu0 0.0
  %1866 = vmatpush1.msra.mxu0 %v30
  %1867 = vmatprep.subr.mxu0 0.0
  %1868 = vmatpush1.msra.mxu0 %v29
  %1869 = vmatprep.subr.mxu0 0.0
  %1870 = vmatpush2.msra.mxu0 0.0
  %1871 = vmatprep.subr.mxu0 0.0
  %1872 = vmatpush2.msra.mxu0 0.0
  %1873 = vmatprep.subr.mxu0 0.0
  %1874 = vmatpush2.msra.mxu0 0.0
  %1875 = vmatprep.subr.mxu0 0.0
  %1876 = vmatpush2.msra.mxu0 0.0
  %1877 = vmatprep.subr.mxu0 0.0
  %1878 = vmatpush2.msra.mxu0 0.0
  %1879 = vmatprep.subr.mxu0 0.0
  %1880 = vmatpush2.msra.mxu0 0.0
  %1881 = vmatprep.subr.mxu0 0.0
  %1882 = vmatpush2.msra.mxu0 0.0
  %1883 = vmatprep.subr.mxu0 0.0
  %1884 = vmatpush2.msra.mxu0 0.0
  %1885 = vmatprep.subr.mxu0 0.0
  %1886 = vmatpush2.msra.mxu0 0.0
  %1887 = vmatprep.subr.mxu0 0.0
  %1888 = vmatpush2.msra.mxu0 0.0
  %1889 = vmatprep.subr.mxu0 0.0
  %1890 = vmatpush2.msra.mxu0 0.0
  %1891 = vmatprep.subr.mxu0 0.0
  %1892 = vmatpush2.msra.mxu0 0.0
  %1893 = vmatprep.subr.mxu0 0.0
  %1894 = vmatpush2.msra.mxu0 0.0
  %1895 = vmatprep.subr.mxu0 0.0
  %1896 = vmatpush2.msra.mxu0 0.0
  %1897 = vmatprep.subr.mxu0 0.0
  %1898 = vmatpush2.msra.mxu0 0.0
  %1899 = vmatprep.subr.mxu0 0.0
  %1900 = vmatpush2.msra.mxu0 0.0
  %1901 = vmatprep.mubr.f32.mxu0 0.0
  %1902 = vmatmul.mubr.f32.gmra.mxu0 %v1765
  %v1903 = vpop.f32.mrf.mxu0
  %v1904 = vadd.f32 %v536, %v1903
  %v1905 = vpop.f32.mrf.mxu0
  %1906 = vdwg.mxu0
  %1907 = vmatprep.subr.mxu0 0.0
  %1908 = vmatpush1.msra.mxu0 0.0
  %1909 = vmatprep.subr.mxu0 0.0
  %1910 = vmatpush1.msra.mxu0 0.0
  %1911 = vmatprep.subr.mxu0 0.0
  %1912 = vmatpush1.msra.mxu0 0.0
  %1913 = vmatprep.subr.mxu0 0.0
  %1914 = vmatpush1.msra.mxu0 0.0
  %1915 = vmatprep.subr.mxu0 0.0
  %1916 = vmatpush1.msra.mxu0 0.0
  %1917 = vmatprep.subr.mxu0 0.0
  %1918 = vmatpush1.msra.mxu0 0.0
  %1919 = vmatprep.subr.mxu0 0.0
  %1920 = vmatpush1.msra.mxu0 0.0
  %1921 = vmatprep.subr.mxu0 0.0
  %1922 = vmatpush1.msra.mxu0 0.0
  %1923 = vmatprep.subr.mxu0 0.0
  %1924 = vmatpush1.msra.mxu0 0.0
  %1925 = vmatprep.subr.mxu0 0.0
  %1926 = vmatpush1.msra.mxu0 0.0
  %1927 = vmatprep.subr.mxu0 0.0
  %1928 = vmatpush1.msra.mxu0 0.0
  %1929 = vmatprep.subr.mxu0 0.0
  %1930 = vmatpush1.msra.mxu0 0.0
  %1931 = vmatprep.subr.mxu0 0.0
  %1932 = vmatpush1.msra.mxu0 0.0
  %1933 = vmatprep.subr.mxu0 0.0
  %1934 = vmatpush1.msra.mxu0 0.0
  %1935 = vmatprep.subr.mxu0 0.0
  %1936 = vmatpush1.msra.mxu0 %v32
  %1937 = vmatprep.subr.mxu0 0.0
  %1938 = vmatpush1.msra.mxu0 %v31
  %1939 = vmatprep.subr.mxu0 0.0
  %1940 = vmatpush2.msra.mxu0 0.0
  %1941 = vmatprep.subr.mxu0 0.0
  %1942 = vmatpush2.msra.mxu0 0.0
  %1943 = vmatprep.subr.mxu0 0.0
  %1944 = vmatpush2.msra.mxu0 0.0
  %1945 = vmatprep.subr.mxu0 0.0
  %1946 = vmatpush2.msra.mxu0 0.0
  %1947 = vmatprep.subr.mxu0 0.0
  %1948 = vmatpush2.msra.mxu0 0.0
  %1949 = vmatprep.subr.mxu0 0.0
  %1950 = vmatpush2.msra.mxu0 0.0
  %1951 = vmatprep.subr.mxu0 0.0
  %1952 = vmatpush2.msra.mxu0 0.0
  %1953 = vmatprep.subr.mxu0 0.0
  %1954 = vmatpush2.msra.mxu0 0.0
  %1955 = vmatprep.subr.mxu0 0.0
  %1956 = vmatpush2.msra.mxu0 0.0
  %1957 = vmatprep.subr.mxu0 0.0
  %1958 = vmatpush2.msra.mxu0 0.0
  %1959 = vmatprep.subr.mxu0 0.0
  %1960 = vmatpush2.msra.mxu0 0.0
  %1961 = vmatprep.subr.mxu0 0.0
  %1962 = vmatpush2.msra.mxu0 0.0
  %1963 = vmatprep.subr.mxu0 0.0
  %1964 = vmatpush2.msra.mxu0 0.0
  %1965 = vmatprep.subr.mxu0 0.0
  %1966 = vmatpush2.msra.mxu0 0.0
  %1967 = vmatprep.subr.mxu0 0.0
  %1968 = vmatpush2.msra.mxu0 0.0
  %1969 = vmatprep.subr.mxu0 0.0
  %1970 = vmatpush2.msra.mxu0 0.0
  %1971 = vmatprep.mubr.f32.mxu0 0.0
  %1972 = vmatmul.mubr.f32.gmra.mxu0 %v1765
  %v1973 = vpop.f32.mrf.mxu0
  %v1974 = vadd.f32 %v540, %v1973
  %v1975 = vpop.f32.mrf.mxu0
  %1976 = vdwg.mxu0
  %1977 = vmatprep.subr.mxu0 0.0
  %1978 = vmatpush1.msra.mxu0 0.0
  %1979 = vmatprep.subr.mxu0 0.0
  %1980 = vmatpush1.msra.mxu0 0.0
  %1981 = vmatprep.subr.mxu0 0.0
  %1982 = vmatpush1.msra.mxu0 0.0
  %1983 = vmatprep.subr.mxu0 0.0
  %1984 = vmatpush1.msra.mxu0 0.0
  %1985 = vmatprep.subr.mxu0 0.0
  %1986 = vmatpush1.msra.mxu0 0.0
  %1987 = vmatprep.subr.mxu0 0.0
  %1988 = vmatpush1.msra.mxu0 0.0
  %1989 = vmatprep.subr.mxu0 0.0
  %1990 = vmatpush1.msra.mxu0 0.0
  %1991 = vmatprep.subr.mxu0 0.0
  %1992 = vmatpush1.msra.mxu0 0.0
  %1993 = vmatprep.subr.mxu0 0.0
  %1994 = vmatpush1.msra.mxu0 0.0
  %1995 = vmatprep.subr.mxu0 0.0
  %1996 = vmatpush1.msra.mxu0 0.0
  %1997 = vmatprep.subr.mxu0 0.0
  %1998 = vmatpush1.msra.mxu0 0.0
  %1999 = vmatprep.subr.mxu0 0.0
  %2000 = vmatpush1.msra.mxu0 0.0
  %2001 = vmatprep.subr.mxu0 0.0
  %2002 = vmatpush1.msra.mxu0 0.0
  %2003 = vmatprep.subr.mxu0 0.0
  %2004 = vmatpush1.msra.mxu0 0.0
  %2005 = vmatprep.subr.mxu0 0.0
  %2006 = vmatpush1.msra.mxu0 %v34
  %2007 = vmatprep.subr.mxu0 0.0
  %2008 = vmatpush1.msra.mxu0 %v33
  %2009 = vmatprep.subr.mxu0 0.0
  %2010 = vmatpush2.msra.mxu0 0.0
  %2011 = vmatprep.subr.mxu0 0.0
  %2012 = vmatpush2.msra.mxu0 0.0
  %2013 = vmatprep.subr.mxu0 0.0
  %2014 = vmatpush2.msra.mxu0 0.0
  %2015 = vmatprep.subr.mxu0 0.0
  %2016 = vmatpush2.msra.mxu0 0.0
  %2017 = vmatprep.subr.mxu0 0.0
  %2018 = vmatpush2.msra.mxu0 0.0
  %2019 = vmatprep.subr.mxu0 0.0
  %2020 = vmatpush2.msra.mxu0 0.0
  %2021 = vmatprep.subr.mxu0 0.0
  %2022 = vmatpush2.msra.mxu0 0.0
  %2023 = vmatprep.subr.mxu0 0.0
  %2024 = vmatpush2.msra.mxu0 0.0
  %2025 = vmatprep.subr.mxu0 0.0
  %2026 = vmatpush2.msra.mxu0 0.0
  %2027 = vmatprep.subr.mxu0 0.0
  %2028 = vmatpush2.msra.mxu0 0.0
  %2029 = vmatprep.subr.mxu0 0.0
  %2030 = vmatpush2.msra.mxu0 0.0
  %2031 = vmatprep.subr.mxu0 0.0
  %2032 = vmatpush2.msra.mxu0 0.0
  %2033 = vmatprep.subr.mxu0 0.0
  %2034 = vmatpush2.msra.mxu0 0.0
  %2035 = vmatprep.subr.mxu0 0.0
  %2036 = vmatpush2.msra.mxu0 0.0
  %2037 = vmatprep.subr.mxu0 0.0
  %2038 = vmatpush2.msra.mxu0 0.0
  %2039 = vmatprep.subr.mxu0 0.0
  %2040 = vmatpush2.msra.mxu0 0.0
  %2041 = vmatprep.mubr.f32.mxu0 0.0
  %2042 = vmatmul.mubr.f32.gmra.mxu0 %v1765
  %v2043 = vpop.f32.mrf.mxu0
  %v2044 = vadd.f32 %v544, %v2043
  %v2045 = vpop.f32.mrf.mxu0
  %2046 = vdwg.mxu0
  %v2048 = vsel %vm547, %v1449, 0
  %2050 = vmatprep.subr.mxu0 0.0
  %2051 = vmatpush1.msra.mxu0 0.0
  %2052 = vmatprep.subr.mxu0 0.0
  %2053 = vmatpush1.msra.mxu0 0.0
  %2054 = vmatprep.subr.mxu0 0.0
  %2055 = vmatpush1.msra.mxu0 0.0
  %2056 = vmatprep.subr.mxu0 0.0
  %2057 = vmatpush1.msra.mxu0 0.0
  %2058 = vmatprep.subr.mxu0 0.0
  %2059 = vmatpush1.msra.mxu0 0.0
  %2060 = vmatprep.subr.mxu0 0.0
  %2061 = vmatpush1.msra.mxu0 0.0
  %2062 = vmatprep.subr.mxu0 0.0
  %2063 = vmatpush1.msra.mxu0 0.0
  %2064 = vmatprep.subr.mxu0 0.0
  %2065 = vmatpush1.msra.mxu0 0.0
  %2066 = vmatprep.subr.mxu0 0.0
  %2067 = vmatpush1.msra.mxu0 0.0
  %2068 = vmatprep.subr.mxu0 0.0
  %2069 = vmatpush1.msra.mxu0 0.0
  %2070 = vmatprep.subr.mxu0 0.0
  %2071 = vmatpush1.msra.mxu0 0.0
  %2072 = vmatprep.subr.mxu0 0.0
  %2073 = vmatpush1.msra.mxu0 0.0
  %2074 = vmatprep.subr.mxu0 0.0
  %2075 = vmatpush1.msra.mxu0 0.0
  %2076 = vmatprep.subr.mxu0 0.0
  %2077 = vmatpush1.msra.mxu0 0.0
  %2078 = vmatprep.subr.mxu0 0.0
  %2079 = vmatpush1.msra.mxu0 %v36
  %2080 = vmatprep.subr.mxu0 0.0
  %2081 = vmatpush1.msra.mxu0 %v35
  %2082 = vmatprep.subr.mxu0 0.0
  %2083 = vmatpush2.msra.mxu0 0.0
  %2084 = vmatprep.subr.mxu0 0.0
  %2085 = vmatpush2.msra.mxu0 0.0
  %2086 = vmatprep.subr.mxu0 0.0
  %2087 = vmatpush2.msra.mxu0 0.0
  %2088 = vmatprep.subr.mxu0 0.0
  %2089 = vmatpush2.msra.mxu0 0.0
  %2090 = vmatprep.subr.mxu0 0.0
  %2091 = vmatpush2.msra.mxu0 0.0
  %2092 = vmatprep.subr.mxu0 0.0
  %2093 = vmatpush2.msra.mxu0 0.0
  %2094 = vmatprep.subr.mxu0 0.0
  %2095 = vmatpush2.msra.mxu0 0.0
  %2096 = vmatprep.subr.mxu0 0.0
  %2097 = vmatpush2.msra.mxu0 0.0
  %2098 = vmatprep.subr.mxu0 0.0
  %2099 = vmatpush2.msra.mxu0 0.0
  %2100 = vmatprep.subr.mxu0 0.0
  %2101 = vmatpush2.msra.mxu0 0.0
  %2102 = vmatprep.subr.mxu0 0.0
  %2103 = vmatpush2.msra.mxu0 0.0
  %2104 = vmatprep.subr.mxu0 0.0
  %2105 = vmatpush2.msra.mxu0 0.0
  %2106 = vmatprep.subr.mxu0 0.0
  %2107 = vmatpush2.msra.mxu0 0.0
  %2108 = vmatprep.subr.mxu0 0.0
  %2109 = vmatpush2.msra.mxu0 0.0
  %2110 = vmatprep.subr.mxu0 0.0
  %2111 = vmatpush2.msra.mxu0 0.0
  %2112 = vmatprep.subr.mxu0 0.0
  %2113 = vmatpush2.msra.mxu0 0.0
  %2114 = vmatprep.mubr.f32.mxu0 0.0
  %2115 = vmatmul.mubr.f32.gmra.mxu0 %v2048
  %v2116 = vpop.f32.mrf.mxu0
  %v2117 = vadd.f32 0.0, %v2116
  %v2118 = vpop.f32.mrf.mxu0
  %2119 = vdwg.mxu0
  %v2120 = vadd.f32 %v1834, %v2117
  %2121 = vmatprep.subr.mxu0 0.0
  %2122 = vmatpush1.msra.mxu0 0.0
  %2123 = vmatprep.subr.mxu0 0.0
  %2124 = vmatpush1.msra.mxu0 0.0
  %2125 = vmatprep.subr.mxu0 0.0
  %2126 = vmatpush1.msra.mxu0 0.0
  %2127 = vmatprep.subr.mxu0 0.0
  %2128 = vmatpush1.msra.mxu0 0.0
  %2129 = vmatprep.subr.mxu0 0.0
  %2130 = vmatpush1.msra.mxu0 0.0
  %2131 = vmatprep.subr.mxu0 0.0
  %2132 = vmatpush1.msra.mxu0 0.0
  %2133 = vmatprep.subr.mxu0 0.0
  %2134 = vmatpush1.msra.mxu0 0.0
  %2135 = vmatprep.subr.mxu0 0.0
  %2136 = vmatpush1.msra.mxu0 0.0
  %2137 = vmatprep.subr.mxu0 0.0
  %2138 = vmatpush1.msra.mxu0 0.0
  %2139 = vmatprep.subr.mxu0 0.0
  %2140 = vmatpush1.msra.mxu0 0.0
  %2141 = vmatprep.subr.mxu0 0.0
  %2142 = vmatpush1.msra.mxu0 0.0
  %2143 = vmatprep.subr.mxu0 0.0
  %2144 = vmatpush1.msra.mxu0 0.0
  %2145 = vmatprep.subr.mxu0 0.0
  %2146 = vmatpush1.msra.mxu0 0.0
  %2147 = vmatprep.subr.mxu0 0.0
  %2148 = vmatpush1.msra.mxu0 0.0
  %2149 = vmatprep.subr.mxu0 0.0
  %2150 = vmatpush1.msra.mxu0 %v38
  %2151 = vmatprep.subr.mxu0 0.0
  %2152 = vmatpush1.msra.mxu0 %v37
  %2153 = vmatprep.subr.mxu0 0.0
  %2154 = vmatpush2.msra.mxu0 0.0
  %2155 = vmatprep.subr.mxu0 0.0
  %2156 = vmatpush2.msra.mxu0 0.0
  %2157 = vmatprep.subr.mxu0 0.0
  %2158 = vmatpush2.msra.mxu0 0.0
  %2159 = vmatprep.subr.mxu0 0.0
  %2160 = vmatpush2.msra.mxu0 0.0
  %2161 = vmatprep.subr.mxu0 0.0
  %2162 = vmatpush2.msra.mxu0 0.0
  %2163 = vmatprep.subr.mxu0 0.0
  %2164 = vmatpush2.msra.mxu0 0.0
  %2165 = vmatprep.subr.mxu0 0.0
  %2166 = vmatpush2.msra.mxu0 0.0
  %2167 = vmatprep.subr.mxu0 0.0
  %2168 = vmatpush2.msra.mxu0 0.0
  %2169 = vmatprep.subr.mxu0 0.0
  %2170 = vmatpush2.msra.mxu0 0.0
  %2171 = vmatprep.subr.mxu0 0.0
  %2172 = vmatpush2.msra.mxu0 0.0
  %2173 = vmatprep.subr.mxu0 0.0
  %2174 = vmatpush2.msra.mxu0 0.0
  %2175 = vmatprep.subr.mxu0 0.0
  %2176 = vmatpush2.msra.mxu0 0.0
  %2177 = vmatprep.subr.mxu0 0.0
  %2178 = vmatpush2.msra.mxu0 0.0
  %2179 = vmatprep.subr.mxu0 0.0
  %2180 = vmatpush2.msra.mxu0 0.0
  %2181 = vmatprep.subr.mxu0 0.0
  %2182 = vmatpush2.msra.mxu0 0.0
  %2183 = vmatprep.subr.mxu0 0.0
  %2184 = vmatpush2.msra.mxu0 0.0
  %2185 = vmatprep.mubr.f32.mxu0 0.0
  %2186 = vmatmul.mubr.f32.gmra.mxu0 %v2048
  %v2187 = vpop.f32.mrf.mxu0
  %v2188 = vadd.f32 0.0, %v2187
  %v2189 = vpop.f32.mrf.mxu0
  %2190 = vdwg.mxu0
  %v2191 = vadd.f32 %v1904, %v2188
  %2192 = vmatprep.subr.mxu0 0.0
  %2193 = vmatpush1.msra.mxu0 0.0
  %2194 = vmatprep.subr.mxu0 0.0
  %2195 = vmatpush1.msra.mxu0 0.0
  %2196 = vmatprep.subr.mxu0 0.0
  %2197 = vmatpush1.msra.mxu0 0.0
  %2198 = vmatprep.subr.mxu0 0.0
  %2199 = vmatpush1.msra.mxu0 0.0
  %2200 = vmatprep.subr.mxu0 0.0
  %2201 = vmatpush1.msra.mxu0 0.0
  %2202 = vmatprep.subr.mxu0 0.0
  %2203 = vmatpush1.msra.mxu0 0.0
  %2204 = vmatprep.subr.mxu0 0.0
  %2205 = vmatpush1.msra.mxu0 0.0
  %2206 = vmatprep.subr.mxu0 0.0
  %2207 = vmatpush1.msra.mxu0 0.0
  %2208 = vmatprep.subr.mxu0 0.0
  %2209 = vmatpush1.msra.mxu0 0.0
  %2210 = vmatprep.subr.mxu0 0.0
  %2211 = vmatpush1.msra.mxu0 0.0
  %2212 = vmatprep.subr.mxu0 0.0
  %2213 = vmatpush1.msra.mxu0 0.0
  %2214 = vmatprep.subr.mxu0 0.0
  %2215 = vmatpush1.msra.mxu0 0.0
  %2216 = vmatprep.subr.mxu0 0.0
  %2217 = vmatpush1.msra.mxu0 0.0
  %2218 = vmatprep.subr.mxu0 0.0
  %2219 = vmatpush1.msra.mxu0 0.0
  %2220 = vmatprep.subr.mxu0 0.0
  %2221 = vmatpush1.msra.mxu0 %v40
  %2222 = vmatprep.subr.mxu0 0.0
  %2223 = vmatpush1.msra.mxu0 %v39
  %2224 = vmatprep.subr.mxu0 0.0
  %2225 = vmatpush2.msra.mxu0 0.0
  %2226 = vmatprep.subr.mxu0 0.0
  %2227 = vmatpush2.msra.mxu0 0.0
  %2228 = vmatprep.subr.mxu0 0.0
  %2229 = vmatpush2.msra.mxu0 0.0
  %2230 = vmatprep.subr.mxu0 0.0
  %2231 = vmatpush2.msra.mxu0 0.0
  %2232 = vmatprep.subr.mxu0 0.0
  %2233 = vmatpush2.msra.mxu0 0.0
  %2234 = vmatprep.subr.mxu0 0.0
  %2235 = vmatpush2.msra.mxu0 0.0
  %2236 = vmatprep.subr.mxu0 0.0
  %2237 = vmatpush2.msra.mxu0 0.0
  %2238 = vmatprep.subr.mxu0 0.0
  %2239 = vmatpush2.msra.mxu0 0.0
  %2240 = vmatprep.subr.mxu0 0.0
  %2241 = vmatpush2.msra.mxu0 0.0
  %2242 = vmatprep.subr.mxu0 0.0
  %2243 = vmatpush2.msra.mxu0 0.0
  %2244 = vmatprep.subr.mxu0 0.0
  %2245 = vmatpush2.msra.mxu0 0.0
  %2246 = vmatprep.subr.mxu0 0.0
  %2247 = vmatpush2.msra.mxu0 0.0
  %2248 = vmatprep.subr.mxu0 0.0
  %2249 = vmatpush2.msra.mxu0 0.0
  %2250 = vmatprep.subr.mxu0 0.0
  %2251 = vmatpush2.msra.mxu0 0.0
  %2252 = vmatprep.subr.mxu0 0.0
  %2253 = vmatpush2.msra.mxu0 0.0
  %2254 = vmatprep.subr.mxu0 0.0
  %2255 = vmatpush2.msra.mxu0 0.0
  %2256 = vmatprep.mubr.f32.mxu0 0.0
  %2257 = vmatmul.mubr.f32.gmra.mxu0 %v2048
  %v2258 = vpop.f32.mrf.mxu0
  %v2259 = vadd.f32 0.0, %v2258
  %v2260 = vpop.f32.mrf.mxu0
  %2261 = vdwg.mxu0
  %v2262 = vadd.f32 %v1974, %v2259
  %2263 = vmatprep.subr.mxu0 0.0
  %2264 = vmatpush1.msra.mxu0 0.0
  %2265 = vmatprep.subr.mxu0 0.0
  %2266 = vmatpush1.msra.mxu0 0.0
  %2267 = vmatprep.subr.mxu0 0.0
  %2268 = vmatpush1.msra.mxu0 0.0
  %2269 = vmatprep.subr.mxu0 0.0
  %2270 = vmatpush1.msra.mxu0 0.0
  %2271 = vmatprep.subr.mxu0 0.0
  %2272 = vmatpush1.msra.mxu0 0.0
  %2273 = vmatprep.subr.mxu0 0.0
  %2274 = vmatpush1.msra.mxu0 0.0
  %2275 = vmatprep.subr.mxu0 0.0
  %2276 = vmatpush1.msra.mxu0 0.0
  %2277 = vmatprep.subr.mxu0 0.0
  %2278 = vmatpush1.msra.mxu0 0.0
  %2279 = vmatprep.subr.mxu0 0.0
  %2280 = vmatpush1.msra.mxu0 0.0
  %2281 = vmatprep.subr.mxu0 0.0
  %2282 = vmatpush1.msra.mxu0 0.0
  %2283 = vmatprep.subr.mxu0 0.0
  %2284 = vmatpush1.msra.mxu0 0.0
  %2285 = vmatprep.subr.mxu0 0.0
  %2286 = vmatpush1.msra.mxu0 0.0
  %2287 = vmatprep.subr.mxu0 0.0
  %2288 = vmatpush1.msra.mxu0 0.0
  %2289 = vmatprep.subr.mxu0 0.0
  %2290 = vmatpush1.msra.mxu0 0.0
  %2291 = vmatprep.subr.mxu0 0.0
  %2292 = vmatpush1.msra.mxu0 %v42
  %2293 = vmatprep.subr.mxu0 0.0
  %2294 = vmatpush1.msra.mxu0 %v41
  %2295 = vmatprep.subr.mxu0 0.0
  %2296 = vmatpush2.msra.mxu0 0.0
  %2297 = vmatprep.subr.mxu0 0.0
  %2298 = vmatpush2.msra.mxu0 0.0
  %2299 = vmatprep.subr.mxu0 0.0
  %2300 = vmatpush2.msra.mxu0 0.0
  %2301 = vmatprep.subr.mxu0 0.0
  %2302 = vmatpush2.msra.mxu0 0.0
  %2303 = vmatprep.subr.mxu0 0.0
  %2304 = vmatpush2.msra.mxu0 0.0
  %2305 = vmatprep.subr.mxu0 0.0
  %2306 = vmatpush2.msra.mxu0 0.0
  %2307 = vmatprep.subr.mxu0 0.0
  %2308 = vmatpush2.msra.mxu0 0.0
  %2309 = vmatprep.subr.mxu0 0.0
  %2310 = vmatpush2.msra.mxu0 0.0
  %2311 = vmatprep.subr.mxu0 0.0
  %2312 = vmatpush2.msra.mxu0 0.0
  %2313 = vmatprep.subr.mxu0 0.0
  %2314 = vmatpush2.msra.mxu0 0.0
  %2315 = vmatprep.subr.mxu0 0.0
  %2316 = vmatpush2.msra.mxu0 0.0
  %2317 = vmatprep.subr.mxu0 0.0
  %2318 = vmatpush2.msra.mxu0 0.0
  %2319 = vmatprep.subr.mxu0 0.0
  %2320 = vmatpush2.msra.mxu0 0.0
  %2321 = vmatprep.subr.mxu0 0.0
  %2322 = vmatpush2.msra.mxu0 0.0
  %2323 = vmatprep.subr.mxu0 0.0
  %2324 = vmatpush2.msra.mxu0 0.0
  %2325 = vmatprep.subr.mxu0 0.0
  %2326 = vmatpush2.msra.mxu0 0.0
  %2327 = vmatprep.mubr.f32.mxu0 0.0
  %2328 = vmatmul.mubr.f32.gmra.mxu0 %v2048
  %v2329 = vpop.f32.mrf.mxu0
  %v2330 = vadd.f32 0.0, %v2329
  %v2331 = vpop.f32.mrf.mxu0
  %2332 = vdwg.mxu0
  %v2333 = vadd.f32 %v2044, %v2330
  %v2334 = vxor.u32 %v2120, 2147483648
  %v2335 = vmul.f32 %v2334, 1.442695
  %v2336 = vpow.pop %v2335
  %v2337 = vadd.f32 %v2336, 1.0
  %v2338 = vrcp.pop %v2337
  %v2339 = vmul.f32 1.0, %v2338
  %v2340 = vxor.u32 %v2191, 2147483648
  %v2341 = vmul.f32 %v2340, 1.442695
  %v2342 = vpow.pop %v2341
  %v2343 = vadd.f32 %v2342, 1.0
  %v2344 = vrcp.pop %v2343
  %v2345 = vmul.f32 1.0, %v2344
  %v2346 = vtanh.pop %v2262
  %v2347 = vxor.u32 %v2333, 2147483648
  %v2348 = vmul.f32 %v2347, 1.442695
  %v2349 = vpow.pop %v2348
  %v2350 = vadd.f32 %v2349, 1.0
  %v2351 = vrcp.pop %v2350
  %v2352 = vmul.f32 1.0, %v2351
  %v2353 = vmul.f32 %v2345, %v1447
  %v2354 = vmul.f32 %v2339, %v2346
  %v2355 = vadd.f32 %v2353, %v2354
  %v2356 = vtanh.pop %v2355
  %v2357 = vmul.f32 %v2352, %v2356
  %vm2358 = vcmp.eq.s32.totalorder %v546, 1
  %v2359 = vlaneseq
  %v2360 = vshrl.u32 %v2359, 7
  %v2361 = vsub.s32 7, %v2360
  %v2362 = vrot.slane %v2357, %v2361
  %v2363 = vsel %vm2358, %v2362, %v1455
  %2364 = vmatprep.subr.mxu0 0.0
  %2365 = vmatpush1.msra.mxu0 0.0
  %2366 = vmatprep.subr.mxu0 0.0
  %2367 = vmatpush1.msra.mxu0 0.0
  %2368 = vmatprep.subr.mxu0 0.0
  %2369 = vmatpush1.msra.mxu0 0.0
  %2370 = vmatprep.subr.mxu0 0.0
  %2371 = vmatpush1.msra.mxu0 0.0
  %2372 = vmatprep.subr.mxu0 0.0
  %2373 = vmatpush1.msra.mxu0 0.0
  %2374 = vmatprep.subr.mxu0 0.0
  %2375 = vmatpush1.msra.mxu0 0.0
  %2376 = vmatprep.subr.mxu0 0.0
  %2377 = vmatpush1.msra.mxu0 0.0
  %2378 = vmatprep.subr.mxu0 0.0
  %2379 = vmatpush1.msra.mxu0 0.0
  %2380 = vmatprep.subr.mxu0 0.0
  %2381 = vmatpush1.msra.mxu0 0.0
  %2382 = vmatprep.subr.mxu0 0.0
  %2383 = vmatpush1.msra.mxu0 0.0
  %2384 = vmatprep.subr.mxu0 0.0
  %2385 = vmatpush1.msra.mxu0 0.0
  %2386 = vmatprep.subr.mxu0 0.0
  %2387 = vmatpush1.msra.mxu0 0.0
  %2388 = vmatprep.subr.mxu0 0.0
  %2389 = vmatpush1.msra.mxu0 0.0
  %2390 = vmatprep.subr.mxu0 0.0
  %2391 = vmatpush1.msra.mxu0 0.0
  %2392 = vmatprep.subr.mxu0 0.0
  %2393 = vmatpush1.msra.mxu0 %v16
  %2394 = vmatprep.subr.mxu0 0.0
  %2395 = vmatpush1.msra.mxu0 %v15
  %2396 = vmatprep.subr.mxu0 0.0
  %2397 = vmatpush2.msra.mxu0 0.0
  %2398 = vmatprep.subr.mxu0 0.0
  %2399 = vmatpush2.msra.mxu0 0.0
  %2400 = vmatprep.subr.mxu0 0.0
  %2401 = vmatpush2.msra.mxu0 0.0
  %2402 = vmatprep.subr.mxu0 0.0
  %2403 = vmatpush2.msra.mxu0 0.0
  %2404 = vmatprep.subr.mxu0 0.0
  %2405 = vmatpush2.msra.mxu0 0.0
  %2406 = vmatprep.subr.mxu0 0.0
  %2407 = vmatpush2.msra.mxu0 0.0
  %2408 = vmatprep.subr.mxu0 0.0
  %2409 = vmatpush2.msra.mxu0 0.0
  %2410 = vmatprep.subr.mxu0 0.0
  %2411 = vmatpush2.msra.mxu0 0.0
  %2412 = vmatprep.subr.mxu0 0.0
  %2413 = vmatpush2.msra.mxu0 0.0
  %2414 = vmatprep.subr.mxu0 0.0
  %2415 = vmatpush2.msra.mxu0 0.0
  %2416 = vmatprep.subr.mxu0 0.0
  %2417 = vmatpush2.msra.mxu0 0.0
  %2418 = vmatprep.subr.mxu0 0.0
  %2419 = vmatpush2.msra.mxu0 0.0
  %2420 = vmatprep.subr.mxu0 0.0
  %2421 = vmatpush2.msra.mxu0 0.0
  %2422 = vmatprep.subr.mxu0 0.0
  %2423 = vmatpush2.msra.mxu0 0.0
  %2424 = vmatprep.subr.mxu0 0.0
  %2425 = vmatpush2.msra.mxu0 0.0
  %2426 = vmatprep.subr.mxu0 0.0
  %2427 = vmatpush2.msra.mxu0 0.0
  %2428 = vmatprep.mubr.f32.mxu0 0.0
  %2429 = vmatmul.mubr.f32.gmra.mxu0 %v1765
  %v2430 = vpop.f32.mrf.mxu0
  %v2431 = vadd.f32 0.0, %v2430
  %v2432 = vpop.f32.mrf.mxu0
  %2433 = vdwg.mxu0
  %v2434 = vadd.f32 %v165, %v2431
  %2435 = vmatprep.subr.mxu0 0.0
  %2436 = vmatpush1.msra.mxu0 0.0
  %2437 = vmatprep.subr.mxu0 0.0
  %2438 = vmatpush1.msra.mxu0 0.0
  %2439 = vmatprep.subr.mxu0 0.0
  %2440 = vmatpush1.msra.mxu0 0.0
  %2441 = vmatprep.subr.mxu0 0.0
  %2442 = vmatpush1.msra.mxu0 0.0
  %2443 = vmatprep.subr.mxu0 0.0
  %2444 = vmatpush1.msra.mxu0 0.0
  %2445 = vmatprep.subr.mxu0 0.0
  %2446 = vmatpush1.msra.mxu0 0.0
  %2447 = vmatprep.subr.mxu0 0.0
  %2448 = vmatpush1.msra.mxu0 0.0
  %2449 = vmatprep.subr.mxu0 0.0
  %2450 = vmatpush1.msra.mxu0 0.0
  %2451 = vmatprep.subr.mxu0 0.0
  %2452 = vmatpush1.msra.mxu0 0.0
  %2453 = vmatprep.subr.mxu0 0.0
  %2454 = vmatpush1.msra.mxu0 0.0
  %2455 = vmatprep.subr.mxu0 0.0
  %2456 = vmatpush1.msra.mxu0 0.0
  %2457 = vmatprep.subr.mxu0 0.0
  %2458 = vmatpush1.msra.mxu0 0.0
  %2459 = vmatprep.subr.mxu0 0.0
  %2460 = vmatpush1.msra.mxu0 0.0
  %2461 = vmatprep.subr.mxu0 0.0
  %2462 = vmatpush1.msra.mxu0 0.0
  %2463 = vmatprep.subr.mxu0 0.0
  %2464 = vmatpush1.msra.mxu0 %v18
  %2465 = vmatprep.subr.mxu0 0.0
  %2466 = vmatpush1.msra.mxu0 %v17
  %2467 = vmatprep.subr.mxu0 0.0
  %2468 = vmatpush2.msra.mxu0 0.0
  %2469 = vmatprep.subr.mxu0 0.0
  %2470 = vmatpush2.msra.mxu0 0.0
  %2471 = vmatprep.subr.mxu0 0.0
  %2472 = vmatpush2.msra.mxu0 0.0
  %2473 = vmatprep.subr.mxu0 0.0
  %2474 = vmatpush2.msra.mxu0 0.0
  %2475 = vmatprep.subr.mxu0 0.0
  %2476 = vmatpush2.msra.mxu0 0.0
  %2477 = vmatprep.subr.mxu0 0.0
  %2478 = vmatpush2.msra.mxu0 0.0
  %2479 = vmatprep.subr.mxu0 0.0
  %2480 = vmatpush2.msra.mxu0 0.0
  %2481 = vmatprep.subr.mxu0 0.0
  %2482 = vmatpush2.msra.mxu0 0.0
  %2483 = vmatprep.subr.mxu0 0.0
  %2484 = vmatpush2.msra.mxu0 0.0
  %2485 = vmatprep.subr.mxu0 0.0
  %2486 = vmatpush2.msra.mxu0 0.0
  %2487 = vmatprep.subr.mxu0 0.0
  %2488 = vmatpush2.msra.mxu0 0.0
  %2489 = vmatprep.subr.mxu0 0.0
  %2490 = vmatpush2.msra.mxu0 0.0
  %2491 = vmatprep.subr.mxu0 0.0
  %2492 = vmatpush2.msra.mxu0 0.0
  %2493 = vmatprep.subr.mxu0 0.0
  %2494 = vmatpush2.msra.mxu0 0.0
  %2495 = vmatprep.subr.mxu0 0.0
  %2496 = vmatpush2.msra.mxu0 0.0
  %2497 = vmatprep.subr.mxu0 0.0
  %2498 = vmatpush2.msra.mxu0 0.0
  %2499 = vmatprep.mubr.f32.mxu0 0.0
  %2500 = vmatmul.mubr.f32.gmra.mxu0 %v1765
  %v2501 = vpop.f32.mrf.mxu0
  %v2502 = vadd.f32 0.0, %v2501
  %v2503 = vpop.f32.mrf.mxu0
  %2504 = vdwg.mxu0
  %v2505 = vadd.f32 %v277, %v2502
  %2506 = vmatprep.subr.mxu0 0.0
  %2507 = vmatpush1.msra.mxu0 0.0
  %2508 = vmatprep.subr.mxu0 0.0
  %2509 = vmatpush1.msra.mxu0 0.0
  %2510 = vmatprep.subr.mxu0 0.0
  %2511 = vmatpush1.msra.mxu0 0.0
  %2512 = vmatprep.subr.mxu0 0.0
  %2513 = vmatpush1.msra.mxu0 0.0
  %2514 = vmatprep.subr.mxu0 0.0
  %2515 = vmatpush1.msra.mxu0 0.0
  %2516 = vmatprep.subr.mxu0 0.0
  %2517 = vmatpush1.msra.mxu0 0.0
  %2518 = vmatprep.subr.mxu0 0.0
  %2519 = vmatpush1.msra.mxu0 0.0
  %2520 = vmatprep.subr.mxu0 0.0
  %2521 = vmatpush1.msra.mxu0 0.0
  %2522 = vmatprep.subr.mxu0 0.0
  %2523 = vmatpush1.msra.mxu0 0.0
  %2524 = vmatprep.subr.mxu0 0.0
  %2525 = vmatpush1.msra.mxu0 0.0
  %2526 = vmatprep.subr.mxu0 0.0
  %2527 = vmatpush1.msra.mxu0 0.0
  %2528 = vmatprep.subr.mxu0 0.0
  %2529 = vmatpush1.msra.mxu0 0.0
  %2530 = vmatprep.subr.mxu0 0.0
  %2531 = vmatpush1.msra.mxu0 0.0
  %2532 = vmatprep.subr.mxu0 0.0
  %2533 = vmatpush1.msra.mxu0 0.0
  %2534 = vmatprep.subr.mxu0 0.0
  %2535 = vmatpush1.msra.mxu0 %v20
  %2536 = vmatprep.subr.mxu0 0.0
  %2537 = vmatpush1.msra.mxu0 %v19
  %2538 = vmatprep.subr.mxu0 0.0
  %2539 = vmatpush2.msra.mxu0 0.0
  %2540 = vmatprep.subr.mxu0 0.0
  %2541 = vmatpush2.msra.mxu0 0.0
  %2542 = vmatprep.subr.mxu0 0.0
  %2543 = vmatpush2.msra.mxu0 0.0
  %2544 = vmatprep.subr.mxu0 0.0
  %2545 = vmatpush2.msra.mxu0 0.0
  %2546 = vmatprep.subr.mxu0 0.0
  %2547 = vmatpush2.msra.mxu0 0.0
  %2548 = vmatprep.subr.mxu0 0.0
  %2549 = vmatpush2.msra.mxu0 0.0
  %2550 = vmatprep.subr.mxu0 0.0
  %2551 = vmatpush2.msra.mxu0 0.0
  %2552 = vmatprep.subr.mxu0 0.0
  %2553 = vmatpush2.msra.mxu0 0.0
  %2554 = vmatprep.subr.mxu0 0.0
  %2555 = vmatpush2.msra.mxu0 0.0
  %2556 = vmatprep.subr.mxu0 0.0
  %2557 = vmatpush2.msra.mxu0 0.0
  %2558 = vmatprep.subr.mxu0 0.0
  %2559 = vmatpush2.msra.mxu0 0.0
  %2560 = vmatprep.subr.mxu0 0.0
  %2561 = vmatpush2.msra.mxu0 0.0
  %2562 = vmatprep.subr.mxu0 0.0
  %2563 = vmatpush2.msra.mxu0 0.0
  %2564 = vmatprep.subr.mxu0 0.0
  %2565 = vmatpush2.msra.mxu0 0.0
  %2566 = vmatprep.subr.mxu0 0.0
  %2567 = vmatpush2.msra.mxu0 0.0
  %2568 = vmatprep.subr.mxu0 0.0
  %2569 = vmatpush2.msra.mxu0 0.0
  %2570 = vmatprep.mubr.f32.mxu0 0.0
  %2571 = vmatmul.mubr.f32.gmra.mxu0 %v1765
  %v2572 = vpop.f32.mrf.mxu0
  %v2573 = vadd.f32 0.0, %v2572
  %v2574 = vpop.f32.mrf.mxu0
  %2575 = vdwg.mxu0
  %v2576 = vadd.f32 %v389, %v2573
  %2577 = vmatprep.subr.mxu0 0.0
  %2578 = vmatpush1.msra.mxu0 0.0
  %2579 = vmatprep.subr.mxu0 0.0
  %2580 = vmatpush1.msra.mxu0 0.0
  %2581 = vmatprep.subr.mxu0 0.0
  %2582 = vmatpush1.msra.mxu0 0.0
  %2583 = vmatprep.subr.mxu0 0.0
  %2584 = vmatpush1.msra.mxu0 0.0
  %2585 = vmatprep.subr.mxu0 0.0
  %2586 = vmatpush1.msra.mxu0 0.0
  %2587 = vmatprep.subr.mxu0 0.0
  %2588 = vmatpush1.msra.mxu0 0.0
  %2589 = vmatprep.subr.mxu0 0.0
  %2590 = vmatpush1.msra.mxu0 0.0
  %2591 = vmatprep.subr.mxu0 0.0
  %2592 = vmatpush1.msra.mxu0 0.0
  %2593 = vmatprep.subr.mxu0 0.0
  %2594 = vmatpush1.msra.mxu0 0.0
  %2595 = vmatprep.subr.mxu0 0.0
  %2596 = vmatpush1.msra.mxu0 0.0
  %2597 = vmatprep.subr.mxu0 0.0
  %2598 = vmatpush1.msra.mxu0 0.0
  %2599 = vmatprep.subr.mxu0 0.0
  %2600 = vmatpush1.msra.mxu0 0.0
  %2601 = vmatprep.subr.mxu0 0.0
  %2602 = vmatpush1.msra.mxu0 0.0
  %2603 = vmatprep.subr.mxu0 0.0
  %2604 = vmatpush1.msra.mxu0 0.0
  %2605 = vmatprep.subr.mxu0 0.0
  %2606 = vmatpush1.msra.mxu0 %v22
  %2607 = vmatprep.subr.mxu0 0.0
  %2608 = vmatpush1.msra.mxu0 %v21
  %2609 = vmatprep.subr.mxu0 0.0
  %2610 = vmatpush2.msra.mxu0 0.0
  %2611 = vmatprep.subr.mxu0 0.0
  %2612 = vmatpush2.msra.mxu0 0.0
  %2613 = vmatprep.subr.mxu0 0.0
  %2614 = vmatpush2.msra.mxu0 0.0
  %2615 = vmatprep.subr.mxu0 0.0
  %2616 = vmatpush2.msra.mxu0 0.0
  %2617 = vmatprep.subr.mxu0 0.0
  %2618 = vmatpush2.msra.mxu0 0.0
  %2619 = vmatprep.subr.mxu0 0.0
  %2620 = vmatpush2.msra.mxu0 0.0
  %2621 = vmatprep.subr.mxu0 0.0
  %2622 = vmatpush2.msra.mxu0 0.0
  %2623 = vmatprep.subr.mxu0 0.0
  %2624 = vmatpush2.msra.mxu0 0.0
  %2625 = vmatprep.subr.mxu0 0.0
  %2626 = vmatpush2.msra.mxu0 0.0
  %2627 = vmatprep.subr.mxu0 0.0
  %2628 = vmatpush2.msra.mxu0 0.0
  %2629 = vmatprep.subr.mxu0 0.0
  %2630 = vmatpush2.msra.mxu0 0.0
  %2631 = vmatprep.subr.mxu0 0.0
  %2632 = vmatpush2.msra.mxu0 0.0
  %2633 = vmatprep.subr.mxu0 0.0
  %2634 = vmatpush2.msra.mxu0 0.0
  %2635 = vmatprep.subr.mxu0 0.0
  %2636 = vmatpush2.msra.mxu0 0.0
  %2637 = vmatprep.subr.mxu0 0.0
  %2638 = vmatpush2.msra.mxu0 0.0
  %2639 = vmatprep.subr.mxu0 0.0
  %2640 = vmatpush2.msra.mxu0 0.0
  %2641 = vmatprep.mubr.f32.mxu0 0.0
  %2642 = vmatmul.mubr.f32.gmra.mxu0 %v1765
  %v2643 = vpop.f32.mrf.mxu0
  %v2644 = vadd.f32 0.0, %v2643
  %v2645 = vpop.f32.mrf.mxu0
  %2646 = vdwg.mxu0
  %v2647 = vadd.f32 %v501, %v2644
  %v2648 = vxor.u32 %v2434, 2147483648
  %v2649 = vmul.f32 %v2648, 1.442695
  %v2650 = vpow.pop %v2649
  %v2651 = vadd.f32 %v2650, 1.0
  %v2652 = vrcp.pop %v2651
  %v2653 = vmul.f32 1.0, %v2652
  %v2654 = vxor.u32 %v2505, 2147483648
  %v2655 = vmul.f32 %v2654, 1.442695
  %v2656 = vpow.pop %v2655
  %v2657 = vadd.f32 %v2656, 1.0
  %v2658 = vrcp.pop %v2657
  %v2659 = vmul.f32 1.0, %v2658
  %v2660 = vtanh.pop %v2576
  %v2661 = vxor.u32 %v2647, 2147483648
  %v2662 = vmul.f32 %v2661, 1.442695
  %v2663 = vpow.pop %v2662
  %v2664 = vadd.f32 %v2663, 1.0
  %v2665 = vrcp.pop %v2664
  %v2666 = vmul.f32 1.0, %v2665
  %v2667 = vmul.f32 %v2659, %v1761
  %v2668 = vmul.f32 %v2653, %v2660
  %v2669 = vadd.f32 %v2667, %v2668
  %v2670 = vtanh.pop %v2669
  %v2671 = vmul.f32 %v2666, %v2670
  %v2673 = vsel %vm547, %v2671, 0
  %2675 = vmatprep.subr.mxu0 0.0
  %2676 = vmatpush1.msra.mxu0 0.0
  %2677 = vmatprep.subr.mxu0 0.0
  %2678 = vmatpush1.msra.mxu0 0.0
  %2679 = vmatprep.subr.mxu0 0.0
  %2680 = vmatpush1.msra.mxu0 0.0
  %2681 = vmatprep.subr.mxu0 0.0
  %2682 = vmatpush1.msra.mxu0 0.0
  %2683 = vmatprep.subr.mxu0 0.0
  %2684 = vmatpush1.msra.mxu0 0.0
  %2685 = vmatprep.subr.mxu0 0.0
  %2686 = vmatpush1.msra.mxu0 0.0
  %2687 = vmatprep.subr.mxu0 0.0
  %2688 = vmatpush1.msra.mxu0 0.0
  %2689 = vmatprep.subr.mxu0 0.0
  %2690 = vmatpush1.msra.mxu0 0.0
  %2691 = vmatprep.subr.mxu0 0.0
  %2692 = vmatpush1.msra.mxu0 0.0
  %2693 = vmatprep.subr.mxu0 0.0
  %2694 = vmatpush1.msra.mxu0 0.0
  %2695 = vmatprep.subr.mxu0 0.0
  %2696 = vmatpush1.msra.mxu0 0.0
  %2697 = vmatprep.subr.mxu0 0.0
  %2698 = vmatpush1.msra.mxu0 0.0
  %2699 = vmatprep.subr.mxu0 0.0
  %2700 = vmatpush1.msra.mxu0 0.0
  %2701 = vmatprep.subr.mxu0 0.0
  %2702 = vmatpush1.msra.mxu0 0.0
  %2703 = vmatprep.subr.mxu0 0.0
  %2704 = vmatpush1.msra.mxu0 %v28
  %2705 = vmatprep.subr.mxu0 0.0
  %2706 = vmatpush1.msra.mxu0 %v27
  %2707 = vmatprep.subr.mxu0 0.0
  %2708 = vmatpush2.msra.mxu0 0.0
  %2709 = vmatprep.subr.mxu0 0.0
  %2710 = vmatpush2.msra.mxu0 0.0
  %2711 = vmatprep.subr.mxu0 0.0
  %2712 = vmatpush2.msra.mxu0 0.0
  %2713 = vmatprep.subr.mxu0 0.0
  %2714 = vmatpush2.msra.mxu0 0.0
  %2715 = vmatprep.subr.mxu0 0.0
  %2716 = vmatpush2.msra.mxu0 0.0
  %2717 = vmatprep.subr.mxu0 0.0
  %2718 = vmatpush2.msra.mxu0 0.0
  %2719 = vmatprep.subr.mxu0 0.0
  %2720 = vmatpush2.msra.mxu0 0.0
  %2721 = vmatprep.subr.mxu0 0.0
  %2722 = vmatpush2.msra.mxu0 0.0
  %2723 = vmatprep.subr.mxu0 0.0
  %2724 = vmatpush2.msra.mxu0 0.0
  %2725 = vmatprep.subr.mxu0 0.0
  %2726 = vmatpush2.msra.mxu0 0.0
  %2727 = vmatprep.subr.mxu0 0.0
  %2728 = vmatpush2.msra.mxu0 0.0
  %2729 = vmatprep.subr.mxu0 0.0
  %2730 = vmatpush2.msra.mxu0 0.0
  %2731 = vmatprep.subr.mxu0 0.0
  %2732 = vmatpush2.msra.mxu0 0.0
  %2733 = vmatprep.subr.mxu0 0.0
  %2734 = vmatpush2.msra.mxu0 0.0
  %2735 = vmatprep.subr.mxu0 0.0
  %2736 = vmatpush2.msra.mxu0 0.0
  %2737 = vmatprep.subr.mxu0 0.0
  %2738 = vmatpush2.msra.mxu0 0.0
  %2739 = vmatprep.mubr.f32.mxu0 0.0
  %2740 = vmatmul.mubr.f32.gmra.mxu0 %v2673
  %v2741 = vpop.f32.mrf.mxu0
  %v2742 = vadd.f32 %v532, %v2741
  %v2743 = vpop.f32.mrf.mxu0
  %2744 = vdwg.mxu0
  %2745 = vmatprep.subr.mxu0 0.0
  %2746 = vmatpush1.msra.mxu0 0.0
  %2747 = vmatprep.subr.mxu0 0.0
  %2748 = vmatpush1.msra.mxu0 0.0
  %2749 = vmatprep.subr.mxu0 0.0
  %2750 = vmatpush1.msra.mxu0 0.0
  %2751 = vmatprep.subr.mxu0 0.0
  %2752 = vmatpush1.msra.mxu0 0.0
  %2753 = vmatprep.subr.mxu0 0.0
  %2754 = vmatpush1.msra.mxu0 0.0
  %2755 = vmatprep.subr.mxu0 0.0
  %2756 = vmatpush1.msra.mxu0 0.0
  %2757 = vmatprep.subr.mxu0 0.0
  %2758 = vmatpush1.msra.mxu0 0.0
  %2759 = vmatprep.subr.mxu0 0.0
  %2760 = vmatpush1.msra.mxu0 0.0
  %2761 = vmatprep.subr.mxu0 0.0
  %2762 = vmatpush1.msra.mxu0 0.0
  %2763 = vmatprep.subr.mxu0 0.0
  %2764 = vmatpush1.msra.mxu0 0.0
  %2765 = vmatprep.subr.mxu0 0.0
  %2766 = vmatpush1.msra.mxu0 0.0
  %2767 = vmatprep.subr.mxu0 0.0
  %2768 = vmatpush1.msra.mxu0 0.0
  %2769 = vmatprep.subr.mxu0 0.0
  %2770 = vmatpush1.msra.mxu0 0.0
  %2771 = vmatprep.subr.mxu0 0.0
  %2772 = vmatpush1.msra.mxu0 0.0
  %2773 = vmatprep.subr.mxu0 0.0
  %2774 = vmatpush1.msra.mxu0 %v30
  %2775 = vmatprep.subr.mxu0 0.0
  %2776 = vmatpush1.msra.mxu0 %v29
  %2777 = vmatprep.subr.mxu0 0.0
  %2778 = vmatpush2.msra.mxu0 0.0
  %2779 = vmatprep.subr.mxu0 0.0
  %2780 = vmatpush2.msra.mxu0 0.0
  %2781 = vmatprep.subr.mxu0 0.0
  %2782 = vmatpush2.msra.mxu0 0.0
  %2783 = vmatprep.subr.mxu0 0.0
  %2784 = vmatpush2.msra.mxu0 0.0
  %2785 = vmatprep.subr.mxu0 0.0
  %2786 = vmatpush2.msra.mxu0 0.0
  %2787 = vmatprep.subr.mxu0 0.0
  %2788 = vmatpush2.msra.mxu0 0.0
  %2789 = vmatprep.subr.mxu0 0.0
  %2790 = vmatpush2.msra.mxu0 0.0
  %2791 = vmatprep.subr.mxu0 0.0
  %2792 = vmatpush2.msra.mxu0 0.0
  %2793 = vmatprep.subr.mxu0 0.0
  %2794 = vmatpush2.msra.mxu0 0.0
  %2795 = vmatprep.subr.mxu0 0.0
  %2796 = vmatpush2.msra.mxu0 0.0
  %2797 = vmatprep.subr.mxu0 0.0
  %2798 = vmatpush2.msra.mxu0 0.0
  %2799 = vmatprep.subr.mxu0 0.0
  %2800 = vmatpush2.msra.mxu0 0.0
  %2801 = vmatprep.subr.mxu0 0.0
  %2802 = vmatpush2.msra.mxu0 0.0
  %2803 = vmatprep.subr.mxu0 0.0
  %2804 = vmatpush2.msra.mxu0 0.0
  %2805 = vmatprep.subr.mxu0 0.0
  %2806 = vmatpush2.msra.mxu0 0.0
  %2807 = vmatprep.subr.mxu0 0.0
  %2808 = vmatpush2.msra.mxu0 0.0
  %2809 = vmatprep.mubr.f32.mxu0 0.0
  %2810 = vmatmul.mubr.f32.gmra.mxu0 %v2673
  %v2811 = vpop.f32.mrf.mxu0
  %v2812 = vadd.f32 %v536, %v2811
  %v2813 = vpop.f32.mrf.mxu0
  %2814 = vdwg.mxu0
  %2815 = vmatprep.subr.mxu0 0.0
  %2816 = vmatpush1.msra.mxu0 0.0
  %2817 = vmatprep.subr.mxu0 0.0
  %2818 = vmatpush1.msra.mxu0 0.0
  %2819 = vmatprep.subr.mxu0 0.0
  %2820 = vmatpush1.msra.mxu0 0.0
  %2821 = vmatprep.subr.mxu0 0.0
  %2822 = vmatpush1.msra.mxu0 0.0
  %2823 = vmatprep.subr.mxu0 0.0
  %2824 = vmatpush1.msra.mxu0 0.0
  %2825 = vmatprep.subr.mxu0 0.0
  %2826 = vmatpush1.msra.mxu0 0.0
  %2827 = vmatprep.subr.mxu0 0.0
  %2828 = vmatpush1.msra.mxu0 0.0
  %2829 = vmatprep.subr.mxu0 0.0
  %2830 = vmatpush1.msra.mxu0 0.0
  %2831 = vmatprep.subr.mxu0 0.0
  %2832 = vmatpush1.msra.mxu0 0.0
  %2833 = vmatprep.subr.mxu0 0.0
  %2834 = vmatpush1.msra.mxu0 0.0
  %2835 = vmatprep.subr.mxu0 0.0
  %2836 = vmatpush1.msra.mxu0 0.0
  %2837 = vmatprep.subr.mxu0 0.0
  %2838 = vmatpush1.msra.mxu0 0.0
  %2839 = vmatprep.subr.mxu0 0.0
  %2840 = vmatpush1.msra.mxu0 0.0
  %2841 = vmatprep.subr.mxu0 0.0
  %2842 = vmatpush1.msra.mxu0 0.0
  %2843 = vmatprep.subr.mxu0 0.0
  %2844 = vmatpush1.msra.mxu0 %v32
  %2845 = vmatprep.subr.mxu0 0.0
  %2846 = vmatpush1.msra.mxu0 %v31
  %2847 = vmatprep.subr.mxu0 0.0
  %2848 = vmatpush2.msra.mxu0 0.0
  %2849 = vmatprep.subr.mxu0 0.0
  %2850 = vmatpush2.msra.mxu0 0.0
  %2851 = vmatprep.subr.mxu0 0.0
  %2852 = vmatpush2.msra.mxu0 0.0
  %2853 = vmatprep.subr.mxu0 0.0
  %2854 = vmatpush2.msra.mxu0 0.0
  %2855 = vmatprep.subr.mxu0 0.0
  %2856 = vmatpush2.msra.mxu0 0.0
  %2857 = vmatprep.subr.mxu0 0.0
  %2858 = vmatpush2.msra.mxu0 0.0
  %2859 = vmatprep.subr.mxu0 0.0
  %2860 = vmatpush2.msra.mxu0 0.0
  %2861 = vmatprep.subr.mxu0 0.0
  %2862 = vmatpush2.msra.mxu0 0.0
  %2863 = vmatprep.subr.mxu0 0.0
  %2864 = vmatpush2.msra.mxu0 0.0
  %2865 = vmatprep.subr.mxu0 0.0
  %2866 = vmatpush2.msra.mxu0 0.0
  %2867 = vmatprep.subr.mxu0 0.0
  %2868 = vmatpush2.msra.mxu0 0.0
  %2869 = vmatprep.subr.mxu0 0.0
  %2870 = vmatpush2.msra.mxu0 0.0
  %2871 = vmatprep.subr.mxu0 0.0
  %2872 = vmatpush2.msra.mxu0 0.0
  %2873 = vmatprep.subr.mxu0 0.0
  %2874 = vmatpush2.msra.mxu0 0.0
  %2875 = vmatprep.subr.mxu0 0.0
  %2876 = vmatpush2.msra.mxu0 0.0
  %2877 = vmatprep.subr.mxu0 0.0
  %2878 = vmatpush2.msra.mxu0 0.0
  %2879 = vmatprep.mubr.f32.mxu0 0.0
  %2880 = vmatmul.mubr.f32.gmra.mxu0 %v2673
  %v2881 = vpop.f32.mrf.mxu0
  %v2882 = vadd.f32 %v540, %v2881
  %v2883 = vpop.f32.mrf.mxu0
  %2884 = vdwg.mxu0
  %2885 = vmatprep.subr.mxu0 0.0
  %2886 = vmatpush1.msra.mxu0 0.0
  %2887 = vmatprep.subr.mxu0 0.0
  %2888 = vmatpush1.msra.mxu0 0.0
  %2889 = vmatprep.subr.mxu0 0.0
  %2890 = vmatpush1.msra.mxu0 0.0
  %2891 = vmatprep.subr.mxu0 0.0
  %2892 = vmatpush1.msra.mxu0 0.0
  %2893 = vmatprep.subr.mxu0 0.0
  %2894 = vmatpush1.msra.mxu0 0.0
  %2895 = vmatprep.subr.mxu0 0.0
  %2896 = vmatpush1.msra.mxu0 0.0
  %2897 = vmatprep.subr.mxu0 0.0
  %2898 = vmatpush1.msra.mxu0 0.0
  %2899 = vmatprep.subr.mxu0 0.0
  %2900 = vmatpush1.msra.mxu0 0.0
  %2901 = vmatprep.subr.mxu0 0.0
  %2902 = vmatpush1.msra.mxu0 0.0
  %2903 = vmatprep.subr.mxu0 0.0
  %2904 = vmatpush1.msra.mxu0 0.0
  %2905 = vmatprep.subr.mxu0 0.0
  %2906 = vmatpush1.msra.mxu0 0.0
  %2907 = vmatprep.subr.mxu0 0.0
  %2908 = vmatpush1.msra.mxu0 0.0
  %2909 = vmatprep.subr.mxu0 0.0
  %2910 = vmatpush1.msra.mxu0 0.0
  %2911 = vmatprep.subr.mxu0 0.0
  %2912 = vmatpush1.msra.mxu0 0.0
  %2913 = vmatprep.subr.mxu0 0.0
  %2914 = vmatpush1.msra.mxu0 %v34
  %2915 = vmatprep.subr.mxu0 0.0
  %2916 = vmatpush1.msra.mxu0 %v33
  %2917 = vmatprep.subr.mxu0 0.0
  %2918 = vmatpush2.msra.mxu0 0.0
  %2919 = vmatprep.subr.mxu0 0.0
  %2920 = vmatpush2.msra.mxu0 0.0
  %2921 = vmatprep.subr.mxu0 0.0
  %2922 = vmatpush2.msra.mxu0 0.0
  %2923 = vmatprep.subr.mxu0 0.0
  %2924 = vmatpush2.msra.mxu0 0.0
  %2925 = vmatprep.subr.mxu0 0.0
  %2926 = vmatpush2.msra.mxu0 0.0
  %2927 = vmatprep.subr.mxu0 0.0
  %2928 = vmatpush2.msra.mxu0 0.0
  %2929 = vmatprep.subr.mxu0 0.0
  %2930 = vmatpush2.msra.mxu0 0.0
  %2931 = vmatprep.subr.mxu0 0.0
  %2932 = vmatpush2.msra.mxu0 0.0
  %2933 = vmatprep.subr.mxu0 0.0
  %2934 = vmatpush2.msra.mxu0 0.0
  %2935 = vmatprep.subr.mxu0 0.0
  %2936 = vmatpush2.msra.mxu0 0.0
  %2937 = vmatprep.subr.mxu0 0.0
  %2938 = vmatpush2.msra.mxu0 0.0
  %2939 = vmatprep.subr.mxu0 0.0
  %2940 = vmatpush2.msra.mxu0 0.0
  %2941 = vmatprep.subr.mxu0 0.0
  %2942 = vmatpush2.msra.mxu0 0.0
  %2943 = vmatprep.subr.mxu0 0.0
  %2944 = vmatpush2.msra.mxu0 0.0
  %2945 = vmatprep.subr.mxu0 0.0
  %2946 = vmatpush2.msra.mxu0 0.0
  %2947 = vmatprep.subr.mxu0 0.0
  %2948 = vmatpush2.msra.mxu0 0.0
  %2949 = vmatprep.mubr.f32.mxu0 0.0
  %2950 = vmatmul.mubr.f32.gmra.mxu0 %v2673
  %v2951 = vpop.f32.mrf.mxu0
  %v2952 = vadd.f32 %v544, %v2951
  %v2953 = vpop.f32.mrf.mxu0
  %2954 = vdwg.mxu0
  %v2956 = vsel %vm547, %v2357, 0
  %2958 = vmatprep.subr.mxu0 0.0
  %2959 = vmatpush1.msra.mxu0 0.0
  %2960 = vmatprep.subr.mxu0 0.0
  %2961 = vmatpush1.msra.mxu0 0.0
  %2962 = vmatprep.subr.mxu0 0.0
  %2963 = vmatpush1.msra.mxu0 0.0
  %2964 = vmatprep.subr.mxu0 0.0
  %2965 = vmatpush1.msra.mxu0 0.0
  %2966 = vmatprep.subr.mxu0 0.0
  %2967 = vmatpush1.msra.mxu0 0.0
  %2968 = vmatprep.subr.mxu0 0.0
  %2969 = vmatpush1.msra.mxu0 0.0
  %2970 = vmatprep.subr.mxu0 0.0
  %2971 = vmatpush1.msra.mxu0 0.0
  %2972 = vmatprep.subr.mxu0 0.0
  %2973 = vmatpush1.msra.mxu0 0.0
  %2974 = vmatprep.subr.mxu0 0.0
  %2975 = vmatpush1.msra.mxu0 0.0
  %2976 = vmatprep.subr.mxu0 0.0
  %2977 = vmatpush1.msra.mxu0 0.0
  %2978 = vmatprep.subr.mxu0 0.0
  %2979 = vmatpush1.msra.mxu0 0.0
  %2980 = vmatprep.subr.mxu0 0.0
  %2981 = vmatpush1.msra.mxu0 0.0
  %2982 = vmatprep.subr.mxu0 0.0
  %2983 = vmatpush1.msra.mxu0 0.0
  %2984 = vmatprep.subr.mxu0 0.0
  %2985 = vmatpush1.msra.mxu0 0.0
  %2986 = vmatprep.subr.mxu0 0.0
  %2987 = vmatpush1.msra.mxu0 %v36
  %2988 = vmatprep.subr.mxu0 0.0
  %2989 = vmatpush1.msra.mxu0 %v35
  %2990 = vmatprep.subr.mxu0 0.0
  %2991 = vmatpush2.msra.mxu0 0.0
  %2992 = vmatprep.subr.mxu0 0.0
  %2993 = vmatpush2.msra.mxu0 0.0
  %2994 = vmatprep.subr.mxu0 0.0
  %2995 = vmatpush2.msra.mxu0 0.0
  %2996 = vmatprep.subr.mxu0 0.0
  %2997 = vmatpush2.msra.mxu0 0.0
  %2998 = vmatprep.subr.mxu0 0.0
  %2999 = vmatpush2.msra.mxu0 0.0
  %3000 = vmatprep.subr.mxu0 0.0
  %3001 = vmatpush2.msra.mxu0 0.0
  %3002 = vmatprep.subr.mxu0 0.0
  %3003 = vmatpush2.msra.mxu0 0.0
  %3004 = vmatprep.subr.mxu0 0.0
  %3005 = vmatpush2.msra.mxu0 0.0
  %3006 = vmatprep.subr.mxu0 0.0
  %3007 = vmatpush2.msra.mxu0 0.0
  %3008 = vmatprep.subr.mxu0 0.0
  %3009 = vmatpush2.msra.mxu0 0.0
  %3010 = vmatprep.subr.mxu0 0.0
  %3011 = vmatpush2.msra.mxu0 0.0
  %3012 = vmatprep.subr.mxu0 0.0
  %3013 = vmatpush2.msra.mxu0 0.0
  %3014 = vmatprep.subr.mxu0 0.0
  %3015 = vmatpush2.msra.mxu0 0.0
  %3016 = vmatprep.subr.mxu0 0.0
  %3017 = vmatpush2.msra.mxu0 0.0
  %3018 = vmatprep.subr.mxu0 0.0
  %3019 = vmatpush2.msra.mxu0 0.0
  %3020 = vmatprep.subr.mxu0 0.0
  %3021 = vmatpush2.msra.mxu0 0.0
  %3022 = vmatprep.mubr.f32.mxu0 0.0
  %3023 = vmatmul.mubr.f32.gmra.mxu0 %v2956
  %v3024 = vpop.f32.mrf.mxu0
  %v3025 = vadd.f32 0.0, %v3024
  %v3026 = vpop.f32.mrf.mxu0
  %3027 = vdwg.mxu0
  %v3028 = vadd.f32 %v2742, %v3025
  %3029 = vmatprep.subr.mxu0 0.0
  %3030 = vmatpush1.msra.mxu0 0.0
  %3031 = vmatprep.subr.mxu0 0.0
  %3032 = vmatpush1.msra.mxu0 0.0
  %3033 = vmatprep.subr.mxu0 0.0
  %3034 = vmatpush1.msra.mxu0 0.0
  %3035 = vmatprep.subr.mxu0 0.0
  %3036 = vmatpush1.msra.mxu0 0.0
  %3037 = vmatprep.subr.mxu0 0.0
  %3038 = vmatpush1.msra.mxu0 0.0
  %3039 = vmatprep.subr.mxu0 0.0
  %3040 = vmatpush1.msra.mxu0 0.0
  %3041 = vmatprep.subr.mxu0 0.0
  %3042 = vmatpush1.msra.mxu0 0.0
  %3043 = vmatprep.subr.mxu0 0.0
  %3044 = vmatpush1.msra.mxu0 0.0
  %3045 = vmatprep.subr.mxu0 0.0
  %3046 = vmatpush1.msra.mxu0 0.0
  %3047 = vmatprep.subr.mxu0 0.0
  %3048 = vmatpush1.msra.mxu0 0.0
  %3049 = vmatprep.subr.mxu0 0.0
  %3050 = vmatpush1.msra.mxu0 0.0
  %3051 = vmatprep.subr.mxu0 0.0
  %3052 = vmatpush1.msra.mxu0 0.0
  %3053 = vmatprep.subr.mxu0 0.0
  %3054 = vmatpush1.msra.mxu0 0.0
  %3055 = vmatprep.subr.mxu0 0.0
  %3056 = vmatpush1.msra.mxu0 0.0
  %3057 = vmatprep.subr.mxu0 0.0
  %3058 = vmatpush1.msra.mxu0 %v38
  %3059 = vmatprep.subr.mxu0 0.0
  %3060 = vmatpush1.msra.mxu0 %v37
  %3061 = vmatprep.subr.mxu0 0.0
  %3062 = vmatpush2.msra.mxu0 0.0
  %3063 = vmatprep.subr.mxu0 0.0
  %3064 = vmatpush2.msra.mxu0 0.0
  %3065 = vmatprep.subr.mxu0 0.0
  %3066 = vmatpush2.msra.mxu0 0.0
  %3067 = vmatprep.subr.mxu0 0.0
  %3068 = vmatpush2.msra.mxu0 0.0
  %3069 = vmatprep.subr.mxu0 0.0
  %3070 = vmatpush2.msra.mxu0 0.0
  %3071 = vmatprep.subr.mxu0 0.0
  %3072 = vmatpush2.msra.mxu0 0.0
  %3073 = vmatprep.subr.mxu0 0.0
  %3074 = vmatpush2.msra.mxu0 0.0
  %3075 = vmatprep.subr.mxu0 0.0
  %3076 = vmatpush2.msra.mxu0 0.0
  %3077 = vmatprep.subr.mxu0 0.0
  %3078 = vmatpush2.msra.mxu0 0.0
  %3079 = vmatprep.subr.mxu0 0.0
  %3080 = vmatpush2.msra.mxu0 0.0
  %3081 = vmatprep.subr.mxu0 0.0
  %3082 = vmatpush2.msra.mxu0 0.0
  %3083 = vmatprep.subr.mxu0 0.0
  %3084 = vmatpush2.msra.mxu0 0.0
  %3085 = vmatprep.subr.mxu0 0.0
  %3086 = vmatpush2.msra.mxu0 0.0
  %3087 = vmatprep.subr.mxu0 0.0
  %3088 = vmatpush2.msra.mxu0 0.0
  %3089 = vmatprep.subr.mxu0 0.0
  %3090 = vmatpush2.msra.mxu0 0.0
  %3091 = vmatprep.subr.mxu0 0.0
  %3092 = vmatpush2.msra.mxu0 0.0
  %3093 = vmatprep.mubr.f32.mxu0 0.0
  %3094 = vmatmul.mubr.f32.gmra.mxu0 %v2956
  %v3095 = vpop.f32.mrf.mxu0
  %v3096 = vadd.f32 0.0, %v3095
  %v3097 = vpop.f32.mrf.mxu0
  %3098 = vdwg.mxu0
  %v3099 = vadd.f32 %v2812, %v3096
  %3100 = vmatprep.subr.mxu0 0.0
  %3101 = vmatpush1.msra.mxu0 0.0
  %3102 = vmatprep.subr.mxu0 0.0
  %3103 = vmatpush1.msra.mxu0 0.0
  %3104 = vmatprep.subr.mxu0 0.0
  %3105 = vmatpush1.msra.mxu0 0.0
  %3106 = vmatprep.subr.mxu0 0.0
  %3107 = vmatpush1.msra.mxu0 0.0
  %3108 = vmatprep.subr.mxu0 0.0
  %3109 = vmatpush1.msra.mxu0 0.0
  %3110 = vmatprep.subr.mxu0 0.0
  %3111 = vmatpush1.msra.mxu0 0.0
  %3112 = vmatprep.subr.mxu0 0.0
  %3113 = vmatpush1.msra.mxu0 0.0
  %3114 = vmatprep.subr.mxu0 0.0
  %3115 = vmatpush1.msra.mxu0 0.0
  %3116 = vmatprep.subr.mxu0 0.0
  %3117 = vmatpush1.msra.mxu0 0.0
  %3118 = vmatprep.subr.mxu0 0.0
  %3119 = vmatpush1.msra.mxu0 0.0
  %3120 = vmatprep.subr.mxu0 0.0
  %3121 = vmatpush1.msra.mxu0 0.0
  %3122 = vmatprep.subr.mxu0 0.0
  %3123 = vmatpush1.msra.mxu0 0.0
  %3124 = vmatprep.subr.mxu0 0.0
  %3125 = vmatpush1.msra.mxu0 0.0
  %3126 = vmatprep.subr.mxu0 0.0
  %3127 = vmatpush1.msra.mxu0 0.0
  %3128 = vmatprep.subr.mxu0 0.0
  %3129 = vmatpush1.msra.mxu0 %v40
  %3130 = vmatprep.subr.mxu0 0.0
  %3131 = vmatpush1.msra.mxu0 %v39
  %3132 = vmatprep.subr.mxu0 0.0
  %3133 = vmatpush2.msra.mxu0 0.0
  %3134 = vmatprep.subr.mxu0 0.0
  %3135 = vmatpush2.msra.mxu0 0.0
  %3136 = vmatprep.subr.mxu0 0.0
  %3137 = vmatpush2.msra.mxu0 0.0
  %3138 = vmatprep.subr.mxu0 0.0
  %3139 = vmatpush2.msra.mxu0 0.0
  %3140 = vmatprep.subr.mxu0 0.0
  %3141 = vmatpush2.msra.mxu0 0.0
  %3142 = vmatprep.subr.mxu0 0.0
  %3143 = vmatpush2.msra.mxu0 0.0
  %3144 = vmatprep.subr.mxu0 0.0
  %3145 = vmatpush2.msra.mxu0 0.0
  %3146 = vmatprep.subr.mxu0 0.0
  %3147 = vmatpush2.msra.mxu0 0.0
  %3148 = vmatprep.subr.mxu0 0.0
  %3149 = vmatpush2.msra.mxu0 0.0
  %3150 = vmatprep.subr.mxu0 0.0
  %3151 = vmatpush2.msra.mxu0 0.0
  %3152 = vmatprep.subr.mxu0 0.0
  %3153 = vmatpush2.msra.mxu0 0.0
  %3154 = vmatprep.subr.mxu0 0.0
  %3155 = vmatpush2.msra.mxu0 0.0
  %3156 = vmatprep.subr.mxu0 0.0
  %3157 = vmatpush2.msra.mxu0 0.0
  %3158 = vmatprep.subr.mxu0 0.0
  %3159 = vmatpush2.msra.mxu0 0.0
  %3160 = vmatprep.subr.mxu0 0.0
  %3161 = vmatpush2.msra.mxu0 0.0
  %3162 = vmatprep.subr.mxu0 0.0
  %3163 = vmatpush2.msra.mxu0 0.0
  %3164 = vmatprep.mubr.f32.mxu0 0.0
  %3165 = vmatmul.mubr.f32.gmra.mxu0 %v2956
  %v3166 = vpop.f32.mrf.mxu0
  %v3167 = vadd.f32 0.0, %v3166
  %v3168 = vpop.f32.mrf.mxu0
  %3169 = vdwg.mxu0
  %v3170 = vadd.f32 %v2882, %v3167
  %3171 = vmatprep.subr.mxu0 0.0
  %3172 = vmatpush1.msra.mxu0 0.0
  %3173 = vmatprep.subr.mxu0 0.0
  %3174 = vmatpush1.msra.mxu0 0.0
  %3175 = vmatprep.subr.mxu0 0.0
  %3176 = vmatpush1.msra.mxu0 0.0
  %3177 = vmatprep.subr.mxu0 0.0
  %3178 = vmatpush1.msra.mxu0 0.0
  %3179 = vmatprep.subr.mxu0 0.0
  %3180 = vmatpush1.msra.mxu0 0.0
  %3181 = vmatprep.subr.mxu0 0.0
  %3182 = vmatpush1.msra.mxu0 0.0
  %3183 = vmatprep.subr.mxu0 0.0
  %3184 = vmatpush1.msra.mxu0 0.0
  %3185 = vmatprep.subr.mxu0 0.0
  %3186 = vmatpush1.msra.mxu0 0.0
  %3187 = vmatprep.subr.mxu0 0.0
  %3188 = vmatpush1.msra.mxu0 0.0
  %3189 = vmatprep.subr.mxu0 0.0
  %3190 = vmatpush1.msra.mxu0 0.0
  %3191 = vmatprep.subr.mxu0 0.0
  %3192 = vmatpush1.msra.mxu0 0.0
  %3193 = vmatprep.subr.mxu0 0.0
  %3194 = vmatpush1.msra.mxu0 0.0
  %3195 = vmatprep.subr.mxu0 0.0
  %3196 = vmatpush1.msra.mxu0 0.0
  %3197 = vmatprep.subr.mxu0 0.0
  %3198 = vmatpush1.msra.mxu0 0.0
  %3199 = vmatprep.subr.mxu0 0.0
  %3200 = vmatpush1.msra.mxu0 %v42
  %3201 = vmatprep.subr.mxu0 0.0
  %3202 = vmatpush1.msra.mxu0 %v41
  %3203 = vmatprep.subr.mxu0 0.0
  %3204 = vmatpush2.msra.mxu0 0.0
  %3205 = vmatprep.subr.mxu0 0.0
  %3206 = vmatpush2.msra.mxu0 0.0
  %3207 = vmatprep.subr.mxu0 0.0
  %3208 = vmatpush2.msra.mxu0 0.0
  %3209 = vmatprep.subr.mxu0 0.0
  %3210 = vmatpush2.msra.mxu0 0.0
  %3211 = vmatprep.subr.mxu0 0.0
  %3212 = vmatpush2.msra.mxu0 0.0
  %3213 = vmatprep.subr.mxu0 0.0
  %3214 = vmatpush2.msra.mxu0 0.0
  %3215 = vmatprep.subr.mxu0 0.0
  %3216 = vmatpush2.msra.mxu0 0.0
  %3217 = vmatprep.subr.mxu0 0.0
  %3218 = vmatpush2.msra.mxu0 0.0
  %3219 = vmatprep.subr.mxu0 0.0
  %3220 = vmatpush2.msra.mxu0 0.0
  %3221 = vmatprep.subr.mxu0 0.0
  %3222 = vmatpush2.msra.mxu0 0.0
  %3223 = vmatprep.subr.mxu0 0.0
  %3224 = vmatpush2.msra.mxu0 0.0
  %3225 = vmatprep.subr.mxu0 0.0
  %3226 = vmatpush2.msra.mxu0 0.0
  %3227 = vmatprep.subr.mxu0 0.0
  %3228 = vmatpush2.msra.mxu0 0.0
  %3229 = vmatprep.subr.mxu0 0.0
  %3230 = vmatpush2.msra.mxu0 0.0
  %3231 = vmatprep.subr.mxu0 0.0
  %3232 = vmatpush2.msra.mxu0 0.0
  %3233 = vmatprep.subr.mxu0 0.0
  %3234 = vmatpush2.msra.mxu0 0.0
  %3235 = vmatprep.mubr.f32.mxu0 0.0
  %3236 = vmatmul.mubr.f32.gmra.mxu0 %v2956
  %v3237 = vpop.f32.mrf.mxu0
  %v3238 = vadd.f32 0.0, %v3237
  %v3239 = vpop.f32.mrf.mxu0
  %3240 = vdwg.mxu0
  %v3241 = vadd.f32 %v2952, %v3238
  %v3242 = vxor.u32 %v3028, 2147483648
  %v3243 = vmul.f32 %v3242, 1.442695
  %v3244 = vpow.pop %v3243
  %v3245 = vadd.f32 %v3244, 1.0
  %v3246 = vrcp.pop %v3245
  %v3247 = vmul.f32 1.0, %v3246
  %v3248 = vxor.u32 %v3099, 2147483648
  %v3249 = vmul.f32 %v3248, 1.442695
  %v3250 = vpow.pop %v3249
  %v3251 = vadd.f32 %v3250, 1.0
  %v3252 = vrcp.pop %v3251
  %v3253 = vmul.f32 1.0, %v3252
  %v3254 = vtanh.pop %v3170
  %v3255 = vxor.u32 %v3241, 2147483648
  %v3256 = vmul.f32 %v3255, 1.442695
  %v3257 = vpow.pop %v3256
  %v3258 = vadd.f32 %v3257, 1.0
  %v3259 = vrcp.pop %v3258
  %v3260 = vmul.f32 1.0, %v3259
  %v3261 = vmul.f32 %v3253, %v2355
  %v3262 = vmul.f32 %v3247, %v3254
  %v3263 = vadd.f32 %v3261, %v3262
  %v3264 = vtanh.pop %v3263
  %v3265 = vmul.f32 %v3260, %v3264
  %vm3266 = vcmp.eq.s32.totalorder %v546, 2
  %v3267 = vlaneseq
  %v3268 = vshrl.u32 %v3267, 7
  %v3269 = vsub.s32 7, %v3268
  %v3270 = vrot.slane %v3265, %v3269
  %v3271 = vsel %vm3266, %v3270, %v2363
  %3272 = vmatprep.subr.mxu0 0.0
  %3273 = vmatpush1.msra.mxu0 0.0
  %3274 = vmatprep.subr.mxu0 0.0
  %3275 = vmatpush1.msra.mxu0 0.0
  %3276 = vmatprep.subr.mxu0 0.0
  %3277 = vmatpush1.msra.mxu0 0.0
  %3278 = vmatprep.subr.mxu0 0.0
  %3279 = vmatpush1.msra.mxu0 0.0
  %3280 = vmatprep.subr.mxu0 0.0
  %3281 = vmatpush1.msra.mxu0 0.0
  %3282 = vmatprep.subr.mxu0 0.0
  %3283 = vmatpush1.msra.mxu0 0.0
  %3284 = vmatprep.subr.mxu0 0.0
  %3285 = vmatpush1.msra.mxu0 0.0
  %3286 = vmatprep.subr.mxu0 0.0
  %3287 = vmatpush1.msra.mxu0 0.0
  %3288 = vmatprep.subr.mxu0 0.0
  %3289 = vmatpush1.msra.mxu0 0.0
  %3290 = vmatprep.subr.mxu0 0.0
  %3291 = vmatpush1.msra.mxu0 0.0
  %3292 = vmatprep.subr.mxu0 0.0
  %3293 = vmatpush1.msra.mxu0 0.0
  %3294 = vmatprep.subr.mxu0 0.0
  %3295 = vmatpush1.msra.mxu0 0.0
  %3296 = vmatprep.subr.mxu0 0.0
  %3297 = vmatpush1.msra.mxu0 0.0
  %3298 = vmatprep.subr.mxu0 0.0
  %3299 = vmatpush1.msra.mxu0 0.0
  %3300 = vmatprep.subr.mxu0 0.0
  %3301 = vmatpush1.msra.mxu0 %v16
  %3302 = vmatprep.subr.mxu0 0.0
  %3303 = vmatpush1.msra.mxu0 %v15
  %3304 = vmatprep.subr.mxu0 0.0
  %3305 = vmatpush2.msra.mxu0 0.0
  %3306 = vmatprep.subr.mxu0 0.0
  %3307 = vmatpush2.msra.mxu0 0.0
  %3308 = vmatprep.subr.mxu0 0.0
  %3309 = vmatpush2.msra.mxu0 0.0
  %3310 = vmatprep.subr.mxu0 0.0
  %3311 = vmatpush2.msra.mxu0 0.0
  %3312 = vmatprep.subr.mxu0 0.0
  %3313 = vmatpush2.msra.mxu0 0.0
  %3314 = vmatprep.subr.mxu0 0.0
  %3315 = vmatpush2.msra.mxu0 0.0
  %3316 = vmatprep.subr.mxu0 0.0
  %3317 = vmatpush2.msra.mxu0 0.0
  %3318 = vmatprep.subr.mxu0 0.0
  %3319 = vmatpush2.msra.mxu0 0.0
  %3320 = vmatprep.subr.mxu0 0.0
  %3321 = vmatpush2.msra.mxu0 0.0
  %3322 = vmatprep.subr.mxu0 0.0
  %3323 = vmatpush2.msra.mxu0 0.0
  %3324 = vmatprep.subr.mxu0 0.0
  %3325 = vmatpush2.msra.mxu0 0.0
  %3326 = vmatprep.subr.mxu0 0.0
  %3327 = vmatpush2.msra.mxu0 0.0
  %3328 = vmatprep.subr.mxu0 0.0
  %3329 = vmatpush2.msra.mxu0 0.0
  %3330 = vmatprep.subr.mxu0 0.0
  %3331 = vmatpush2.msra.mxu0 0.0
  %3332 = vmatprep.subr.mxu0 0.0
  %3333 = vmatpush2.msra.mxu0 0.0
  %3334 = vmatprep.subr.mxu0 0.0
  %3335 = vmatpush2.msra.mxu0 0.0
  %3336 = vmatprep.mubr.f32.mxu0 0.0
  %3337 = vmatmul.mubr.f32.gmra.mxu0 %v2673
  %v3338 = vpop.f32.mrf.mxu0
  %v3339 = vadd.f32 0.0, %v3338
  %v3340 = vpop.f32.mrf.mxu0
  %3341 = vdwg.mxu0
  %v3342 = vadd.f32 %v170, %v3339
  %3343 = vmatprep.subr.mxu0 0.0
  %3344 = vmatpush1.msra.mxu0 0.0
  %3345 = vmatprep.subr.mxu0 0.0
  %3346 = vmatpush1.msra.mxu0 0.0
  %3347 = vmatprep.subr.mxu0 0.0
  %3348 = vmatpush1.msra.mxu0 0.0
  %3349 = vmatprep.subr.mxu0 0.0
  %3350 = vmatpush1.msra.mxu0 0.0
  %3351 = vmatprep.subr.mxu0 0.0
  %3352 = vmatpush1.msra.mxu0 0.0
  %3353 = vmatprep.subr.mxu0 0.0
  %3354 = vmatpush1.msra.mxu0 0.0
  %3355 = vmatprep.subr.mxu0 0.0
  %3356 = vmatpush1.msra.mxu0 0.0
  %3357 = vmatprep.subr.mxu0 0.0
  %3358 = vmatpush1.msra.mxu0 0.0
  %3359 = vmatprep.subr.mxu0 0.0
  %3360 = vmatpush1.msra.mxu0 0.0
  %3361 = vmatprep.subr.mxu0 0.0
  %3362 = vmatpush1.msra.mxu0 0.0
  %3363 = vmatprep.subr.mxu0 0.0
  %3364 = vmatpush1.msra.mxu0 0.0
  %3365 = vmatprep.subr.mxu0 0.0
  %3366 = vmatpush1.msra.mxu0 0.0
  %3367 = vmatprep.subr.mxu0 0.0
  %3368 = vmatpush1.msra.mxu0 0.0
  %3369 = vmatprep.subr.mxu0 0.0
  %3370 = vmatpush1.msra.mxu0 0.0
  %3371 = vmatprep.subr.mxu0 0.0
  %3372 = vmatpush1.msra.mxu0 %v18
  %3373 = vmatprep.subr.mxu0 0.0
  %3374 = vmatpush1.msra.mxu0 %v17
  %3375 = vmatprep.subr.mxu0 0.0
  %3376 = vmatpush2.msra.mxu0 0.0
  %3377 = vmatprep.subr.mxu0 0.0
  %3378 = vmatpush2.msra.mxu0 0.0
  %3379 = vmatprep.subr.mxu0 0.0
  %3380 = vmatpush2.msra.mxu0 0.0
  %3381 = vmatprep.subr.mxu0 0.0
  %3382 = vmatpush2.msra.mxu0 0.0
  %3383 = vmatprep.subr.mxu0 0.0
  %3384 = vmatpush2.msra.mxu0 0.0
  %3385 = vmatprep.subr.mxu0 0.0
  %3386 = vmatpush2.msra.mxu0 0.0
  %3387 = vmatprep.subr.mxu0 0.0
  %3388 = vmatpush2.msra.mxu0 0.0
  %3389 = vmatprep.subr.mxu0 0.0
  %3390 = vmatpush2.msra.mxu0 0.0
  %3391 = vmatprep.subr.mxu0 0.0
  %3392 = vmatpush2.msra.mxu0 0.0
  %3393 = vmatprep.subr.mxu0 0.0
  %3394 = vmatpush2.msra.mxu0 0.0
  %3395 = vmatprep.subr.mxu0 0.0
  %3396 = vmatpush2.msra.mxu0 0.0
  %3397 = vmatprep.subr.mxu0 0.0
  %3398 = vmatpush2.msra.mxu0 0.0
  %3399 = vmatprep.subr.mxu0 0.0
  %3400 = vmatpush2.msra.mxu0 0.0
  %3401 = vmatprep.subr.mxu0 0.0
  %3402 = vmatpush2.msra.mxu0 0.0
  %3403 = vmatprep.subr.mxu0 0.0
  %3404 = vmatpush2.msra.mxu0 0.0
  %3405 = vmatprep.subr.mxu0 0.0
  %3406 = vmatpush2.msra.mxu0 0.0
  %3407 = vmatprep.mubr.f32.mxu0 0.0
  %3408 = vmatmul.mubr.f32.gmra.mxu0 %v2673
  %v3409 = vpop.f32.mrf.mxu0
  %v3410 = vadd.f32 0.0, %v3409
  %v3411 = vpop.f32.mrf.mxu0
  %3412 = vdwg.mxu0
  %v3413 = vadd.f32 %v282, %v3410
  %3414 = vmatprep.subr.mxu0 0.0
  %3415 = vmatpush1.msra.mxu0 0.0
  %3416 = vmatprep.subr.mxu0 0.0
  %3417 = vmatpush1.msra.mxu0 0.0
  %3418 = vmatprep.subr.mxu0 0.0
  %3419 = vmatpush1.msra.mxu0 0.0
  %3420 = vmatprep.subr.mxu0 0.0
  %3421 = vmatpush1.msra.mxu0 0.0
  %3422 = vmatprep.subr.mxu0 0.0
  %3423 = vmatpush1.msra.mxu0 0.0
  %3424 = vmatprep.subr.mxu0 0.0
  %3425 = vmatpush1.msra.mxu0 0.0
  %3426 = vmatprep.subr.mxu0 0.0
  %3427 = vmatpush1.msra.mxu0 0.0
  %3428 = vmatprep.subr.mxu0 0.0
  %3429 = vmatpush1.msra.mxu0 0.0
  %3430 = vmatprep.subr.mxu0 0.0
  %3431 = vmatpush1.msra.mxu0 0.0
  %3432 = vmatprep.subr.mxu0 0.0
  %3433 = vmatpush1.msra.mxu0 0.0
  %3434 = vmatprep.subr.mxu0 0.0
  %3435 = vmatpush1.msra.mxu0 0.0
  %3436 = vmatprep.subr.mxu0 0.0
  %3437 = vmatpush1.msra.mxu0 0.0
  %3438 = vmatprep.subr.mxu0 0.0
  %3439 = vmatpush1.msra.mxu0 0.0
  %3440 = vmatprep.subr.mxu0 0.0
  %3441 = vmatpush1.msra.mxu0 0.0
  %3442 = vmatprep.subr.mxu0 0.0
  %3443 = vmatpush1.msra.mxu0 %v20
  %3444 = vmatprep.subr.mxu0 0.0
  %3445 = vmatpush1.msra.mxu0 %v19
  %3446 = vmatprep.subr.mxu0 0.0
  %3447 = vmatpush2.msra.mxu0 0.0
  %3448 = vmatprep.subr.mxu0 0.0
  %3449 = vmatpush2.msra.mxu0 0.0
  %3450 = vmatprep.subr.mxu0 0.0
  %3451 = vmatpush2.msra.mxu0 0.0
  %3452 = vmatprep.subr.mxu0 0.0
  %3453 = vmatpush2.msra.mxu0 0.0
  %3454 = vmatprep.subr.mxu0 0.0
  %3455 = vmatpush2.msra.mxu0 0.0
  %3456 = vmatprep.subr.mxu0 0.0
  %3457 = vmatpush2.msra.mxu0 0.0
  %3458 = vmatprep.subr.mxu0 0.0
  %3459 = vmatpush2.msra.mxu0 0.0
  %3460 = vmatprep.subr.mxu0 0.0
  %3461 = vmatpush2.msra.mxu0 0.0
  %3462 = vmatprep.subr.mxu0 0.0
  %3463 = vmatpush2.msra.mxu0 0.0
  %3464 = vmatprep.subr.mxu0 0.0
  %3465 = vmatpush2.msra.mxu0 0.0
  %3466 = vmatprep.subr.mxu0 0.0
  %3467 = vmatpush2.msra.mxu0 0.0
  %3468 = vmatprep.subr.mxu0 0.0
  %3469 = vmatpush2.msra.mxu0 0.0
  %3470 = vmatprep.subr.mxu0 0.0
  %3471 = vmatpush2.msra.mxu0 0.0
  %3472 = vmatprep.subr.mxu0 0.0
  %3473 = vmatpush2.msra.mxu0 0.0
  %3474 = vmatprep.subr.mxu0 0.0
  %3475 = vmatpush2.msra.mxu0 0.0
  %3476 = vmatprep.subr.mxu0 0.0
  %3477 = vmatpush2.msra.mxu0 0.0
  %3478 = vmatprep.mubr.f32.mxu0 0.0
  %3479 = vmatmul.mubr.f32.gmra.mxu0 %v2673
  %v3480 = vpop.f32.mrf.mxu0
  %v3481 = vadd.f32 0.0, %v3480
  %v3482 = vpop.f32.mrf.mxu0
  %3483 = vdwg.mxu0
  %v3484 = vadd.f32 %v394, %v3481
  %3485 = vmatprep.subr.mxu0 0.0
  %3486 = vmatpush1.msra.mxu0 0.0
  %3487 = vmatprep.subr.mxu0 0.0
  %3488 = vmatpush1.msra.mxu0 0.0
  %3489 = vmatprep.subr.mxu0 0.0
  %3490 = vmatpush1.msra.mxu0 0.0
  %3491 = vmatprep.subr.mxu0 0.0
  %3492 = vmatpush1.msra.mxu0 0.0
  %3493 = vmatprep.subr.mxu0 0.0
  %3494 = vmatpush1.msra.mxu0 0.0
  %3495 = vmatprep.subr.mxu0 0.0
  %3496 = vmatpush1.msra.mxu0 0.0
  %3497 = vmatprep.subr.mxu0 0.0
  %3498 = vmatpush1.msra.mxu0 0.0
  %3499 = vmatprep.subr.mxu0 0.0
  %3500 = vmatpush1.msra.mxu0 0.0
  %3501 = vmatprep.subr.mxu0 0.0
  %3502 = vmatpush1.msra.mxu0 0.0
  %3503 = vmatprep.subr.mxu0 0.0
  %3504 = vmatpush1.msra.mxu0 0.0
  %3505 = vmatprep.subr.mxu0 0.0
  %3506 = vmatpush1.msra.mxu0 0.0
  %3507 = vmatprep.subr.mxu0 0.0
  %3508 = vmatpush1.msra.mxu0 0.0
  %3509 = vmatprep.subr.mxu0 0.0
  %3510 = vmatpush1.msra.mxu0 0.0
  %3511 = vmatprep.subr.mxu0 0.0
  %3512 = vmatpush1.msra.mxu0 0.0
  %3513 = vmatprep.subr.mxu0 0.0
  %3514 = vmatpush1.msra.mxu0 %v22
  %3515 = vmatprep.subr.mxu0 0.0
  %3516 = vmatpush1.msra.mxu0 %v21
  %3517 = vmatprep.subr.mxu0 0.0
  %3518 = vmatpush2.msra.mxu0 0.0
  %3519 = vmatprep.subr.mxu0 0.0
  %3520 = vmatpush2.msra.mxu0 0.0
  %3521 = vmatprep.subr.mxu0 0.0
  %3522 = vmatpush2.msra.mxu0 0.0
  %3523 = vmatprep.subr.mxu0 0.0
  %3524 = vmatpush2.msra.mxu0 0.0
  %3525 = vmatprep.subr.mxu0 0.0
  %3526 = vmatpush2.msra.mxu0 0.0
  %3527 = vmatprep.subr.mxu0 0.0
  %3528 = vmatpush2.msra.mxu0 0.0
  %3529 = vmatprep.subr.mxu0 0.0
  %3530 = vmatpush2.msra.mxu0 0.0
  %3531 = vmatprep.subr.mxu0 0.0
  %3532 = vmatpush2.msra.mxu0 0.0
  %3533 = vmatprep.subr.mxu0 0.0
  %3534 = vmatpush2.msra.mxu0 0.0
  %3535 = vmatprep.subr.mxu0 0.0
  %3536 = vmatpush2.msra.mxu0 0.0
  %3537 = vmatprep.subr.mxu0 0.0
  %3538 = vmatpush2.msra.mxu0 0.0
  %3539 = vmatprep.subr.mxu0 0.0
  %3540 = vmatpush2.msra.mxu0 0.0
  %3541 = vmatprep.subr.mxu0 0.0
  %3542 = vmatpush2.msra.mxu0 0.0
  %3543 = vmatprep.subr.mxu0 0.0
  %3544 = vmatpush2.msra.mxu0 0.0
  %3545 = vmatprep.subr.mxu0 0.0
  %3546 = vmatpush2.msra.mxu0 0.0
  %3547 = vmatprep.subr.mxu0 0.0
  %3548 = vmatpush2.msra.mxu0 0.0
  %3549 = vmatprep.mubr.f32.mxu0 0.0
  %3550 = vmatmul.mubr.f32.gmra.mxu0 %v2673
  %v3551 = vpop.f32.mrf.mxu0
  %v3552 = vadd.f32 0.0, %v3551
  %v3553 = vpop.f32.mrf.mxu0
  %3554 = vdwg.mxu0
  %v3555 = vadd.f32 %v506, %v3552
  %v3556 = vxor.u32 %v3342, 2147483648
  %v3557 = vmul.f32 %v3556, 1.442695
  %v3558 = vpow.pop %v3557
  %v3559 = vadd.f32 %v3558, 1.0
  %v3560 = vrcp.pop %v3559
  %v3561 = vmul.f32 1.0, %v3560
  %v3562 = vxor.u32 %v3413, 2147483648
  %v3563 = vmul.f32 %v3562, 1.442695
  %v3564 = vpow.pop %v3563
  %v3565 = vadd.f32 %v3564, 1.0
  %v3566 = vrcp.pop %v3565
  %v3567 = vmul.f32 1.0, %v3566
  %v3568 = vtanh.pop %v3484
  %v3569 = vxor.u32 %v3555, 2147483648
  %v3570 = vmul.f32 %v3569, 1.442695
  %v3571 = vpow.pop %v3570
  %v3572 = vadd.f32 %v3571, 1.0
  %v3573 = vrcp.pop %v3572
  %v3574 = vmul.f32 1.0, %v3573
  %v3575 = vmul.f32 %v3567, %v2669
  %v3576 = vmul.f32 %v3561, %v3568
  %v3577 = vadd.f32 %v3575, %v3576
  %v3578 = vtanh.pop %v3577
  %v3579 = vmul.f32 %v3574, %v3578
  %v3581 = vsel %vm547, %v3579, 0
  %3583 = vmatprep.subr.mxu0 0.0
  %3584 = vmatpush1.msra.mxu0 0.0
  %3585 = vmatprep.subr.mxu0 0.0
  %3586 = vmatpush1.msra.mxu0 0.0
  %3587 = vmatprep.subr.mxu0 0.0
  %3588 = vmatpush1.msra.mxu0 0.0
  %3589 = vmatprep.subr.mxu0 0.0
  %3590 = vmatpush1.msra.mxu0 0.0
  %3591 = vmatprep.subr.mxu0 0.0
  %3592 = vmatpush1.msra.mxu0 0.0
  %3593 = vmatprep.subr.mxu0 0.0
  %3594 = vmatpush1.msra.mxu0 0.0
  %3595 = vmatprep.subr.mxu0 0.0
  %3596 = vmatpush1.msra.mxu0 0.0
  %3597 = vmatprep.subr.mxu0 0.0
  %3598 = vmatpush1.msra.mxu0 0.0
  %3599 = vmatprep.subr.mxu0 0.0
  %3600 = vmatpush1.msra.mxu0 0.0
  %3601 = vmatprep.subr.mxu0 0.0
  %3602 = vmatpush1.msra.mxu0 0.0
  %3603 = vmatprep.subr.mxu0 0.0
  %3604 = vmatpush1.msra.mxu0 0.0
  %3605 = vmatprep.subr.mxu0 0.0
  %3606 = vmatpush1.msra.mxu0 0.0
  %3607 = vmatprep.subr.mxu0 0.0
  %3608 = vmatpush1.msra.mxu0 0.0
  %3609 = vmatprep.subr.mxu0 0.0
  %3610 = vmatpush1.msra.mxu0 0.0
  %3611 = vmatprep.subr.mxu0 0.0
  %3612 = vmatpush1.msra.mxu0 %v28
  %3613 = vmatprep.subr.mxu0 0.0
  %3614 = vmatpush1.msra.mxu0 %v27
  %3615 = vmatprep.subr.mxu0 0.0
  %3616 = vmatpush2.msra.mxu0 0.0
  %3617 = vmatprep.subr.mxu0 0.0
  %3618 = vmatpush2.msra.mxu0 0.0
  %3619 = vmatprep.subr.mxu0 0.0
  %3620 = vmatpush2.msra.mxu0 0.0
  %3621 = vmatprep.subr.mxu0 0.0
  %3622 = vmatpush2.msra.mxu0 0.0
  %3623 = vmatprep.subr.mxu0 0.0
  %3624 = vmatpush2.msra.mxu0 0.0
  %3625 = vmatprep.subr.mxu0 0.0
  %3626 = vmatpush2.msra.mxu0 0.0
  %3627 = vmatprep.subr.mxu0 0.0
  %3628 = vmatpush2.msra.mxu0 0.0
  %3629 = vmatprep.subr.mxu0 0.0
  %3630 = vmatpush2.msra.mxu0 0.0
  %3631 = vmatprep.subr.mxu0 0.0
  %3632 = vmatpush2.msra.mxu0 0.0
  %3633 = vmatprep.subr.mxu0 0.0
  %3634 = vmatpush2.msra.mxu0 0.0
  %3635 = vmatprep.subr.mxu0 0.0
  %3636 = vmatpush2.msra.mxu0 0.0
  %3637 = vmatprep.subr.mxu0 0.0
  %3638 = vmatpush2.msra.mxu0 0.0
  %3639 = vmatprep.subr.mxu0 0.0
  %3640 = vmatpush2.msra.mxu0 0.0
  %3641 = vmatprep.subr.mxu0 0.0
  %3642 = vmatpush2.msra.mxu0 0.0
  %3643 = vmatprep.subr.mxu0 0.0
  %3644 = vmatpush2.msra.mxu0 0.0
  %3645 = vmatprep.subr.mxu0 0.0
  %3646 = vmatpush2.msra.mxu0 0.0
  %3647 = vmatprep.mubr.f32.mxu0 0.0
  %3648 = vmatmul.mubr.f32.gmra.mxu0 %v3581
  %v3649 = vpop.f32.mrf.mxu0
  %v3650 = vadd.f32 %v532, %v3649
  %v3651 = vpop.f32.mrf.mxu0
  %3652 = vdwg.mxu0
  %3653 = vmatprep.subr.mxu0 0.0
  %3654 = vmatpush1.msra.mxu0 0.0
  %3655 = vmatprep.subr.mxu0 0.0
  %3656 = vmatpush1.msra.mxu0 0.0
  %3657 = vmatprep.subr.mxu0 0.0
  %3658 = vmatpush1.msra.mxu0 0.0
  %3659 = vmatprep.subr.mxu0 0.0
  %3660 = vmatpush1.msra.mxu0 0.0
  %3661 = vmatprep.subr.mxu0 0.0
  %3662 = vmatpush1.msra.mxu0 0.0
  %3663 = vmatprep.subr.mxu0 0.0
  %3664 = vmatpush1.msra.mxu0 0.0
  %3665 = vmatprep.subr.mxu0 0.0
  %3666 = vmatpush1.msra.mxu0 0.0
  %3667 = vmatprep.subr.mxu0 0.0
  %3668 = vmatpush1.msra.mxu0 0.0
  %3669 = vmatprep.subr.mxu0 0.0
  %3670 = vmatpush1.msra.mxu0 0.0
  %3671 = vmatprep.subr.mxu0 0.0
  %3672 = vmatpush1.msra.mxu0 0.0
  %3673 = vmatprep.subr.mxu0 0.0
  %3674 = vmatpush1.msra.mxu0 0.0
  %3675 = vmatprep.subr.mxu0 0.0
  %3676 = vmatpush1.msra.mxu0 0.0
  %3677 = vmatprep.subr.mxu0 0.0
  %3678 = vmatpush1.msra.mxu0 0.0
  %3679 = vmatprep.subr.mxu0 0.0
  %3680 = vmatpush1.msra.mxu0 0.0
  %3681 = vmatprep.subr.mxu0 0.0
  %3682 = vmatpush1.msra.mxu0 %v30
  %3683 = vmatprep.subr.mxu0 0.0
  %3684 = vmatpush1.msra.mxu0 %v29
  %3685 = vmatprep.subr.mxu0 0.0
  %3686 = vmatpush2.msra.mxu0 0.0
  %3687 = vmatprep.subr.mxu0 0.0
  %3688 = vmatpush2.msra.mxu0 0.0
  %3689 = vmatprep.subr.mxu0 0.0
  %3690 = vmatpush2.msra.mxu0 0.0
  %3691 = vmatprep.subr.mxu0 0.0
  %3692 = vmatpush2.msra.mxu0 0.0
  %3693 = vmatprep.subr.mxu0 0.0
  %3694 = vmatpush2.msra.mxu0 0.0
  %3695 = vmatprep.subr.mxu0 0.0
  %3696 = vmatpush2.msra.mxu0 0.0
  %3697 = vmatprep.subr.mxu0 0.0
  %3698 = vmatpush2.msra.mxu0 0.0
  %3699 = vmatprep.subr.mxu0 0.0
  %3700 = vmatpush2.msra.mxu0 0.0
  %3701 = vmatprep.subr.mxu0 0.0
  %3702 = vmatpush2.msra.mxu0 0.0
  %3703 = vmatprep.subr.mxu0 0.0
  %3704 = vmatpush2.msra.mxu0 0.0
  %3705 = vmatprep.subr.mxu0 0.0
  %3706 = vmatpush2.msra.mxu0 0.0
  %3707 = vmatprep.subr.mxu0 0.0
  %3708 = vmatpush2.msra.mxu0 0.0
  %3709 = vmatprep.subr.mxu0 0.0
  %3710 = vmatpush2.msra.mxu0 0.0
  %3711 = vmatprep.subr.mxu0 0.0
  %3712 = vmatpush2.msra.mxu0 0.0
  %3713 = vmatprep.subr.mxu0 0.0
  %3714 = vmatpush2.msra.mxu0 0.0
  %3715 = vmatprep.subr.mxu0 0.0
  %3716 = vmatpush2.msra.mxu0 0.0
  %3717 = vmatprep.mubr.f32.mxu0 0.0
  %3718 = vmatmul.mubr.f32.gmra.mxu0 %v3581
  %v3719 = vpop.f32.mrf.mxu0
  %v3720 = vadd.f32 %v536, %v3719
  %v3721 = vpop.f32.mrf.mxu0
  %3722 = vdwg.mxu0
  %3723 = vmatprep.subr.mxu0 0.0
  %3724 = vmatpush1.msra.mxu0 0.0
  %3725 = vmatprep.subr.mxu0 0.0
  %3726 = vmatpush1.msra.mxu0 0.0
  %3727 = vmatprep.subr.mxu0 0.0
  %3728 = vmatpush1.msra.mxu0 0.0
  %3729 = vmatprep.subr.mxu0 0.0
  %3730 = vmatpush1.msra.mxu0 0.0
  %3731 = vmatprep.subr.mxu0 0.0
  %3732 = vmatpush1.msra.mxu0 0.0
  %3733 = vmatprep.subr.mxu0 0.0
  %3734 = vmatpush1.msra.mxu0 0.0
  %3735 = vmatprep.subr.mxu0 0.0
  %3736 = vmatpush1.msra.mxu0 0.0
  %3737 = vmatprep.subr.mxu0 0.0
  %3738 = vmatpush1.msra.mxu0 0.0
  %3739 = vmatprep.subr.mxu0 0.0
  %3740 = vmatpush1.msra.mxu0 0.0
  %3741 = vmatprep.subr.mxu0 0.0
  %3742 = vmatpush1.msra.mxu0 0.0
  %3743 = vmatprep.subr.mxu0 0.0
  %3744 = vmatpush1.msra.mxu0 0.0
  %3745 = vmatprep.subr.mxu0 0.0
  %3746 = vmatpush1.msra.mxu0 0.0
  %3747 = vmatprep.subr.mxu0 0.0
  %3748 = vmatpush1.msra.mxu0 0.0
  %3749 = vmatprep.subr.mxu0 0.0
  %3750 = vmatpush1.msra.mxu0 0.0
  %3751 = vmatprep.subr.mxu0 0.0
  %3752 = vmatpush1.msra.mxu0 %v32
  %3753 = vmatprep.subr.mxu0 0.0
  %3754 = vmatpush1.msra.mxu0 %v31
  %3755 = vmatprep.subr.mxu0 0.0
  %3756 = vmatpush2.msra.mxu0 0.0
  %3757 = vmatprep.subr.mxu0 0.0
  %3758 = vmatpush2.msra.mxu0 0.0
  %3759 = vmatprep.subr.mxu0 0.0
  %3760 = vmatpush2.msra.mxu0 0.0
  %3761 = vmatprep.subr.mxu0 0.0
  %3762 = vmatpush2.msra.mxu0 0.0
  %3763 = vmatprep.subr.mxu0 0.0
  %3764 = vmatpush2.msra.mxu0 0.0
  %3765 = vmatprep.subr.mxu0 0.0
  %3766 = vmatpush2.msra.mxu0 0.0
  %3767 = vmatprep.subr.mxu0 0.0
  %3768 = vmatpush2.msra.mxu0 0.0
  %3769 = vmatprep.subr.mxu0 0.0
  %3770 = vmatpush2.msra.mxu0 0.0
  %3771 = vmatprep.subr.mxu0 0.0
  %3772 = vmatpush2.msra.mxu0 0.0
  %3773 = vmatprep.subr.mxu0 0.0
  %3774 = vmatpush2.msra.mxu0 0.0
  %3775 = vmatprep.subr.mxu0 0.0
  %3776 = vmatpush2.msra.mxu0 0.0
  %3777 = vmatprep.subr.mxu0 0.0
  %3778 = vmatpush2.msra.mxu0 0.0
  %3779 = vmatprep.subr.mxu0 0.0
  %3780 = vmatpush2.msra.mxu0 0.0
  %3781 = vmatprep.subr.mxu0 0.0
  %3782 = vmatpush2.msra.mxu0 0.0
  %3783 = vmatprep.subr.mxu0 0.0
  %3784 = vmatpush2.msra.mxu0 0.0
  %3785 = vmatprep.subr.mxu0 0.0
  %3786 = vmatpush2.msra.mxu0 0.0
  %3787 = vmatprep.mubr.f32.mxu0 0.0
  %3788 = vmatmul.mubr.f32.gmra.mxu0 %v3581
  %v3789 = vpop.f32.mrf.mxu0
  %v3790 = vadd.f32 %v540, %v3789
  %v3791 = vpop.f32.mrf.mxu0
  %3792 = vdwg.mxu0
  %3793 = vmatprep.subr.mxu0 0.0
  %3794 = vmatpush1.msra.mxu0 0.0
  %3795 = vmatprep.subr.mxu0 0.0
  %3796 = vmatpush1.msra.mxu0 0.0
  %3797 = vmatprep.subr.mxu0 0.0
  %3798 = vmatpush1.msra.mxu0 0.0
  %3799 = vmatprep.subr.mxu0 0.0
  %3800 = vmatpush1.msra.mxu0 0.0
  %3801 = vmatprep.subr.mxu0 0.0
  %3802 = vmatpush1.msra.mxu0 0.0
  %3803 = vmatprep.subr.mxu0 0.0
  %3804 = vmatpush1.msra.mxu0 0.0
  %3805 = vmatprep.subr.mxu0 0.0
  %3806 = vmatpush1.msra.mxu0 0.0
  %3807 = vmatprep.subr.mxu0 0.0
  %3808 = vmatpush1.msra.mxu0 0.0
  %3809 = vmatprep.subr.mxu0 0.0
  %3810 = vmatpush1.msra.mxu0 0.0
  %3811 = vmatprep.subr.mxu0 0.0
  %3812 = vmatpush1.msra.mxu0 0.0
  %3813 = vmatprep.subr.mxu0 0.0
  %3814 = vmatpush1.msra.mxu0 0.0
  %3815 = vmatprep.subr.mxu0 0.0
  %3816 = vmatpush1.msra.mxu0 0.0
  %3817 = vmatprep.subr.mxu0 0.0
  %3818 = vmatpush1.msra.mxu0 0.0
  %3819 = vmatprep.subr.mxu0 0.0
  %3820 = vmatpush1.msra.mxu0 0.0
  %3821 = vmatprep.subr.mxu0 0.0
  %3822 = vmatpush1.msra.mxu0 %v34
  %3823 = vmatprep.subr.mxu0 0.0
  %3824 = vmatpush1.msra.mxu0 %v33
  %3825 = vmatprep.subr.mxu0 0.0
  %3826 = vmatpush2.msra.mxu0 0.0
  %3827 = vmatprep.subr.mxu0 0.0
  %3828 = vmatpush2.msra.mxu0 0.0
  %3829 = vmatprep.subr.mxu0 0.0
  %3830 = vmatpush2.msra.mxu0 0.0
  %3831 = vmatprep.subr.mxu0 0.0
  %3832 = vmatpush2.msra.mxu0 0.0
  %3833 = vmatprep.subr.mxu0 0.0
  %3834 = vmatpush2.msra.mxu0 0.0
  %3835 = vmatprep.subr.mxu0 0.0
  %3836 = vmatpush2.msra.mxu0 0.0
  %3837 = vmatprep.subr.mxu0 0.0
  %3838 = vmatpush2.msra.mxu0 0.0
  %3839 = vmatprep.subr.mxu0 0.0
  %3840 = vmatpush2.msra.mxu0 0.0
  %3841 = vmatprep.subr.mxu0 0.0
  %3842 = vmatpush2.msra.mxu0 0.0
  %3843 = vmatprep.subr.mxu0 0.0
  %3844 = vmatpush2.msra.mxu0 0.0
  %3845 = vmatprep.subr.mxu0 0.0
  %3846 = vmatpush2.msra.mxu0 0.0
  %3847 = vmatprep.subr.mxu0 0.0
  %3848 = vmatpush2.msra.mxu0 0.0
  %3849 = vmatprep.subr.mxu0 0.0
  %3850 = vmatpush2.msra.mxu0 0.0
  %3851 = vmatprep.subr.mxu0 0.0
  %3852 = vmatpush2.msra.mxu0 0.0
  %3853 = vmatprep.subr.mxu0 0.0
  %3854 = vmatpush2.msra.mxu0 0.0
  %3855 = vmatprep.subr.mxu0 0.0
  %3856 = vmatpush2.msra.mxu0 0.0
  %3857 = vmatprep.mubr.f32.mxu0 0.0
  %3858 = vmatmul.mubr.f32.gmra.mxu0 %v3581
  %v3859 = vpop.f32.mrf.mxu0
  %v3860 = vadd.f32 %v544, %v3859
  %v3861 = vpop.f32.mrf.mxu0
  %3862 = vdwg.mxu0
  %v3864 = vsel %vm547, %v3265, 0
  %3866 = vmatprep.subr.mxu0 0.0
  %3867 = vmatpush1.msra.mxu0 0.0
  %3868 = vmatprep.subr.mxu0 0.0
  %3869 = vmatpush1.msra.mxu0 0.0
  %3870 = vmatprep.subr.mxu0 0.0
  %3871 = vmatpush1.msra.mxu0 0.0
  %3872 = vmatprep.subr.mxu0 0.0
  %3873 = vmatpush1.msra.mxu0 0.0
  %3874 = vmatprep.subr.mxu0 0.0
  %3875 = vmatpush1.msra.mxu0 0.0
  %3876 = vmatprep.subr.mxu0 0.0
  %3877 = vmatpush1.msra.mxu0 0.0
  %3878 = vmatprep.subr.mxu0 0.0
  %3879 = vmatpush1.msra.mxu0 0.0
  %3880 = vmatprep.subr.mxu0 0.0
  %3881 = vmatpush1.msra.mxu0 0.0
  %3882 = vmatprep.subr.mxu0 0.0
  %3883 = vmatpush1.msra.mxu0 0.0
  %3884 = vmatprep.subr.mxu0 0.0
  %3885 = vmatpush1.msra.mxu0 0.0
  %3886 = vmatprep.subr.mxu0 0.0
  %3887 = vmatpush1.msra.mxu0 0.0
  %3888 = vmatprep.subr.mxu0 0.0
  %3889 = vmatpush1.msra.mxu0 0.0
  %3890 = vmatprep.subr.mxu0 0.0
  %3891 = vmatpush1.msra.mxu0 0.0
  %3892 = vmatprep.subr.mxu0 0.0
  %3893 = vmatpush1.msra.mxu0 0.0
  %3894 = vmatprep.subr.mxu0 0.0
  %3895 = vmatpush1.msra.mxu0 %v36
  %3896 = vmatprep.subr.mxu0 0.0
  %3897 = vmatpush1.msra.mxu0 %v35
  %3898 = vmatprep.subr.mxu0 0.0
  %3899 = vmatpush2.msra.mxu0 0.0
  %3900 = vmatprep.subr.mxu0 0.0
  %3901 = vmatpush2.msra.mxu0 0.0
  %3902 = vmatprep.subr.mxu0 0.0
  %3903 = vmatpush2.msra.mxu0 0.0
  %3904 = vmatprep.subr.mxu0 0.0
  %3905 = vmatpush2.msra.mxu0 0.0
  %3906 = vmatprep.subr.mxu0 0.0
  %3907 = vmatpush2.msra.mxu0 0.0
  %3908 = vmatprep.subr.mxu0 0.0
  %3909 = vmatpush2.msra.mxu0 0.0
  %3910 = vmatprep.subr.mxu0 0.0
  %3911 = vmatpush2.msra.mxu0 0.0
  %3912 = vmatprep.subr.mxu0 0.0
  %3913 = vmatpush2.msra.mxu0 0.0
  %3914 = vmatprep.subr.mxu0 0.0
  %3915 = vmatpush2.msra.mxu0 0.0
  %3916 = vmatprep.subr.mxu0 0.0
  %3917 = vmatpush2.msra.mxu0 0.0
  %3918 = vmatprep.subr.mxu0 0.0
  %3919 = vmatpush2.msra.mxu0 0.0
  %3920 = vmatprep.subr.mxu0 0.0
  %3921 = vmatpush2.msra.mxu0 0.0
  %3922 = vmatprep.subr.mxu0 0.0
  %3923 = vmatpush2.msra.mxu0 0.0
  %3924 = vmatprep.subr.mxu0 0.0
  %3925 = vmatpush2.msra.mxu0 0.0
  %3926 = vmatprep.subr.mxu0 0.0
  %3927 = vmatpush2.msra.mxu0 0.0
  %3928 = vmatprep.subr.mxu0 0.0
  %3929 = vmatpush2.msra.mxu0 0.0
  %3930 = vmatprep.mubr.f32.mxu0 0.0
  %3931 = vmatmul.mubr.f32.gmra.mxu0 %v3864
  %v3932 = vpop.f32.mrf.mxu0
  %v3933 = vadd.f32 0.0, %v3932
  %v3934 = vpop.f32.mrf.mxu0
  %3935 = vdwg.mxu0
  %v3936 = vadd.f32 %v3650, %v3933
  %3937 = vmatprep.subr.mxu0 0.0
  %3938 = vmatpush1.msra.mxu0 0.0
  %3939 = vmatprep.subr.mxu0 0.0
  %3940 = vmatpush1.msra.mxu0 0.0
  %3941 = vmatprep.subr.mxu0 0.0
  %3942 = vmatpush1.msra.mxu0 0.0
  %3943 = vmatprep.subr.mxu0 0.0
  %3944 = vmatpush1.msra.mxu0 0.0
  %3945 = vmatprep.subr.mxu0 0.0
  %3946 = vmatpush1.msra.mxu0 0.0
  %3947 = vmatprep.subr.mxu0 0.0
  %3948 = vmatpush1.msra.mxu0 0.0
  %3949 = vmatprep.subr.mxu0 0.0
  %3950 = vmatpush1.msra.mxu0 0.0
  %3951 = vmatprep.subr.mxu0 0.0
  %3952 = vmatpush1.msra.mxu0 0.0
  %3953 = vmatprep.subr.mxu0 0.0
  %3954 = vmatpush1.msra.mxu0 0.0
  %3955 = vmatprep.subr.mxu0 0.0
  %3956 = vmatpush1.msra.mxu0 0.0
  %3957 = vmatprep.subr.mxu0 0.0
  %3958 = vmatpush1.msra.mxu0 0.0
  %3959 = vmatprep.subr.mxu0 0.0
  %3960 = vmatpush1.msra.mxu0 0.0
  %3961 = vmatprep.subr.mxu0 0.0
  %3962 = vmatpush1.msra.mxu0 0.0
  %3963 = vmatprep.subr.mxu0 0.0
  %3964 = vmatpush1.msra.mxu0 0.0
  %3965 = vmatprep.subr.mxu0 0.0
  %3966 = vmatpush1.msra.mxu0 %v38
  %3967 = vmatprep.subr.mxu0 0.0
  %3968 = vmatpush1.msra.mxu0 %v37
  %3969 = vmatprep.subr.mxu0 0.0
  %3970 = vmatpush2.msra.mxu0 0.0
  %3971 = vmatprep.subr.mxu0 0.0
  %3972 = vmatpush2.msra.mxu0 0.0
  %3973 = vmatprep.subr.mxu0 0.0
  %3974 = vmatpush2.msra.mxu0 0.0
  %3975 = vmatprep.subr.mxu0 0.0
  %3976 = vmatpush2.msra.mxu0 0.0
  %3977 = vmatprep.subr.mxu0 0.0
  %3978 = vmatpush2.msra.mxu0 0.0
  %3979 = vmatprep.subr.mxu0 0.0
  %3980 = vmatpush2.msra.mxu0 0.0
  %3981 = vmatprep.subr.mxu0 0.0
  %3982 = vmatpush2.msra.mxu0 0.0
  %3983 = vmatprep.subr.mxu0 0.0
  %3984 = vmatpush2.msra.mxu0 0.0
  %3985 = vmatprep.subr.mxu0 0.0
  %3986 = vmatpush2.msra.mxu0 0.0
  %3987 = vmatprep.subr.mxu0 0.0
  %3988 = vmatpush2.msra.mxu0 0.0
  %3989 = vmatprep.subr.mxu0 0.0
  %3990 = vmatpush2.msra.mxu0 0.0
  %3991 = vmatprep.subr.mxu0 0.0
  %3992 = vmatpush2.msra.mxu0 0.0
  %3993 = vmatprep.subr.mxu0 0.0
  %3994 = vmatpush2.msra.mxu0 0.0
  %3995 = vmatprep.subr.mxu0 0.0
  %3996 = vmatpush2.msra.mxu0 0.0
  %3997 = vmatprep.subr.mxu0 0.0
  %3998 = vmatpush2.msra.mxu0 0.0
  %3999 = vmatprep.subr.mxu0 0.0
  %4000 = vmatpush2.msra.mxu0 0.0
  %4001 = vmatprep.mubr.f32.mxu0 0.0
  %4002 = vmatmul.mubr.f32.gmra.mxu0 %v3864
  %v4003 = vpop.f32.mrf.mxu0
  %v4004 = vadd.f32 0.0, %v4003
  %v4005 = vpop.f32.mrf.mxu0
  %4006 = vdwg.mxu0
  %v4007 = vadd.f32 %v3720, %v4004
  %4008 = vmatprep.subr.mxu0 0.0
  %4009 = vmatpush1.msra.mxu0 0.0
  %4010 = vmatprep.subr.mxu0 0.0
  %4011 = vmatpush1.msra.mxu0 0.0
  %4012 = vmatprep.subr.mxu0 0.0
  %4013 = vmatpush1.msra.mxu0 0.0
  %4014 = vmatprep.subr.mxu0 0.0
  %4015 = vmatpush1.msra.mxu0 0.0
  %4016 = vmatprep.subr.mxu0 0.0
  %4017 = vmatpush1.msra.mxu0 0.0
  %4018 = vmatprep.subr.mxu0 0.0
  %4019 = vmatpush1.msra.mxu0 0.0
  %4020 = vmatprep.subr.mxu0 0.0
  %4021 = vmatpush1.msra.mxu0 0.0
  %4022 = vmatprep.subr.mxu0 0.0
  %4023 = vmatpush1.msra.mxu0 0.0
  %4024 = vmatprep.subr.mxu0 0.0
  %4025 = vmatpush1.msra.mxu0 0.0
  %4026 = vmatprep.subr.mxu0 0.0
  %4027 = vmatpush1.msra.mxu0 0.0
  %4028 = vmatprep.subr.mxu0 0.0
  %4029 = vmatpush1.msra.mxu0 0.0
  %4030 = vmatprep.subr.mxu0 0.0
  %4031 = vmatpush1.msra.mxu0 0.0
  %4032 = vmatprep.subr.mxu0 0.0
  %4033 = vmatpush1.msra.mxu0 0.0
  %4034 = vmatprep.subr.mxu0 0.0
  %4035 = vmatpush1.msra.mxu0 0.0
  %4036 = vmatprep.subr.mxu0 0.0
  %4037 = vmatpush1.msra.mxu0 %v40
  %4038 = vmatprep.subr.mxu0 0.0
  %4039 = vmatpush1.msra.mxu0 %v39
  %4040 = vmatprep.subr.mxu0 0.0
  %4041 = vmatpush2.msra.mxu0 0.0
  %4042 = vmatprep.subr.mxu0 0.0
  %4043 = vmatpush2.msra.mxu0 0.0
  %4044 = vmatprep.subr.mxu0 0.0
  %4045 = vmatpush2.msra.mxu0 0.0
  %4046 = vmatprep.subr.mxu0 0.0
  %4047 = vmatpush2.msra.mxu0 0.0
  %4048 = vmatprep.subr.mxu0 0.0
  %4049 = vmatpush2.msra.mxu0 0.0
  %4050 = vmatprep.subr.mxu0 0.0
  %4051 = vmatpush2.msra.mxu0 0.0
  %4052 = vmatprep.subr.mxu0 0.0
  %4053 = vmatpush2.msra.mxu0 0.0
  %4054 = vmatprep.subr.mxu0 0.0
  %4055 = vmatpush2.msra.mxu0 0.0
  %4056 = vmatprep.subr.mxu0 0.0
  %4057 = vmatpush2.msra.mxu0 0.0
  %4058 = vmatprep.subr.mxu0 0.0
  %4059 = vmatpush2.msra.mxu0 0.0
  %4060 = vmatprep.subr.mxu0 0.0
  %4061 = vmatpush2.msra.mxu0 0.0
  %4062 = vmatprep.subr.mxu0 0.0
  %4063 = vmatpush2.msra.mxu0 0.0
  %4064 = vmatprep.subr.mxu0 0.0
  %4065 = vmatpush2.msra.mxu0 0.0
  %4066 = vmatprep.subr.mxu0 0.0
  %4067 = vmatpush2.msra.mxu0 0.0
  %4068 = vmatprep.subr.mxu0 0.0
  %4069 = vmatpush2.msra.mxu0 0.0
  %4070 = vmatprep.subr.mxu0 0.0
  %4071 = vmatpush2.msra.mxu0 0.0
  %4072 = vmatprep.mubr.f32.mxu0 0.0
  %4073 = vmatmul.mubr.f32.gmra.mxu0 %v3864
  %v4074 = vpop.f32.mrf.mxu0
  %v4075 = vadd.f32 0.0, %v4074
  %v4076 = vpop.f32.mrf.mxu0
  %4077 = vdwg.mxu0
  %v4078 = vadd.f32 %v3790, %v4075
  %4079 = vmatprep.subr.mxu0 0.0
  %4080 = vmatpush1.msra.mxu0 0.0
  %4081 = vmatprep.subr.mxu0 0.0
  %4082 = vmatpush1.msra.mxu0 0.0
  %4083 = vmatprep.subr.mxu0 0.0
  %4084 = vmatpush1.msra.mxu0 0.0
  %4085 = vmatprep.subr.mxu0 0.0
  %4086 = vmatpush1.msra.mxu0 0.0
  %4087 = vmatprep.subr.mxu0 0.0
  %4088 = vmatpush1.msra.mxu0 0.0
  %4089 = vmatprep.subr.mxu0 0.0
  %4090 = vmatpush1.msra.mxu0 0.0
  %4091 = vmatprep.subr.mxu0 0.0
  %4092 = vmatpush1.msra.mxu0 0.0
  %4093 = vmatprep.subr.mxu0 0.0
  %4094 = vmatpush1.msra.mxu0 0.0
  %4095 = vmatprep.subr.mxu0 0.0
  %4096 = vmatpush1.msra.mxu0 0.0
  %4097 = vmatprep.subr.mxu0 0.0
  %4098 = vmatpush1.msra.mxu0 0.0
  %4099 = vmatprep.subr.mxu0 0.0
  %4100 = vmatpush1.msra.mxu0 0.0
  %4101 = vmatprep.subr.mxu0 0.0
  %4102 = vmatpush1.msra.mxu0 0.0
  %4103 = vmatprep.subr.mxu0 0.0
  %4104 = vmatpush1.msra.mxu0 0.0
  %4105 = vmatprep.subr.mxu0 0.0
  %4106 = vmatpush1.msra.mxu0 0.0
  %4107 = vmatprep.subr.mxu0 0.0
  %4108 = vmatpush1.msra.mxu0 %v42
  %4109 = vmatprep.subr.mxu0 0.0
  %4110 = vmatpush1.msra.mxu0 %v41
  %4111 = vmatprep.subr.mxu0 0.0
  %4112 = vmatpush2.msra.mxu0 0.0
  %4113 = vmatprep.subr.mxu0 0.0
  %4114 = vmatpush2.msra.mxu0 0.0
  %4115 = vmatprep.subr.mxu0 0.0
  %4116 = vmatpush2.msra.mxu0 0.0
  %4117 = vmatprep.subr.mxu0 0.0
  %4118 = vmatpush2.msra.mxu0 0.0
  %4119 = vmatprep.subr.mxu0 0.0
  %4120 = vmatpush2.msra.mxu0 0.0
  %4121 = vmatprep.subr.mxu0 0.0
  %4122 = vmatpush2.msra.mxu0 0.0
  %4123 = vmatprep.subr.mxu0 0.0
  %4124 = vmatpush2.msra.mxu0 0.0
  %4125 = vmatprep.subr.mxu0 0.0
  %4126 = vmatpush2.msra.mxu0 0.0
  %4127 = vmatprep.subr.mxu0 0.0
  %4128 = vmatpush2.msra.mxu0 0.0
  %4129 = vmatprep.subr.mxu0 0.0
  %4130 = vmatpush2.msra.mxu0 0.0
  %4131 = vmatprep.subr.mxu0 0.0
  %4132 = vmatpush2.msra.mxu0 0.0
  %4133 = vmatprep.subr.mxu0 0.0
  %4134 = vmatpush2.msra.mxu0 0.0
  %4135 = vmatprep.subr.mxu0 0.0
  %4136 = vmatpush2.msra.mxu0 0.0
  %4137 = vmatprep.subr.mxu0 0.0
  %4138 = vmatpush2.msra.mxu0 0.0
  %4139 = vmatprep.subr.mxu0 0.0
  %4140 = vmatpush2.msra.mxu0 0.0
  %4141 = vmatprep.subr.mxu0 0.0
  %4142 = vmatpush2.msra.mxu0 0.0
  %4143 = vmatprep.mubr.f32.mxu0 0.0
  %4144 = vmatmul.mubr.f32.gmra.mxu0 %v3864
  %v4145 = vpop.f32.mrf.mxu0
  %v4146 = vadd.f32 0.0, %v4145
  %v4147 = vpop.f32.mrf.mxu0
  %4148 = vdwg.mxu0
  %v4149 = vadd.f32 %v3860, %v4146
  %v4150 = vxor.u32 %v3936, 2147483648
  %v4151 = vmul.f32 %v4150, 1.442695
  %v4152 = vpow.pop %v4151
  %v4153 = vadd.f32 %v4152, 1.0
  %v4154 = vrcp.pop %v4153
  %v4155 = vmul.f32 1.0, %v4154
  %v4156 = vxor.u32 %v4007, 2147483648
  %v4157 = vmul.f32 %v4156, 1.442695
  %v4158 = vpow.pop %v4157
  %v4159 = vadd.f32 %v4158, 1.0
  %v4160 = vrcp.pop %v4159
  %v4161 = vmul.f32 1.0, %v4160
  %v4162 = vtanh.pop %v4078
  %v4163 = vxor.u32 %v4149, 2147483648
  %v4164 = vmul.f32 %v4163, 1.442695
  %v4165 = vpow.pop %v4164
  %v4166 = vadd.f32 %v4165, 1.0
  %v4167 = vrcp.pop %v4166
  %v4168 = vmul.f32 1.0, %v4167
  %v4169 = vmul.f32 %v4161, %v3263
  %v4170 = vmul.f32 %v4155, %v4162
  %v4171 = vadd.f32 %v4169, %v4170
  %v4172 = vtanh.pop %v4171
  %v4173 = vmul.f32 %v4168, %v4172
  %vm4174 = vcmp.eq.s32.totalorder %v546, 3
  %v4175 = vlaneseq
  %v4176 = vshrl.u32 %v4175, 7
  %v4177 = vsub.s32 7, %v4176
  %v4178 = vrot.slane %v4173, %v4177
  %v4179 = vsel %vm4174, %v4178, %v3271
  %4180 = vmatprep.subr.mxu0 0.0
  %4181 = vmatpush1.msra.mxu0 0.0
  %4182 = vmatprep.subr.mxu0 0.0
  %4183 = vmatpush1.msra.mxu0 0.0
  %4184 = vmatprep.subr.mxu0 0.0
  %4185 = vmatpush1.msra.mxu0 0.0
  %4186 = vmatprep.subr.mxu0 0.0
  %4187 = vmatpush1.msra.mxu0 0.0
  %4188 = vmatprep.subr.mxu0 0.0
  %4189 = vmatpush1.msra.mxu0 0.0
  %4190 = vmatprep.subr.mxu0 0.0
  %4191 = vmatpush1.msra.mxu0 0.0
  %4192 = vmatprep.subr.mxu0 0.0
  %4193 = vmatpush1.msra.mxu0 0.0
  %4194 = vmatprep.subr.mxu0 0.0
  %4195 = vmatpush1.msra.mxu0 0.0
  %4196 = vmatprep.subr.mxu0 0.0
  %4197 = vmatpush1.msra.mxu0 0.0
  %4198 = vmatprep.subr.mxu0 0.0
  %4199 = vmatpush1.msra.mxu0 0.0
  %4200 = vmatprep.subr.mxu0 0.0
  %4201 = vmatpush1.msra.mxu0 0.0
  %4202 = vmatprep.subr.mxu0 0.0
  %4203 = vmatpush1.msra.mxu0 0.0
  %4204 = vmatprep.subr.mxu0 0.0
  %4205 = vmatpush1.msra.mxu0 0.0
  %4206 = vmatprep.subr.mxu0 0.0
  %4207 = vmatpush1.msra.mxu0 0.0
  %4208 = vmatprep.subr.mxu0 0.0
  %4209 = vmatpush1.msra.mxu0 %v16
  %4210 = vmatprep.subr.mxu0 0.0
  %4211 = vmatpush1.msra.mxu0 %v15
  %4212 = vmatprep.subr.mxu0 0.0
  %4213 = vmatpush2.msra.mxu0 0.0
  %4214 = vmatprep.subr.mxu0 0.0
  %4215 = vmatpush2.msra.mxu0 0.0
  %4216 = vmatprep.subr.mxu0 0.0
  %4217 = vmatpush2.msra.mxu0 0.0
  %4218 = vmatprep.subr.mxu0 0.0
  %4219 = vmatpush2.msra.mxu0 0.0
  %4220 = vmatprep.subr.mxu0 0.0
  %4221 = vmatpush2.msra.mxu0 0.0
  %4222 = vmatprep.subr.mxu0 0.0
  %4223 = vmatpush2.msra.mxu0 0.0
  %4224 = vmatprep.subr.mxu0 0.0
  %4225 = vmatpush2.msra.mxu0 0.0
  %4226 = vmatprep.subr.mxu0 0.0
  %4227 = vmatpush2.msra.mxu0 0.0
  %4228 = vmatprep.subr.mxu0 0.0
  %4229 = vmatpush2.msra.mxu0 0.0
  %4230 = vmatprep.subr.mxu0 0.0
  %4231 = vmatpush2.msra.mxu0 0.0
  %4232 = vmatprep.subr.mxu0 0.0
  %4233 = vmatpush2.msra.mxu0 0.0
  %4234 = vmatprep.subr.mxu0 0.0
  %4235 = vmatpush2.msra.mxu0 0.0
  %4236 = vmatprep.subr.mxu0 0.0
  %4237 = vmatpush2.msra.mxu0 0.0
  %4238 = vmatprep.subr.mxu0 0.0
  %4239 = vmatpush2.msra.mxu0 0.0
  %4240 = vmatprep.subr.mxu0 0.0
  %4241 = vmatpush2.msra.mxu0 0.0
  %4242 = vmatprep.subr.mxu0 0.0
  %4243 = vmatpush2.msra.mxu0 0.0
  %4244 = vmatprep.mubr.f32.mxu0 0.0
  %4245 = vmatmul.mubr.f32.gmra.mxu0 %v3581
  %v4246 = vpop.f32.mrf.mxu0
  %v4247 = vadd.f32 0.0, %v4246
  %v4248 = vpop.f32.mrf.mxu0
  %4249 = vdwg.mxu0
  %v4250 = vadd.f32 %v175, %v4247
  %4251 = vmatprep.subr.mxu0 0.0
  %4252 = vmatpush1.msra.mxu0 0.0
  %4253 = vmatprep.subr.mxu0 0.0
  %4254 = vmatpush1.msra.mxu0 0.0
  %4255 = vmatprep.subr.mxu0 0.0
  %4256 = vmatpush1.msra.mxu0 0.0
  %4257 = vmatprep.subr.mxu0 0.0
  %4258 = vmatpush1.msra.mxu0 0.0
  %4259 = vmatprep.subr.mxu0 0.0
  %4260 = vmatpush1.msra.mxu0 0.0
  %4261 = vmatprep.subr.mxu0 0.0
  %4262 = vmatpush1.msra.mxu0 0.0
  %4263 = vmatprep.subr.mxu0 0.0
  %4264 = vmatpush1.msra.mxu0 0.0
  %4265 = vmatprep.subr.mxu0 0.0
  %4266 = vmatpush1.msra.mxu0 0.0
  %4267 = vmatprep.subr.mxu0 0.0
  %4268 = vmatpush1.msra.mxu0 0.0
  %4269 = vmatprep.subr.mxu0 0.0
  %4270 = vmatpush1.msra.mxu0 0.0
  %4271 = vmatprep.subr.mxu0 0.0
  %4272 = vmatpush1.msra.mxu0 0.0
  %4273 = vmatprep.subr.mxu0 0.0
  %4274 = vmatpush1.msra.mxu0 0.0
  %4275 = vmatprep.subr.mxu0 0.0
  %4276 = vmatpush1.msra.mxu0 0.0
  %4277 = vmatprep.subr.mxu0 0.0
  %4278 = vmatpush1.msra.mxu0 0.0
  %4279 = vmatprep.subr.mxu0 0.0
  %4280 = vmatpush1.msra.mxu0 %v18
  %4281 = vmatprep.subr.mxu0 0.0
  %4282 = vmatpush1.msra.mxu0 %v17
  %4283 = vmatprep.subr.mxu0 0.0
  %4284 = vmatpush2.msra.mxu0 0.0
  %4285 = vmatprep.subr.mxu0 0.0
  %4286 = vmatpush2.msra.mxu0 0.0
  %4287 = vmatprep.subr.mxu0 0.0
  %4288 = vmatpush2.msra.mxu0 0.0
  %4289 = vmatprep.subr.mxu0 0.0
  %4290 = vmatpush2.msra.mxu0 0.0
  %4291 = vmatprep.subr.mxu0 0.0
  %4292 = vmatpush2.msra.mxu0 0.0
  %4293 = vmatprep.subr.mxu0 0.0
  %4294 = vmatpush2.msra.mxu0 0.0
  %4295 = vmatprep.subr.mxu0 0.0
  %4296 = vmatpush2.msra.mxu0 0.0
  %4297 = vmatprep.subr.mxu0 0.0
  %4298 = vmatpush2.msra.mxu0 0.0
  %4299 = vmatprep.subr.mxu0 0.0
  %4300 = vmatpush2.msra.mxu0 0.0
  %4301 = vmatprep.subr.mxu0 0.0
  %4302 = vmatpush2.msra.mxu0 0.0
  %4303 = vmatprep.subr.mxu0 0.0
  %4304 = vmatpush2.msra.mxu0 0.0
  %4305 = vmatprep.subr.mxu0 0.0
  %4306 = vmatpush2.msra.mxu0 0.0
  %4307 = vmatprep.subr.mxu0 0.0
  %4308 = vmatpush2.msra.mxu0 0.0
  %4309 = vmatprep.subr.mxu0 0.0
  %4310 = vmatpush2.msra.mxu0 0.0
  %4311 = vmatprep.subr.mxu0 0.0
  %4312 = vmatpush2.msra.mxu0 0.0
  %4313 = vmatprep.subr.mxu0 0.0
  %4314 = vmatpush2.msra.mxu0 0.0
  %4315 = vmatprep.mubr.f32.mxu0 0.0
  %4316 = vmatmul.mubr.f32.gmra.mxu0 %v3581
  %v4317 = vpop.f32.mrf.mxu0
  %v4318 = vadd.f32 0.0, %v4317
  %v4319 = vpop.f32.mrf.mxu0
  %4320 = vdwg.mxu0
  %v4321 = vadd.f32 %v287, %v4318
  %4322 = vmatprep.subr.mxu0 0.0
  %4323 = vmatpush1.msra.mxu0 0.0
  %4324 = vmatprep.subr.mxu0 0.0
  %4325 = vmatpush1.msra.mxu0 0.0
  %4326 = vmatprep.subr.mxu0 0.0
  %4327 = vmatpush1.msra.mxu0 0.0
  %4328 = vmatprep.subr.mxu0 0.0
  %4329 = vmatpush1.msra.mxu0 0.0
  %4330 = vmatprep.subr.mxu0 0.0
  %4331 = vmatpush1.msra.mxu0 0.0
  %4332 = vmatprep.subr.mxu0 0.0
  %4333 = vmatpush1.msra.mxu0 0.0
  %4334 = vmatprep.subr.mxu0 0.0
  %4335 = vmatpush1.msra.mxu0 0.0
  %4336 = vmatprep.subr.mxu0 0.0
  %4337 = vmatpush1.msra.mxu0 0.0
  %4338 = vmatprep.subr.mxu0 0.0
  %4339 = vmatpush1.msra.mxu0 0.0
  %4340 = vmatprep.subr.mxu0 0.0
  %4341 = vmatpush1.msra.mxu0 0.0
  %4342 = vmatprep.subr.mxu0 0.0
  %4343 = vmatpush1.msra.mxu0 0.0
  %4344 = vmatprep.subr.mxu0 0.0
  %4345 = vmatpush1.msra.mxu0 0.0
  %4346 = vmatprep.subr.mxu0 0.0
  %4347 = vmatpush1.msra.mxu0 0.0
  %4348 = vmatprep.subr.mxu0 0.0
  %4349 = vmatpush1.msra.mxu0 0.0
  %4350 = vmatprep.subr.mxu0 0.0
  %4351 = vmatpush1.msra.mxu0 %v20
  %4352 = vmatprep.subr.mxu0 0.0
  %4353 = vmatpush1.msra.mxu0 %v19
  %4354 = vmatprep.subr.mxu0 0.0
  %4355 = vmatpush2.msra.mxu0 0.0
  %4356 = vmatprep.subr.mxu0 0.0
  %4357 = vmatpush2.msra.mxu0 0.0
  %4358 = vmatprep.subr.mxu0 0.0
  %4359 = vmatpush2.msra.mxu0 0.0
  %4360 = vmatprep.subr.mxu0 0.0
  %4361 = vmatpush2.msra.mxu0 0.0
  %4362 = vmatprep.subr.mxu0 0.0
  %4363 = vmatpush2.msra.mxu0 0.0
  %4364 = vmatprep.subr.mxu0 0.0
  %4365 = vmatpush2.msra.mxu0 0.0
  %4366 = vmatprep.subr.mxu0 0.0
  %4367 = vmatpush2.msra.mxu0 0.0
  %4368 = vmatprep.subr.mxu0 0.0
  %4369 = vmatpush2.msra.mxu0 0.0
  %4370 = vmatprep.subr.mxu0 0.0
  %4371 = vmatpush2.msra.mxu0 0.0
  %4372 = vmatprep.subr.mxu0 0.0
  %4373 = vmatpush2.msra.mxu0 0.0
  %4374 = vmatprep.subr.mxu0 0.0
  %4375 = vmatpush2.msra.mxu0 0.0
  %4376 = vmatprep.subr.mxu0 0.0
  %4377 = vmatpush2.msra.mxu0 0.0
  %4378 = vmatprep.subr.mxu0 0.0
  %4379 = vmatpush2.msra.mxu0 0.0
  %4380 = vmatprep.subr.mxu0 0.0
  %4381 = vmatpush2.msra.mxu0 0.0
  %4382 = vmatprep.subr.mxu0 0.0
  %4383 = vmatpush2.msra.mxu0 0.0
  %4384 = vmatprep.subr.mxu0 0.0
  %4385 = vmatpush2.msra.mxu0 0.0
  %4386 = vmatprep.mubr.f32.mxu0 0.0
  %4387 = vmatmul.mubr.f32.gmra.mxu0 %v3581
  %v4388 = vpop.f32.mrf.mxu0
  %v4389 = vadd.f32 0.0, %v4388
  %v4390 = vpop.f32.mrf.mxu0
  %4391 = vdwg.mxu0
  %v4392 = vadd.f32 %v399, %v4389
  %4393 = vmatprep.subr.mxu0 0.0
  %4394 = vmatpush1.msra.mxu0 0.0
  %4395 = vmatprep.subr.mxu0 0.0
  %4396 = vmatpush1.msra.mxu0 0.0
  %4397 = vmatprep.subr.mxu0 0.0
  %4398 = vmatpush1.msra.mxu0 0.0
  %4399 = vmatprep.subr.mxu0 0.0
  %4400 = vmatpush1.msra.mxu0 0.0
  %4401 = vmatprep.subr.mxu0 0.0
  %4402 = vmatpush1.msra.mxu0 0.0
  %4403 = vmatprep.subr.mxu0 0.0
  %4404 = vmatpush1.msra.mxu0 0.0
  %4405 = vmatprep.subr.mxu0 0.0
  %4406 = vmatpush1.msra.mxu0 0.0
  %4407 = vmatprep.subr.mxu0 0.0
  %4408 = vmatpush1.msra.mxu0 0.0
  %4409 = vmatprep.subr.mxu0 0.0
  %4410 = vmatpush1.msra.mxu0 0.0
  %4411 = vmatprep.subr.mxu0 0.0
  %4412 = vmatpush1.msra.mxu0 0.0
  %4413 = vmatprep.subr.mxu0 0.0
  %4414 = vmatpush1.msra.mxu0 0.0
  %4415 = vmatprep.subr.mxu0 0.0
  %4416 = vmatpush1.msra.mxu0 0.0
  %4417 = vmatprep.subr.mxu0 0.0
  %4418 = vmatpush1.msra.mxu0 0.0
  %4419 = vmatprep.subr.mxu0 0.0
  %4420 = vmatpush1.msra.mxu0 0.0
  %4421 = vmatprep.subr.mxu0 0.0
  %4422 = vmatpush1.msra.mxu0 %v22
  %4423 = vmatprep.subr.mxu0 0.0
  %4424 = vmatpush1.msra.mxu0 %v21
  %4425 = vmatprep.subr.mxu0 0.0
  %4426 = vmatpush2.msra.mxu0 0.0
  %4427 = vmatprep.subr.mxu0 0.0
  %4428 = vmatpush2.msra.mxu0 0.0
  %4429 = vmatprep.subr.mxu0 0.0
  %4430 = vmatpush2.msra.mxu0 0.0
  %4431 = vmatprep.subr.mxu0 0.0
  %4432 = vmatpush2.msra.mxu0 0.0
  %4433 = vmatprep.subr.mxu0 0.0
  %4434 = vmatpush2.msra.mxu0 0.0
  %4435 = vmatprep.subr.mxu0 0.0
  %4436 = vmatpush2.msra.mxu0 0.0
  %4437 = vmatprep.subr.mxu0 0.0
  %4438 = vmatpush2.msra.mxu0 0.0
  %4439 = vmatprep.subr.mxu0 0.0
  %4440 = vmatpush2.msra.mxu0 0.0
  %4441 = vmatprep.subr.mxu0 0.0
  %4442 = vmatpush2.msra.mxu0 0.0
  %4443 = vmatprep.subr.mxu0 0.0
  %4444 = vmatpush2.msra.mxu0 0.0
  %4445 = vmatprep.subr.mxu0 0.0
  %4446 = vmatpush2.msra.mxu0 0.0
  %4447 = vmatprep.subr.mxu0 0.0
  %4448 = vmatpush2.msra.mxu0 0.0
  %4449 = vmatprep.subr.mxu0 0.0
  %4450 = vmatpush2.msra.mxu0 0.0
  %4451 = vmatprep.subr.mxu0 0.0
  %4452 = vmatpush2.msra.mxu0 0.0
  %4453 = vmatprep.subr.mxu0 0.0
  %4454 = vmatpush2.msra.mxu0 0.0
  %4455 = vmatprep.subr.mxu0 0.0
  %4456 = vmatpush2.msra.mxu0 0.0
  %4457 = vmatprep.mubr.f32.mxu0 0.0
  %4458 = vmatmul.mubr.f32.gmra.mxu0 %v3581
  %v4459 = vpop.f32.mrf.mxu0
  %v4460 = vadd.f32 0.0, %v4459
  %v4461 = vpop.f32.mrf.mxu0
  %4462 = vdwg.mxu0
  %v4463 = vadd.f32 %v511, %v4460
  %v4464 = vxor.u32 %v4250, 2147483648
  %v4465 = vmul.f32 %v4464, 1.442695
  %v4466 = vpow.pop %v4465
  %v4467 = vadd.f32 %v4466, 1.0
  %v4468 = vrcp.pop %v4467
  %v4469 = vmul.f32 1.0, %v4468
  %v4470 = vxor.u32 %v4321, 2147483648
  %v4471 = vmul.f32 %v4470, 1.442695
  %v4472 = vpow.pop %v4471
  %v4473 = vadd.f32 %v4472, 1.0
  %v4474 = vrcp.pop %v4473
  %v4475 = vmul.f32 1.0, %v4474
  %v4476 = vtanh.pop %v4392
  %v4477 = vxor.u32 %v4463, 2147483648
  %v4478 = vmul.f32 %v4477, 1.442695
  %v4479 = vpow.pop %v4478
  %v4480 = vadd.f32 %v4479, 1.0
  %v4481 = vrcp.pop %v4480
  %v4482 = vmul.f32 1.0, %v4481
  %v4483 = vmul.f32 %v4475, %v3577
  %v4484 = vmul.f32 %v4469, %v4476
  %v4485 = vadd.f32 %v4483, %v4484
  %v4486 = vtanh.pop %v4485
  %v4487 = vmul.f32 %v4482, %v4486
  %v4489 = vsel %vm547, %v4487, 0
  %4491 = vmatprep.subr.mxu0 0.0
  %4492 = vmatpush1.msra.mxu0 0.0
  %4493 = vmatprep.subr.mxu0 0.0
  %4494 = vmatpush1.msra.mxu0 0.0
  %4495 = vmatprep.subr.mxu0 0.0
  %4496 = vmatpush1.msra.mxu0 0.0
  %4497 = vmatprep.subr.mxu0 0.0
  %4498 = vmatpush1.msra.mxu0 0.0
  %4499 = vmatprep.subr.mxu0 0.0
  %4500 = vmatpush1.msra.mxu0 0.0
  %4501 = vmatprep.subr.mxu0 0.0
  %4502 = vmatpush1.msra.mxu0 0.0
  %4503 = vmatprep.subr.mxu0 0.0
  %4504 = vmatpush1.msra.mxu0 0.0
  %4505 = vmatprep.subr.mxu0 0.0
  %4506 = vmatpush1.msra.mxu0 0.0
  %4507 = vmatprep.subr.mxu0 0.0
  %4508 = vmatpush1.msra.mxu0 0.0
  %4509 = vmatprep.subr.mxu0 0.0
  %4510 = vmatpush1.msra.mxu0 0.0
  %4511 = vmatprep.subr.mxu0 0.0
  %4512 = vmatpush1.msra.mxu0 0.0
  %4513 = vmatprep.subr.mxu0 0.0
  %4514 = vmatpush1.msra.mxu0 0.0
  %4515 = vmatprep.subr.mxu0 0.0
  %4516 = vmatpush1.msra.mxu0 0.0
  %4517 = vmatprep.subr.mxu0 0.0
  %4518 = vmatpush1.msra.mxu0 0.0
  %4519 = vmatprep.subr.mxu0 0.0
  %4520 = vmatpush1.msra.mxu0 %v28
  %4521 = vmatprep.subr.mxu0 0.0
  %4522 = vmatpush1.msra.mxu0 %v27
  %4523 = vmatprep.subr.mxu0 0.0
  %4524 = vmatpush2.msra.mxu0 0.0
  %4525 = vmatprep.subr.mxu0 0.0
  %4526 = vmatpush2.msra.mxu0 0.0
  %4527 = vmatprep.subr.mxu0 0.0
  %4528 = vmatpush2.msra.mxu0 0.0
  %4529 = vmatprep.subr.mxu0 0.0
  %4530 = vmatpush2.msra.mxu0 0.0
  %4531 = vmatprep.subr.mxu0 0.0
  %4532 = vmatpush2.msra.mxu0 0.0
  %4533 = vmatprep.subr.mxu0 0.0
  %4534 = vmatpush2.msra.mxu0 0.0
  %4535 = vmatprep.subr.mxu0 0.0
  %4536 = vmatpush2.msra.mxu0 0.0
  %4537 = vmatprep.subr.mxu0 0.0
  %4538 = vmatpush2.msra.mxu0 0.0
  %4539 = vmatprep.subr.mxu0 0.0
  %4540 = vmatpush2.msra.mxu0 0.0
  %4541 = vmatprep.subr.mxu0 0.0
  %4542 = vmatpush2.msra.mxu0 0.0
  %4543 = vmatprep.subr.mxu0 0.0
  %4544 = vmatpush2.msra.mxu0 0.0
  %4545 = vmatprep.subr.mxu0 0.0
  %4546 = vmatpush2.msra.mxu0 0.0
  %4547 = vmatprep.subr.mxu0 0.0
  %4548 = vmatpush2.msra.mxu0 0.0
  %4549 = vmatprep.subr.mxu0 0.0
  %4550 = vmatpush2.msra.mxu0 0.0
  %4551 = vmatprep.subr.mxu0 0.0
  %4552 = vmatpush2.msra.mxu0 0.0
  %4553 = vmatprep.subr.mxu0 0.0
  %4554 = vmatpush2.msra.mxu0 0.0
  %4555 = vmatprep.mubr.f32.mxu0 0.0
  %4556 = vmatmul.mubr.f32.gmra.mxu0 %v4489
  %v4557 = vpop.f32.mrf.mxu0
  %v4558 = vadd.f32 %v532, %v4557
  %v4559 = vpop.f32.mrf.mxu0
  %4560 = vdwg.mxu0
  %4561 = vmatprep.subr.mxu0 0.0
  %4562 = vmatpush1.msra.mxu0 0.0
  %4563 = vmatprep.subr.mxu0 0.0
  %4564 = vmatpush1.msra.mxu0 0.0
  %4565 = vmatprep.subr.mxu0 0.0
  %4566 = vmatpush1.msra.mxu0 0.0
  %4567 = vmatprep.subr.mxu0 0.0
  %4568 = vmatpush1.msra.mxu0 0.0
  %4569 = vmatprep.subr.mxu0 0.0
  %4570 = vmatpush1.msra.mxu0 0.0
  %4571 = vmatprep.subr.mxu0 0.0
  %4572 = vmatpush1.msra.mxu0 0.0
  %4573 = vmatprep.subr.mxu0 0.0
  %4574 = vmatpush1.msra.mxu0 0.0
  %4575 = vmatprep.subr.mxu0 0.0
  %4576 = vmatpush1.msra.mxu0 0.0
  %4577 = vmatprep.subr.mxu0 0.0
  %4578 = vmatpush1.msra.mxu0 0.0
  %4579 = vmatprep.subr.mxu0 0.0
  %4580 = vmatpush1.msra.mxu0 0.0
  %4581 = vmatprep.subr.mxu0 0.0
  %4582 = vmatpush1.msra.mxu0 0.0
  %4583 = vmatprep.subr.mxu0 0.0
  %4584 = vmatpush1.msra.mxu0 0.0
  %4585 = vmatprep.subr.mxu0 0.0
  %4586 = vmatpush1.msra.mxu0 0.0
  %4587 = vmatprep.subr.mxu0 0.0
  %4588 = vmatpush1.msra.mxu0 0.0
  %4589 = vmatprep.subr.mxu0 0.0
  %4590 = vmatpush1.msra.mxu0 %v30
  %4591 = vmatprep.subr.mxu0 0.0
  %4592 = vmatpush1.msra.mxu0 %v29
  %4593 = vmatprep.subr.mxu0 0.0
  %4594 = vmatpush2.msra.mxu0 0.0
  %4595 = vmatprep.subr.mxu0 0.0
  %4596 = vmatpush2.msra.mxu0 0.0
  %4597 = vmatprep.subr.mxu0 0.0
  %4598 = vmatpush2.msra.mxu0 0.0
  %4599 = vmatprep.subr.mxu0 0.0
  %4600 = vmatpush2.msra.mxu0 0.0
  %4601 = vmatprep.subr.mxu0 0.0
  %4602 = vmatpush2.msra.mxu0 0.0
  %4603 = vmatprep.subr.mxu0 0.0
  %4604 = vmatpush2.msra.mxu0 0.0
  %4605 = vmatprep.subr.mxu0 0.0
  %4606 = vmatpush2.msra.mxu0 0.0
  %4607 = vmatprep.subr.mxu0 0.0
  %4608 = vmatpush2.msra.mxu0 0.0
  %4609 = vmatprep.subr.mxu0 0.0
  %4610 = vmatpush2.msra.mxu0 0.0
  %4611 = vmatprep.subr.mxu0 0.0
  %4612 = vmatpush2.msra.mxu0 0.0
  %4613 = vmatprep.subr.mxu0 0.0
  %4614 = vmatpush2.msra.mxu0 0.0
  %4615 = vmatprep.subr.mxu0 0.0
  %4616 = vmatpush2.msra.mxu0 0.0
  %4617 = vmatprep.subr.mxu0 0.0
  %4618 = vmatpush2.msra.mxu0 0.0
  %4619 = vmatprep.subr.mxu0 0.0
  %4620 = vmatpush2.msra.mxu0 0.0
  %4621 = vmatprep.subr.mxu0 0.0
  %4622 = vmatpush2.msra.mxu0 0.0
  %4623 = vmatprep.subr.mxu0 0.0
  %4624 = vmatpush2.msra.mxu0 0.0
  %4625 = vmatprep.mubr.f32.mxu0 0.0
  %4626 = vmatmul.mubr.f32.gmra.mxu0 %v4489
  %v4627 = vpop.f32.mrf.mxu0
  %v4628 = vadd.f32 %v536, %v4627
  %v4629 = vpop.f32.mrf.mxu0
  %4630 = vdwg.mxu0
  %4631 = vmatprep.subr.mxu0 0.0
  %4632 = vmatpush1.msra.mxu0 0.0
  %4633 = vmatprep.subr.mxu0 0.0
  %4634 = vmatpush1.msra.mxu0 0.0
  %4635 = vmatprep.subr.mxu0 0.0
  %4636 = vmatpush1.msra.mxu0 0.0
  %4637 = vmatprep.subr.mxu0 0.0
  %4638 = vmatpush1.msra.mxu0 0.0
  %4639 = vmatprep.subr.mxu0 0.0
  %4640 = vmatpush1.msra.mxu0 0.0
  %4641 = vmatprep.subr.mxu0 0.0
  %4642 = vmatpush1.msra.mxu0 0.0
  %4643 = vmatprep.subr.mxu0 0.0
  %4644 = vmatpush1.msra.mxu0 0.0
  %4645 = vmatprep.subr.mxu0 0.0
  %4646 = vmatpush1.msra.mxu0 0.0
  %4647 = vmatprep.subr.mxu0 0.0
  %4648 = vmatpush1.msra.mxu0 0.0
  %4649 = vmatprep.subr.mxu0 0.0
  %4650 = vmatpush1.msra.mxu0 0.0
  %4651 = vmatprep.subr.mxu0 0.0
  %4652 = vmatpush1.msra.mxu0 0.0
  %4653 = vmatprep.subr.mxu0 0.0
  %4654 = vmatpush1.msra.mxu0 0.0
  %4655 = vmatprep.subr.mxu0 0.0
  %4656 = vmatpush1.msra.mxu0 0.0
  %4657 = vmatprep.subr.mxu0 0.0
  %4658 = vmatpush1.msra.mxu0 0.0
  %4659 = vmatprep.subr.mxu0 0.0
  %4660 = vmatpush1.msra.mxu0 %v32
  %4661 = vmatprep.subr.mxu0 0.0
  %4662 = vmatpush1.msra.mxu0 %v31
  %4663 = vmatprep.subr.mxu0 0.0
  %4664 = vmatpush2.msra.mxu0 0.0
  %4665 = vmatprep.subr.mxu0 0.0
  %4666 = vmatpush2.msra.mxu0 0.0
  %4667 = vmatprep.subr.mxu0 0.0
  %4668 = vmatpush2.msra.mxu0 0.0
  %4669 = vmatprep.subr.mxu0 0.0
  %4670 = vmatpush2.msra.mxu0 0.0
  %4671 = vmatprep.subr.mxu0 0.0
  %4672 = vmatpush2.msra.mxu0 0.0
  %4673 = vmatprep.subr.mxu0 0.0
  %4674 = vmatpush2.msra.mxu0 0.0
  %4675 = vmatprep.subr.mxu0 0.0
  %4676 = vmatpush2.msra.mxu0 0.0
  %4677 = vmatprep.subr.mxu0 0.0
  %4678 = vmatpush2.msra.mxu0 0.0
  %4679 = vmatprep.subr.mxu0 0.0
  %4680 = vmatpush2.msra.mxu0 0.0
  %4681 = vmatprep.subr.mxu0 0.0
  %4682 = vmatpush2.msra.mxu0 0.0
  %4683 = vmatprep.subr.mxu0 0.0
  %4684 = vmatpush2.msra.mxu0 0.0
  %4685 = vmatprep.subr.mxu0 0.0
  %4686 = vmatpush2.msra.mxu0 0.0
  %4687 = vmatprep.subr.mxu0 0.0
  %4688 = vmatpush2.msra.mxu0 0.0
  %4689 = vmatprep.subr.mxu0 0.0
  %4690 = vmatpush2.msra.mxu0 0.0
  %4691 = vmatprep.subr.mxu0 0.0
  %4692 = vmatpush2.msra.mxu0 0.0
  %4693 = vmatprep.subr.mxu0 0.0
  %4694 = vmatpush2.msra.mxu0 0.0
  %4695 = vmatprep.mubr.f32.mxu0 0.0
  %4696 = vmatmul.mubr.f32.gmra.mxu0 %v4489
  %v4697 = vpop.f32.mrf.mxu0
  %v4698 = vadd.f32 %v540, %v4697
  %v4699 = vpop.f32.mrf.mxu0
  %4700 = vdwg.mxu0
  %4701 = vmatprep.subr.mxu0 0.0
  %4702 = vmatpush1.msra.mxu0 0.0
  %4703 = vmatprep.subr.mxu0 0.0
  %4704 = vmatpush1.msra.mxu0 0.0
  %4705 = vmatprep.subr.mxu0 0.0
  %4706 = vmatpush1.msra.mxu0 0.0
  %4707 = vmatprep.subr.mxu0 0.0
  %4708 = vmatpush1.msra.mxu0 0.0
  %4709 = vmatprep.subr.mxu0 0.0
  %4710 = vmatpush1.msra.mxu0 0.0
  %4711 = vmatprep.subr.mxu0 0.0
  %4712 = vmatpush1.msra.mxu0 0.0
  %4713 = vmatprep.subr.mxu0 0.0
  %4714 = vmatpush1.msra.mxu0 0.0
  %4715 = vmatprep.subr.mxu0 0.0
  %4716 = vmatpush1.msra.mxu0 0.0
  %4717 = vmatprep.subr.mxu0 0.0
  %4718 = vmatpush1.msra.mxu0 0.0
  %4719 = vmatprep.subr.mxu0 0.0
  %4720 = vmatpush1.msra.mxu0 0.0
  %4721 = vmatprep.subr.mxu0 0.0
  %4722 = vmatpush1.msra.mxu0 0.0
  %4723 = vmatprep.subr.mxu0 0.0
  %4724 = vmatpush1.msra.mxu0 0.0
  %4725 = vmatprep.subr.mxu0 0.0
  %4726 = vmatpush1.msra.mxu0 0.0
  %4727 = vmatprep.subr.mxu0 0.0
  %4728 = vmatpush1.msra.mxu0 0.0
  %4729 = vmatprep.subr.mxu0 0.0
  %4730 = vmatpush1.msra.mxu0 %v34
  %4731 = vmatprep.subr.mxu0 0.0
  %4732 = vmatpush1.msra.mxu0 %v33
  %4733 = vmatprep.subr.mxu0 0.0
  %4734 = vmatpush2.msra.mxu0 0.0
  %4735 = vmatprep.subr.mxu0 0.0
  %4736 = vmatpush2.msra.mxu0 0.0
  %4737 = vmatprep.subr.mxu0 0.0
  %4738 = vmatpush2.msra.mxu0 0.0
  %4739 = vmatprep.subr.mxu0 0.0
  %4740 = vmatpush2.msra.mxu0 0.0
  %4741 = vmatprep.subr.mxu0 0.0
  %4742 = vmatpush2.msra.mxu0 0.0
  %4743 = vmatprep.subr.mxu0 0.0
  %4744 = vmatpush2.msra.mxu0 0.0
  %4745 = vmatprep.subr.mxu0 0.0
  %4746 = vmatpush2.msra.mxu0 0.0
  %4747 = vmatprep.subr.mxu0 0.0
  %4748 = vmatpush2.msra.mxu0 0.0
  %4749 = vmatprep.subr.mxu0 0.0
  %4750 = vmatpush2.msra.mxu0 0.0
  %4751 = vmatprep.subr.mxu0 0.0
  %4752 = vmatpush2.msra.mxu0 0.0
  %4753 = vmatprep.subr.mxu0 0.0
  %4754 = vmatpush2.msra.mxu0 0.0
  %4755 = vmatprep.subr.mxu0 0.0
  %4756 = vmatpush2.msra.mxu0 0.0
  %4757 = vmatprep.subr.mxu0 0.0
  %4758 = vmatpush2.msra.mxu0 0.0
  %4759 = vmatprep.subr.mxu0 0.0
  %4760 = vmatpush2.msra.mxu0 0.0
  %4761 = vmatprep.subr.mxu0 0.0
  %4762 = vmatpush2.msra.mxu0 0.0
  %4763 = vmatprep.subr.mxu0 0.0
  %4764 = vmatpush2.msra.mxu0 0.0
  %4765 = vmatprep.mubr.f32.mxu0 0.0
  %4766 = vmatmul.mubr.f32.gmra.mxu0 %v4489
  %v4767 = vpop.f32.mrf.mxu0
  %v4768 = vadd.f32 %v544, %v4767
  %v4769 = vpop.f32.mrf.mxu0
  %4770 = vdwg.mxu0
  %v4772 = vsel %vm547, %v4173, 0
  %4774 = vmatprep.subr.mxu0 0.0
  %4775 = vmatpush1.msra.mxu0 0.0
  %4776 = vmatprep.subr.mxu0 0.0
  %4777 = vmatpush1.msra.mxu0 0.0
  %4778 = vmatprep.subr.mxu0 0.0
  %4779 = vmatpush1.msra.mxu0 0.0
  %4780 = vmatprep.subr.mxu0 0.0
  %4781 = vmatpush1.msra.mxu0 0.0
  %4782 = vmatprep.subr.mxu0 0.0
  %4783 = vmatpush1.msra.mxu0 0.0
  %4784 = vmatprep.subr.mxu0 0.0
  %4785 = vmatpush1.msra.mxu0 0.0
  %4786 = vmatprep.subr.mxu0 0.0
  %4787 = vmatpush1.msra.mxu0 0.0
  %4788 = vmatprep.subr.mxu0 0.0
  %4789 = vmatpush1.msra.mxu0 0.0
  %4790 = vmatprep.subr.mxu0 0.0
  %4791 = vmatpush1.msra.mxu0 0.0
  %4792 = vmatprep.subr.mxu0 0.0
  %4793 = vmatpush1.msra.mxu0 0.0
  %4794 = vmatprep.subr.mxu0 0.0
  %4795 = vmatpush1.msra.mxu0 0.0
  %4796 = vmatprep.subr.mxu0 0.0
  %4797 = vmatpush1.msra.mxu0 0.0
  %4798 = vmatprep.subr.mxu0 0.0
  %4799 = vmatpush1.msra.mxu0 0.0
  %4800 = vmatprep.subr.mxu0 0.0
  %4801 = vmatpush1.msra.mxu0 0.0
  %4802 = vmatprep.subr.mxu0 0.0
  %4803 = vmatpush1.msra.mxu0 %v36
  %4804 = vmatprep.subr.mxu0 0.0
  %4805 = vmatpush1.msra.mxu0 %v35
  %4806 = vmatprep.subr.mxu0 0.0
  %4807 = vmatpush2.msra.mxu0 0.0
  %4808 = vmatprep.subr.mxu0 0.0
  %4809 = vmatpush2.msra.mxu0 0.0
  %4810 = vmatprep.subr.mxu0 0.0
  %4811 = vmatpush2.msra.mxu0 0.0
  %4812 = vmatprep.subr.mxu0 0.0
  %4813 = vmatpush2.msra.mxu0 0.0
  %4814 = vmatprep.subr.mxu0 0.0
  %4815 = vmatpush2.msra.mxu0 0.0
  %4816 = vmatprep.subr.mxu0 0.0
  %4817 = vmatpush2.msra.mxu0 0.0
  %4818 = vmatprep.subr.mxu0 0.0
  %4819 = vmatpush2.msra.mxu0 0.0
  %4820 = vmatprep.subr.mxu0 0.0
  %4821 = vmatpush2.msra.mxu0 0.0
  %4822 = vmatprep.subr.mxu0 0.0
  %4823 = vmatpush2.msra.mxu0 0.0
  %4824 = vmatprep.subr.mxu0 0.0
  %4825 = vmatpush2.msra.mxu0 0.0
  %4826 = vmatprep.subr.mxu0 0.0
  %4827 = vmatpush2.msra.mxu0 0.0
  %4828 = vmatprep.subr.mxu0 0.0
  %4829 = vmatpush2.msra.mxu0 0.0
  %4830 = vmatprep.subr.mxu0 0.0
  %4831 = vmatpush2.msra.mxu0 0.0
  %4832 = vmatprep.subr.mxu0 0.0
  %4833 = vmatpush2.msra.mxu0 0.0
  %4834 = vmatprep.subr.mxu0 0.0
  %4835 = vmatpush2.msra.mxu0 0.0
  %4836 = vmatprep.subr.mxu0 0.0
  %4837 = vmatpush2.msra.mxu0 0.0
  %4838 = vmatprep.mubr.f32.mxu0 0.0
  %4839 = vmatmul.mubr.f32.gmra.mxu0 %v4772
  %v4840 = vpop.f32.mrf.mxu0
  %v4841 = vadd.f32 0.0, %v4840
  %v4842 = vpop.f32.mrf.mxu0
  %4843 = vdwg.mxu0
  %v4844 = vadd.f32 %v4558, %v4841
  %4845 = vmatprep.subr.mxu0 0.0
  %4846 = vmatpush1.msra.mxu0 0.0
  %4847 = vmatprep.subr.mxu0 0.0
  %4848 = vmatpush1.msra.mxu0 0.0
  %4849 = vmatprep.subr.mxu0 0.0
  %4850 = vmatpush1.msra.mxu0 0.0
  %4851 = vmatprep.subr.mxu0 0.0
  %4852 = vmatpush1.msra.mxu0 0.0
  %4853 = vmatprep.subr.mxu0 0.0
  %4854 = vmatpush1.msra.mxu0 0.0
  %4855 = vmatprep.subr.mxu0 0.0
  %4856 = vmatpush1.msra.mxu0 0.0
  %4857 = vmatprep.subr.mxu0 0.0
  %4858 = vmatpush1.msra.mxu0 0.0
  %4859 = vmatprep.subr.mxu0 0.0
  %4860 = vmatpush1.msra.mxu0 0.0
  %4861 = vmatprep.subr.mxu0 0.0
  %4862 = vmatpush1.msra.mxu0 0.0
  %4863 = vmatprep.subr.mxu0 0.0
  %4864 = vmatpush1.msra.mxu0 0.0
  %4865 = vmatprep.subr.mxu0 0.0
  %4866 = vmatpush1.msra.mxu0 0.0
  %4867 = vmatprep.subr.mxu0 0.0
  %4868 = vmatpush1.msra.mxu0 0.0
  %4869 = vmatprep.subr.mxu0 0.0
  %4870 = vmatpush1.msra.mxu0 0.0
  %4871 = vmatprep.subr.mxu0 0.0
  %4872 = vmatpush1.msra.mxu0 0.0
  %4873 = vmatprep.subr.mxu0 0.0
  %4874 = vmatpush1.msra.mxu0 %v38
  %4875 = vmatprep.subr.mxu0 0.0
  %4876 = vmatpush1.msra.mxu0 %v37
  %4877 = vmatprep.subr.mxu0 0.0
  %4878 = vmatpush2.msra.mxu0 0.0
  %4879 = vmatprep.subr.mxu0 0.0
  %4880 = vmatpush2.msra.mxu0 0.0
  %4881 = vmatprep.subr.mxu0 0.0
  %4882 = vmatpush2.msra.mxu0 0.0
  %4883 = vmatprep.subr.mxu0 0.0
  %4884 = vmatpush2.msra.mxu0 0.0
  %4885 = vmatprep.subr.mxu0 0.0
  %4886 = vmatpush2.msra.mxu0 0.0
  %4887 = vmatprep.subr.mxu0 0.0
  %4888 = vmatpush2.msra.mxu0 0.0
  %4889 = vmatprep.subr.mxu0 0.0
  %4890 = vmatpush2.msra.mxu0 0.0
  %4891 = vmatprep.subr.mxu0 0.0
  %4892 = vmatpush2.msra.mxu0 0.0
  %4893 = vmatprep.subr.mxu0 0.0
  %4894 = vmatpush2.msra.mxu0 0.0
  %4895 = vmatprep.subr.mxu0 0.0
  %4896 = vmatpush2.msra.mxu0 0.0
  %4897 = vmatprep.subr.mxu0 0.0
  %4898 = vmatpush2.msra.mxu0 0.0
  %4899 = vmatprep.subr.mxu0 0.0
  %4900 = vmatpush2.msra.mxu0 0.0
  %4901 = vmatprep.subr.mxu0 0.0
  %4902 = vmatpush2.msra.mxu0 0.0
  %4903 = vmatprep.subr.mxu0 0.0
  %4904 = vmatpush2.msra.mxu0 0.0
  %4905 = vmatprep.subr.mxu0 0.0
  %4906 = vmatpush2.msra.mxu0 0.0
  %4907 = vmatprep.subr.mxu0 0.0
  %4908 = vmatpush2.msra.mxu0 0.0
  %4909 = vmatprep.mubr.f32.mxu0 0.0
  %4910 = vmatmul.mubr.f32.gmra.mxu0 %v4772
  %v4911 = vpop.f32.mrf.mxu0
  %v4912 = vadd.f32 0.0, %v4911
  %v4913 = vpop.f32.mrf.mxu0
  %4914 = vdwg.mxu0
  %v4915 = vadd.f32 %v4628, %v4912
  %4916 = vmatprep.subr.mxu0 0.0
  %4917 = vmatpush1.msra.mxu0 0.0
  %4918 = vmatprep.subr.mxu0 0.0
  %4919 = vmatpush1.msra.mxu0 0.0
  %4920 = vmatprep.subr.mxu0 0.0
  %4921 = vmatpush1.msra.mxu0 0.0
  %4922 = vmatprep.subr.mxu0 0.0
  %4923 = vmatpush1.msra.mxu0 0.0
  %4924 = vmatprep.subr.mxu0 0.0
  %4925 = vmatpush1.msra.mxu0 0.0
  %4926 = vmatprep.subr.mxu0 0.0
  %4927 = vmatpush1.msra.mxu0 0.0
  %4928 = vmatprep.subr.mxu0 0.0
  %4929 = vmatpush1.msra.mxu0 0.0
  %4930 = vmatprep.subr.mxu0 0.0
  %4931 = vmatpush1.msra.mxu0 0.0
  %4932 = vmatprep.subr.mxu0 0.0
  %4933 = vmatpush1.msra.mxu0 0.0
  %4934 = vmatprep.subr.mxu0 0.0
  %4935 = vmatpush1.msra.mxu0 0.0
  %4936 = vmatprep.subr.mxu0 0.0
  %4937 = vmatpush1.msra.mxu0 0.0
  %4938 = vmatprep.subr.mxu0 0.0
  %4939 = vmatpush1.msra.mxu0 0.0
  %4940 = vmatprep.subr.mxu0 0.0
  %4941 = vmatpush1.msra.mxu0 0.0
  %4942 = vmatprep.subr.mxu0 0.0
  %4943 = vmatpush1.msra.mxu0 0.0
  %4944 = vmatprep.subr.mxu0 0.0
  %4945 = vmatpush1.msra.mxu0 %v40
  %4946 = vmatprep.subr.mxu0 0.0
  %4947 = vmatpush1.msra.mxu0 %v39
  %4948 = vmatprep.subr.mxu0 0.0
  %4949 = vmatpush2.msra.mxu0 0.0
  %4950 = vmatprep.subr.mxu0 0.0
  %4951 = vmatpush2.msra.mxu0 0.0
  %4952 = vmatprep.subr.mxu0 0.0
  %4953 = vmatpush2.msra.mxu0 0.0
  %4954 = vmatprep.subr.mxu0 0.0
  %4955 = vmatpush2.msra.mxu0 0.0
  %4956 = vmatprep.subr.mxu0 0.0
  %4957 = vmatpush2.msra.mxu0 0.0
  %4958 = vmatprep.subr.mxu0 0.0
  %4959 = vmatpush2.msra.mxu0 0.0
  %4960 = vmatprep.subr.mxu0 0.0
  %4961 = vmatpush2.msra.mxu0 0.0
  %4962 = vmatprep.subr.mxu0 0.0
  %4963 = vmatpush2.msra.mxu0 0.0
  %4964 = vmatprep.subr.mxu0 0.0
  %4965 = vmatpush2.msra.mxu0 0.0
  %4966 = vmatprep.subr.mxu0 0.0
  %4967 = vmatpush2.msra.mxu0 0.0
  %4968 = vmatprep.subr.mxu0 0.0
  %4969 = vmatpush2.msra.mxu0 0.0
  %4970 = vmatprep.subr.mxu0 0.0
  %4971 = vmatpush2.msra.mxu0 0.0
  %4972 = vmatprep.subr.mxu0 0.0
  %4973 = vmatpush2.msra.mxu0 0.0
  %4974 = vmatprep.subr.mxu0 0.0
  %4975 = vmatpush2.msra.mxu0 0.0
  %4976 = vmatprep.subr.mxu0 0.0
  %4977 = vmatpush2.msra.mxu0 0.0
  %4978 = vmatprep.subr.mxu0 0.0
  %4979 = vmatpush2.msra.mxu0 0.0
  %4980 = vmatprep.mubr.f32.mxu0 0.0
  %4981 = vmatmul.mubr.f32.gmra.mxu0 %v4772
  %v4982 = vpop.f32.mrf.mxu0
  %v4983 = vadd.f32 0.0, %v4982
  %v4984 = vpop.f32.mrf.mxu0
  %4985 = vdwg.mxu0
  %v4986 = vadd.f32 %v4698, %v4983
  %4987 = vmatprep.subr.mxu0 0.0
  %4988 = vmatpush1.msra.mxu0 0.0
  %4989 = vmatprep.subr.mxu0 0.0
  %4990 = vmatpush1.msra.mxu0 0.0
  %4991 = vmatprep.subr.mxu0 0.0
  %4992 = vmatpush1.msra.mxu0 0.0
  %4993 = vmatprep.subr.mxu0 0.0
  %4994 = vmatpush1.msra.mxu0 0.0
  %4995 = vmatprep.subr.mxu0 0.0
  %4996 = vmatpush1.msra.mxu0 0.0
  %4997 = vmatprep.subr.mxu0 0.0
  %4998 = vmatpush1.msra.mxu0 0.0
  %4999 = vmatprep.subr.mxu0 0.0
  %5000 = vmatpush1.msra.mxu0 0.0
  %5001 = vmatprep.subr.mxu0 0.0
  %5002 = vmatpush1.msra.mxu0 0.0
  %5003 = vmatprep.subr.mxu0 0.0
  %5004 = vmatpush1.msra.mxu0 0.0
  %5005 = vmatprep.subr.mxu0 0.0
  %5006 = vmatpush1.msra.mxu0 0.0
  %5007 = vmatprep.subr.mxu0 0.0
  %5008 = vmatpush1.msra.mxu0 0.0
  %5009 = vmatprep.subr.mxu0 0.0
  %5010 = vmatpush1.msra.mxu0 0.0
  %5011 = vmatprep.subr.mxu0 0.0
  %5012 = vmatpush1.msra.mxu0 0.0
  %5013 = vmatprep.subr.mxu0 0.0
  %5014 = vmatpush1.msra.mxu0 0.0
  %5015 = vmatprep.subr.mxu0 0.0
  %5016 = vmatpush1.msra.mxu0 %v42
  %5017 = vmatprep.subr.mxu0 0.0
  %5018 = vmatpush1.msra.mxu0 %v41
  %5019 = vmatprep.subr.mxu0 0.0
  %5020 = vmatpush2.msra.mxu0 0.0
  %5021 = vmatprep.subr.mxu0 0.0
  %5022 = vmatpush2.msra.mxu0 0.0
  %5023 = vmatprep.subr.mxu0 0.0
  %5024 = vmatpush2.msra.mxu0 0.0
  %5025 = vmatprep.subr.mxu0 0.0
  %5026 = vmatpush2.msra.mxu0 0.0
  %5027 = vmatprep.subr.mxu0 0.0
  %5028 = vmatpush2.msra.mxu0 0.0
  %5029 = vmatprep.subr.mxu0 0.0
  %5030 = vmatpush2.msra.mxu0 0.0
  %5031 = vmatprep.subr.mxu0 0.0
  %5032 = vmatpush2.msra.mxu0 0.0
  %5033 = vmatprep.subr.mxu0 0.0
  %5034 = vmatpush2.msra.mxu0 0.0
  %5035 = vmatprep.subr.mxu0 0.0
  %5036 = vmatpush2.msra.mxu0 0.0
  %5037 = vmatprep.subr.mxu0 0.0
  %5038 = vmatpush2.msra.mxu0 0.0
  %5039 = vmatprep.subr.mxu0 0.0
  %5040 = vmatpush2.msra.mxu0 0.0
  %5041 = vmatprep.subr.mxu0 0.0
  %5042 = vmatpush2.msra.mxu0 0.0
  %5043 = vmatprep.subr.mxu0 0.0
  %5044 = vmatpush2.msra.mxu0 0.0
  %5045 = vmatprep.subr.mxu0 0.0
  %5046 = vmatpush2.msra.mxu0 0.0
  %5047 = vmatprep.subr.mxu0 0.0
  %5048 = vmatpush2.msra.mxu0 0.0
  %5049 = vmatprep.subr.mxu0 0.0
  %5050 = vmatpush2.msra.mxu0 0.0
  %5051 = vmatprep.mubr.f32.mxu0 0.0
  %5052 = vmatmul.mubr.f32.gmra.mxu0 %v4772
  %v5053 = vpop.f32.mrf.mxu0
  %v5054 = vadd.f32 0.0, %v5053
  %v5055 = vpop.f32.mrf.mxu0
  %5056 = vdwg.mxu0
  %v5057 = vadd.f32 %v4768, %v5054
  %v5058 = vxor.u32 %v4844, 2147483648
  %v5059 = vmul.f32 %v5058, 1.442695
  %v5060 = vpow.pop %v5059
  %v5061 = vadd.f32 %v5060, 1.0
  %v5062 = vrcp.pop %v5061
  %v5063 = vmul.f32 1.0, %v5062
  %v5064 = vxor.u32 %v4915, 2147483648
  %v5065 = vmul.f32 %v5064, 1.442695
  %v5066 = vpow.pop %v5065
  %v5067 = vadd.f32 %v5066, 1.0
  %v5068 = vrcp.pop %v5067
  %v5069 = vmul.f32 1.0, %v5068
  %v5070 = vtanh.pop %v4986
  %v5071 = vxor.u32 %v5057, 2147483648
  %v5072 = vmul.f32 %v5071, 1.442695
  %v5073 = vpow.pop %v5072
  %v5074 = vadd.f32 %v5073, 1.0
  %v5075 = vrcp.pop %v5074
  %v5076 = vmul.f32 1.0, %v5075
  %v5077 = vmul.f32 %v5069, %v4171
  %v5078 = vmul.f32 %v5063, %v5070
  %v5079 = vadd.f32 %v5077, %v5078
  %v5080 = vtanh.pop %v5079
  %v5081 = vmul.f32 %v5076, %v5080
  %vm5082 = vcmp.eq.s32.totalorder %v546, 4
  %v5083 = vlaneseq
  %v5084 = vshrl.u32 %v5083, 7
  %v5085 = vsub.s32 7, %v5084
  %v5086 = vrot.slane %v5081, %v5085
  %v5087 = vsel %vm5082, %v5086, %v4179
  %5088 = vmatprep.subr.mxu0 0.0
  %5089 = vmatpush1.msra.mxu0 0.0
  %5090 = vmatprep.subr.mxu0 0.0
  %5091 = vmatpush1.msra.mxu0 0.0
  %5092 = vmatprep.subr.mxu0 0.0
  %5093 = vmatpush1.msra.mxu0 0.0
  %5094 = vmatprep.subr.mxu0 0.0
  %5095 = vmatpush1.msra.mxu0 0.0
  %5096 = vmatprep.subr.mxu0 0.0
  %5097 = vmatpush1.msra.mxu0 0.0
  %5098 = vmatprep.subr.mxu0 0.0
  %5099 = vmatpush1.msra.mxu0 0.0
  %5100 = vmatprep.subr.mxu0 0.0
  %5101 = vmatpush1.msra.mxu0 0.0
  %5102 = vmatprep.subr.mxu0 0.0
  %5103 = vmatpush1.msra.mxu0 0.0
  %5104 = vmatprep.subr.mxu0 0.0
  %5105 = vmatpush1.msra.mxu0 0.0
  %5106 = vmatprep.subr.mxu0 0.0
  %5107 = vmatpush1.msra.mxu0 0.0
  %5108 = vmatprep.subr.mxu0 0.0
  %5109 = vmatpush1.msra.mxu0 0.0
  %5110 = vmatprep.subr.mxu0 0.0
  %5111 = vmatpush1.msra.mxu0 0.0
  %5112 = vmatprep.subr.mxu0 0.0
  %5113 = vmatpush1.msra.mxu0 0.0
  %5114 = vmatprep.subr.mxu0 0.0
  %5115 = vmatpush1.msra.mxu0 0.0
  %5116 = vmatprep.subr.mxu0 0.0
  %5117 = vmatpush1.msra.mxu0 %v16
  %5118 = vmatprep.subr.mxu0 0.0
  %5119 = vmatpush1.msra.mxu0 %v15
  %5120 = vmatprep.subr.mxu0 0.0
  %5121 = vmatpush2.msra.mxu0 0.0
  %5122 = vmatprep.subr.mxu0 0.0
  %5123 = vmatpush2.msra.mxu0 0.0
  %5124 = vmatprep.subr.mxu0 0.0
  %5125 = vmatpush2.msra.mxu0 0.0
  %5126 = vmatprep.subr.mxu0 0.0
  %5127 = vmatpush2.msra.mxu0 0.0
  %5128 = vmatprep.subr.mxu0 0.0
  %5129 = vmatpush2.msra.mxu0 0.0
  %5130 = vmatprep.subr.mxu0 0.0
  %5131 = vmatpush2.msra.mxu0 0.0
  %5132 = vmatprep.subr.mxu0 0.0
  %5133 = vmatpush2.msra.mxu0 0.0
  %5134 = vmatprep.subr.mxu0 0.0
  %5135 = vmatpush2.msra.mxu0 0.0
  %5136 = vmatprep.subr.mxu0 0.0
  %5137 = vmatpush2.msra.mxu0 0.0
  %5138 = vmatprep.subr.mxu0 0.0
  %5139 = vmatpush2.msra.mxu0 0.0
  %5140 = vmatprep.subr.mxu0 0.0
  %5141 = vmatpush2.msra.mxu0 0.0
  %5142 = vmatprep.subr.mxu0 0.0
  %5143 = vmatpush2.msra.mxu0 0.0
  %5144 = vmatprep.subr.mxu0 0.0
  %5145 = vmatpush2.msra.mxu0 0.0
  %5146 = vmatprep.subr.mxu0 0.0
  %5147 = vmatpush2.msra.mxu0 0.0
  %5148 = vmatprep.subr.mxu0 0.0
  %5149 = vmatpush2.msra.mxu0 0.0
  %5150 = vmatprep.subr.mxu0 0.0
  %5151 = vmatpush2.msra.mxu0 0.0
  %5152 = vmatprep.mubr.f32.mxu0 0.0
  %5153 = vmatmul.mubr.f32.gmra.mxu0 %v4489
  %v5154 = vpop.f32.mrf.mxu0
  %v5155 = vadd.f32 0.0, %v5154
  %v5156 = vpop.f32.mrf.mxu0
  %5157 = vdwg.mxu0
  %v5158 = vadd.f32 %v180, %v5155
  %5159 = vmatprep.subr.mxu0 0.0
  %5160 = vmatpush1.msra.mxu0 0.0
  %5161 = vmatprep.subr.mxu0 0.0
  %5162 = vmatpush1.msra.mxu0 0.0
  %5163 = vmatprep.subr.mxu0 0.0
  %5164 = vmatpush1.msra.mxu0 0.0
  %5165 = vmatprep.subr.mxu0 0.0
  %5166 = vmatpush1.msra.mxu0 0.0
  %5167 = vmatprep.subr.mxu0 0.0
  %5168 = vmatpush1.msra.mxu0 0.0
  %5169 = vmatprep.subr.mxu0 0.0
  %5170 = vmatpush1.msra.mxu0 0.0
  %5171 = vmatprep.subr.mxu0 0.0
  %5172 = vmatpush1.msra.mxu0 0.0
  %5173 = vmatprep.subr.mxu0 0.0
  %5174 = vmatpush1.msra.mxu0 0.0
  %5175 = vmatprep.subr.mxu0 0.0
  %5176 = vmatpush1.msra.mxu0 0.0
  %5177 = vmatprep.subr.mxu0 0.0
  %5178 = vmatpush1.msra.mxu0 0.0
  %5179 = vmatprep.subr.mxu0 0.0
  %5180 = vmatpush1.msra.mxu0 0.0
  %5181 = vmatprep.subr.mxu0 0.0
  %5182 = vmatpush1.msra.mxu0 0.0
  %5183 = vmatprep.subr.mxu0 0.0
  %5184 = vmatpush1.msra.mxu0 0.0
  %5185 = vmatprep.subr.mxu0 0.0
  %5186 = vmatpush1.msra.mxu0 0.0
  %5187 = vmatprep.subr.mxu0 0.0
  %5188 = vmatpush1.msra.mxu0 %v18
  %5189 = vmatprep.subr.mxu0 0.0
  %5190 = vmatpush1.msra.mxu0 %v17
  %5191 = vmatprep.subr.mxu0 0.0
  %5192 = vmatpush2.msra.mxu0 0.0
  %5193 = vmatprep.subr.mxu0 0.0
  %5194 = vmatpush2.msra.mxu0 0.0
  %5195 = vmatprep.subr.mxu0 0.0
  %5196 = vmatpush2.msra.mxu0 0.0
  %5197 = vmatprep.subr.mxu0 0.0
  %5198 = vmatpush2.msra.mxu0 0.0
  %5199 = vmatprep.subr.mxu0 0.0
  %5200 = vmatpush2.msra.mxu0 0.0
  %5201 = vmatprep.subr.mxu0 0.0
  %5202 = vmatpush2.msra.mxu0 0.0
  %5203 = vmatprep.subr.mxu0 0.0
  %5204 = vmatpush2.msra.mxu0 0.0
  %5205 = vmatprep.subr.mxu0 0.0
  %5206 = vmatpush2.msra.mxu0 0.0
  %5207 = vmatprep.subr.mxu0 0.0
  %5208 = vmatpush2.msra.mxu0 0.0
  %5209 = vmatprep.subr.mxu0 0.0
  %5210 = vmatpush2.msra.mxu0 0.0
  %5211 = vmatprep.subr.mxu0 0.0
  %5212 = vmatpush2.msra.mxu0 0.0
  %5213 = vmatprep.subr.mxu0 0.0
  %5214 = vmatpush2.msra.mxu0 0.0
  %5215 = vmatprep.subr.mxu0 0.0
  %5216 = vmatpush2.msra.mxu0 0.0
  %5217 = vmatprep.subr.mxu0 0.0
  %5218 = vmatpush2.msra.mxu0 0.0
  %5219 = vmatprep.subr.mxu0 0.0
  %5220 = vmatpush2.msra.mxu0 0.0
  %5221 = vmatprep.subr.mxu0 0.0
  %5222 = vmatpush2.msra.mxu0 0.0
  %5223 = vmatprep.mubr.f32.mxu0 0.0
  %5224 = vmatmul.mubr.f32.gmra.mxu0 %v4489
  %v5225 = vpop.f32.mrf.mxu0
  %v5226 = vadd.f32 0.0, %v5225
  %v5227 = vpop.f32.mrf.mxu0
  %5228 = vdwg.mxu0
  %v5229 = vadd.f32 %v292, %v5226
  %5230 = vmatprep.subr.mxu0 0.0
  %5231 = vmatpush1.msra.mxu0 0.0
  %5232 = vmatprep.subr.mxu0 0.0
  %5233 = vmatpush1.msra.mxu0 0.0
  %5234 = vmatprep.subr.mxu0 0.0
  %5235 = vmatpush1.msra.mxu0 0.0
  %5236 = vmatprep.subr.mxu0 0.0
  %5237 = vmatpush1.msra.mxu0 0.0
  %5238 = vmatprep.subr.mxu0 0.0
  %5239 = vmatpush1.msra.mxu0 0.0
  %5240 = vmatprep.subr.mxu0 0.0
  %5241 = vmatpush1.msra.mxu0 0.0
  %5242 = vmatprep.subr.mxu0 0.0
  %5243 = vmatpush1.msra.mxu0 0.0
  %5244 = vmatprep.subr.mxu0 0.0
  %5245 = vmatpush1.msra.mxu0 0.0
  %5246 = vmatprep.subr.mxu0 0.0
  %5247 = vmatpush1.msra.mxu0 0.0
  %5248 = vmatprep.subr.mxu0 0.0
  %5249 = vmatpush1.msra.mxu0 0.0
  %5250 = vmatprep.subr.mxu0 0.0
  %5251 = vmatpush1.msra.mxu0 0.0
  %5252 = vmatprep.subr.mxu0 0.0
  %5253 = vmatpush1.msra.mxu0 0.0
  %5254 = vmatprep.subr.mxu0 0.0
  %5255 = vmatpush1.msra.mxu0 0.0
  %5256 = vmatprep.subr.mxu0 0.0
  %5257 = vmatpush1.msra.mxu0 0.0
  %5258 = vmatprep.subr.mxu0 0.0
  %5259 = vmatpush1.msra.mxu0 %v20
  %5260 = vmatprep.subr.mxu0 0.0
  %5261 = vmatpush1.msra.mxu0 %v19
  %5262 = vmatprep.subr.mxu0 0.0
  %5263 = vmatpush2.msra.mxu0 0.0
  %5264 = vmatprep.subr.mxu0 0.0
  %5265 = vmatpush2.msra.mxu0 0.0
  %5266 = vmatprep.subr.mxu0 0.0
  %5267 = vmatpush2.msra.mxu0 0.0
  %5268 = vmatprep.subr.mxu0 0.0
  %5269 = vmatpush2.msra.mxu0 0.0
  %5270 = vmatprep.subr.mxu0 0.0
  %5271 = vmatpush2.msra.mxu0 0.0
  %5272 = vmatprep.subr.mxu0 0.0
  %5273 = vmatpush2.msra.mxu0 0.0
  %5274 = vmatprep.subr.mxu0 0.0
  %5275 = vmatpush2.msra.mxu0 0.0
  %5276 = vmatprep.subr.mxu0 0.0
  %5277 = vmatpush2.msra.mxu0 0.0
  %5278 = vmatprep.subr.mxu0 0.0
  %5279 = vmatpush2.msra.mxu0 0.0
  %5280 = vmatprep.subr.mxu0 0.0
  %5281 = vmatpush2.msra.mxu0 0.0
  %5282 = vmatprep.subr.mxu0 0.0
  %5283 = vmatpush2.msra.mxu0 0.0
  %5284 = vmatprep.subr.mxu0 0.0
  %5285 = vmatpush2.msra.mxu0 0.0
  %5286 = vmatprep.subr.mxu0 0.0
  %5287 = vmatpush2.msra.mxu0 0.0
  %5288 = vmatprep.subr.mxu0 0.0
  %5289 = vmatpush2.msra.mxu0 0.0
  %5290 = vmatprep.subr.mxu0 0.0
  %5291 = vmatpush2.msra.mxu0 0.0
  %5292 = vmatprep.subr.mxu0 0.0
  %5293 = vmatpush2.msra.mxu0 0.0
  %5294 = vmatprep.mubr.f32.mxu0 0.0
  %5295 = vmatmul.mubr.f32.gmra.mxu0 %v4489
  %v5296 = vpop.f32.mrf.mxu0
  %v5297 = vadd.f32 0.0, %v5296
  %v5298 = vpop.f32.mrf.mxu0
  %5299 = vdwg.mxu0
  %v5300 = vadd.f32 %v404, %v5297
  %5301 = vmatprep.subr.mxu0 0.0
  %5302 = vmatpush1.msra.mxu0 0.0
  %5303 = vmatprep.subr.mxu0 0.0
  %5304 = vmatpush1.msra.mxu0 0.0
  %5305 = vmatprep.subr.mxu0 0.0
  %5306 = vmatpush1.msra.mxu0 0.0
  %5307 = vmatprep.subr.mxu0 0.0
  %5308 = vmatpush1.msra.mxu0 0.0
  %5309 = vmatprep.subr.mxu0 0.0
  %5310 = vmatpush1.msra.mxu0 0.0
  %5311 = vmatprep.subr.mxu0 0.0
  %5312 = vmatpush1.msra.mxu0 0.0
  %5313 = vmatprep.subr.mxu0 0.0
  %5314 = vmatpush1.msra.mxu0 0.0
  %5315 = vmatprep.subr.mxu0 0.0
  %5316 = vmatpush1.msra.mxu0 0.0
  %5317 = vmatprep.subr.mxu0 0.0
  %5318 = vmatpush1.msra.mxu0 0.0
  %5319 = vmatprep.subr.mxu0 0.0
  %5320 = vmatpush1.msra.mxu0 0.0
  %5321 = vmatprep.subr.mxu0 0.0
  %5322 = vmatpush1.msra.mxu0 0.0
  %5323 = vmatprep.subr.mxu0 0.0
  %5324 = vmatpush1.msra.mxu0 0.0
  %5325 = vmatprep.subr.mxu0 0.0
  %5326 = vmatpush1.msra.mxu0 0.0
  %5327 = vmatprep.subr.mxu0 0.0
  %5328 = vmatpush1.msra.mxu0 0.0
  %5329 = vmatprep.subr.mxu0 0.0
  %5330 = vmatpush1.msra.mxu0 %v22
  %5331 = vmatprep.subr.mxu0 0.0
  %5332 = vmatpush1.msra.mxu0 %v21
  %5333 = vmatprep.subr.mxu0 0.0
  %5334 = vmatpush2.msra.mxu0 0.0
  %5335 = vmatprep.subr.mxu0 0.0
  %5336 = vmatpush2.msra.mxu0 0.0
  %5337 = vmatprep.subr.mxu0 0.0
  %5338 = vmatpush2.msra.mxu0 0.0
  %5339 = vmatprep.subr.mxu0 0.0
  %5340 = vmatpush2.msra.mxu0 0.0
  %5341 = vmatprep.subr.mxu0 0.0
  %5342 = vmatpush2.msra.mxu0 0.0
  %5343 = vmatprep.subr.mxu0 0.0
  %5344 = vmatpush2.msra.mxu0 0.0
  %5345 = vmatprep.subr.mxu0 0.0
  %5346 = vmatpush2.msra.mxu0 0.0
  %5347 = vmatprep.subr.mxu0 0.0
  %5348 = vmatpush2.msra.mxu0 0.0
  %5349 = vmatprep.subr.mxu0 0.0
  %5350 = vmatpush2.msra.mxu0 0.0
  %5351 = vmatprep.subr.mxu0 0.0
  %5352 = vmatpush2.msra.mxu0 0.0
  %5353 = vmatprep.subr.mxu0 0.0
  %5354 = vmatpush2.msra.mxu0 0.0
  %5355 = vmatprep.subr.mxu0 0.0
  %5356 = vmatpush2.msra.mxu0 0.0
  %5357 = vmatprep.subr.mxu0 0.0
  %5358 = vmatpush2.msra.mxu0 0.0
  %5359 = vmatprep.subr.mxu0 0.0
  %5360 = vmatpush2.msra.mxu0 0.0
  %5361 = vmatprep.subr.mxu0 0.0
  %5362 = vmatpush2.msra.mxu0 0.0
  %5363 = vmatprep.subr.mxu0 0.0
  %5364 = vmatpush2.msra.mxu0 0.0
  %5365 = vmatprep.mubr.f32.mxu0 0.0
  %5366 = vmatmul.mubr.f32.gmra.mxu0 %v4489
  %v5367 = vpop.f32.mrf.mxu0
  %v5368 = vadd.f32 0.0, %v5367
  %v5369 = vpop.f32.mrf.mxu0
  %5370 = vdwg.mxu0
  %v5371 = vadd.f32 %v516, %v5368
  %v5372 = vxor.u32 %v5158, 2147483648
  %v5373 = vmul.f32 %v5372, 1.442695
  %v5374 = vpow.pop %v5373
  %v5375 = vadd.f32 %v5374, 1.0
  %v5376 = vrcp.pop %v5375
  %v5377 = vmul.f32 1.0, %v5376
  %v5378 = vxor.u32 %v5229, 2147483648
  %v5379 = vmul.f32 %v5378, 1.442695
  %v5380 = vpow.pop %v5379
  %v5381 = vadd.f32 %v5380, 1.0
  %v5382 = vrcp.pop %v5381
  %v5383 = vmul.f32 1.0, %v5382
  %v5384 = vtanh.pop %v5300
  %v5385 = vxor.u32 %v5371, 2147483648
  %v5386 = vmul.f32 %v5385, 1.442695
  %v5387 = vpow.pop %v5386
  %v5388 = vadd.f32 %v5387, 1.0
  %v5389 = vrcp.pop %v5388
  %v5390 = vmul.f32 1.0, %v5389
  %v5391 = vmul.f32 %v5383, %v4485
  %v5392 = vmul.f32 %v5377, %v5384
  %v5393 = vadd.f32 %v5391, %v5392
  %v5394 = vtanh.pop %v5393
  %v5395 = vmul.f32 %v5390, %v5394
  %v5397 = vsel %vm547, %v5395, 0
  %5399 = vmatprep.subr.mxu0 0.0
  %5400 = vmatpush1.msra.mxu0 0.0
  %5401 = vmatprep.subr.mxu0 0.0
  %5402 = vmatpush1.msra.mxu0 0.0
  %5403 = vmatprep.subr.mxu0 0.0
  %5404 = vmatpush1.msra.mxu0 0.0
  %5405 = vmatprep.subr.mxu0 0.0
  %5406 = vmatpush1.msra.mxu0 0.0
  %5407 = vmatprep.subr.mxu0 0.0
  %5408 = vmatpush1.msra.mxu0 0.0
  %5409 = vmatprep.subr.mxu0 0.0
  %5410 = vmatpush1.msra.mxu0 0.0
  %5411 = vmatprep.subr.mxu0 0.0
  %5412 = vmatpush1.msra.mxu0 0.0
  %5413 = vmatprep.subr.mxu0 0.0
  %5414 = vmatpush1.msra.mxu0 0.0
  %5415 = vmatprep.subr.mxu0 0.0
  %5416 = vmatpush1.msra.mxu0 0.0
  %5417 = vmatprep.subr.mxu0 0.0
  %5418 = vmatpush1.msra.mxu0 0.0
  %5419 = vmatprep.subr.mxu0 0.0
  %5420 = vmatpush1.msra.mxu0 0.0
  %5421 = vmatprep.subr.mxu0 0.0
  %5422 = vmatpush1.msra.mxu0 0.0
  %5423 = vmatprep.subr.mxu0 0.0
  %5424 = vmatpush1.msra.mxu0 0.0
  %5425 = vmatprep.subr.mxu0 0.0
  %5426 = vmatpush1.msra.mxu0 0.0
  %5427 = vmatprep.subr.mxu0 0.0
  %5428 = vmatpush1.msra.mxu0 %v28
  %5429 = vmatprep.subr.mxu0 0.0
  %5430 = vmatpush1.msra.mxu0 %v27
  %5431 = vmatprep.subr.mxu0 0.0
  %5432 = vmatpush2.msra.mxu0 0.0
  %5433 = vmatprep.subr.mxu0 0.0
  %5434 = vmatpush2.msra.mxu0 0.0
  %5435 = vmatprep.subr.mxu0 0.0
  %5436 = vmatpush2.msra.mxu0 0.0
  %5437 = vmatprep.subr.mxu0 0.0
  %5438 = vmatpush2.msra.mxu0 0.0
  %5439 = vmatprep.subr.mxu0 0.0
  %5440 = vmatpush2.msra.mxu0 0.0
  %5441 = vmatprep.subr.mxu0 0.0
  %5442 = vmatpush2.msra.mxu0 0.0
  %5443 = vmatprep.subr.mxu0 0.0
  %5444 = vmatpush2.msra.mxu0 0.0
  %5445 = vmatprep.subr.mxu0 0.0
  %5446 = vmatpush2.msra.mxu0 0.0
  %5447 = vmatprep.subr.mxu0 0.0
  %5448 = vmatpush2.msra.mxu0 0.0
  %5449 = vmatprep.subr.mxu0 0.0
  %5450 = vmatpush2.msra.mxu0 0.0
  %5451 = vmatprep.subr.mxu0 0.0
  %5452 = vmatpush2.msra.mxu0 0.0
  %5453 = vmatprep.subr.mxu0 0.0
  %5454 = vmatpush2.msra.mxu0 0.0
  %5455 = vmatprep.subr.mxu0 0.0
  %5456 = vmatpush2.msra.mxu0 0.0
  %5457 = vmatprep.subr.mxu0 0.0
  %5458 = vmatpush2.msra.mxu0 0.0
  %5459 = vmatprep.subr.mxu0 0.0
  %5460 = vmatpush2.msra.mxu0 0.0
  %5461 = vmatprep.subr.mxu0 0.0
  %5462 = vmatpush2.msra.mxu0 0.0
  %5463 = vmatprep.mubr.f32.mxu0 0.0
  %5464 = vmatmul.mubr.f32.gmra.mxu0 %v5397
  %v5465 = vpop.f32.mrf.mxu0
  %v5466 = vadd.f32 %v532, %v5465
  %v5467 = vpop.f32.mrf.mxu0
  %5468 = vdwg.mxu0
  %5469 = vmatprep.subr.mxu0 0.0
  %5470 = vmatpush1.msra.mxu0 0.0
  %5471 = vmatprep.subr.mxu0 0.0
  %5472 = vmatpush1.msra.mxu0 0.0
  %5473 = vmatprep.subr.mxu0 0.0
  %5474 = vmatpush1.msra.mxu0 0.0
  %5475 = vmatprep.subr.mxu0 0.0
  %5476 = vmatpush1.msra.mxu0 0.0
  %5477 = vmatprep.subr.mxu0 0.0
  %5478 = vmatpush1.msra.mxu0 0.0
  %5479 = vmatprep.subr.mxu0 0.0
  %5480 = vmatpush1.msra.mxu0 0.0
  %5481 = vmatprep.subr.mxu0 0.0
  %5482 = vmatpush1.msra.mxu0 0.0
  %5483 = vmatprep.subr.mxu0 0.0
  %5484 = vmatpush1.msra.mxu0 0.0
  %5485 = vmatprep.subr.mxu0 0.0
  %5486 = vmatpush1.msra.mxu0 0.0
  %5487 = vmatprep.subr.mxu0 0.0
  %5488 = vmatpush1.msra.mxu0 0.0
  %5489 = vmatprep.subr.mxu0 0.0
  %5490 = vmatpush1.msra.mxu0 0.0
  %5491 = vmatprep.subr.mxu0 0.0
  %5492 = vmatpush1.msra.mxu0 0.0
  %5493 = vmatprep.subr.mxu0 0.0
  %5494 = vmatpush1.msra.mxu0 0.0
  %5495 = vmatprep.subr.mxu0 0.0
  %5496 = vmatpush1.msra.mxu0 0.0
  %5497 = vmatprep.subr.mxu0 0.0
  %5498 = vmatpush1.msra.mxu0 %v30
  %5499 = vmatprep.subr.mxu0 0.0
  %5500 = vmatpush1.msra.mxu0 %v29
  %5501 = vmatprep.subr.mxu0 0.0
  %5502 = vmatpush2.msra.mxu0 0.0
  %5503 = vmatprep.subr.mxu0 0.0
  %5504 = vmatpush2.msra.mxu0 0.0
  %5505 = vmatprep.subr.mxu0 0.0
  %5506 = vmatpush2.msra.mxu0 0.0
  %5507 = vmatprep.subr.mxu0 0.0
  %5508 = vmatpush2.msra.mxu0 0.0
  %5509 = vmatprep.subr.mxu0 0.0
  %5510 = vmatpush2.msra.mxu0 0.0
  %5511 = vmatprep.subr.mxu0 0.0
  %5512 = vmatpush2.msra.mxu0 0.0
  %5513 = vmatprep.subr.mxu0 0.0
  %5514 = vmatpush2.msra.mxu0 0.0
  %5515 = vmatprep.subr.mxu0 0.0
  %5516 = vmatpush2.msra.mxu0 0.0
  %5517 = vmatprep.subr.mxu0 0.0
  %5518 = vmatpush2.msra.mxu0 0.0
  %5519 = vmatprep.subr.mxu0 0.0
  %5520 = vmatpush2.msra.mxu0 0.0
  %5521 = vmatprep.subr.mxu0 0.0
  %5522 = vmatpush2.msra.mxu0 0.0
  %5523 = vmatprep.subr.mxu0 0.0
  %5524 = vmatpush2.msra.mxu0 0.0
  %5525 = vmatprep.subr.mxu0 0.0
  %5526 = vmatpush2.msra.mxu0 0.0
  %5527 = vmatprep.subr.mxu0 0.0
  %5528 = vmatpush2.msra.mxu0 0.0
  %5529 = vmatprep.subr.mxu0 0.0
  %5530 = vmatpush2.msra.mxu0 0.0
  %5531 = vmatprep.subr.mxu0 0.0
  %5532 = vmatpush2.msra.mxu0 0.0
  %5533 = vmatprep.mubr.f32.mxu0 0.0
  %5534 = vmatmul.mubr.f32.gmra.mxu0 %v5397
  %v5535 = vpop.f32.mrf.mxu0
  %v5536 = vadd.f32 %v536, %v5535
  %v5537 = vpop.f32.mrf.mxu0
  %5538 = vdwg.mxu0
  %5539 = vmatprep.subr.mxu0 0.0
  %5540 = vmatpush1.msra.mxu0 0.0
  %5541 = vmatprep.subr.mxu0 0.0
  %5542 = vmatpush1.msra.mxu0 0.0
  %5543 = vmatprep.subr.mxu0 0.0
  %5544 = vmatpush1.msra.mxu0 0.0
  %5545 = vmatprep.subr.mxu0 0.0
  %5546 = vmatpush1.msra.mxu0 0.0
  %5547 = vmatprep.subr.mxu0 0.0
  %5548 = vmatpush1.msra.mxu0 0.0
  %5549 = vmatprep.subr.mxu0 0.0
  %5550 = vmatpush1.msra.mxu0 0.0
  %5551 = vmatprep.subr.mxu0 0.0
  %5552 = vmatpush1.msra.mxu0 0.0
  %5553 = vmatprep.subr.mxu0 0.0
  %5554 = vmatpush1.msra.mxu0 0.0
  %5555 = vmatprep.subr.mxu0 0.0
  %5556 = vmatpush1.msra.mxu0 0.0
  %5557 = vmatprep.subr.mxu0 0.0
  %5558 = vmatpush1.msra.mxu0 0.0
  %5559 = vmatprep.subr.mxu0 0.0
  %5560 = vmatpush1.msra.mxu0 0.0
  %5561 = vmatprep.subr.mxu0 0.0
  %5562 = vmatpush1.msra.mxu0 0.0
  %5563 = vmatprep.subr.mxu0 0.0
  %5564 = vmatpush1.msra.mxu0 0.0
  %5565 = vmatprep.subr.mxu0 0.0
  %5566 = vmatpush1.msra.mxu0 0.0
  %5567 = vmatprep.subr.mxu0 0.0
  %5568 = vmatpush1.msra.mxu0 %v32
  %5569 = vmatprep.subr.mxu0 0.0
  %5570 = vmatpush1.msra.mxu0 %v31
  %5571 = vmatprep.subr.mxu0 0.0
  %5572 = vmatpush2.msra.mxu0 0.0
  %5573 = vmatprep.subr.mxu0 0.0
  %5574 = vmatpush2.msra.mxu0 0.0
  %5575 = vmatprep.subr.mxu0 0.0
  %5576 = vmatpush2.msra.mxu0 0.0
  %5577 = vmatprep.subr.mxu0 0.0
  %5578 = vmatpush2.msra.mxu0 0.0
  %5579 = vmatprep.subr.mxu0 0.0
  %5580 = vmatpush2.msra.mxu0 0.0
  %5581 = vmatprep.subr.mxu0 0.0
  %5582 = vmatpush2.msra.mxu0 0.0
  %5583 = vmatprep.subr.mxu0 0.0
  %5584 = vmatpush2.msra.mxu0 0.0
  %5585 = vmatprep.subr.mxu0 0.0
  %5586 = vmatpush2.msra.mxu0 0.0
  %5587 = vmatprep.subr.mxu0 0.0
  %5588 = vmatpush2.msra.mxu0 0.0
  %5589 = vmatprep.subr.mxu0 0.0
  %5590 = vmatpush2.msra.mxu0 0.0
  %5591 = vmatprep.subr.mxu0 0.0
  %5592 = vmatpush2.msra.mxu0 0.0
  %5593 = vmatprep.subr.mxu0 0.0
  %5594 = vmatpush2.msra.mxu0 0.0
  %5595 = vmatprep.subr.mxu0 0.0
  %5596 = vmatpush2.msra.mxu0 0.0
  %5597 = vmatprep.subr.mxu0 0.0
  %5598 = vmatpush2.msra.mxu0 0.0
  %5599 = vmatprep.subr.mxu0 0.0
  %5600 = vmatpush2.msra.mxu0 0.0
  %5601 = vmatprep.subr.mxu0 0.0
  %5602 = vmatpush2.msra.mxu0 0.0
  %5603 = vmatprep.mubr.f32.mxu0 0.0
  %5604 = vmatmul.mubr.f32.gmra.mxu0 %v5397
  %v5605 = vpop.f32.mrf.mxu0
  %v5606 = vadd.f32 %v540, %v5605
  %v5607 = vpop.f32.mrf.mxu0
  %5608 = vdwg.mxu0
  %5609 = vmatprep.subr.mxu0 0.0
  %5610 = vmatpush1.msra.mxu0 0.0
  %5611 = vmatprep.subr.mxu0 0.0
  %5612 = vmatpush1.msra.mxu0 0.0
  %5613 = vmatprep.subr.mxu0 0.0
  %5614 = vmatpush1.msra.mxu0 0.0
  %5615 = vmatprep.subr.mxu0 0.0
  %5616 = vmatpush1.msra.mxu0 0.0
  %5617 = vmatprep.subr.mxu0 0.0
  %5618 = vmatpush1.msra.mxu0 0.0
  %5619 = vmatprep.subr.mxu0 0.0
  %5620 = vmatpush1.msra.mxu0 0.0
  %5621 = vmatprep.subr.mxu0 0.0
  %5622 = vmatpush1.msra.mxu0 0.0
  %5623 = vmatprep.subr.mxu0 0.0
  %5624 = vmatpush1.msra.mxu0 0.0
  %5625 = vmatprep.subr.mxu0 0.0
  %5626 = vmatpush1.msra.mxu0 0.0
  %5627 = vmatprep.subr.mxu0 0.0
  %5628 = vmatpush1.msra.mxu0 0.0
  %5629 = vmatprep.subr.mxu0 0.0
  %5630 = vmatpush1.msra.mxu0 0.0
  %5631 = vmatprep.subr.mxu0 0.0
  %5632 = vmatpush1.msra.mxu0 0.0
  %5633 = vmatprep.subr.mxu0 0.0
  %5634 = vmatpush1.msra.mxu0 0.0
  %5635 = vmatprep.subr.mxu0 0.0
  %5636 = vmatpush1.msra.mxu0 0.0
  %5637 = vmatprep.subr.mxu0 0.0
  %5638 = vmatpush1.msra.mxu0 %v34
  %5639 = vmatprep.subr.mxu0 0.0
  %5640 = vmatpush1.msra.mxu0 %v33
  %5641 = vmatprep.subr.mxu0 0.0
  %5642 = vmatpush2.msra.mxu0 0.0
  %5643 = vmatprep.subr.mxu0 0.0
  %5644 = vmatpush2.msra.mxu0 0.0
  %5645 = vmatprep.subr.mxu0 0.0
  %5646 = vmatpush2.msra.mxu0 0.0
  %5647 = vmatprep.subr.mxu0 0.0
  %5648 = vmatpush2.msra.mxu0 0.0
  %5649 = vmatprep.subr.mxu0 0.0
  %5650 = vmatpush2.msra.mxu0 0.0
  %5651 = vmatprep.subr.mxu0 0.0
  %5652 = vmatpush2.msra.mxu0 0.0
  %5653 = vmatprep.subr.mxu0 0.0
  %5654 = vmatpush2.msra.mxu0 0.0
  %5655 = vmatprep.subr.mxu0 0.0
  %5656 = vmatpush2.msra.mxu0 0.0
  %5657 = vmatprep.subr.mxu0 0.0
  %5658 = vmatpush2.msra.mxu0 0.0
  %5659 = vmatprep.subr.mxu0 0.0
  %5660 = vmatpush2.msra.mxu0 0.0
  %5661 = vmatprep.subr.mxu0 0.0
  %5662 = vmatpush2.msra.mxu0 0.0
  %5663 = vmatprep.subr.mxu0 0.0
  %5664 = vmatpush2.msra.mxu0 0.0
  %5665 = vmatprep.subr.mxu0 0.0
  %5666 = vmatpush2.msra.mxu0 0.0
  %5667 = vmatprep.subr.mxu0 0.0
  %5668 = vmatpush2.msra.mxu0 0.0
  %5669 = vmatprep.subr.mxu0 0.0
  %5670 = vmatpush2.msra.mxu0 0.0
  %5671 = vmatprep.subr.mxu0 0.0
  %5672 = vmatpush2.msra.mxu0 0.0
  %5673 = vmatprep.mubr.f32.mxu0 0.0
  %5674 = vmatmul.mubr.f32.gmra.mxu0 %v5397
  %v5675 = vpop.f32.mrf.mxu0
  %v5676 = vadd.f32 %v544, %v5675
  %v5677 = vpop.f32.mrf.mxu0
  %5678 = vdwg.mxu0
  %v5680 = vsel %vm547, %v5081, 0
  %5682 = vmatprep.subr.mxu0 0.0
  %5683 = vmatpush1.msra.mxu0 0.0
  %5684 = vmatprep.subr.mxu0 0.0
  %5685 = vmatpush1.msra.mxu0 0.0
  %5686 = vmatprep.subr.mxu0 0.0
  %5687 = vmatpush1.msra.mxu0 0.0
  %5688 = vmatprep.subr.mxu0 0.0
  %5689 = vmatpush1.msra.mxu0 0.0
  %5690 = vmatprep.subr.mxu0 0.0
  %5691 = vmatpush1.msra.mxu0 0.0
  %5692 = vmatprep.subr.mxu0 0.0
  %5693 = vmatpush1.msra.mxu0 0.0
  %5694 = vmatprep.subr.mxu0 0.0
  %5695 = vmatpush1.msra.mxu0 0.0
  %5696 = vmatprep.subr.mxu0 0.0
  %5697 = vmatpush1.msra.mxu0 0.0
  %5698 = vmatprep.subr.mxu0 0.0
  %5699 = vmatpush1.msra.mxu0 0.0
  %5700 = vmatprep.subr.mxu0 0.0
  %5701 = vmatpush1.msra.mxu0 0.0
  %5702 = vmatprep.subr.mxu0 0.0
  %5703 = vmatpush1.msra.mxu0 0.0
  %5704 = vmatprep.subr.mxu0 0.0
  %5705 = vmatpush1.msra.mxu0 0.0
  %5706 = vmatprep.subr.mxu0 0.0
  %5707 = vmatpush1.msra.mxu0 0.0
  %5708 = vmatprep.subr.mxu0 0.0
  %5709 = vmatpush1.msra.mxu0 0.0
  %5710 = vmatprep.subr.mxu0 0.0
  %5711 = vmatpush1.msra.mxu0 %v36
  %5712 = vmatprep.subr.mxu0 0.0
  %5713 = vmatpush1.msra.mxu0 %v35
  %5714 = vmatprep.subr.mxu0 0.0
  %5715 = vmatpush2.msra.mxu0 0.0
  %5716 = vmatprep.subr.mxu0 0.0
  %5717 = vmatpush2.msra.mxu0 0.0
  %5718 = vmatprep.subr.mxu0 0.0
  %5719 = vmatpush2.msra.mxu0 0.0
  %5720 = vmatprep.subr.mxu0 0.0
  %5721 = vmatpush2.msra.mxu0 0.0
  %5722 = vmatprep.subr.mxu0 0.0
  %5723 = vmatpush2.msra.mxu0 0.0
  %5724 = vmatprep.subr.mxu0 0.0
  %5725 = vmatpush2.msra.mxu0 0.0
  %5726 = vmatprep.subr.mxu0 0.0
  %5727 = vmatpush2.msra.mxu0 0.0
  %5728 = vmatprep.subr.mxu0 0.0
  %5729 = vmatpush2.msra.mxu0 0.0
  %5730 = vmatprep.subr.mxu0 0.0
  %5731 = vmatpush2.msra.mxu0 0.0
  %5732 = vmatprep.subr.mxu0 0.0
  %5733 = vmatpush2.msra.mxu0 0.0
  %5734 = vmatprep.subr.mxu0 0.0
  %5735 = vmatpush2.msra.mxu0 0.0
  %5736 = vmatprep.subr.mxu0 0.0
  %5737 = vmatpush2.msra.mxu0 0.0
  %5738 = vmatprep.subr.mxu0 0.0
  %5739 = vmatpush2.msra.mxu0 0.0
  %5740 = vmatprep.subr.mxu0 0.0
  %5741 = vmatpush2.msra.mxu0 0.0
  %5742 = vmatprep.subr.mxu0 0.0
  %5743 = vmatpush2.msra.mxu0 0.0
  %5744 = vmatprep.subr.mxu0 0.0
  %5745 = vmatpush2.msra.mxu0 0.0
  %5746 = vmatprep.mubr.f32.mxu0 0.0
  %5747 = vmatmul.mubr.f32.gmra.mxu0 %v5680
  %v5748 = vpop.f32.mrf.mxu0
  %v5749 = vadd.f32 0.0, %v5748
  %v5750 = vpop.f32.mrf.mxu0
  %5751 = vdwg.mxu0
  %v5752 = vadd.f32 %v5466, %v5749
  %5753 = vmatprep.subr.mxu0 0.0
  %5754 = vmatpush1.msra.mxu0 0.0
  %5755 = vmatprep.subr.mxu0 0.0
  %5756 = vmatpush1.msra.mxu0 0.0
  %5757 = vmatprep.subr.mxu0 0.0
  %5758 = vmatpush1.msra.mxu0 0.0
  %5759 = vmatprep.subr.mxu0 0.0
  %5760 = vmatpush1.msra.mxu0 0.0
  %5761 = vmatprep.subr.mxu0 0.0
  %5762 = vmatpush1.msra.mxu0 0.0
  %5763 = vmatprep.subr.mxu0 0.0
  %5764 = vmatpush1.msra.mxu0 0.0
  %5765 = vmatprep.subr.mxu0 0.0
  %5766 = vmatpush1.msra.mxu0 0.0
  %5767 = vmatprep.subr.mxu0 0.0
  %5768 = vmatpush1.msra.mxu0 0.0
  %5769 = vmatprep.subr.mxu0 0.0
  %5770 = vmatpush1.msra.mxu0 0.0
  %5771 = vmatprep.subr.mxu0 0.0
  %5772 = vmatpush1.msra.mxu0 0.0
  %5773 = vmatprep.subr.mxu0 0.0
  %5774 = vmatpush1.msra.mxu0 0.0
  %5775 = vmatprep.subr.mxu0 0.0
  %5776 = vmatpush1.msra.mxu0 0.0
  %5777 = vmatprep.subr.mxu0 0.0
  %5778 = vmatpush1.msra.mxu0 0.0
  %5779 = vmatprep.subr.mxu0 0.0
  %5780 = vmatpush1.msra.mxu0 0.0
  %5781 = vmatprep.subr.mxu0 0.0
  %5782 = vmatpush1.msra.mxu0 %v38
  %5783 = vmatprep.subr.mxu0 0.0
  %5784 = vmatpush1.msra.mxu0 %v37
  %5785 = vmatprep.subr.mxu0 0.0
  %5786 = vmatpush2.msra.mxu0 0.0
  %5787 = vmatprep.subr.mxu0 0.0
  %5788 = vmatpush2.msra.mxu0 0.0
  %5789 = vmatprep.subr.mxu0 0.0
  %5790 = vmatpush2.msra.mxu0 0.0
  %5791 = vmatprep.subr.mxu0 0.0
  %5792 = vmatpush2.msra.mxu0 0.0
  %5793 = vmatprep.subr.mxu0 0.0
  %5794 = vmatpush2.msra.mxu0 0.0
  %5795 = vmatprep.subr.mxu0 0.0
  %5796 = vmatpush2.msra.mxu0 0.0
  %5797 = vmatprep.subr.mxu0 0.0
  %5798 = vmatpush2.msra.mxu0 0.0
  %5799 = vmatprep.subr.mxu0 0.0
  %5800 = vmatpush2.msra.mxu0 0.0
  %5801 = vmatprep.subr.mxu0 0.0
  %5802 = vmatpush2.msra.mxu0 0.0
  %5803 = vmatprep.subr.mxu0 0.0
  %5804 = vmatpush2.msra.mxu0 0.0
  %5805 = vmatprep.subr.mxu0 0.0
  %5806 = vmatpush2.msra.mxu0 0.0
  %5807 = vmatprep.subr.mxu0 0.0
  %5808 = vmatpush2.msra.mxu0 0.0
  %5809 = vmatprep.subr.mxu0 0.0
  %5810 = vmatpush2.msra.mxu0 0.0
  %5811 = vmatprep.subr.mxu0 0.0
  %5812 = vmatpush2.msra.mxu0 0.0
  %5813 = vmatprep.subr.mxu0 0.0
  %5814 = vmatpush2.msra.mxu0 0.0
  %5815 = vmatprep.subr.mxu0 0.0
  %5816 = vmatpush2.msra.mxu0 0.0
  %5817 = vmatprep.mubr.f32.mxu0 0.0
  %5818 = vmatmul.mubr.f32.gmra.mxu0 %v5680
  %v5819 = vpop.f32.mrf.mxu0
  %v5820 = vadd.f32 0.0, %v5819
  %v5821 = vpop.f32.mrf.mxu0
  %5822 = vdwg.mxu0
  %v5823 = vadd.f32 %v5536, %v5820
  %5824 = vmatprep.subr.mxu0 0.0
  %5825 = vmatpush1.msra.mxu0 0.0
  %5826 = vmatprep.subr.mxu0 0.0
  %5827 = vmatpush1.msra.mxu0 0.0
  %5828 = vmatprep.subr.mxu0 0.0
  %5829 = vmatpush1.msra.mxu0 0.0
  %5830 = vmatprep.subr.mxu0 0.0
  %5831 = vmatpush1.msra.mxu0 0.0
  %5832 = vmatprep.subr.mxu0 0.0
  %5833 = vmatpush1.msra.mxu0 0.0
  %5834 = vmatprep.subr.mxu0 0.0
  %5835 = vmatpush1.msra.mxu0 0.0
  %5836 = vmatprep.subr.mxu0 0.0
  %5837 = vmatpush1.msra.mxu0 0.0
  %5838 = vmatprep.subr.mxu0 0.0
  %5839 = vmatpush1.msra.mxu0 0.0
  %5840 = vmatprep.subr.mxu0 0.0
  %5841 = vmatpush1.msra.mxu0 0.0
  %5842 = vmatprep.subr.mxu0 0.0
  %5843 = vmatpush1.msra.mxu0 0.0
  %5844 = vmatprep.subr.mxu0 0.0
  %5845 = vmatpush1.msra.mxu0 0.0
  %5846 = vmatprep.subr.mxu0 0.0
  %5847 = vmatpush1.msra.mxu0 0.0
  %5848 = vmatprep.subr.mxu0 0.0
  %5849 = vmatpush1.msra.mxu0 0.0
  %5850 = vmatprep.subr.mxu0 0.0
  %5851 = vmatpush1.msra.mxu0 0.0
  %5852 = vmatprep.subr.mxu0 0.0
  %5853 = vmatpush1.msra.mxu0 %v40
  %5854 = vmatprep.subr.mxu0 0.0
  %5855 = vmatpush1.msra.mxu0 %v39
  %5856 = vmatprep.subr.mxu0 0.0
  %5857 = vmatpush2.msra.mxu0 0.0
  %5858 = vmatprep.subr.mxu0 0.0
  %5859 = vmatpush2.msra.mxu0 0.0
  %5860 = vmatprep.subr.mxu0 0.0
  %5861 = vmatpush2.msra.mxu0 0.0
  %5862 = vmatprep.subr.mxu0 0.0
  %5863 = vmatpush2.msra.mxu0 0.0
  %5864 = vmatprep.subr.mxu0 0.0
  %5865 = vmatpush2.msra.mxu0 0.0
  %5866 = vmatprep.subr.mxu0 0.0
  %5867 = vmatpush2.msra.mxu0 0.0
  %5868 = vmatprep.subr.mxu0 0.0
  %5869 = vmatpush2.msra.mxu0 0.0
  %5870 = vmatprep.subr.mxu0 0.0
  %5871 = vmatpush2.msra.mxu0 0.0
  %5872 = vmatprep.subr.mxu0 0.0
  %5873 = vmatpush2.msra.mxu0 0.0
  %5874 = vmatprep.subr.mxu0 0.0
  %5875 = vmatpush2.msra.mxu0 0.0
  %5876 = vmatprep.subr.mxu0 0.0
  %5877 = vmatpush2.msra.mxu0 0.0
  %5878 = vmatprep.subr.mxu0 0.0
  %5879 = vmatpush2.msra.mxu0 0.0
  %5880 = vmatprep.subr.mxu0 0.0
  %5881 = vmatpush2.msra.mxu0 0.0
  %5882 = vmatprep.subr.mxu0 0.0
  %5883 = vmatpush2.msra.mxu0 0.0
  %5884 = vmatprep.subr.mxu0 0.0
  %5885 = vmatpush2.msra.mxu0 0.0
  %5886 = vmatprep.subr.mxu0 0.0
  %5887 = vmatpush2.msra.mxu0 0.0
  %5888 = vmatprep.mubr.f32.mxu0 0.0
  %5889 = vmatmul.mubr.f32.gmra.mxu0 %v5680
  %v5890 = vpop.f32.mrf.mxu0
  %v5891 = vadd.f32 0.0, %v5890
  %v5892 = vpop.f32.mrf.mxu0
  %5893 = vdwg.mxu0
  %v5894 = vadd.f32 %v5606, %v5891
  %5895 = vmatprep.subr.mxu0 0.0
  %5896 = vmatpush1.msra.mxu0 0.0
  %5897 = vmatprep.subr.mxu0 0.0
  %5898 = vmatpush1.msra.mxu0 0.0
  %5899 = vmatprep.subr.mxu0 0.0
  %5900 = vmatpush1.msra.mxu0 0.0
  %5901 = vmatprep.subr.mxu0 0.0
  %5902 = vmatpush1.msra.mxu0 0.0
  %5903 = vmatprep.subr.mxu0 0.0
  %5904 = vmatpush1.msra.mxu0 0.0
  %5905 = vmatprep.subr.mxu0 0.0
  %5906 = vmatpush1.msra.mxu0 0.0
  %5907 = vmatprep.subr.mxu0 0.0
  %5908 = vmatpush1.msra.mxu0 0.0
  %5909 = vmatprep.subr.mxu0 0.0
  %5910 = vmatpush1.msra.mxu0 0.0
  %5911 = vmatprep.subr.mxu0 0.0
  %5912 = vmatpush1.msra.mxu0 0.0
  %5913 = vmatprep.subr.mxu0 0.0
  %5914 = vmatpush1.msra.mxu0 0.0
  %5915 = vmatprep.subr.mxu0 0.0
  %5916 = vmatpush1.msra.mxu0 0.0
  %5917 = vmatprep.subr.mxu0 0.0
  %5918 = vmatpush1.msra.mxu0 0.0
  %5919 = vmatprep.subr.mxu0 0.0
  %5920 = vmatpush1.msra.mxu0 0.0
  %5921 = vmatprep.subr.mxu0 0.0
  %5922 = vmatpush1.msra.mxu0 0.0
  %5923 = vmatprep.subr.mxu0 0.0
  %5924 = vmatpush1.msra.mxu0 %v42
  %5925 = vmatprep.subr.mxu0 0.0
  %5926 = vmatpush1.msra.mxu0 %v41
  %5927 = vmatprep.subr.mxu0 0.0
  %5928 = vmatpush2.msra.mxu0 0.0
  %5929 = vmatprep.subr.mxu0 0.0
  %5930 = vmatpush2.msra.mxu0 0.0
  %5931 = vmatprep.subr.mxu0 0.0
  %5932 = vmatpush2.msra.mxu0 0.0
  %5933 = vmatprep.subr.mxu0 0.0
  %5934 = vmatpush2.msra.mxu0 0.0
  %5935 = vmatprep.subr.mxu0 0.0
  %5936 = vmatpush2.msra.mxu0 0.0
  %5937 = vmatprep.subr.mxu0 0.0
  %5938 = vmatpush2.msra.mxu0 0.0
  %5939 = vmatprep.subr.mxu0 0.0
  %5940 = vmatpush2.msra.mxu0 0.0
  %5941 = vmatprep.subr.mxu0 0.0
  %5942 = vmatpush2.msra.mxu0 0.0
  %5943 = vmatprep.subr.mxu0 0.0
  %5944 = vmatpush2.msra.mxu0 0.0
  %5945 = vmatprep.subr.mxu0 0.0
  %5946 = vmatpush2.msra.mxu0 0.0
  %5947 = vmatprep.subr.mxu0 0.0
  %5948 = vmatpush2.msra.mxu0 0.0
  %5949 = vmatprep.subr.mxu0 0.0
  %5950 = vmatpush2.msra.mxu0 0.0
  %5951 = vmatprep.subr.mxu0 0.0
  %5952 = vmatpush2.msra.mxu0 0.0
  %5953 = vmatprep.subr.mxu0 0.0
  %5954 = vmatpush2.msra.mxu0 0.0
  %5955 = vmatprep.subr.mxu0 0.0
  %5956 = vmatpush2.msra.mxu0 0.0
  %5957 = vmatprep.subr.mxu0 0.0
  %5958 = vmatpush2.msra.mxu0 0.0
  %5959 = vmatprep.mubr.f32.mxu0 0.0
  %5960 = vmatmul.mubr.f32.gmra.mxu0 %v5680
  %v5961 = vpop.f32.mrf.mxu0
  %v5962 = vadd.f32 0.0, %v5961
  %v5963 = vpop.f32.mrf.mxu0
  %5964 = vdwg.mxu0
  %v5965 = vadd.f32 %v5676, %v5962
  %v5966 = vxor.u32 %v5752, 2147483648
  %v5967 = vmul.f32 %v5966, 1.442695
  %v5968 = vpow.pop %v5967
  %v5969 = vadd.f32 %v5968, 1.0
  %v5970 = vrcp.pop %v5969
  %v5971 = vmul.f32 1.0, %v5970
  %v5972 = vxor.u32 %v5823, 2147483648
  %v5973 = vmul.f32 %v5972, 1.442695
  %v5974 = vpow.pop %v5973
  %v5975 = vadd.f32 %v5974, 1.0
  %v5976 = vrcp.pop %v5975
  %v5977 = vmul.f32 1.0, %v5976
  %v5978 = vtanh.pop %v5894
  %v5979 = vxor.u32 %v5965, 2147483648
  %v5980 = vmul.f32 %v5979, 1.442695
  %v5981 = vpow.pop %v5980
  %v5982 = vadd.f32 %v5981, 1.0
  %v5983 = vrcp.pop %v5982
  %v5984 = vmul.f32 1.0, %v5983
  %v5985 = vmul.f32 %v5977, %v5079
  %v5986 = vmul.f32 %v5971, %v5978
  %v5987 = vadd.f32 %v5985, %v5986
  %v5988 = vtanh.pop %v5987
  %v5989 = vmul.f32 %v5984, %v5988
  %vm5990 = vcmp.eq.s32.totalorder %v546, 5
  %v5991 = vlaneseq
  %v5992 = vshrl.u32 %v5991, 7
  %v5993 = vsub.s32 7, %v5992
  %v5994 = vrot.slane %v5989, %v5993
  %v5995 = vsel %vm5990, %v5994, %v5087
  %5996 = vmatprep.subr.mxu0 0.0
  %5997 = vmatpush1.msra.mxu0 0.0
  %5998 = vmatprep.subr.mxu0 0.0
  %5999 = vmatpush1.msra.mxu0 0.0
  %6000 = vmatprep.subr.mxu0 0.0
  %6001 = vmatpush1.msra.mxu0 0.0
  %6002 = vmatprep.subr.mxu0 0.0
  %6003 = vmatpush1.msra.mxu0 0.0
  %6004 = vmatprep.subr.mxu0 0.0
  %6005 = vmatpush1.msra.mxu0 0.0
  %6006 = vmatprep.subr.mxu0 0.0
  %6007 = vmatpush1.msra.mxu0 0.0
  %6008 = vmatprep.subr.mxu0 0.0
  %6009 = vmatpush1.msra.mxu0 0.0
  %6010 = vmatprep.subr.mxu0 0.0
  %6011 = vmatpush1.msra.mxu0 0.0
  %6012 = vmatprep.subr.mxu0 0.0
  %6013 = vmatpush1.msra.mxu0 0.0
  %6014 = vmatprep.subr.mxu0 0.0
  %6015 = vmatpush1.msra.mxu0 0.0
  %6016 = vmatprep.subr.mxu0 0.0
  %6017 = vmatpush1.msra.mxu0 0.0
  %6018 = vmatprep.subr.mxu0 0.0
  %6019 = vmatpush1.msra.mxu0 0.0
  %6020 = vmatprep.subr.mxu0 0.0
  %6021 = vmatpush1.msra.mxu0 0.0
  %6022 = vmatprep.subr.mxu0 0.0
  %6023 = vmatpush1.msra.mxu0 0.0
  %6024 = vmatprep.subr.mxu0 0.0
  %6025 = vmatpush1.msra.mxu0 %v16
  %6026 = vmatprep.subr.mxu0 0.0
  %6027 = vmatpush1.msra.mxu0 %v15
  %6028 = vmatprep.subr.mxu0 0.0
  %6029 = vmatpush2.msra.mxu0 0.0
  %6030 = vmatprep.subr.mxu0 0.0
  %6031 = vmatpush2.msra.mxu0 0.0
  %6032 = vmatprep.subr.mxu0 0.0
  %6033 = vmatpush2.msra.mxu0 0.0
  %6034 = vmatprep.subr.mxu0 0.0
  %6035 = vmatpush2.msra.mxu0 0.0
  %6036 = vmatprep.subr.mxu0 0.0
  %6037 = vmatpush2.msra.mxu0 0.0
  %6038 = vmatprep.subr.mxu0 0.0
  %6039 = vmatpush2.msra.mxu0 0.0
  %6040 = vmatprep.subr.mxu0 0.0
  %6041 = vmatpush2.msra.mxu0 0.0
  %6042 = vmatprep.subr.mxu0 0.0
  %6043 = vmatpush2.msra.mxu0 0.0
  %6044 = vmatprep.subr.mxu0 0.0
  %6045 = vmatpush2.msra.mxu0 0.0
  %6046 = vmatprep.subr.mxu0 0.0
  %6047 = vmatpush2.msra.mxu0 0.0
  %6048 = vmatprep.subr.mxu0 0.0
  %6049 = vmatpush2.msra.mxu0 0.0
  %6050 = vmatprep.subr.mxu0 0.0
  %6051 = vmatpush2.msra.mxu0 0.0
  %6052 = vmatprep.subr.mxu0 0.0
  %6053 = vmatpush2.msra.mxu0 0.0
  %6054 = vmatprep.subr.mxu0 0.0
  %6055 = vmatpush2.msra.mxu0 0.0
  %6056 = vmatprep.subr.mxu0 0.0
  %6057 = vmatpush2.msra.mxu0 0.0
  %6058 = vmatprep.subr.mxu0 0.0
  %6059 = vmatpush2.msra.mxu0 0.0
  %6060 = vmatprep.mubr.f32.mxu0 0.0
  %6061 = vmatmul.mubr.f32.gmra.mxu0 %v5397
  %v6062 = vpop.f32.mrf.mxu0
  %v6063 = vadd.f32 0.0, %v6062
  %v6064 = vpop.f32.mrf.mxu0
  %6065 = vdwg.mxu0
  %v6066 = vadd.f32 %v185, %v6063
  %6067 = vmatprep.subr.mxu0 0.0
  %6068 = vmatpush1.msra.mxu0 0.0
  %6069 = vmatprep.subr.mxu0 0.0
  %6070 = vmatpush1.msra.mxu0 0.0
  %6071 = vmatprep.subr.mxu0 0.0
  %6072 = vmatpush1.msra.mxu0 0.0
  %6073 = vmatprep.subr.mxu0 0.0
  %6074 = vmatpush1.msra.mxu0 0.0
  %6075 = vmatprep.subr.mxu0 0.0
  %6076 = vmatpush1.msra.mxu0 0.0
  %6077 = vmatprep.subr.mxu0 0.0
  %6078 = vmatpush1.msra.mxu0 0.0
  %6079 = vmatprep.subr.mxu0 0.0
  %6080 = vmatpush1.msra.mxu0 0.0
  %6081 = vmatprep.subr.mxu0 0.0
  %6082 = vmatpush1.msra.mxu0 0.0
  %6083 = vmatprep.subr.mxu0 0.0
  %6084 = vmatpush1.msra.mxu0 0.0
  %6085 = vmatprep.subr.mxu0 0.0
  %6086 = vmatpush1.msra.mxu0 0.0
  %6087 = vmatprep.subr.mxu0 0.0
  %6088 = vmatpush1.msra.mxu0 0.0
  %6089 = vmatprep.subr.mxu0 0.0
  %6090 = vmatpush1.msra.mxu0 0.0
  %6091 = vmatprep.subr.mxu0 0.0
  %6092 = vmatpush1.msra.mxu0 0.0
  %6093 = vmatprep.subr.mxu0 0.0
  %6094 = vmatpush1.msra.mxu0 0.0
  %6095 = vmatprep.subr.mxu0 0.0
  %6096 = vmatpush1.msra.mxu0 %v18
  %6097 = vmatprep.subr.mxu0 0.0
  %6098 = vmatpush1.msra.mxu0 %v17
  %6099 = vmatprep.subr.mxu0 0.0
  %6100 = vmatpush2.msra.mxu0 0.0
  %6101 = vmatprep.subr.mxu0 0.0
  %6102 = vmatpush2.msra.mxu0 0.0
  %6103 = vmatprep.subr.mxu0 0.0
  %6104 = vmatpush2.msra.mxu0 0.0
  %6105 = vmatprep.subr.mxu0 0.0
  %6106 = vmatpush2.msra.mxu0 0.0
  %6107 = vmatprep.subr.mxu0 0.0
  %6108 = vmatpush2.msra.mxu0 0.0
  %6109 = vmatprep.subr.mxu0 0.0
  %6110 = vmatpush2.msra.mxu0 0.0
  %6111 = vmatprep.subr.mxu0 0.0
  %6112 = vmatpush2.msra.mxu0 0.0
  %6113 = vmatprep.subr.mxu0 0.0
  %6114 = vmatpush2.msra.mxu0 0.0
  %6115 = vmatprep.subr.mxu0 0.0
  %6116 = vmatpush2.msra.mxu0 0.0
  %6117 = vmatprep.subr.mxu0 0.0
  %6118 = vmatpush2.msra.mxu0 0.0
  %6119 = vmatprep.subr.mxu0 0.0
  %6120 = vmatpush2.msra.mxu0 0.0
  %6121 = vmatprep.subr.mxu0 0.0
  %6122 = vmatpush2.msra.mxu0 0.0
  %6123 = vmatprep.subr.mxu0 0.0
  %6124 = vmatpush2.msra.mxu0 0.0
  %6125 = vmatprep.subr.mxu0 0.0
  %6126 = vmatpush2.msra.mxu0 0.0
  %6127 = vmatprep.subr.mxu0 0.0
  %6128 = vmatpush2.msra.mxu0 0.0
  %6129 = vmatprep.subr.mxu0 0.0
  %6130 = vmatpush2.msra.mxu0 0.0
  %6131 = vmatprep.mubr.f32.mxu0 0.0
  %6132 = vmatmul.mubr.f32.gmra.mxu0 %v5397
  %v6133 = vpop.f32.mrf.mxu0
  %v6134 = vadd.f32 0.0, %v6133
  %v6135 = vpop.f32.mrf.mxu0
  %6136 = vdwg.mxu0
  %v6137 = vadd.f32 %v297, %v6134
  %6138 = vmatprep.subr.mxu0 0.0
  %6139 = vmatpush1.msra.mxu0 0.0
  %6140 = vmatprep.subr.mxu0 0.0
  %6141 = vmatpush1.msra.mxu0 0.0
  %6142 = vmatprep.subr.mxu0 0.0
  %6143 = vmatpush1.msra.mxu0 0.0
  %6144 = vmatprep.subr.mxu0 0.0
  %6145 = vmatpush1.msra.mxu0 0.0
  %6146 = vmatprep.subr.mxu0 0.0
  %6147 = vmatpush1.msra.mxu0 0.0
  %6148 = vmatprep.subr.mxu0 0.0
  %6149 = vmatpush1.msra.mxu0 0.0
  %6150 = vmatprep.subr.mxu0 0.0
  %6151 = vmatpush1.msra.mxu0 0.0
  %6152 = vmatprep.subr.mxu0 0.0
  %6153 = vmatpush1.msra.mxu0 0.0
  %6154 = vmatprep.subr.mxu0 0.0
  %6155 = vmatpush1.msra.mxu0 0.0
  %6156 = vmatprep.subr.mxu0 0.0
  %6157 = vmatpush1.msra.mxu0 0.0
  %6158 = vmatprep.subr.mxu0 0.0
  %6159 = vmatpush1.msra.mxu0 0.0
  %6160 = vmatprep.subr.mxu0 0.0
  %6161 = vmatpush1.msra.mxu0 0.0
  %6162 = vmatprep.subr.mxu0 0.0
  %6163 = vmatpush1.msra.mxu0 0.0
  %6164 = vmatprep.subr.mxu0 0.0
  %6165 = vmatpush1.msra.mxu0 0.0
  %6166 = vmatprep.subr.mxu0 0.0
  %6167 = vmatpush1.msra.mxu0 %v20
  %6168 = vmatprep.subr.mxu0 0.0
  %6169 = vmatpush1.msra.mxu0 %v19
  %6170 = vmatprep.subr.mxu0 0.0
  %6171 = vmatpush2.msra.mxu0 0.0
  %6172 = vmatprep.subr.mxu0 0.0
  %6173 = vmatpush2.msra.mxu0 0.0
  %6174 = vmatprep.subr.mxu0 0.0
  %6175 = vmatpush2.msra.mxu0 0.0
  %6176 = vmatprep.subr.mxu0 0.0
  %6177 = vmatpush2.msra.mxu0 0.0
  %6178 = vmatprep.subr.mxu0 0.0
  %6179 = vmatpush2.msra.mxu0 0.0
  %6180 = vmatprep.subr.mxu0 0.0
  %6181 = vmatpush2.msra.mxu0 0.0
  %6182 = vmatprep.subr.mxu0 0.0
  %6183 = vmatpush2.msra.mxu0 0.0
  %6184 = vmatprep.subr.mxu0 0.0
  %6185 = vmatpush2.msra.mxu0 0.0
  %6186 = vmatprep.subr.mxu0 0.0
  %6187 = vmatpush2.msra.mxu0 0.0
  %6188 = vmatprep.subr.mxu0 0.0
  %6189 = vmatpush2.msra.mxu0 0.0
  %6190 = vmatprep.subr.mxu0 0.0
  %6191 = vmatpush2.msra.mxu0 0.0
  %6192 = vmatprep.subr.mxu0 0.0
  %6193 = vmatpush2.msra.mxu0 0.0
  %6194 = vmatprep.subr.mxu0 0.0
  %6195 = vmatpush2.msra.mxu0 0.0
  %6196 = vmatprep.subr.mxu0 0.0
  %6197 = vmatpush2.msra.mxu0 0.0
  %6198 = vmatprep.subr.mxu0 0.0
  %6199 = vmatpush2.msra.mxu0 0.0
  %6200 = vmatprep.subr.mxu0 0.0
  %6201 = vmatpush2.msra.mxu0 0.0
  %6202 = vmatprep.mubr.f32.mxu0 0.0
  %6203 = vmatmul.mubr.f32.gmra.mxu0 %v5397
  %v6204 = vpop.f32.mrf.mxu0
  %v6205 = vadd.f32 0.0, %v6204
  %v6206 = vpop.f32.mrf.mxu0
  %6207 = vdwg.mxu0
  %v6208 = vadd.f32 %v409, %v6205
  %6209 = vmatprep.subr.mxu0 0.0
  %6210 = vmatpush1.msra.mxu0 0.0
  %6211 = vmatprep.subr.mxu0 0.0
  %6212 = vmatpush1.msra.mxu0 0.0
  %6213 = vmatprep.subr.mxu0 0.0
  %6214 = vmatpush1.msra.mxu0 0.0
  %6215 = vmatprep.subr.mxu0 0.0
  %6216 = vmatpush1.msra.mxu0 0.0
  %6217 = vmatprep.subr.mxu0 0.0
  %6218 = vmatpush1.msra.mxu0 0.0
  %6219 = vmatprep.subr.mxu0 0.0
  %6220 = vmatpush1.msra.mxu0 0.0
  %6221 = vmatprep.subr.mxu0 0.0
  %6222 = vmatpush1.msra.mxu0 0.0
  %6223 = vmatprep.subr.mxu0 0.0
  %6224 = vmatpush1.msra.mxu0 0.0
  %6225 = vmatprep.subr.mxu0 0.0
  %6226 = vmatpush1.msra.mxu0 0.0
  %6227 = vmatprep.subr.mxu0 0.0
  %6228 = vmatpush1.msra.mxu0 0.0
  %6229 = vmatprep.subr.mxu0 0.0
  %6230 = vmatpush1.msra.mxu0 0.0
  %6231 = vmatprep.subr.mxu0 0.0
  %6232 = vmatpush1.msra.mxu0 0.0
  %6233 = vmatprep.subr.mxu0 0.0
  %6234 = vmatpush1.msra.mxu0 0.0
  %6235 = vmatprep.subr.mxu0 0.0
  %6236 = vmatpush1.msra.mxu0 0.0
  %6237 = vmatprep.subr.mxu0 0.0
  %6238 = vmatpush1.msra.mxu0 %v22
  %6239 = vmatprep.subr.mxu0 0.0
  %6240 = vmatpush1.msra.mxu0 %v21
  %6241 = vmatprep.subr.mxu0 0.0
  %6242 = vmatpush2.msra.mxu0 0.0
  %6243 = vmatprep.subr.mxu0 0.0
  %6244 = vmatpush2.msra.mxu0 0.0
  %6245 = vmatprep.subr.mxu0 0.0
  %6246 = vmatpush2.msra.mxu0 0.0
  %6247 = vmatprep.subr.mxu0 0.0
  %6248 = vmatpush2.msra.mxu0 0.0
  %6249 = vmatprep.subr.mxu0 0.0
  %6250 = vmatpush2.msra.mxu0 0.0
  %6251 = vmatprep.subr.mxu0 0.0
  %6252 = vmatpush2.msra.mxu0 0.0
  %6253 = vmatprep.subr.mxu0 0.0
  %6254 = vmatpush2.msra.mxu0 0.0
  %6255 = vmatprep.subr.mxu0 0.0
  %6256 = vmatpush2.msra.mxu0 0.0
  %6257 = vmatprep.subr.mxu0 0.0
  %6258 = vmatpush2.msra.mxu0 0.0
  %6259 = vmatprep.subr.mxu0 0.0
  %6260 = vmatpush2.msra.mxu0 0.0
  %6261 = vmatprep.subr.mxu0 0.0
  %6262 = vmatpush2.msra.mxu0 0.0
  %6263 = vmatprep.subr.mxu0 0.0
  %6264 = vmatpush2.msra.mxu0 0.0
  %6265 = vmatprep.subr.mxu0 0.0
  %6266 = vmatpush2.msra.mxu0 0.0
  %6267 = vmatprep.subr.mxu0 0.0
  %6268 = vmatpush2.msra.mxu0 0.0
  %6269 = vmatprep.subr.mxu0 0.0
  %6270 = vmatpush2.msra.mxu0 0.0
  %6271 = vmatprep.subr.mxu0 0.0
  %6272 = vmatpush2.msra.mxu0 0.0
  %6273 = vmatprep.mubr.f32.mxu0 0.0
  %6274 = vmatmul.mubr.f32.gmra.mxu0 %v5397
  %v6275 = vpop.f32.mrf.mxu0
  %v6276 = vadd.f32 0.0, %v6275
  %v6277 = vpop.f32.mrf.mxu0
  %6278 = vdwg.mxu0
  %v6279 = vadd.f32 %v521, %v6276
  %v6280 = vxor.u32 %v6066, 2147483648
  %v6281 = vmul.f32 %v6280, 1.442695
  %v6282 = vpow.pop %v6281
  %v6283 = vadd.f32 %v6282, 1.0
  %v6284 = vrcp.pop %v6283
  %v6285 = vmul.f32 1.0, %v6284
  %v6286 = vxor.u32 %v6137, 2147483648
  %v6287 = vmul.f32 %v6286, 1.442695
  %v6288 = vpow.pop %v6287
  %v6289 = vadd.f32 %v6288, 1.0
  %v6290 = vrcp.pop %v6289
  %v6291 = vmul.f32 1.0, %v6290
  %v6292 = vtanh.pop %v6208
  %v6293 = vxor.u32 %v6279, 2147483648
  %v6294 = vmul.f32 %v6293, 1.442695
  %v6295 = vpow.pop %v6294
  %v6296 = vadd.f32 %v6295, 1.0
  %v6297 = vrcp.pop %v6296
  %v6298 = vmul.f32 1.0, %v6297
  %v6299 = vmul.f32 %v6291, %v5393
  %v6300 = vmul.f32 %v6285, %v6292
  %v6301 = vadd.f32 %v6299, %v6300
  %v6302 = vtanh.pop %v6301
  %v6303 = vmul.f32 %v6298, %v6302
  %v6305 = vsel %vm547, %v6303, 0
  %6307 = vmatprep.subr.mxu0 0.0
  %6308 = vmatpush1.msra.mxu0 0.0
  %6309 = vmatprep.subr.mxu0 0.0
  %6310 = vmatpush1.msra.mxu0 0.0
  %6311 = vmatprep.subr.mxu0 0.0
  %6312 = vmatpush1.msra.mxu0 0.0
  %6313 = vmatprep.subr.mxu0 0.0
  %6314 = vmatpush1.msra.mxu0 0.0
  %6315 = vmatprep.subr.mxu0 0.0
  %6316 = vmatpush1.msra.mxu0 0.0
  %6317 = vmatprep.subr.mxu0 0.0
  %6318 = vmatpush1.msra.mxu0 0.0
  %6319 = vmatprep.subr.mxu0 0.0
  %6320 = vmatpush1.msra.mxu0 0.0
  %6321 = vmatprep.subr.mxu0 0.0
  %6322 = vmatpush1.msra.mxu0 0.0
  %6323 = vmatprep.subr.mxu0 0.0
  %6324 = vmatpush1.msra.mxu0 0.0
  %6325 = vmatprep.subr.mxu0 0.0
  %6326 = vmatpush1.msra.mxu0 0.0
  %6327 = vmatprep.subr.mxu0 0.0
  %6328 = vmatpush1.msra.mxu0 0.0
  %6329 = vmatprep.subr.mxu0 0.0
  %6330 = vmatpush1.msra.mxu0 0.0
  %6331 = vmatprep.subr.mxu0 0.0
  %6332 = vmatpush1.msra.mxu0 0.0
  %6333 = vmatprep.subr.mxu0 0.0
  %6334 = vmatpush1.msra.mxu0 0.0
  %6335 = vmatprep.subr.mxu0 0.0
  %6336 = vmatpush1.msra.mxu0 %v28
  %6337 = vmatprep.subr.mxu0 0.0
  %6338 = vmatpush1.msra.mxu0 %v27
  %6339 = vmatprep.subr.mxu0 0.0
  %6340 = vmatpush2.msra.mxu0 0.0
  %6341 = vmatprep.subr.mxu0 0.0
  %6342 = vmatpush2.msra.mxu0 0.0
  %6343 = vmatprep.subr.mxu0 0.0
  %6344 = vmatpush2.msra.mxu0 0.0
  %6345 = vmatprep.subr.mxu0 0.0
  %6346 = vmatpush2.msra.mxu0 0.0
  %6347 = vmatprep.subr.mxu0 0.0
  %6348 = vmatpush2.msra.mxu0 0.0
  %6349 = vmatprep.subr.mxu0 0.0
  %6350 = vmatpush2.msra.mxu0 0.0
  %6351 = vmatprep.subr.mxu0 0.0
  %6352 = vmatpush2.msra.mxu0 0.0
  %6353 = vmatprep.subr.mxu0 0.0
  %6354 = vmatpush2.msra.mxu0 0.0
  %6355 = vmatprep.subr.mxu0 0.0
  %6356 = vmatpush2.msra.mxu0 0.0
  %6357 = vmatprep.subr.mxu0 0.0
  %6358 = vmatpush2.msra.mxu0 0.0
  %6359 = vmatprep.subr.mxu0 0.0
  %6360 = vmatpush2.msra.mxu0 0.0
  %6361 = vmatprep.subr.mxu0 0.0
  %6362 = vmatpush2.msra.mxu0 0.0
  %6363 = vmatprep.subr.mxu0 0.0
  %6364 = vmatpush2.msra.mxu0 0.0
  %6365 = vmatprep.subr.mxu0 0.0
  %6366 = vmatpush2.msra.mxu0 0.0
  %6367 = vmatprep.subr.mxu0 0.0
  %6368 = vmatpush2.msra.mxu0 0.0
  %6369 = vmatprep.subr.mxu0 0.0
  %6370 = vmatpush2.msra.mxu0 0.0
  %6371 = vmatprep.mubr.f32.mxu0 0.0
  %6372 = vmatmul.mubr.f32.gmra.mxu0 %v6305
  %v6373 = vpop.f32.mrf.mxu0
  %v6374 = vadd.f32 %v532, %v6373
  %v6375 = vpop.f32.mrf.mxu0
  %6376 = vdwg.mxu0
  %6377 = vmatprep.subr.mxu0 0.0
  %6378 = vmatpush1.msra.mxu0 0.0
  %6379 = vmatprep.subr.mxu0 0.0
  %6380 = vmatpush1.msra.mxu0 0.0
  %6381 = vmatprep.subr.mxu0 0.0
  %6382 = vmatpush1.msra.mxu0 0.0
  %6383 = vmatprep.subr.mxu0 0.0
  %6384 = vmatpush1.msra.mxu0 0.0
  %6385 = vmatprep.subr.mxu0 0.0
  %6386 = vmatpush1.msra.mxu0 0.0
  %6387 = vmatprep.subr.mxu0 0.0
  %6388 = vmatpush1.msra.mxu0 0.0
  %6389 = vmatprep.subr.mxu0 0.0
  %6390 = vmatpush1.msra.mxu0 0.0
  %6391 = vmatprep.subr.mxu0 0.0
  %6392 = vmatpush1.msra.mxu0 0.0
  %6393 = vmatprep.subr.mxu0 0.0
  %6394 = vmatpush1.msra.mxu0 0.0
  %6395 = vmatprep.subr.mxu0 0.0
  %6396 = vmatpush1.msra.mxu0 0.0
  %6397 = vmatprep.subr.mxu0 0.0
  %6398 = vmatpush1.msra.mxu0 0.0
  %6399 = vmatprep.subr.mxu0 0.0
  %6400 = vmatpush1.msra.mxu0 0.0
  %6401 = vmatprep.subr.mxu0 0.0
  %6402 = vmatpush1.msra.mxu0 0.0
  %6403 = vmatprep.subr.mxu0 0.0
  %6404 = vmatpush1.msra.mxu0 0.0
  %6405 = vmatprep.subr.mxu0 0.0
  %6406 = vmatpush1.msra.mxu0 %v30
  %6407 = vmatprep.subr.mxu0 0.0
  %6408 = vmatpush1.msra.mxu0 %v29
  %6409 = vmatprep.subr.mxu0 0.0
  %6410 = vmatpush2.msra.mxu0 0.0
  %6411 = vmatprep.subr.mxu0 0.0
  %6412 = vmatpush2.msra.mxu0 0.0
  %6413 = vmatprep.subr.mxu0 0.0
  %6414 = vmatpush2.msra.mxu0 0.0
  %6415 = vmatprep.subr.mxu0 0.0
  %6416 = vmatpush2.msra.mxu0 0.0
  %6417 = vmatprep.subr.mxu0 0.0
  %6418 = vmatpush2.msra.mxu0 0.0
  %6419 = vmatprep.subr.mxu0 0.0
  %6420 = vmatpush2.msra.mxu0 0.0
  %6421 = vmatprep.subr.mxu0 0.0
  %6422 = vmatpush2.msra.mxu0 0.0
  %6423 = vmatprep.subr.mxu0 0.0
  %6424 = vmatpush2.msra.mxu0 0.0
  %6425 = vmatprep.subr.mxu0 0.0
  %6426 = vmatpush2.msra.mxu0 0.0
  %6427 = vmatprep.subr.mxu0 0.0
  %6428 = vmatpush2.msra.mxu0 0.0
  %6429 = vmatprep.subr.mxu0 0.0
  %6430 = vmatpush2.msra.mxu0 0.0
  %6431 = vmatprep.subr.mxu0 0.0
  %6432 = vmatpush2.msra.mxu0 0.0
  %6433 = vmatprep.subr.mxu0 0.0
  %6434 = vmatpush2.msra.mxu0 0.0
  %6435 = vmatprep.subr.mxu0 0.0
  %6436 = vmatpush2.msra.mxu0 0.0
  %6437 = vmatprep.subr.mxu0 0.0
  %6438 = vmatpush2.msra.mxu0 0.0
  %6439 = vmatprep.subr.mxu0 0.0
  %6440 = vmatpush2.msra.mxu0 0.0
  %6441 = vmatprep.mubr.f32.mxu0 0.0
  %6442 = vmatmul.mubr.f32.gmra.mxu0 %v6305
  %v6443 = vpop.f32.mrf.mxu0
  %v6444 = vadd.f32 %v536, %v6443
  %v6445 = vpop.f32.mrf.mxu0
  %6446 = vdwg.mxu0
  %6447 = vmatprep.subr.mxu0 0.0
  %6448 = vmatpush1.msra.mxu0 0.0
  %6449 = vmatprep.subr.mxu0 0.0
  %6450 = vmatpush1.msra.mxu0 0.0
  %6451 = vmatprep.subr.mxu0 0.0
  %6452 = vmatpush1.msra.mxu0 0.0
  %6453 = vmatprep.subr.mxu0 0.0
  %6454 = vmatpush1.msra.mxu0 0.0
  %6455 = vmatprep.subr.mxu0 0.0
  %6456 = vmatpush1.msra.mxu0 0.0
  %6457 = vmatprep.subr.mxu0 0.0
  %6458 = vmatpush1.msra.mxu0 0.0
  %6459 = vmatprep.subr.mxu0 0.0
  %6460 = vmatpush1.msra.mxu0 0.0
  %6461 = vmatprep.subr.mxu0 0.0
  %6462 = vmatpush1.msra.mxu0 0.0
  %6463 = vmatprep.subr.mxu0 0.0
  %6464 = vmatpush1.msra.mxu0 0.0
  %6465 = vmatprep.subr.mxu0 0.0
  %6466 = vmatpush1.msra.mxu0 0.0
  %6467 = vmatprep.subr.mxu0 0.0
  %6468 = vmatpush1.msra.mxu0 0.0
  %6469 = vmatprep.subr.mxu0 0.0
  %6470 = vmatpush1.msra.mxu0 0.0
  %6471 = vmatprep.subr.mxu0 0.0
  %6472 = vmatpush1.msra.mxu0 0.0
  %6473 = vmatprep.subr.mxu0 0.0
  %6474 = vmatpush1.msra.mxu0 0.0
  %6475 = vmatprep.subr.mxu0 0.0
  %6476 = vmatpush1.msra.mxu0 %v32
  %6477 = vmatprep.subr.mxu0 0.0
  %6478 = vmatpush1.msra.mxu0 %v31
  %6479 = vmatprep.subr.mxu0 0.0
  %6480 = vmatpush2.msra.mxu0 0.0
  %6481 = vmatprep.subr.mxu0 0.0
  %6482 = vmatpush2.msra.mxu0 0.0
  %6483 = vmatprep.subr.mxu0 0.0
  %6484 = vmatpush2.msra.mxu0 0.0
  %6485 = vmatprep.subr.mxu0 0.0
  %6486 = vmatpush2.msra.mxu0 0.0
  %6487 = vmatprep.subr.mxu0 0.0
  %6488 = vmatpush2.msra.mxu0 0.0
  %6489 = vmatprep.subr.mxu0 0.0
  %6490 = vmatpush2.msra.mxu0 0.0
  %6491 = vmatprep.subr.mxu0 0.0
  %6492 = vmatpush2.msra.mxu0 0.0
  %6493 = vmatprep.subr.mxu0 0.0
  %6494 = vmatpush2.msra.mxu0 0.0
  %6495 = vmatprep.subr.mxu0 0.0
  %6496 = vmatpush2.msra.mxu0 0.0
  %6497 = vmatprep.subr.mxu0 0.0
  %6498 = vmatpush2.msra.mxu0 0.0
  %6499 = vmatprep.subr.mxu0 0.0
  %6500 = vmatpush2.msra.mxu0 0.0
  %6501 = vmatprep.subr.mxu0 0.0
  %6502 = vmatpush2.msra.mxu0 0.0
  %6503 = vmatprep.subr.mxu0 0.0
  %6504 = vmatpush2.msra.mxu0 0.0
  %6505 = vmatprep.subr.mxu0 0.0
  %6506 = vmatpush2.msra.mxu0 0.0
  %6507 = vmatprep.subr.mxu0 0.0
  %6508 = vmatpush2.msra.mxu0 0.0
  %6509 = vmatprep.subr.mxu0 0.0
  %6510 = vmatpush2.msra.mxu0 0.0
  %6511 = vmatprep.mubr.f32.mxu0 0.0
  %6512 = vmatmul.mubr.f32.gmra.mxu0 %v6305
  %v6513 = vpop.f32.mrf.mxu0
  %v6514 = vadd.f32 %v540, %v6513
  %v6515 = vpop.f32.mrf.mxu0
  %6516 = vdwg.mxu0
  %6517 = vmatprep.subr.mxu0 0.0
  %6518 = vmatpush1.msra.mxu0 0.0
  %6519 = vmatprep.subr.mxu0 0.0
  %6520 = vmatpush1.msra.mxu0 0.0
  %6521 = vmatprep.subr.mxu0 0.0
  %6522 = vmatpush1.msra.mxu0 0.0
  %6523 = vmatprep.subr.mxu0 0.0
  %6524 = vmatpush1.msra.mxu0 0.0
  %6525 = vmatprep.subr.mxu0 0.0
  %6526 = vmatpush1.msra.mxu0 0.0
  %6527 = vmatprep.subr.mxu0 0.0
  %6528 = vmatpush1.msra.mxu0 0.0
  %6529 = vmatprep.subr.mxu0 0.0
  %6530 = vmatpush1.msra.mxu0 0.0
  %6531 = vmatprep.subr.mxu0 0.0
  %6532 = vmatpush1.msra.mxu0 0.0
  %6533 = vmatprep.subr.mxu0 0.0
  %6534 = vmatpush1.msra.mxu0 0.0
  %6535 = vmatprep.subr.mxu0 0.0
  %6536 = vmatpush1.msra.mxu0 0.0
  %6537 = vmatprep.subr.mxu0 0.0
  %6538 = vmatpush1.msra.mxu0 0.0
  %6539 = vmatprep.subr.mxu0 0.0
  %6540 = vmatpush1.msra.mxu0 0.0
  %6541 = vmatprep.subr.mxu0 0.0
  %6542 = vmatpush1.msra.mxu0 0.0
  %6543 = vmatprep.subr.mxu0 0.0
  %6544 = vmatpush1.msra.mxu0 0.0
  %6545 = vmatprep.subr.mxu0 0.0
  %6546 = vmatpush1.msra.mxu0 %v34
  %6547 = vmatprep.subr.mxu0 0.0
  %6548 = vmatpush1.msra.mxu0 %v33
  %6549 = vmatprep.subr.mxu0 0.0
  %6550 = vmatpush2.msra.mxu0 0.0
  %6551 = vmatprep.subr.mxu0 0.0
  %6552 = vmatpush2.msra.mxu0 0.0
  %6553 = vmatprep.subr.mxu0 0.0
  %6554 = vmatpush2.msra.mxu0 0.0
  %6555 = vmatprep.subr.mxu0 0.0
  %6556 = vmatpush2.msra.mxu0 0.0
  %6557 = vmatprep.subr.mxu0 0.0
  %6558 = vmatpush2.msra.mxu0 0.0
  %6559 = vmatprep.subr.mxu0 0.0
  %6560 = vmatpush2.msra.mxu0 0.0
  %6561 = vmatprep.subr.mxu0 0.0
  %6562 = vmatpush2.msra.mxu0 0.0
  %6563 = vmatprep.subr.mxu0 0.0
  %6564 = vmatpush2.msra.mxu0 0.0
  %6565 = vmatprep.subr.mxu0 0.0
  %6566 = vmatpush2.msra.mxu0 0.0
  %6567 = vmatprep.subr.mxu0 0.0
  %6568 = vmatpush2.msra.mxu0 0.0
  %6569 = vmatprep.subr.mxu0 0.0
  %6570 = vmatpush2.msra.mxu0 0.0
  %6571 = vmatprep.subr.mxu0 0.0
  %6572 = vmatpush2.msra.mxu0 0.0
  %6573 = vmatprep.subr.mxu0 0.0
  %6574 = vmatpush2.msra.mxu0 0.0
  %6575 = vmatprep.subr.mxu0 0.0
  %6576 = vmatpush2.msra.mxu0 0.0
  %6577 = vmatprep.subr.mxu0 0.0
  %6578 = vmatpush2.msra.mxu0 0.0
  %6579 = vmatprep.subr.mxu0 0.0
  %6580 = vmatpush2.msra.mxu0 0.0
  %6581 = vmatprep.mubr.f32.mxu0 0.0
  %6582 = vmatmul.mubr.f32.gmra.mxu0 %v6305
  %v6583 = vpop.f32.mrf.mxu0
  %v6584 = vadd.f32 %v544, %v6583
  %v6585 = vpop.f32.mrf.mxu0
  %6586 = vdwg.mxu0
  %v6588 = vsel %vm547, %v5989, 0
  %6590 = vmatprep.subr.mxu0 0.0
  %6591 = vmatpush1.msra.mxu0 0.0
  %6592 = vmatprep.subr.mxu0 0.0
  %6593 = vmatpush1.msra.mxu0 0.0
  %6594 = vmatprep.subr.mxu0 0.0
  %6595 = vmatpush1.msra.mxu0 0.0
  %6596 = vmatprep.subr.mxu0 0.0
  %6597 = vmatpush1.msra.mxu0 0.0
  %6598 = vmatprep.subr.mxu0 0.0
  %6599 = vmatpush1.msra.mxu0 0.0
  %6600 = vmatprep.subr.mxu0 0.0
  %6601 = vmatpush1.msra.mxu0 0.0
  %6602 = vmatprep.subr.mxu0 0.0
  %6603 = vmatpush1.msra.mxu0 0.0
  %6604 = vmatprep.subr.mxu0 0.0
  %6605 = vmatpush1.msra.mxu0 0.0
  %6606 = vmatprep.subr.mxu0 0.0
  %6607 = vmatpush1.msra.mxu0 0.0
  %6608 = vmatprep.subr.mxu0 0.0
  %6609 = vmatpush1.msra.mxu0 0.0
  %6610 = vmatprep.subr.mxu0 0.0
  %6611 = vmatpush1.msra.mxu0 0.0
  %6612 = vmatprep.subr.mxu0 0.0
  %6613 = vmatpush1.msra.mxu0 0.0
  %6614 = vmatprep.subr.mxu0 0.0
  %6615 = vmatpush1.msra.mxu0 0.0
  %6616 = vmatprep.subr.mxu0 0.0
  %6617 = vmatpush1.msra.mxu0 0.0
  %6618 = vmatprep.subr.mxu0 0.0
  %6619 = vmatpush1.msra.mxu0 %v36
  %6620 = vmatprep.subr.mxu0 0.0
  %6621 = vmatpush1.msra.mxu0 %v35
  %6622 = vmatprep.subr.mxu0 0.0
  %6623 = vmatpush2.msra.mxu0 0.0
  %6624 = vmatprep.subr.mxu0 0.0
  %6625 = vmatpush2.msra.mxu0 0.0
  %6626 = vmatprep.subr.mxu0 0.0
  %6627 = vmatpush2.msra.mxu0 0.0
  %6628 = vmatprep.subr.mxu0 0.0
  %6629 = vmatpush2.msra.mxu0 0.0
  %6630 = vmatprep.subr.mxu0 0.0
  %6631 = vmatpush2.msra.mxu0 0.0
  %6632 = vmatprep.subr.mxu0 0.0
  %6633 = vmatpush2.msra.mxu0 0.0
  %6634 = vmatprep.subr.mxu0 0.0
  %6635 = vmatpush2.msra.mxu0 0.0
  %6636 = vmatprep.subr.mxu0 0.0
  %6637 = vmatpush2.msra.mxu0 0.0
  %6638 = vmatprep.subr.mxu0 0.0
  %6639 = vmatpush2.msra.mxu0 0.0
  %6640 = vmatprep.subr.mxu0 0.0
  %6641 = vmatpush2.msra.mxu0 0.0
  %6642 = vmatprep.subr.mxu0 0.0
  %6643 = vmatpush2.msra.mxu0 0.0
  %6644 = vmatprep.subr.mxu0 0.0
  %6645 = vmatpush2.msra.mxu0 0.0
  %6646 = vmatprep.subr.mxu0 0.0
  %6647 = vmatpush2.msra.mxu0 0.0
  %6648 = vmatprep.subr.mxu0 0.0
  %6649 = vmatpush2.msra.mxu0 0.0
  %6650 = vmatprep.subr.mxu0 0.0
  %6651 = vmatpush2.msra.mxu0 0.0
  %6652 = vmatprep.subr.mxu0 0.0
  %6653 = vmatpush2.msra.mxu0 0.0
  %6654 = vmatprep.mubr.f32.mxu0 0.0
  %6655 = vmatmul.mubr.f32.gmra.mxu0 %v6588
  %v6656 = vpop.f32.mrf.mxu0
  %v6657 = vadd.f32 0.0, %v6656
  %v6658 = vpop.f32.mrf.mxu0
  %6659 = vdwg.mxu0
  %v6660 = vadd.f32 %v6374, %v6657
  %6661 = vmatprep.subr.mxu0 0.0
  %6662 = vmatpush1.msra.mxu0 0.0
  %6663 = vmatprep.subr.mxu0 0.0
  %6664 = vmatpush1.msra.mxu0 0.0
  %6665 = vmatprep.subr.mxu0 0.0
  %6666 = vmatpush1.msra.mxu0 0.0
  %6667 = vmatprep.subr.mxu0 0.0
  %6668 = vmatpush1.msra.mxu0 0.0
  %6669 = vmatprep.subr.mxu0 0.0
  %6670 = vmatpush1.msra.mxu0 0.0
  %6671 = vmatprep.subr.mxu0 0.0
  %6672 = vmatpush1.msra.mxu0 0.0
  %6673 = vmatprep.subr.mxu0 0.0
  %6674 = vmatpush1.msra.mxu0 0.0
  %6675 = vmatprep.subr.mxu0 0.0
  %6676 = vmatpush1.msra.mxu0 0.0
  %6677 = vmatprep.subr.mxu0 0.0
  %6678 = vmatpush1.msra.mxu0 0.0
  %6679 = vmatprep.subr.mxu0 0.0
  %6680 = vmatpush1.msra.mxu0 0.0
  %6681 = vmatprep.subr.mxu0 0.0
  %6682 = vmatpush1.msra.mxu0 0.0
  %6683 = vmatprep.subr.mxu0 0.0
  %6684 = vmatpush1.msra.mxu0 0.0
  %6685 = vmatprep.subr.mxu0 0.0
  %6686 = vmatpush1.msra.mxu0 0.0
  %6687 = vmatprep.subr.mxu0 0.0
  %6688 = vmatpush1.msra.mxu0 0.0
  %6689 = vmatprep.subr.mxu0 0.0
  %6690 = vmatpush1.msra.mxu0 %v38
  %6691 = vmatprep.subr.mxu0 0.0
  %6692 = vmatpush1.msra.mxu0 %v37
  %6693 = vmatprep.subr.mxu0 0.0
  %6694 = vmatpush2.msra.mxu0 0.0
  %6695 = vmatprep.subr.mxu0 0.0
  %6696 = vmatpush2.msra.mxu0 0.0
  %6697 = vmatprep.subr.mxu0 0.0
  %6698 = vmatpush2.msra.mxu0 0.0
  %6699 = vmatprep.subr.mxu0 0.0
  %6700 = vmatpush2.msra.mxu0 0.0
  %6701 = vmatprep.subr.mxu0 0.0
  %6702 = vmatpush2.msra.mxu0 0.0
  %6703 = vmatprep.subr.mxu0 0.0
  %6704 = vmatpush2.msra.mxu0 0.0
  %6705 = vmatprep.subr.mxu0 0.0
  %6706 = vmatpush2.msra.mxu0 0.0
  %6707 = vmatprep.subr.mxu0 0.0
  %6708 = vmatpush2.msra.mxu0 0.0
  %6709 = vmatprep.subr.mxu0 0.0
  %6710 = vmatpush2.msra.mxu0 0.0
  %6711 = vmatprep.subr.mxu0 0.0
  %6712 = vmatpush2.msra.mxu0 0.0
  %6713 = vmatprep.subr.mxu0 0.0
  %6714 = vmatpush2.msra.mxu0 0.0
  %6715 = vmatprep.subr.mxu0 0.0
  %6716 = vmatpush2.msra.mxu0 0.0
  %6717 = vmatprep.subr.mxu0 0.0
  %6718 = vmatpush2.msra.mxu0 0.0
  %6719 = vmatprep.subr.mxu0 0.0
  %6720 = vmatpush2.msra.mxu0 0.0
  %6721 = vmatprep.subr.mxu0 0.0
  %6722 = vmatpush2.msra.mxu0 0.0
  %6723 = vmatprep.subr.mxu0 0.0
  %6724 = vmatpush2.msra.mxu0 0.0
  %6725 = vmatprep.mubr.f32.mxu0 0.0
  %6726 = vmatmul.mubr.f32.gmra.mxu0 %v6588
  %v6727 = vpop.f32.mrf.mxu0
  %v6728 = vadd.f32 0.0, %v6727
  %v6729 = vpop.f32.mrf.mxu0
  %6730 = vdwg.mxu0
  %v6731 = vadd.f32 %v6444, %v6728
  %6732 = vmatprep.subr.mxu0 0.0
  %6733 = vmatpush1.msra.mxu0 0.0
  %6734 = vmatprep.subr.mxu0 0.0
  %6735 = vmatpush1.msra.mxu0 0.0
  %6736 = vmatprep.subr.mxu0 0.0
  %6737 = vmatpush1.msra.mxu0 0.0
  %6738 = vmatprep.subr.mxu0 0.0
  %6739 = vmatpush1.msra.mxu0 0.0
  %6740 = vmatprep.subr.mxu0 0.0
  %6741 = vmatpush1.msra.mxu0 0.0
  %6742 = vmatprep.subr.mxu0 0.0
  %6743 = vmatpush1.msra.mxu0 0.0
  %6744 = vmatprep.subr.mxu0 0.0
  %6745 = vmatpush1.msra.mxu0 0.0
  %6746 = vmatprep.subr.mxu0 0.0
  %6747 = vmatpush1.msra.mxu0 0.0
  %6748 = vmatprep.subr.mxu0 0.0
  %6749 = vmatpush1.msra.mxu0 0.0
  %6750 = vmatprep.subr.mxu0 0.0
  %6751 = vmatpush1.msra.mxu0 0.0
  %6752 = vmatprep.subr.mxu0 0.0
  %6753 = vmatpush1.msra.mxu0 0.0
  %6754 = vmatprep.subr.mxu0 0.0
  %6755 = vmatpush1.msra.mxu0 0.0
  %6756 = vmatprep.subr.mxu0 0.0
  %6757 = vmatpush1.msra.mxu0 0.0
  %6758 = vmatprep.subr.mxu0 0.0
  %6759 = vmatpush1.msra.mxu0 0.0
  %6760 = vmatprep.subr.mxu0 0.0
  %6761 = vmatpush1.msra.mxu0 %v40
  %6762 = vmatprep.subr.mxu0 0.0
  %6763 = vmatpush1.msra.mxu0 %v39
  %6764 = vmatprep.subr.mxu0 0.0
  %6765 = vmatpush2.msra.mxu0 0.0
  %6766 = vmatprep.subr.mxu0 0.0
  %6767 = vmatpush2.msra.mxu0 0.0
  %6768 = vmatprep.subr.mxu0 0.0
  %6769 = vmatpush2.msra.mxu0 0.0
  %6770 = vmatprep.subr.mxu0 0.0
  %6771 = vmatpush2.msra.mxu0 0.0
  %6772 = vmatprep.subr.mxu0 0.0
  %6773 = vmatpush2.msra.mxu0 0.0
  %6774 = vmatprep.subr.mxu0 0.0
  %6775 = vmatpush2.msra.mxu0 0.0
  %6776 = vmatprep.subr.mxu0 0.0
  %6777 = vmatpush2.msra.mxu0 0.0
  %6778 = vmatprep.subr.mxu0 0.0
  %6779 = vmatpush2.msra.mxu0 0.0
  %6780 = vmatprep.subr.mxu0 0.0
  %6781 = vmatpush2.msra.mxu0 0.0
  %6782 = vmatprep.subr.mxu0 0.0
  %6783 = vmatpush2.msra.mxu0 0.0
  %6784 = vmatprep.subr.mxu0 0.0
  %6785 = vmatpush2.msra.mxu0 0.0
  %6786 = vmatprep.subr.mxu0 0.0
  %6787 = vmatpush2.msra.mxu0 0.0
  %6788 = vmatprep.subr.mxu0 0.0
  %6789 = vmatpush2.msra.mxu0 0.0
  %6790 = vmatprep.subr.mxu0 0.0
  %6791 = vmatpush2.msra.mxu0 0.0
  %6792 = vmatprep.subr.mxu0 0.0
  %6793 = vmatpush2.msra.mxu0 0.0
  %6794 = vmatprep.subr.mxu0 0.0
  %6795 = vmatpush2.msra.mxu0 0.0
  %6796 = vmatprep.mubr.f32.mxu0 0.0
  %6797 = vmatmul.mubr.f32.gmra.mxu0 %v6588
  %v6798 = vpop.f32.mrf.mxu0
  %v6799 = vadd.f32 0.0, %v6798
  %v6800 = vpop.f32.mrf.mxu0
  %6801 = vdwg.mxu0
  %v6802 = vadd.f32 %v6514, %v6799
  %6803 = vmatprep.subr.mxu0 0.0
  %6804 = vmatpush1.msra.mxu0 0.0
  %6805 = vmatprep.subr.mxu0 0.0
  %6806 = vmatpush1.msra.mxu0 0.0
  %6807 = vmatprep.subr.mxu0 0.0
  %6808 = vmatpush1.msra.mxu0 0.0
  %6809 = vmatprep.subr.mxu0 0.0
  %6810 = vmatpush1.msra.mxu0 0.0
  %6811 = vmatprep.subr.mxu0 0.0
  %6812 = vmatpush1.msra.mxu0 0.0
  %6813 = vmatprep.subr.mxu0 0.0
  %6814 = vmatpush1.msra.mxu0 0.0
  %6815 = vmatprep.subr.mxu0 0.0
  %6816 = vmatpush1.msra.mxu0 0.0
  %6817 = vmatprep.subr.mxu0 0.0
  %6818 = vmatpush1.msra.mxu0 0.0
  %6819 = vmatprep.subr.mxu0 0.0
  %6820 = vmatpush1.msra.mxu0 0.0
  %6821 = vmatprep.subr.mxu0 0.0
  %6822 = vmatpush1.msra.mxu0 0.0
  %6823 = vmatprep.subr.mxu0 0.0
  %6824 = vmatpush1.msra.mxu0 0.0
  %6825 = vmatprep.subr.mxu0 0.0
  %6826 = vmatpush1.msra.mxu0 0.0
  %6827 = vmatprep.subr.mxu0 0.0
  %6828 = vmatpush1.msra.mxu0 0.0
  %6829 = vmatprep.subr.mxu0 0.0
  %6830 = vmatpush1.msra.mxu0 0.0
  %6831 = vmatprep.subr.mxu0 0.0
  %6832 = vmatpush1.msra.mxu0 %v42
  %6833 = vmatprep.subr.mxu0 0.0
  %6834 = vmatpush1.msra.mxu0 %v41
  %6835 = vmatprep.subr.mxu0 0.0
  %6836 = vmatpush2.msra.mxu0 0.0
  %6837 = vmatprep.subr.mxu0 0.0
  %6838 = vmatpush2.msra.mxu0 0.0
  %6839 = vmatprep.subr.mxu0 0.0
  %6840 = vmatpush2.msra.mxu0 0.0
  %6841 = vmatprep.subr.mxu0 0.0
  %6842 = vmatpush2.msra.mxu0 0.0
  %6843 = vmatprep.subr.mxu0 0.0
  %6844 = vmatpush2.msra.mxu0 0.0
  %6845 = vmatprep.subr.mxu0 0.0
  %6846 = vmatpush2.msra.mxu0 0.0
  %6847 = vmatprep.subr.mxu0 0.0
  %6848 = vmatpush2.msra.mxu0 0.0
  %6849 = vmatprep.subr.mxu0 0.0
  %6850 = vmatpush2.msra.mxu0 0.0
  %6851 = vmatprep.subr.mxu0 0.0
  %6852 = vmatpush2.msra.mxu0 0.0
  %6853 = vmatprep.subr.mxu0 0.0
  %6854 = vmatpush2.msra.mxu0 0.0
  %6855 = vmatprep.subr.mxu0 0.0
  %6856 = vmatpush2.msra.mxu0 0.0
  %6857 = vmatprep.subr.mxu0 0.0
  %6858 = vmatpush2.msra.mxu0 0.0
  %6859 = vmatprep.subr.mxu0 0.0
  %6860 = vmatpush2.msra.mxu0 0.0
  %6861 = vmatprep.subr.mxu0 0.0
  %6862 = vmatpush2.msra.mxu0 0.0
  %6863 = vmatprep.subr.mxu0 0.0
  %6864 = vmatpush2.msra.mxu0 0.0
  %6865 = vmatprep.subr.mxu0 0.0
  %6866 = vmatpush2.msra.mxu0 0.0
  %6867 = vmatprep.mubr.f32.mxu0 0.0
  %6868 = vmatmul.mubr.f32.gmra.mxu0 %v6588
  %v6869 = vpop.f32.mrf.mxu0
  %v6870 = vadd.f32 0.0, %v6869
  %v6871 = vpop.f32.mrf.mxu0
  %6872 = vdwg.mxu0
  %v6873 = vadd.f32 %v6584, %v6870
  %v6874 = vxor.u32 %v6660, 2147483648
  %v6875 = vmul.f32 %v6874, 1.442695
  %v6876 = vpow.pop %v6875
  %v6877 = vadd.f32 %v6876, 1.0
  %v6878 = vrcp.pop %v6877
  %v6879 = vmul.f32 1.0, %v6878
  %v6880 = vxor.u32 %v6731, 2147483648
  %v6881 = vmul.f32 %v6880, 1.442695
  %v6882 = vpow.pop %v6881
  %v6883 = vadd.f32 %v6882, 1.0
  %v6884 = vrcp.pop %v6883
  %v6885 = vmul.f32 1.0, %v6884
  %v6886 = vtanh.pop %v6802
  %v6887 = vxor.u32 %v6873, 2147483648
  %v6888 = vmul.f32 %v6887, 1.442695
  %v6889 = vpow.pop %v6888
  %v6890 = vadd.f32 %v6889, 1.0
  %v6891 = vrcp.pop %v6890
  %v6892 = vmul.f32 1.0, %v6891
  %v6893 = vmul.f32 %v6885, %v5987
  %v6894 = vmul.f32 %v6879, %v6886
  %v6895 = vadd.f32 %v6893, %v6894
  %v6896 = vtanh.pop %v6895
  %v6897 = vmul.f32 %v6892, %v6896
  %vm6898 = vcmp.eq.s32.totalorder %v546, 6
  %v6899 = vlaneseq
  %v6900 = vshrl.u32 %v6899, 7
  %v6901 = vsub.s32 7, %v6900
  %v6902 = vrot.slane %v6897, %v6901
  %v6903 = vsel %vm6898, %v6902, %v5995
  %6904 = vmatprep.subr.mxu0 0.0
  %6905 = vmatpush1.msra.mxu0 0.0
  %6906 = vmatprep.subr.mxu0 0.0
  %6907 = vmatpush1.msra.mxu0 0.0
  %6908 = vmatprep.subr.mxu0 0.0
  %6909 = vmatpush1.msra.mxu0 0.0
  %6910 = vmatprep.subr.mxu0 0.0
  %6911 = vmatpush1.msra.mxu0 0.0
  %6912 = vmatprep.subr.mxu0 0.0
  %6913 = vmatpush1.msra.mxu0 0.0
  %6914 = vmatprep.subr.mxu0 0.0
  %6915 = vmatpush1.msra.mxu0 0.0
  %6916 = vmatprep.subr.mxu0 0.0
  %6917 = vmatpush1.msra.mxu0 0.0
  %6918 = vmatprep.subr.mxu0 0.0
  %6919 = vmatpush1.msra.mxu0 0.0
  %6920 = vmatprep.subr.mxu0 0.0
  %6921 = vmatpush1.msra.mxu0 0.0
  %6922 = vmatprep.subr.mxu0 0.0
  %6923 = vmatpush1.msra.mxu0 0.0
  %6924 = vmatprep.subr.mxu0 0.0
  %6925 = vmatpush1.msra.mxu0 0.0
  %6926 = vmatprep.subr.mxu0 0.0
  %6927 = vmatpush1.msra.mxu0 0.0
  %6928 = vmatprep.subr.mxu0 0.0
  %6929 = vmatpush1.msra.mxu0 0.0
  %6930 = vmatprep.subr.mxu0 0.0
  %6931 = vmatpush1.msra.mxu0 0.0
  %6932 = vmatprep.subr.mxu0 0.0
  %6933 = vmatpush1.msra.mxu0 %v16
  %6934 = vmatprep.subr.mxu0 0.0
  %6935 = vmatpush1.msra.mxu0 %v15
  %6936 = vmatprep.subr.mxu0 0.0
  %6937 = vmatpush2.msra.mxu0 0.0
  %6938 = vmatprep.subr.mxu0 0.0
  %6939 = vmatpush2.msra.mxu0 0.0
  %6940 = vmatprep.subr.mxu0 0.0
  %6941 = vmatpush2.msra.mxu0 0.0
  %6942 = vmatprep.subr.mxu0 0.0
  %6943 = vmatpush2.msra.mxu0 0.0
  %6944 = vmatprep.subr.mxu0 0.0
  %6945 = vmatpush2.msra.mxu0 0.0
  %6946 = vmatprep.subr.mxu0 0.0
  %6947 = vmatpush2.msra.mxu0 0.0
  %6948 = vmatprep.subr.mxu0 0.0
  %6949 = vmatpush2.msra.mxu0 0.0
  %6950 = vmatprep.subr.mxu0 0.0
  %6951 = vmatpush2.msra.mxu0 0.0
  %6952 = vmatprep.subr.mxu0 0.0
  %6953 = vmatpush2.msra.mxu0 0.0
  %6954 = vmatprep.subr.mxu0 0.0
  %6955 = vmatpush2.msra.mxu0 0.0
  %6956 = vmatprep.subr.mxu0 0.0
  %6957 = vmatpush2.msra.mxu0 0.0
  %6958 = vmatprep.subr.mxu0 0.0
  %6959 = vmatpush2.msra.mxu0 0.0
  %6960 = vmatprep.subr.mxu0 0.0
  %6961 = vmatpush2.msra.mxu0 0.0
  %6962 = vmatprep.subr.mxu0 0.0
  %6963 = vmatpush2.msra.mxu0 0.0
  %6964 = vmatprep.subr.mxu0 0.0
  %6965 = vmatpush2.msra.mxu0 0.0
  %6966 = vmatprep.subr.mxu0 0.0
  %6967 = vmatpush2.msra.mxu0 0.0
  %6968 = vmatprep.mubr.f32.mxu0 0.0
  %6969 = vmatmul.mubr.f32.gmra.mxu0 %v6305
  %v6970 = vpop.f32.mrf.mxu0
  %v6971 = vadd.f32 0.0, %v6970
  %v6972 = vpop.f32.mrf.mxu0
  %6973 = vdwg.mxu0
  %v6974 = vadd.f32 %v190, %v6971
  %6975 = vmatprep.subr.mxu0 0.0
  %6976 = vmatpush1.msra.mxu0 0.0
  %6977 = vmatprep.subr.mxu0 0.0
  %6978 = vmatpush1.msra.mxu0 0.0
  %6979 = vmatprep.subr.mxu0 0.0
  %6980 = vmatpush1.msra.mxu0 0.0
  %6981 = vmatprep.subr.mxu0 0.0
  %6982 = vmatpush1.msra.mxu0 0.0
  %6983 = vmatprep.subr.mxu0 0.0
  %6984 = vmatpush1.msra.mxu0 0.0
  %6985 = vmatprep.subr.mxu0 0.0
  %6986 = vmatpush1.msra.mxu0 0.0
  %6987 = vmatprep.subr.mxu0 0.0
  %6988 = vmatpush1.msra.mxu0 0.0
  %6989 = vmatprep.subr.mxu0 0.0
  %6990 = vmatpush1.msra.mxu0 0.0
  %6991 = vmatprep.subr.mxu0 0.0
  %6992 = vmatpush1.msra.mxu0 0.0
  %6993 = vmatprep.subr.mxu0 0.0
  %6994 = vmatpush1.msra.mxu0 0.0
  %6995 = vmatprep.subr.mxu0 0.0
  %6996 = vmatpush1.msra.mxu0 0.0
  %6997 = vmatprep.subr.mxu0 0.0
  %6998 = vmatpush1.msra.mxu0 0.0
  %6999 = vmatprep.subr.mxu0 0.0
  %7000 = vmatpush1.msra.mxu0 0.0
  %7001 = vmatprep.subr.mxu0 0.0
  %7002 = vmatpush1.msra.mxu0 0.0
  %7003 = vmatprep.subr.mxu0 0.0
  %7004 = vmatpush1.msra.mxu0 %v18
  %7005 = vmatprep.subr.mxu0 0.0
  %7006 = vmatpush1.msra.mxu0 %v17
  %7007 = vmatprep.subr.mxu0 0.0
  %7008 = vmatpush2.msra.mxu0 0.0
  %7009 = vmatprep.subr.mxu0 0.0
  %7010 = vmatpush2.msra.mxu0 0.0
  %7011 = vmatprep.subr.mxu0 0.0
  %7012 = vmatpush2.msra.mxu0 0.0
  %7013 = vmatprep.subr.mxu0 0.0
  %7014 = vmatpush2.msra.mxu0 0.0
  %7015 = vmatprep.subr.mxu0 0.0
  %7016 = vmatpush2.msra.mxu0 0.0
  %7017 = vmatprep.subr.mxu0 0.0
  %7018 = vmatpush2.msra.mxu0 0.0
  %7019 = vmatprep.subr.mxu0 0.0
  %7020 = vmatpush2.msra.mxu0 0.0
  %7021 = vmatprep.subr.mxu0 0.0
  %7022 = vmatpush2.msra.mxu0 0.0
  %7023 = vmatprep.subr.mxu0 0.0
  %7024 = vmatpush2.msra.mxu0 0.0
  %7025 = vmatprep.subr.mxu0 0.0
  %7026 = vmatpush2.msra.mxu0 0.0
  %7027 = vmatprep.subr.mxu0 0.0
  %7028 = vmatpush2.msra.mxu0 0.0
  %7029 = vmatprep.subr.mxu0 0.0
  %7030 = vmatpush2.msra.mxu0 0.0
  %7031 = vmatprep.subr.mxu0 0.0
  %7032 = vmatpush2.msra.mxu0 0.0
  %7033 = vmatprep.subr.mxu0 0.0
  %7034 = vmatpush2.msra.mxu0 0.0
  %7035 = vmatprep.subr.mxu0 0.0
  %7036 = vmatpush2.msra.mxu0 0.0
  %7037 = vmatprep.subr.mxu0 0.0
  %7038 = vmatpush2.msra.mxu0 0.0
  %7039 = vmatprep.mubr.f32.mxu0 0.0
  %7040 = vmatmul.mubr.f32.gmra.mxu0 %v6305
  %v7041 = vpop.f32.mrf.mxu0
  %v7042 = vadd.f32 0.0, %v7041
  %v7043 = vpop.f32.mrf.mxu0
  %7044 = vdwg.mxu0
  %v7045 = vadd.f32 %v302, %v7042
  %7046 = vmatprep.subr.mxu0 0.0
  %7047 = vmatpush1.msra.mxu0 0.0
  %7048 = vmatprep.subr.mxu0 0.0
  %7049 = vmatpush1.msra.mxu0 0.0
  %7050 = vmatprep.subr.mxu0 0.0
  %7051 = vmatpush1.msra.mxu0 0.0
  %7052 = vmatprep.subr.mxu0 0.0
  %7053 = vmatpush1.msra.mxu0 0.0
  %7054 = vmatprep.subr.mxu0 0.0
  %7055 = vmatpush1.msra.mxu0 0.0
  %7056 = vmatprep.subr.mxu0 0.0
  %7057 = vmatpush1.msra.mxu0 0.0
  %7058 = vmatprep.subr.mxu0 0.0
  %7059 = vmatpush1.msra.mxu0 0.0
  %7060 = vmatprep.subr.mxu0 0.0
  %7061 = vmatpush1.msra.mxu0 0.0
  %7062 = vmatprep.subr.mxu0 0.0
  %7063 = vmatpush1.msra.mxu0 0.0
  %7064 = vmatprep.subr.mxu0 0.0
  %7065 = vmatpush1.msra.mxu0 0.0
  %7066 = vmatprep.subr.mxu0 0.0
  %7067 = vmatpush1.msra.mxu0 0.0
  %7068 = vmatprep.subr.mxu0 0.0
  %7069 = vmatpush1.msra.mxu0 0.0
  %7070 = vmatprep.subr.mxu0 0.0
  %7071 = vmatpush1.msra.mxu0 0.0
  %7072 = vmatprep.subr.mxu0 0.0
  %7073 = vmatpush1.msra.mxu0 0.0
  %7074 = vmatprep.subr.mxu0 0.0
  %7075 = vmatpush1.msra.mxu0 %v20
  %7076 = vmatprep.subr.mxu0 0.0
  %7077 = vmatpush1.msra.mxu0 %v19
  %7078 = vmatprep.subr.mxu0 0.0
  %7079 = vmatpush2.msra.mxu0 0.0
  %7080 = vmatprep.subr.mxu0 0.0
  %7081 = vmatpush2.msra.mxu0 0.0
  %7082 = vmatprep.subr.mxu0 0.0
  %7083 = vmatpush2.msra.mxu0 0.0
  %7084 = vmatprep.subr.mxu0 0.0
  %7085 = vmatpush2.msra.mxu0 0.0
  %7086 = vmatprep.subr.mxu0 0.0
  %7087 = vmatpush2.msra.mxu0 0.0
  %7088 = vmatprep.subr.mxu0 0.0
  %7089 = vmatpush2.msra.mxu0 0.0
  %7090 = vmatprep.subr.mxu0 0.0
  %7091 = vmatpush2.msra.mxu0 0.0
  %7092 = vmatprep.subr.mxu0 0.0
  %7093 = vmatpush2.msra.mxu0 0.0
  %7094 = vmatprep.subr.mxu0 0.0
  %7095 = vmatpush2.msra.mxu0 0.0
  %7096 = vmatprep.subr.mxu0 0.0
  %7097 = vmatpush2.msra.mxu0 0.0
  %7098 = vmatprep.subr.mxu0 0.0
  %7099 = vmatpush2.msra.mxu0 0.0
  %7100 = vmatprep.subr.mxu0 0.0
  %7101 = vmatpush2.msra.mxu0 0.0
  %7102 = vmatprep.subr.mxu0 0.0
  %7103 = vmatpush2.msra.mxu0 0.0
  %7104 = vmatprep.subr.mxu0 0.0
  %7105 = vmatpush2.msra.mxu0 0.0
  %7106 = vmatprep.subr.mxu0 0.0
  %7107 = vmatpush2.msra.mxu0 0.0
  %7108 = vmatprep.subr.mxu0 0.0
  %7109 = vmatpush2.msra.mxu0 0.0
  %7110 = vmatprep.mubr.f32.mxu0 0.0
  %7111 = vmatmul.mubr.f32.gmra.mxu0 %v6305
  %v7112 = vpop.f32.mrf.mxu0
  %v7113 = vadd.f32 0.0, %v7112
  %v7114 = vpop.f32.mrf.mxu0
  %7115 = vdwg.mxu0
  %v7116 = vadd.f32 %v414, %v7113
  %7117 = vmatprep.subr.mxu0 0.0
  %7118 = vmatpush1.msra.mxu0 0.0
  %7119 = vmatprep.subr.mxu0 0.0
  %7120 = vmatpush1.msra.mxu0 0.0
  %7121 = vmatprep.subr.mxu0 0.0
  %7122 = vmatpush1.msra.mxu0 0.0
  %7123 = vmatprep.subr.mxu0 0.0
  %7124 = vmatpush1.msra.mxu0 0.0
  %7125 = vmatprep.subr.mxu0 0.0
  %7126 = vmatpush1.msra.mxu0 0.0
  %7127 = vmatprep.subr.mxu0 0.0
  %7128 = vmatpush1.msra.mxu0 0.0
  %7129 = vmatprep.subr.mxu0 0.0
  %7130 = vmatpush1.msra.mxu0 0.0
  %7131 = vmatprep.subr.mxu0 0.0
  %7132 = vmatpush1.msra.mxu0 0.0
  %7133 = vmatprep.subr.mxu0 0.0
  %7134 = vmatpush1.msra.mxu0 0.0
  %7135 = vmatprep.subr.mxu0 0.0
  %7136 = vmatpush1.msra.mxu0 0.0
  %7137 = vmatprep.subr.mxu0 0.0
  %7138 = vmatpush1.msra.mxu0 0.0
  %7139 = vmatprep.subr.mxu0 0.0
  %7140 = vmatpush1.msra.mxu0 0.0
  %7141 = vmatprep.subr.mxu0 0.0
  %7142 = vmatpush1.msra.mxu0 0.0
  %7143 = vmatprep.subr.mxu0 0.0
  %7144 = vmatpush1.msra.mxu0 0.0
  %7145 = vmatprep.subr.mxu0 0.0
  %7146 = vmatpush1.msra.mxu0 %v22
  %7147 = vmatprep.subr.mxu0 0.0
  %7148 = vmatpush1.msra.mxu0 %v21
  %7149 = vmatprep.subr.mxu0 0.0
  %7150 = vmatpush2.msra.mxu0 0.0
  %7151 = vmatprep.subr.mxu0 0.0
  %7152 = vmatpush2.msra.mxu0 0.0
  %7153 = vmatprep.subr.mxu0 0.0
  %7154 = vmatpush2.msra.mxu0 0.0
  %7155 = vmatprep.subr.mxu0 0.0
  %7156 = vmatpush2.msra.mxu0 0.0
  %7157 = vmatprep.subr.mxu0 0.0
  %7158 = vmatpush2.msra.mxu0 0.0
  %7159 = vmatprep.subr.mxu0 0.0
  %7160 = vmatpush2.msra.mxu0 0.0
  %7161 = vmatprep.subr.mxu0 0.0
  %7162 = vmatpush2.msra.mxu0 0.0
  %7163 = vmatprep.subr.mxu0 0.0
  %7164 = vmatpush2.msra.mxu0 0.0
  %7165 = vmatprep.subr.mxu0 0.0
  %7166 = vmatpush2.msra.mxu0 0.0
  %7167 = vmatprep.subr.mxu0 0.0
  %7168 = vmatpush2.msra.mxu0 0.0
  %7169 = vmatprep.subr.mxu0 0.0
  %7170 = vmatpush2.msra.mxu0 0.0
  %7171 = vmatprep.subr.mxu0 0.0
  %7172 = vmatpush2.msra.mxu0 0.0
  %7173 = vmatprep.subr.mxu0 0.0
  %7174 = vmatpush2.msra.mxu0 0.0
  %7175 = vmatprep.subr.mxu0 0.0
  %7176 = vmatpush2.msra.mxu0 0.0
  %7177 = vmatprep.subr.mxu0 0.0
  %7178 = vmatpush2.msra.mxu0 0.0
  %7179 = vmatprep.subr.mxu0 0.0
  %7180 = vmatpush2.msra.mxu0 0.0
  %7181 = vmatprep.mubr.f32.mxu0 0.0
  %7182 = vmatmul.mubr.f32.gmra.mxu0 %v6305
  %v7183 = vpop.f32.mrf.mxu0
  %v7184 = vadd.f32 0.0, %v7183
  %v7185 = vpop.f32.mrf.mxu0
  %7186 = vdwg.mxu0
  %v7187 = vadd.f32 %v526, %v7184
  %v7188 = vxor.u32 %v6974, 2147483648
  %v7189 = vmul.f32 %v7188, 1.442695
  %v7190 = vpow.pop %v7189
  %v7191 = vadd.f32 %v7190, 1.0
  %v7192 = vrcp.pop %v7191
  %v7193 = vmul.f32 1.0, %v7192
  %v7194 = vxor.u32 %v7045, 2147483648
  %v7195 = vmul.f32 %v7194, 1.442695
  %v7196 = vpow.pop %v7195
  %v7197 = vadd.f32 %v7196, 1.0
  %v7198 = vrcp.pop %v7197
  %v7199 = vmul.f32 1.0, %v7198
  %v7200 = vtanh.pop %v7116
  %v7201 = vxor.u32 %v7187, 2147483648
  %v7202 = vmul.f32 %v7201, 1.442695
  %v7203 = vpow.pop %v7202
  %v7204 = vadd.f32 %v7203, 1.0
  %v7205 = vrcp.pop %v7204
  %v7206 = vmul.f32 1.0, %v7205
  %v7207 = vmul.f32 %v7199, %v6301
  %v7208 = vmul.f32 %v7193, %v7200
  %v7209 = vadd.f32 %v7207, %v7208
  %v7210 = vtanh.pop %v7209
  %v7211 = vmul.f32 %v7206, %v7210
  %v7213 = vsel %vm547, %v7211, 0
  %7215 = vmatprep.subr.mxu0 0.0
  %7216 = vmatpush1.msra.mxu0 0.0
  %7217 = vmatprep.subr.mxu0 0.0
  %7218 = vmatpush1.msra.mxu0 0.0
  %7219 = vmatprep.subr.mxu0 0.0
  %7220 = vmatpush1.msra.mxu0 0.0
  %7221 = vmatprep.subr.mxu0 0.0
  %7222 = vmatpush1.msra.mxu0 0.0
  %7223 = vmatprep.subr.mxu0 0.0
  %7224 = vmatpush1.msra.mxu0 0.0
  %7225 = vmatprep.subr.mxu0 0.0
  %7226 = vmatpush1.msra.mxu0 0.0
  %7227 = vmatprep.subr.mxu0 0.0
  %7228 = vmatpush1.msra.mxu0 0.0
  %7229 = vmatprep.subr.mxu0 0.0
  %7230 = vmatpush1.msra.mxu0 0.0
  %7231 = vmatprep.subr.mxu0 0.0
  %7232 = vmatpush1.msra.mxu0 0.0
  %7233 = vmatprep.subr.mxu0 0.0
  %7234 = vmatpush1.msra.mxu0 0.0
  %7235 = vmatprep.subr.mxu0 0.0
  %7236 = vmatpush1.msra.mxu0 0.0
  %7237 = vmatprep.subr.mxu0 0.0
  %7238 = vmatpush1.msra.mxu0 0.0
  %7239 = vmatprep.subr.mxu0 0.0
  %7240 = vmatpush1.msra.mxu0 0.0
  %7241 = vmatprep.subr.mxu0 0.0
  %7242 = vmatpush1.msra.mxu0 0.0
  %7243 = vmatprep.subr.mxu0 0.0
  %7244 = vmatpush1.msra.mxu0 %v28
  %7245 = vmatprep.subr.mxu0 0.0
  %7246 = vmatpush1.msra.mxu0 %v27
  %7247 = vmatprep.subr.mxu0 0.0
  %7248 = vmatpush2.msra.mxu0 0.0
  %7249 = vmatprep.subr.mxu0 0.0
  %7250 = vmatpush2.msra.mxu0 0.0
  %7251 = vmatprep.subr.mxu0 0.0
  %7252 = vmatpush2.msra.mxu0 0.0
  %7253 = vmatprep.subr.mxu0 0.0
  %7254 = vmatpush2.msra.mxu0 0.0
  %7255 = vmatprep.subr.mxu0 0.0
  %7256 = vmatpush2.msra.mxu0 0.0
  %7257 = vmatprep.subr.mxu0 0.0
  %7258 = vmatpush2.msra.mxu0 0.0
  %7259 = vmatprep.subr.mxu0 0.0
  %7260 = vmatpush2.msra.mxu0 0.0
  %7261 = vmatprep.subr.mxu0 0.0
  %7262 = vmatpush2.msra.mxu0 0.0
  %7263 = vmatprep.subr.mxu0 0.0
  %7264 = vmatpush2.msra.mxu0 0.0
  %7265 = vmatprep.subr.mxu0 0.0
  %7266 = vmatpush2.msra.mxu0 0.0
  %7267 = vmatprep.subr.mxu0 0.0
  %7268 = vmatpush2.msra.mxu0 0.0
  %7269 = vmatprep.subr.mxu0 0.0
  %7270 = vmatpush2.msra.mxu0 0.0
  %7271 = vmatprep.subr.mxu0 0.0
  %7272 = vmatpush2.msra.mxu0 0.0
  %7273 = vmatprep.subr.mxu0 0.0
  %7274 = vmatpush2.msra.mxu0 0.0
  %7275 = vmatprep.subr.mxu0 0.0
  %7276 = vmatpush2.msra.mxu0 0.0
  %7277 = vmatprep.subr.mxu0 0.0
  %7278 = vmatpush2.msra.mxu0 0.0
  %7279 = vmatprep.mubr.f32.mxu0 0.0
  %7280 = vmatmul.mubr.f32.gmra.mxu0 %v7213
  %v7281 = vpop.f32.mrf.mxu0
  %v7282 = vadd.f32 %v532, %v7281
  %v7283 = vpop.f32.mrf.mxu0
  %7284 = vdwg.mxu0
  %7285 = vmatprep.subr.mxu0 0.0
  %7286 = vmatpush1.msra.mxu0 0.0
  %7287 = vmatprep.subr.mxu0 0.0
  %7288 = vmatpush1.msra.mxu0 0.0
  %7289 = vmatprep.subr.mxu0 0.0
  %7290 = vmatpush1.msra.mxu0 0.0
  %7291 = vmatprep.subr.mxu0 0.0
  %7292 = vmatpush1.msra.mxu0 0.0
  %7293 = vmatprep.subr.mxu0 0.0
  %7294 = vmatpush1.msra.mxu0 0.0
  %7295 = vmatprep.subr.mxu0 0.0
  %7296 = vmatpush1.msra.mxu0 0.0
  %7297 = vmatprep.subr.mxu0 0.0
  %7298 = vmatpush1.msra.mxu0 0.0
  %7299 = vmatprep.subr.mxu0 0.0
  %7300 = vmatpush1.msra.mxu0 0.0
  %7301 = vmatprep.subr.mxu0 0.0
  %7302 = vmatpush1.msra.mxu0 0.0
  %7303 = vmatprep.subr.mxu0 0.0
  %7304 = vmatpush1.msra.mxu0 0.0
  %7305 = vmatprep.subr.mxu0 0.0
  %7306 = vmatpush1.msra.mxu0 0.0
  %7307 = vmatprep.subr.mxu0 0.0
  %7308 = vmatpush1.msra.mxu0 0.0
  %7309 = vmatprep.subr.mxu0 0.0
  %7310 = vmatpush1.msra.mxu0 0.0
  %7311 = vmatprep.subr.mxu0 0.0
  %7312 = vmatpush1.msra.mxu0 0.0
  %7313 = vmatprep.subr.mxu0 0.0
  %7314 = vmatpush1.msra.mxu0 %v30
  %7315 = vmatprep.subr.mxu0 0.0
  %7316 = vmatpush1.msra.mxu0 %v29
  %7317 = vmatprep.subr.mxu0 0.0
  %7318 = vmatpush2.msra.mxu0 0.0
  %7319 = vmatprep.subr.mxu0 0.0
  %7320 = vmatpush2.msra.mxu0 0.0
  %7321 = vmatprep.subr.mxu0 0.0
  %7322 = vmatpush2.msra.mxu0 0.0
  %7323 = vmatprep.subr.mxu0 0.0
  %7324 = vmatpush2.msra.mxu0 0.0
  %7325 = vmatprep.subr.mxu0 0.0
  %7326 = vmatpush2.msra.mxu0 0.0
  %7327 = vmatprep.subr.mxu0 0.0
  %7328 = vmatpush2.msra.mxu0 0.0
  %7329 = vmatprep.subr.mxu0 0.0
  %7330 = vmatpush2.msra.mxu0 0.0
  %7331 = vmatprep.subr.mxu0 0.0
  %7332 = vmatpush2.msra.mxu0 0.0
  %7333 = vmatprep.subr.mxu0 0.0
  %7334 = vmatpush2.msra.mxu0 0.0
  %7335 = vmatprep.subr.mxu0 0.0
  %7336 = vmatpush2.msra.mxu0 0.0
  %7337 = vmatprep.subr.mxu0 0.0
  %7338 = vmatpush2.msra.mxu0 0.0
  %7339 = vmatprep.subr.mxu0 0.0
  %7340 = vmatpush2.msra.mxu0 0.0
  %7341 = vmatprep.subr.mxu0 0.0
  %7342 = vmatpush2.msra.mxu0 0.0
  %7343 = vmatprep.subr.mxu0 0.0
  %7344 = vmatpush2.msra.mxu0 0.0
  %7345 = vmatprep.subr.mxu0 0.0
  %7346 = vmatpush2.msra.mxu0 0.0
  %7347 = vmatprep.subr.mxu0 0.0
  %7348 = vmatpush2.msra.mxu0 0.0
  %7349 = vmatprep.mubr.f32.mxu0 0.0
  %7350 = vmatmul.mubr.f32.gmra.mxu0 %v7213
  %v7351 = vpop.f32.mrf.mxu0
  %v7352 = vadd.f32 %v536, %v7351
  %v7353 = vpop.f32.mrf.mxu0
  %7354 = vdwg.mxu0
  %7355 = vmatprep.subr.mxu0 0.0
  %7356 = vmatpush1.msra.mxu0 0.0
  %7357 = vmatprep.subr.mxu0 0.0
  %7358 = vmatpush1.msra.mxu0 0.0
  %7359 = vmatprep.subr.mxu0 0.0
  %7360 = vmatpush1.msra.mxu0 0.0
  %7361 = vmatprep.subr.mxu0 0.0
  %7362 = vmatpush1.msra.mxu0 0.0
  %7363 = vmatprep.subr.mxu0 0.0
  %7364 = vmatpush1.msra.mxu0 0.0
  %7365 = vmatprep.subr.mxu0 0.0
  %7366 = vmatpush1.msra.mxu0 0.0
  %7367 = vmatprep.subr.mxu0 0.0
  %7368 = vmatpush1.msra.mxu0 0.0
  %7369 = vmatprep.subr.mxu0 0.0
  %7370 = vmatpush1.msra.mxu0 0.0
  %7371 = vmatprep.subr.mxu0 0.0
  %7372 = vmatpush1.msra.mxu0 0.0
  %7373 = vmatprep.subr.mxu0 0.0
  %7374 = vmatpush1.msra.mxu0 0.0
  %7375 = vmatprep.subr.mxu0 0.0
  %7376 = vmatpush1.msra.mxu0 0.0
  %7377 = vmatprep.subr.mxu0 0.0
  %7378 = vmatpush1.msra.mxu0 0.0
  %7379 = vmatprep.subr.mxu0 0.0
  %7380 = vmatpush1.msra.mxu0 0.0
  %7381 = vmatprep.subr.mxu0 0.0
  %7382 = vmatpush1.msra.mxu0 0.0
  %7383 = vmatprep.subr.mxu0 0.0
  %7384 = vmatpush1.msra.mxu0 %v32
  %7385 = vmatprep.subr.mxu0 0.0
  %7386 = vmatpush1.msra.mxu0 %v31
  %7387 = vmatprep.subr.mxu0 0.0
  %7388 = vmatpush2.msra.mxu0 0.0
  %7389 = vmatprep.subr.mxu0 0.0
  %7390 = vmatpush2.msra.mxu0 0.0
  %7391 = vmatprep.subr.mxu0 0.0
  %7392 = vmatpush2.msra.mxu0 0.0
  %7393 = vmatprep.subr.mxu0 0.0
  %7394 = vmatpush2.msra.mxu0 0.0
  %7395 = vmatprep.subr.mxu0 0.0
  %7396 = vmatpush2.msra.mxu0 0.0
  %7397 = vmatprep.subr.mxu0 0.0
  %7398 = vmatpush2.msra.mxu0 0.0
  %7399 = vmatprep.subr.mxu0 0.0
  %7400 = vmatpush2.msra.mxu0 0.0
  %7401 = vmatprep.subr.mxu0 0.0
  %7402 = vmatpush2.msra.mxu0 0.0
  %7403 = vmatprep.subr.mxu0 0.0
  %7404 = vmatpush2.msra.mxu0 0.0
  %7405 = vmatprep.subr.mxu0 0.0
  %7406 = vmatpush2.msra.mxu0 0.0
  %7407 = vmatprep.subr.mxu0 0.0
  %7408 = vmatpush2.msra.mxu0 0.0
  %7409 = vmatprep.subr.mxu0 0.0
  %7410 = vmatpush2.msra.mxu0 0.0
  %7411 = vmatprep.subr.mxu0 0.0
  %7412 = vmatpush2.msra.mxu0 0.0
  %7413 = vmatprep.subr.mxu0 0.0
  %7414 = vmatpush2.msra.mxu0 0.0
  %7415 = vmatprep.subr.mxu0 0.0
  %7416 = vmatpush2.msra.mxu0 0.0
  %7417 = vmatprep.subr.mxu0 0.0
  %7418 = vmatpush2.msra.mxu0 0.0
  %7419 = vmatprep.mubr.f32.mxu0 0.0
  %7420 = vmatmul.mubr.f32.gmra.mxu0 %v7213
  %v7421 = vpop.f32.mrf.mxu0
  %v7422 = vadd.f32 %v540, %v7421
  %v7423 = vpop.f32.mrf.mxu0
  %7424 = vdwg.mxu0
  %7425 = vmatprep.subr.mxu0 0.0
  %7426 = vmatpush1.msra.mxu0 0.0
  %7427 = vmatprep.subr.mxu0 0.0
  %7428 = vmatpush1.msra.mxu0 0.0
  %7429 = vmatprep.subr.mxu0 0.0
  %7430 = vmatpush1.msra.mxu0 0.0
  %7431 = vmatprep.subr.mxu0 0.0
  %7432 = vmatpush1.msra.mxu0 0.0
  %7433 = vmatprep.subr.mxu0 0.0
  %7434 = vmatpush1.msra.mxu0 0.0
  %7435 = vmatprep.subr.mxu0 0.0
  %7436 = vmatpush1.msra.mxu0 0.0
  %7437 = vmatprep.subr.mxu0 0.0
  %7438 = vmatpush1.msra.mxu0 0.0
  %7439 = vmatprep.subr.mxu0 0.0
  %7440 = vmatpush1.msra.mxu0 0.0
  %7441 = vmatprep.subr.mxu0 0.0
  %7442 = vmatpush1.msra.mxu0 0.0
  %7443 = vmatprep.subr.mxu0 0.0
  %7444 = vmatpush1.msra.mxu0 0.0
  %7445 = vmatprep.subr.mxu0 0.0
  %7446 = vmatpush1.msra.mxu0 0.0
  %7447 = vmatprep.subr.mxu0 0.0
  %7448 = vmatpush1.msra.mxu0 0.0
  %7449 = vmatprep.subr.mxu0 0.0
  %7450 = vmatpush1.msra.mxu0 0.0
  %7451 = vmatprep.subr.mxu0 0.0
  %7452 = vmatpush1.msra.mxu0 0.0
  %7453 = vmatprep.subr.mxu0 0.0
  %7454 = vmatpush1.msra.mxu0 %v34
  %7455 = vmatprep.subr.mxu0 0.0
  %7456 = vmatpush1.msra.mxu0 %v33
  %7457 = vmatprep.subr.mxu0 0.0
  %7458 = vmatpush2.msra.mxu0 0.0
  %7459 = vmatprep.subr.mxu0 0.0
  %7460 = vmatpush2.msra.mxu0 0.0
  %7461 = vmatprep.subr.mxu0 0.0
  %7462 = vmatpush2.msra.mxu0 0.0
  %7463 = vmatprep.subr.mxu0 0.0
  %7464 = vmatpush2.msra.mxu0 0.0
  %7465 = vmatprep.subr.mxu0 0.0
  %7466 = vmatpush2.msra.mxu0 0.0
  %7467 = vmatprep.subr.mxu0 0.0
  %7468 = vmatpush2.msra.mxu0 0.0
  %7469 = vmatprep.subr.mxu0 0.0
  %7470 = vmatpush2.msra.mxu0 0.0
  %7471 = vmatprep.subr.mxu0 0.0
  %7472 = vmatpush2.msra.mxu0 0.0
  %7473 = vmatprep.subr.mxu0 0.0
  %7474 = vmatpush2.msra.mxu0 0.0
  %7475 = vmatprep.subr.mxu0 0.0
  %7476 = vmatpush2.msra.mxu0 0.0
  %7477 = vmatprep.subr.mxu0 0.0
  %7478 = vmatpush2.msra.mxu0 0.0
  %7479 = vmatprep.subr.mxu0 0.0
  %7480 = vmatpush2.msra.mxu0 0.0
  %7481 = vmatprep.subr.mxu0 0.0
  %7482 = vmatpush2.msra.mxu0 0.0
  %7483 = vmatprep.subr.mxu0 0.0
  %7484 = vmatpush2.msra.mxu0 0.0
  %7485 = vmatprep.subr.mxu0 0.0
  %7486 = vmatpush2.msra.mxu0 0.0
  %7487 = vmatprep.subr.mxu0 0.0
  %7488 = vmatpush2.msra.mxu0 0.0
  %7489 = vmatprep.mubr.f32.mxu0 0.0
  %7490 = vmatmul.mubr.f32.gmra.mxu0 %v7213
  %v7491 = vpop.f32.mrf.mxu0
  %v7492 = vadd.f32 %v544, %v7491
  %v7493 = vpop.f32.mrf.mxu0
  %7494 = vdwg.mxu0
  %v7496 = vsel %vm547, %v6897, 0
  %7498 = vmatprep.subr.mxu0 0.0
  %7499 = vmatpush1.msra.mxu0 0.0
  %7500 = vmatprep.subr.mxu0 0.0
  %7501 = vmatpush1.msra.mxu0 0.0
  %7502 = vmatprep.subr.mxu0 0.0
  %7503 = vmatpush1.msra.mxu0 0.0
  %7504 = vmatprep.subr.mxu0 0.0
  %7505 = vmatpush1.msra.mxu0 0.0
  %7506 = vmatprep.subr.mxu0 0.0
  %7507 = vmatpush1.msra.mxu0 0.0
  %7508 = vmatprep.subr.mxu0 0.0
  %7509 = vmatpush1.msra.mxu0 0.0
  %7510 = vmatprep.subr.mxu0 0.0
  %7511 = vmatpush1.msra.mxu0 0.0
  %7512 = vmatprep.subr.mxu0 0.0
  %7513 = vmatpush1.msra.mxu0 0.0
  %7514 = vmatprep.subr.mxu0 0.0
  %7515 = vmatpush1.msra.mxu0 0.0
  %7516 = vmatprep.subr.mxu0 0.0
  %7517 = vmatpush1.msra.mxu0 0.0
  %7518 = vmatprep.subr.mxu0 0.0
  %7519 = vmatpush1.msra.mxu0 0.0
  %7520 = vmatprep.subr.mxu0 0.0
  %7521 = vmatpush1.msra.mxu0 0.0
  %7522 = vmatprep.subr.mxu0 0.0
  %7523 = vmatpush1.msra.mxu0 0.0
  %7524 = vmatprep.subr.mxu0 0.0
  %7525 = vmatpush1.msra.mxu0 0.0
  %7526 = vmatprep.subr.mxu0 0.0
  %7527 = vmatpush1.msra.mxu0 %v36
  %7528 = vmatprep.subr.mxu0 0.0
  %7529 = vmatpush1.msra.mxu0 %v35
  %7530 = vmatprep.subr.mxu0 0.0
  %7531 = vmatpush2.msra.mxu0 0.0
  %7532 = vmatprep.subr.mxu0 0.0
  %7533 = vmatpush2.msra.mxu0 0.0
  %7534 = vmatprep.subr.mxu0 0.0
  %7535 = vmatpush2.msra.mxu0 0.0
  %7536 = vmatprep.subr.mxu0 0.0
  %7537 = vmatpush2.msra.mxu0 0.0
  %7538 = vmatprep.subr.mxu0 0.0
  %7539 = vmatpush2.msra.mxu0 0.0
  %7540 = vmatprep.subr.mxu0 0.0
  %7541 = vmatpush2.msra.mxu0 0.0
  %7542 = vmatprep.subr.mxu0 0.0
  %7543 = vmatpush2.msra.mxu0 0.0
  %7544 = vmatprep.subr.mxu0 0.0
  %7545 = vmatpush2.msra.mxu0 0.0
  %7546 = vmatprep.subr.mxu0 0.0
  %7547 = vmatpush2.msra.mxu0 0.0
  %7548 = vmatprep.subr.mxu0 0.0
  %7549 = vmatpush2.msra.mxu0 0.0
  %7550 = vmatprep.subr.mxu0 0.0
  %7551 = vmatpush2.msra.mxu0 0.0
  %7552 = vmatprep.subr.mxu0 0.0
  %7553 = vmatpush2.msra.mxu0 0.0
  %7554 = vmatprep.subr.mxu0 0.0
  %7555 = vmatpush2.msra.mxu0 0.0
  %7556 = vmatprep.subr.mxu0 0.0
  %7557 = vmatpush2.msra.mxu0 0.0
  %7558 = vmatprep.subr.mxu0 0.0
  %7559 = vmatpush2.msra.mxu0 0.0
  %7560 = vmatprep.subr.mxu0 0.0
  %7561 = vmatpush2.msra.mxu0 0.0
  %7562 = vmatprep.mubr.f32.mxu0 0.0
  %7563 = vmatmul.mubr.f32.gmra.mxu0 %v7496
  %v7564 = vpop.f32.mrf.mxu0
  %v7565 = vadd.f32 0.0, %v7564
  %v7566 = vpop.f32.mrf.mxu0
  %7567 = vdwg.mxu0
  %v7568 = vadd.f32 %v7282, %v7565
  %7569 = vmatprep.subr.mxu0 0.0
  %7570 = vmatpush1.msra.mxu0 0.0
  %7571 = vmatprep.subr.mxu0 0.0
  %7572 = vmatpush1.msra.mxu0 0.0
  %7573 = vmatprep.subr.mxu0 0.0
  %7574 = vmatpush1.msra.mxu0 0.0
  %7575 = vmatprep.subr.mxu0 0.0
  %7576 = vmatpush1.msra.mxu0 0.0
  %7577 = vmatprep.subr.mxu0 0.0
  %7578 = vmatpush1.msra.mxu0 0.0
  %7579 = vmatprep.subr.mxu0 0.0
  %7580 = vmatpush1.msra.mxu0 0.0
  %7581 = vmatprep.subr.mxu0 0.0
  %7582 = vmatpush1.msra.mxu0 0.0
  %7583 = vmatprep.subr.mxu0 0.0
  %7584 = vmatpush1.msra.mxu0 0.0
  %7585 = vmatprep.subr.mxu0 0.0
  %7586 = vmatpush1.msra.mxu0 0.0
  %7587 = vmatprep.subr.mxu0 0.0
  %7588 = vmatpush1.msra.mxu0 0.0
  %7589 = vmatprep.subr.mxu0 0.0
  %7590 = vmatpush1.msra.mxu0 0.0
  %7591 = vmatprep.subr.mxu0 0.0
  %7592 = vmatpush1.msra.mxu0 0.0
  %7593 = vmatprep.subr.mxu0 0.0
  %7594 = vmatpush1.msra.mxu0 0.0
  %7595 = vmatprep.subr.mxu0 0.0
  %7596 = vmatpush1.msra.mxu0 0.0
  %7597 = vmatprep.subr.mxu0 0.0
  %7598 = vmatpush1.msra.mxu0 %v38
  %7599 = vmatprep.subr.mxu0 0.0
  %7600 = vmatpush1.msra.mxu0 %v37
  %7601 = vmatprep.subr.mxu0 0.0
  %7602 = vmatpush2.msra.mxu0 0.0
  %7603 = vmatprep.subr.mxu0 0.0
  %7604 = vmatpush2.msra.mxu0 0.0
  %7605 = vmatprep.subr.mxu0 0.0
  %7606 = vmatpush2.msra.mxu0 0.0
  %7607 = vmatprep.subr.mxu0 0.0
  %7608 = vmatpush2.msra.mxu0 0.0
  %7609 = vmatprep.subr.mxu0 0.0
  %7610 = vmatpush2.msra.mxu0 0.0
  %7611 = vmatprep.subr.mxu0 0.0
  %7612 = vmatpush2.msra.mxu0 0.0
  %7613 = vmatprep.subr.mxu0 0.0
  %7614 = vmatpush2.msra.mxu0 0.0
  %7615 = vmatprep.subr.mxu0 0.0
  %7616 = vmatpush2.msra.mxu0 0.0
  %7617 = vmatprep.subr.mxu0 0.0
  %7618 = vmatpush2.msra.mxu0 0.0
  %7619 = vmatprep.subr.mxu0 0.0
  %7620 = vmatpush2.msra.mxu0 0.0
  %7621 = vmatprep.subr.mxu0 0.0
  %7622 = vmatpush2.msra.mxu0 0.0
  %7623 = vmatprep.subr.mxu0 0.0
  %7624 = vmatpush2.msra.mxu0 0.0
  %7625 = vmatprep.subr.mxu0 0.0
  %7626 = vmatpush2.msra.mxu0 0.0
  %7627 = vmatprep.subr.mxu0 0.0
  %7628 = vmatpush2.msra.mxu0 0.0
  %7629 = vmatprep.subr.mxu0 0.0
  %7630 = vmatpush2.msra.mxu0 0.0
  %7631 = vmatprep.subr.mxu0 0.0
  %7632 = vmatpush2.msra.mxu0 0.0
  %7633 = vmatprep.mubr.f32.mxu0 0.0
  %7634 = vmatmul.mubr.f32.gmra.mxu0 %v7496
  %v7635 = vpop.f32.mrf.mxu0
  %v7636 = vadd.f32 0.0, %v7635
  %v7637 = vpop.f32.mrf.mxu0
  %7638 = vdwg.mxu0
  %v7639 = vadd.f32 %v7352, %v7636
  %7640 = vmatprep.subr.mxu0 0.0
  %7641 = vmatpush1.msra.mxu0 0.0
  %7642 = vmatprep.subr.mxu0 0.0
  %7643 = vmatpush1.msra.mxu0 0.0
  %7644 = vmatprep.subr.mxu0 0.0
  %7645 = vmatpush1.msra.mxu0 0.0
  %7646 = vmatprep.subr.mxu0 0.0
  %7647 = vmatpush1.msra.mxu0 0.0
  %7648 = vmatprep.subr.mxu0 0.0
  %7649 = vmatpush1.msra.mxu0 0.0
  %7650 = vmatprep.subr.mxu0 0.0
  %7651 = vmatpush1.msra.mxu0 0.0
  %7652 = vmatprep.subr.mxu0 0.0
  %7653 = vmatpush1.msra.mxu0 0.0
  %7654 = vmatprep.subr.mxu0 0.0
  %7655 = vmatpush1.msra.mxu0 0.0
  %7656 = vmatprep.subr.mxu0 0.0
  %7657 = vmatpush1.msra.mxu0 0.0
  %7658 = vmatprep.subr.mxu0 0.0
  %7659 = vmatpush1.msra.mxu0 0.0
  %7660 = vmatprep.subr.mxu0 0.0
  %7661 = vmatpush1.msra.mxu0 0.0
  %7662 = vmatprep.subr.mxu0 0.0
  %7663 = vmatpush1.msra.mxu0 0.0
  %7664 = vmatprep.subr.mxu0 0.0
  %7665 = vmatpush1.msra.mxu0 0.0
  %7666 = vmatprep.subr.mxu0 0.0
  %7667 = vmatpush1.msra.mxu0 0.0
  %7668 = vmatprep.subr.mxu0 0.0
  %7669 = vmatpush1.msra.mxu0 %v40
  %7670 = vmatprep.subr.mxu0 0.0
  %7671 = vmatpush1.msra.mxu0 %v39
  %7672 = vmatprep.subr.mxu0 0.0
  %7673 = vmatpush2.msra.mxu0 0.0
  %7674 = vmatprep.subr.mxu0 0.0
  %7675 = vmatpush2.msra.mxu0 0.0
  %7676 = vmatprep.subr.mxu0 0.0
  %7677 = vmatpush2.msra.mxu0 0.0
  %7678 = vmatprep.subr.mxu0 0.0
  %7679 = vmatpush2.msra.mxu0 0.0
  %7680 = vmatprep.subr.mxu0 0.0
  %7681 = vmatpush2.msra.mxu0 0.0
  %7682 = vmatprep.subr.mxu0 0.0
  %7683 = vmatpush2.msra.mxu0 0.0
  %7684 = vmatprep.subr.mxu0 0.0
  %7685 = vmatpush2.msra.mxu0 0.0
  %7686 = vmatprep.subr.mxu0 0.0
  %7687 = vmatpush2.msra.mxu0 0.0
  %7688 = vmatprep.subr.mxu0 0.0
  %7689 = vmatpush2.msra.mxu0 0.0
  %7690 = vmatprep.subr.mxu0 0.0
  %7691 = vmatpush2.msra.mxu0 0.0
  %7692 = vmatprep.subr.mxu0 0.0
  %7693 = vmatpush2.msra.mxu0 0.0
  %7694 = vmatprep.subr.mxu0 0.0
  %7695 = vmatpush2.msra.mxu0 0.0
  %7696 = vmatprep.subr.mxu0 0.0
  %7697 = vmatpush2.msra.mxu0 0.0
  %7698 = vmatprep.subr.mxu0 0.0
  %7699 = vmatpush2.msra.mxu0 0.0
  %7700 = vmatprep.subr.mxu0 0.0
  %7701 = vmatpush2.msra.mxu0 0.0
  %7702 = vmatprep.subr.mxu0 0.0
  %7703 = vmatpush2.msra.mxu0 0.0
  %7704 = vmatprep.mubr.f32.mxu0 0.0
  %7705 = vmatmul.mubr.f32.gmra.mxu0 %v7496
  %v7706 = vpop.f32.mrf.mxu0
  %v7707 = vadd.f32 0.0, %v7706
  %v7708 = vpop.f32.mrf.mxu0
  %7709 = vdwg.mxu0
  %v7710 = vadd.f32 %v7422, %v7707
  %7711 = vmatprep.subr.mxu0 0.0
  %7712 = vmatpush1.msra.mxu0 0.0
  %7713 = vmatprep.subr.mxu0 0.0
  %7714 = vmatpush1.msra.mxu0 0.0
  %7715 = vmatprep.subr.mxu0 0.0
  %7716 = vmatpush1.msra.mxu0 0.0
  %7717 = vmatprep.subr.mxu0 0.0
  %7718 = vmatpush1.msra.mxu0 0.0
  %7719 = vmatprep.subr.mxu0 0.0
  %7720 = vmatpush1.msra.mxu0 0.0
  %7721 = vmatprep.subr.mxu0 0.0
  %7722 = vmatpush1.msra.mxu0 0.0
  %7723 = vmatprep.subr.mxu0 0.0
  %7724 = vmatpush1.msra.mxu0 0.0
  %7725 = vmatprep.subr.mxu0 0.0
  %7726 = vmatpush1.msra.mxu0 0.0
  %7727 = vmatprep.subr.mxu0 0.0
  %7728 = vmatpush1.msra.mxu0 0.0
  %7729 = vmatprep.subr.mxu0 0.0
  %7730 = vmatpush1.msra.mxu0 0.0
  %7731 = vmatprep.subr.mxu0 0.0
  %7732 = vmatpush1.msra.mxu0 0.0
  %7733 = vmatprep.subr.mxu0 0.0
  %7734 = vmatpush1.msra.mxu0 0.0
  %7735 = vmatprep.subr.mxu0 0.0
  %7736 = vmatpush1.msra.mxu0 0.0
  %7737 = vmatprep.subr.mxu0 0.0
  %7738 = vmatpush1.msra.mxu0 0.0
  %7739 = vmatprep.subr.mxu0 0.0
  %7740 = vmatpush1.msra.mxu0 %v42
  %7741 = vmatprep.subr.mxu0 0.0
  %7742 = vmatpush1.msra.mxu0 %v41
  %7743 = vmatprep.subr.mxu0 0.0
  %7744 = vmatpush2.msra.mxu0 0.0
  %7745 = vmatprep.subr.mxu0 0.0
  %7746 = vmatpush2.msra.mxu0 0.0
  %7747 = vmatprep.subr.mxu0 0.0
  %7748 = vmatpush2.msra.mxu0 0.0
  %7749 = vmatprep.subr.mxu0 0.0
  %7750 = vmatpush2.msra.mxu0 0.0
  %7751 = vmatprep.subr.mxu0 0.0
  %7752 = vmatpush2.msra.mxu0 0.0
  %7753 = vmatprep.subr.mxu0 0.0
  %7754 = vmatpush2.msra.mxu0 0.0
  %7755 = vmatprep.subr.mxu0 0.0
  %7756 = vmatpush2.msra.mxu0 0.0
  %7757 = vmatprep.subr.mxu0 0.0
  %7758 = vmatpush2.msra.mxu0 0.0
  %7759 = vmatprep.subr.mxu0 0.0
  %7760 = vmatpush2.msra.mxu0 0.0
  %7761 = vmatprep.subr.mxu0 0.0
  %7762 = vmatpush2.msra.mxu0 0.0
  %7763 = vmatprep.subr.mxu0 0.0
  %7764 = vmatpush2.msra.mxu0 0.0
  %7765 = vmatprep.subr.mxu0 0.0
  %7766 = vmatpush2.msra.mxu0 0.0
  %7767 = vmatprep.subr.mxu0 0.0
  %7768 = vmatpush2.msra.mxu0 0.0
  %7769 = vmatprep.subr.mxu0 0.0
  %7770 = vmatpush2.msra.mxu0 0.0
  %7771 = vmatprep.subr.mxu0 0.0
  %7772 = vmatpush2.msra.mxu0 0.0
  %7773 = vmatprep.subr.mxu0 0.0
  %7774 = vmatpush2.msra.mxu0 0.0
  %7775 = vmatprep.mubr.f32.mxu0 0.0
  %7776 = vmatmul.mubr.f32.gmra.mxu0 %v7496
  %v7777 = vpop.f32.mrf.mxu0
  %v7778 = vadd.f32 0.0, %v7777
  %v7779 = vpop.f32.mrf.mxu0
  %7780 = vdwg.mxu0
  %v7781 = vadd.f32 %v7492, %v7778
  %v7782 = vxor.u32 %v7568, 2147483648
  %v7783 = vmul.f32 %v7782, 1.442695
  %v7784 = vpow.pop %v7783
  %v7785 = vadd.f32 %v7784, 1.0
  %v7786 = vrcp.pop %v7785
  %v7787 = vmul.f32 1.0, %v7786
  %v7788 = vxor.u32 %v7639, 2147483648
  %v7789 = vmul.f32 %v7788, 1.442695
  %v7790 = vpow.pop %v7789
  %v7791 = vadd.f32 %v7790, 1.0
  %v7792 = vrcp.pop %v7791
  %v7793 = vmul.f32 1.0, %v7792
  %v7794 = vtanh.pop %v7710
  %v7795 = vxor.u32 %v7781, 2147483648
  %v7796 = vmul.f32 %v7795, 1.442695
  %v7797 = vpow.pop %v7796
  %v7798 = vadd.f32 %v7797, 1.0
  %v7799 = vrcp.pop %v7798
  %v7800 = vmul.f32 1.0, %v7799
  %v7801 = vmul.f32 %v7793, %v6895
  %v7802 = vmul.f32 %v7787, %v7794
  %v7803 = vadd.f32 %v7801, %v7802
  %v7804 = vtanh.pop %v7803
  %v7805 = vmul.f32 %v7800, %v7804
  %vm7806 = vcmp.eq.s32.totalorder %v546, 7
  %v7807 = vlaneseq
  %v7808 = vshrl.u32 %v7807, 7
  %v7809 = vsub.s32 7, %v7808
  %v7810 = vrot.slane %v7805, %v7809
  %v7811 = vsel %vm7806, %v7810, %v6903
  %v7812 = vld [vmem:[%s1 + $0xf0] sm:$0xff]
  %v7813 = vld [vmem:[%s1 + $0xf8] sm:$0xff]
  %v7814 = vld [vmem:[%s1 + $0x100] sm:$0x1]
  %v7815 = vld [vmem:[%s1 + $0x108] sm:$0xff]
  %v7816 = vld [vmem:[%s1 + $0x110] sm:$0xff]
  %v7817 = vld [vmem:[%s1 + $0x118] sm:$0xff]
  %v7818 = vld [vmem:[%s1 + $0x120] sm:$0xff]
  %v7819 = vld [vmem:[%s1 + $0x128] sm:$0x1]
  %v7820 = vlaneseq
  %v7821 = vshrl.u32 %v7820, 7
  %v7822 = vsub.s32 0, %v7821
  %v7823 = vrot.slane %v7814, %v7822
  %v7825 = vsel %vm547, %v7811, 0
  %7827 = vmatprep.subr.mxu0 0.0
  %7828 = vmatpush1.msra.mxu0 0.0
  %7829 = vmatprep.subr.mxu0 0.0
  %7830 = vmatpush1.msra.mxu0 0.0
  %7831 = vmatprep.subr.mxu0 0.0
  %7832 = vmatpush1.msra.mxu0 0.0
  %7833 = vmatprep.subr.mxu0 0.0
  %7834 = vmatpush1.msra.mxu0 0.0
  %7835 = vmatprep.subr.mxu0 0.0
  %7836 = vmatpush1.msra.mxu0 0.0
  %7837 = vmatprep.subr.mxu0 0.0
  %7838 = vmatpush1.msra.mxu0 0.0
  %7839 = vmatprep.subr.mxu0 0.0
  %7840 = vmatpush1.msra.mxu0 0.0
  %7841 = vmatprep.subr.mxu0 0.0
  %7842 = vmatpush1.msra.mxu0 0.0
  %7843 = vmatprep.subr.mxu0 0.0
  %7844 = vmatpush1.msra.mxu0 0.0
  %7845 = vmatprep.subr.mxu0 0.0
  %7846 = vmatpush1.msra.mxu0 0.0
  %7847 = vmatprep.subr.mxu0 0.0
  %7848 = vmatpush1.msra.mxu0 0.0
  %7849 = vmatprep.subr.mxu0 0.0
  %7850 = vmatpush1.msra.mxu0 0.0
  %7851 = vmatprep.subr.mxu0 0.0
  %7852 = vmatpush1.msra.mxu0 0.0
  %7853 = vmatprep.subr.mxu0 0.0
  %7854 = vmatpush1.msra.mxu0 0.0
  %7855 = vmatprep.subr.mxu0 0.0
  %7856 = vmatpush1.msra.mxu0 %v7813
  %7857 = vmatprep.subr.mxu0 0.0
  %7858 = vmatpush1.msra.mxu0 %v7812
  %7859 = vmatprep.subr.mxu0 0.0
  %7860 = vmatpush2.msra.mxu0 0.0
  %7861 = vmatprep.subr.mxu0 0.0
  %7862 = vmatpush2.msra.mxu0 0.0
  %7863 = vmatprep.subr.mxu0 0.0
  %7864 = vmatpush2.msra.mxu0 0.0
  %7865 = vmatprep.subr.mxu0 0.0
  %7866 = vmatpush2.msra.mxu0 0.0
  %7867 = vmatprep.subr.mxu0 0.0
  %7868 = vmatpush2.msra.mxu0 0.0
  %7869 = vmatprep.subr.mxu0 0.0
  %7870 = vmatpush2.msra.mxu0 0.0
  %7871 = vmatprep.subr.mxu0 0.0
  %7872 = vmatpush2.msra.mxu0 0.0
  %7873 = vmatprep.subr.mxu0 0.0
  %7874 = vmatpush2.msra.mxu0 0.0
  %7875 = vmatprep.subr.mxu0 0.0
  %7876 = vmatpush2.msra.mxu0 0.0
  %7877 = vmatprep.subr.mxu0 0.0
  %7878 = vmatpush2.msra.mxu0 0.0
  %7879 = vmatprep.subr.mxu0 0.0
  %7880 = vmatpush2.msra.mxu0 0.0
  %7881 = vmatprep.subr.mxu0 0.0
  %7882 = vmatpush2.msra.mxu0 0.0
  %7883 = vmatprep.subr.mxu0 0.0
  %7884 = vmatpush2.msra.mxu0 0.0
  %7885 = vmatprep.subr.mxu0 0.0
  %7886 = vmatpush2.msra.mxu0 0.0
  %7887 = vmatprep.subr.mxu0 0.0
  %7888 = vmatpush2.msra.mxu0 0.0
  %7889 = vmatprep.subr.mxu0 0.0
  %7890 = vmatpush2.msra.mxu0 0.0
  %7891 = vmatprep.mubr.f32.mxu0 0.0
  %7892 = vmatmul.mubr.f32.gmra.mxu0 %v7825
  %v7893 = vpop.f32.mrf.mxu0
  %v7894 = vadd.f32 %v7823, %v7893
  %v7895 = vpop.f32.mrf.mxu0
  %7896 = vdwg.mxu0
  %v7897 = vtanh.pop %v7894
  %v7898 = vlaneseq
  %v7899 = vshrl.u32 %v7898, 7
  %v7900 = vsub.s32 0, %v7899
  %v7901 = vrot.slane %v7819, %v7900
  %vm7902 = vcmask 261120
  %v7904 = vsel %vm7902, %v7897, 0
  %7906 = vmatprep.subr.mxu0 0.0
  %7907 = vmatpush1.msra.mxu0 0.0
  %7908 = vmatprep.subr.mxu0 0.0
  %7909 = vmatpush1.msra.mxu0 0.0
  %7910 = vmatprep.subr.mxu0 0.0
  %7911 = vmatpush1.msra.mxu0 0.0
  %7912 = vmatprep.subr.mxu0 0.0
  %7913 = vmatpush1.msra.mxu0 0.0
  %7914 = vmatprep.subr.mxu0 0.0
  %7915 = vmatpush1.msra.mxu0 0.0
  %7916 = vmatprep.subr.mxu0 0.0
  %7917 = vmatpush1.msra.mxu0 0.0
  %7918 = vmatprep.subr.mxu0 0.0
  %7919 = vmatpush1.msra.mxu0 0.0
  %7920 = vmatprep.subr.mxu0 0.0
  %7921 = vmatpush1.msra.mxu0 0.0
  %7922 = vmatprep.subr.mxu0 0.0
  %7923 = vmatpush1.msra.mxu0 0.0
  %7924 = vmatprep.subr.mxu0 0.0
  %7925 = vmatpush1.msra.mxu0 0.0
  %7926 = vmatprep.subr.mxu0 0.0
  %7927 = vmatpush1.msra.mxu0 0.0
  %7928 = vmatprep.subr.mxu0 0.0
  %7929 = vmatpush1.msra.mxu0 0.0
  %7930 = vmatprep.subr.mxu0 0.0
  %7931 = vmatpush1.msra.mxu0 %v7818
  %7932 = vmatprep.subr.mxu0 0.0
  %7933 = vmatpush1.msra.mxu0 %v7817
  %7934 = vmatprep.subr.mxu0 0.0
  %7935 = vmatpush1.msra.mxu0 %v7816
  %7936 = vmatprep.subr.mxu0 0.0
  %7937 = vmatpush1.msra.mxu0 %v7815
  %7938 = vmatprep.subr.mxu0 0.0
  %7939 = vmatpush2.msra.mxu0 0.0
  %7940 = vmatprep.subr.mxu0 0.0
  %7941 = vmatpush2.msra.mxu0 0.0
  %7942 = vmatprep.subr.mxu0 0.0
  %7943 = vmatpush2.msra.mxu0 0.0
  %7944 = vmatprep.subr.mxu0 0.0
  %7945 = vmatpush2.msra.mxu0 0.0
  %7946 = vmatprep.subr.mxu0 0.0
  %7947 = vmatpush2.msra.mxu0 0.0
  %7948 = vmatprep.subr.mxu0 0.0
  %7949 = vmatpush2.msra.mxu0 0.0
  %7950 = vmatprep.subr.mxu0 0.0
  %7951 = vmatpush2.msra.mxu0 0.0
  %7952 = vmatprep.subr.mxu0 0.0
  %7953 = vmatpush2.msra.mxu0 0.0
  %7954 = vmatprep.subr.mxu0 0.0
  %7955 = vmatpush2.msra.mxu0 0.0
  %7956 = vmatprep.subr.mxu0 0.0
  %7957 = vmatpush2.msra.mxu0 0.0
  %7958 = vmatprep.subr.mxu0 0.0
  %7959 = vmatpush2.msra.mxu0 0.0
  %7960 = vmatprep.subr.mxu0 0.0
  %7961 = vmatpush2.msra.mxu0 0.0
  %7962 = vmatprep.subr.mxu0 0.0
  %7963 = vmatpush2.msra.mxu0 0.0
  %7964 = vmatprep.subr.mxu0 0.0
  %7965 = vmatpush2.msra.mxu0 0.0
  %7966 = vmatprep.subr.mxu0 0.0
  %7967 = vmatpush2.msra.mxu0 0.0
  %7968 = vmatprep.subr.mxu0 0.0
  %7969 = vmatpush2.msra.mxu0 0.0
  %7970 = vmatprep.mubr.f32.mxu0 0.0
  %7971 = vmatmul.mubr.f32.gmra.mxu0 %v7904
  %v7972 = vpop.f32.mrf.mxu0
  %v7973 = vadd.f32 %v7901, %v7972
  %v7974 = vpop.f32.mrf.mxu0
  %7975 = vdwg.mxu0
  %vm7976 = vcmask 7168
  %7977 = vst.msk [vmem:[%s2] sm:$0xff] %vm7976, %v7973
  // Predicated region
  $region10: #{lstm_model_forward.1} parent=0 // pred_check
    _
  $region11: #{lstm_model_forward.1} parent=0 // pred_check_branch
    %7979 = sbr.rel (0) target = $region13
  $region12: #{lstm_model_forward.1} parent=0 // pred_region
    _
  $region13: #{lstm_model_forward.1} parent=0 // pred_fallthru
    _
  // Predicated region
  $region14: #{lstm_model_forward.1} parent=0 // pred_check
    _
  $region15: #{lstm_model_forward.1} parent=0 // pred_check_branch
    %7981 = sbr.rel (0) target = $region17
  $region16: #{lstm_model_forward.1} parent=0 // pred_region
    _
  $region17: #{lstm_model_forward.1} parent=0 // pred_fallthru
    _

</llo_original>
